<compile_context>
chip_gen: v7x
topology: tpu7x:2x2x1
jax: 0.10.0
libtpu: 0.0.40
codegen_flags: <defaults>
</compile_context>

<pallas_src>
import jax
import jax.numpy as jnp
from jax.experimental import pallas as pl
from jax.experimental.pallas import tpu as pltpu

NEG_SLOPE = 0.01     # nn.LeakyReLU default
BN_EPS = 1e-5        # nn.BatchNorm1d default

# Set to jnp.bfloat16 to take the bf16-native MXU path on v6e/v7x (operands are
# cast in-kernel; accumulation and the bias/LeakyReLU/BN epilogue stay f32).
# Default f32 keeps numerics aligned with the f32 PyTorch reference.
MATMUL_DTYPE = jnp.float32


def _round_up(x, m):
    return (x + m - 1) // m * m


# ----------------------------------------------------------------------------
# Pallas kernels
# ----------------------------------------------------------------------------
def _conv_pool_kernel(p_ref, w_ref, b_ref, o_ref):
    """Fused conv-matmul + bias + LeakyReLU + 2x2x2 max-pool for one row tile.

    p_ref: (8, TM, K)  patches, leading axis = pool-window offset
    w_ref: (K, Cout)   conv weights as a matrix
    b_ref: (1, Cout)   bias
    o_ref: (TM, Cout)  pooled output rows
    """
    w = w_ref[...].astype(MATMUL_DTYPE)
    b = b_ref[...]
    acc = None
    for widx in range(8):                       # unrolled; static leading-dim index
        h = jnp.dot(p_ref[widx].astype(MATMUL_DTYPE), w,
                    preferred_element_type=jnp.float32) + b
        h = jnp.where(h >= 0, h, NEG_SLOPE * h)           # LeakyReLU (f32, VPU)
        acc = h if acc is None else jnp.maximum(acc, h)   # MaxPool3d(2,2,2)
    o_ref[...] = acc.astype(o_ref.dtype)


def _head_kernel(x_ref, w1_ref, b1_ref, g_ref, be_ref, mu_ref, var_ref,
                 w2_ref, b2_ref, o_ref):
    # fc1 + LeakyReLU  (f32 accumulate / epilogue)
    h = jnp.dot(x_ref[...].astype(MATMUL_DTYPE), w1_ref[...].astype(MATMUL_DTYPE),
                preferred_element_type=jnp.float32) + b1_ref[...]
    h = jnp.where(h >= 0, h, NEG_SLOPE * h)
    # BatchNorm1d, eval mode (running statistics)
    h = (h - mu_ref[...]) * jax.lax.rsqrt(var_ref[...] + BN_EPS) * g_ref[...] + be_ref[...]
    # TODO(synk): nn.Dropout(p=0.15) is identity in eval mode; train-mode RNG masking not implemented.
    o = jnp.dot(h.astype(MATMUL_DTYPE), w2_ref[...].astype(MATMUL_DTYPE),
                preferred_element_type=jnp.float32) + b2_ref[...]
    o_ref[...] = o.astype(o_ref.dtype)


# ----------------------------------------------------------------------------
# Wrapper-side layout prep (single fused XLA op per stage)
# ----------------------------------------------------------------------------
def _conv_weight_matrix(w):
    """(Cout, Cin, 3, 3, 3) -> (27*Cin, Cout) with row order (dz, dy, dx, cin)."""
    return w.transpose(2, 3, 4, 1, 0).reshape(-1, w.shape[0])


def _im2col_pool_window(x):
    """x: (B, D, H, W, C) channels-last -> patches (8, Mp, 27*C).

    Leading axis 8 enumerates the 2x2x2 MaxPool window offsets, Mp enumerates
    pooled output positions (b, zp, yp, xp), and the K columns are ordered
    (dz, dy, dx, c) to match _conv_weight_matrix.  Pool uses floor semantics
    (odd conv-output dims are cropped), matching nn.MaxPool3d((2,2,2)).
    """
    B, D, H, W, C = x.shape
    Do, Ho, Wo = D - 2, H - 2, W - 2
    Dp, Hp, Wp = Do // 2, Ho // 2, Wo // 2
    cols = []
    for dz in range(3):
        for dy in range(3):
            for dx in range(3):
                cols.append(x[:, dz:dz + 2 * Dp, dy:dy + 2 * Hp, dx:dx + 2 * Wp, :])
    p = jnp.stack(cols, axis=4)                       # (B, 2Dp, 2Hp, 2Wp, 27, C)
    p = p.reshape(B, Dp, 2, Hp, 2, Wp, 2, 27 * C)
    p = p.transpose(2, 4, 6, 0, 1, 3, 5, 7)           # (2,2,2, B, Dp, Hp, Wp, K)
    Mp = B * Dp * Hp * Wp
    return p.reshape(8, Mp, 27 * C), (B, Dp, Hp, Wp)


def conv_pool_stage(x, w, b, *, tile_m=256):
    """Fused Conv3d(k=3, pad=0) + LeakyReLU + MaxPool3d(2) as one pallas_call.

    x: (B, D, H, W, Cin) channels-last.  Returns (B, Dp, Hp, Wp, Cout).
    """
    Co = w.shape[0]
    patches, (B, Dp, Hp, Wp) = _im2col_pool_window(x)
    _, Mp, K = patches.shape

    TM = min(tile_m, _round_up(Mp, 8))                # sublane-aligned row tile
    Mp_pad = _round_up(Mp, TM)
    if Mp_pad != Mp:
        patches = jnp.pad(patches, ((0, 0), (0, Mp_pad - Mp), (0, 0)))
    wmat = _conv_weight_matrix(w)                     # (K, Cout)

    out = pl.pallas_call(
        _conv_pool_kernel,
        out_shape=jax.ShapeDtypeStruct((Mp_pad, Co), jnp.float32),
        grid=(Mp_pad // TM,),
        in_specs=[
            pl.BlockSpec((8, TM, K), lambda m: (0, m, 0)),   # patches row tile
            pl.BlockSpec((K, Co), lambda m: (0, 0)),         # weights (resident)
            pl.BlockSpec((1, Co), lambda m: (0, 0)),         # bias (resident)
        ],
        out_specs=pl.BlockSpec((TM, Co), lambda m: (m, 0)),
        compiler_params=pltpu.CompilerParams(
            dimension_semantics=("parallel",),               # v7x megacore / pipelining
            vmem_limit_bytes=32 * 1024 * 1024,
        ),
    )(patches, wmat, b.reshape(1, Co))

    return out[:Mp].reshape(B, Dp, Hp, Wp, Co)        # stays channels-last


def head(flat, w1, params):
    """fc1 + LeakyReLU + BatchNorm1d(eval) + Dropout(eval) + fc2, one kernel."""
    B, _ = flat.shape
    Hd = w1.shape[1]
    N = params["w_fc2"].shape[1]

    def full(shape):
        return pl.BlockSpec(shape, lambda: tuple(0 for _ in shape))

    args = (
        flat,
        w1,
        params["b_fc1"].reshape(1, Hd),
        params["gamma"].reshape(1, Hd),
        params["beta"].reshape(1, Hd),
        params["run_mean"].reshape(1, Hd),
        params["run_var"].reshape(1, Hd),
        params["w_fc2"],
        params["b_fc2"].reshape(1, N),
    )
    return pl.pallas_call(
        _head_kernel,
        out_shape=jax.ShapeDtypeStruct((B, N), jnp.float32),
        in_specs=[full(a.shape) for a in args],
        out_specs=full((B, N)),
        compiler_params=pltpu.CompilerParams(vmem_limit_bytes=32 * 1024 * 1024),
    )(*args)


def cnn_forward(x, params):
    # NCDHW -> NDHWC (channels-last).  Cin=1, so this is effectively a reshape.
    xl = jnp.transpose(x, (0, 2, 3, 4, 1))
    y1 = conv_pool_stage(xl, params["w_c1"], params["b_c1"])     # (B, 7, 7, 7, 16)
    y2 = conv_pool_stage(y1, params["w_c2"], params["b_c2"])     # (B, 2, 2, 2, 64)

    B, Dp, Hp, Wp, Co = y2.shape
    S = Dp * Hp * Wp
    flat = y2.reshape(B, S * Co)          # channels-last flatten: index = s*Co + c

    # PyTorch's x.view(B, -1) flattens channel-first (index = c*S + s).  Permute
    # the fc1 weight rows once (off the activation critical path) instead of
    # transposing the activation.
    Hd = params["w_fc1"].shape[1]
    w1_perm = params["w_fc1"].reshape(Co, S, Hd).transpose(1, 0, 2).reshape(S * Co, Hd)

    return head(flat, w1_perm, params)


# ----------------------------------------------------------------------------
# Driver
# ----------------------------------------------------------------------------
if __name__ == "__main__":
    key = jax.random.PRNGKey(0)
    keys = jax.random.split(key, 9)

    params = {
        # Conv3d(1, 16, k=3)
        "w_c1": 0.10 * jax.random.normal(keys[0], (16, 1, 3, 3, 3), jnp.float32),
        "b_c1": 0.10 * jax.random.normal(keys[1], (16,), jnp.float32),
        # Conv3d(16, 64, k=3)
        "w_c2": 0.05 * jax.random.normal(keys[2], (64, 16, 3, 3, 3), jnp.float32),
        "b_c2": 0.05 * jax.random.normal(keys[3], (64,), jnp.float32),
        # Linear(512, 128)  (stored as (in, out), rows in PyTorch channel-first flatten order)
        "w_fc1": 0.05 * jax.random.normal(keys[4], (512, 128), jnp.float32),
        "b_fc1": 0.05 * jax.random.normal(keys[5], (128,), jnp.float32),
        # Linear(128, 9)
        "w_fc2": 0.10 * jax.random.normal(keys[6], (128, 9), jnp.float32),
        "b_fc2": 0.10 * jax.random.normal(keys[7], (9,), jnp.float32),
        # BatchNorm1d(128), eval-mode stats
        "gamma": jnp.ones((128,), jnp.float32),
        "beta": jnp.zeros((128,), jnp.float32),
        "run_mean": jnp.zeros((128,), jnp.float32),
        "run_var": jnp.ones((128,), jnp.float32),
    }

    # Input: (B=2, C=1, D=16, H=16, W=16)   (res=16, single-channel volume)
    x = jax.random.normal(keys[8], (2, 1, 16, 16, 16), jnp.float32)

    out = jax.jit(cnn_forward)(x, params)
    jax.block_until_ready(out)
    assert out.shape == (2, 9) and out.dtype == jnp.float32
    print("KERNEL_OK")
</pallas_src>

<mosaic_0001>
module attributes {stable_mosaic.version = 11 : i64} {
  func.func @_conv_pool_kernel(%arg0: i32, %arg1: memref<8x256x27xf32, #tpu.memory_space<vmem>>, %arg2: memref<27x16xf32, #tpu.memory_space<vmem>>, %arg3: memref<1x16xf32, #tpu.memory_space<vmem>>, %arg4: memref<256x16xf32, #tpu.memory_space<vmem>>) attributes {dimension_semantics = [#tpu.dimension_semantics<parallel>], iteration_bounds = array<i64: 3>, scalar_prefetch = 0 : i64, scratch_operands = 0 : i64, tpu.core_type = #tpu.core_type<tc>, window_params = [{transform_indices = @transform_0, window_bounds = array<i64: 8, 256, 27>}, {pipeline_mode = #tpu.pipeline_mode<synchronous>, transform_indices = @transform_1, window_bounds = array<i64: 27, 16>}, {pipeline_mode = #tpu.pipeline_mode<synchronous>, transform_indices = @transform_2, window_bounds = array<i64: 1, 16>}, {transform_indices = @transform_3, window_bounds = array<i64: 256, 16>}]} {
    %c0 = arith.constant 0 : index
    %c0_0 = arith.constant 0 : index
    %0 = vector.load %arg2[%c0, %c0_0] : memref<27x16xf32, #tpu.memory_space<vmem>>, vector<27x16xf32>
    %c0_1 = arith.constant 0 : index
    %c0_2 = arith.constant 0 : index
    %1 = vector.load %arg3[%c0_1, %c0_2] : memref<1x16xf32, #tpu.memory_space<vmem>>, vector<1x16xf32>
    %c0_3 = arith.constant 0 : index
    %c0_4 = arith.constant 0 : index
    %c0_5 = arith.constant 0 : index
    %2 = vector.load %arg1[%c0_3, %c0_4, %c0_5] : memref<8x256x27xf32, #tpu.memory_space<vmem>>, vector<1x256x27xf32>
    %3 = vector.shape_cast %2 : vector<1x256x27xf32> to vector<256x27xf32>
    %cst = arith.constant dense<0.000000e+00> : vector<256x16xf32>
    %4 = tpu.matmul %3, %0, %cst {dimension_numbers = #tpu.dot_dimension_numbers<[1], [0], [0], [1], [0, 0, 1, 1], [], []>} : vector<256x27xf32>, vector<27x16xf32>, vector<256x16xf32> -> vector<256x16xf32>
    %5 = vector.broadcast %1 : vector<1x16xf32> to vector<256x16xf32>
    %6 = arith.addf %4, %5 : vector<256x16xf32>
    %cst_6 = arith.constant 0.000000e+00 : f32
    %7 = vector.broadcast %cst_6 : f32 to vector<256x16xf32>
    %8 = arith.cmpf oge, %6, %7 : vector<256x16xf32>
    %cst_7 = arith.constant 0.00999999977 : f32
    %9 = vector.broadcast %cst_7 : f32 to vector<256x16xf32>
    %10 = arith.mulf %9, %6 : vector<256x16xf32>
    %11 = arith.select %8, %6, %10 : vector<256x16xi1>, vector<256x16xf32>
    %c1 = arith.constant 1 : index
    %c0_8 = arith.constant 0 : index
    %c0_9 = arith.constant 0 : index
    %12 = vector.load %arg1[%c1, %c0_8, %c0_9] : memref<8x256x27xf32, #tpu.memory_space<vmem>>, vector<1x256x27xf32>
    %13 = vector.shape_cast %12 : vector<1x256x27xf32> to vector<256x27xf32>
    %cst_10 = arith.constant dense<0.000000e+00> : vector<256x16xf32>
    %14 = tpu.matmul %13, %0, %cst_10 {dimension_numbers = #tpu.dot_dimension_numbers<[1], [0], [0], [1], [0, 0, 1, 1], [], []>} : vector<256x27xf32>, vector<27x16xf32>, vector<256x16xf32> -> vector<256x16xf32>
    %15 = vector.broadcast %1 : vector<1x16xf32> to vector<256x16xf32>
    %16 = arith.addf %14, %15 : vector<256x16xf32>
    %cst_11 = arith.constant 0.000000e+00 : f32
    %17 = vector.broadcast %cst_11 : f32 to vector<256x16xf32>
    %18 = arith.cmpf oge, %16, %17 : vector<256x16xf32>
    %cst_12 = arith.constant 0.00999999977 : f32
    %19 = vector.broadcast %cst_12 : f32 to vector<256x16xf32>
    %20 = arith.mulf %19, %16 : vector<256x16xf32>
    %21 = arith.select %18, %16, %20 : vector<256x16xi1>, vector<256x16xf32>
    %22 = arith.maximumf %11, %21 : vector<256x16xf32>
    %c2 = arith.constant 2 : index
    %c0_13 = arith.constant 0 : index
    %c0_14 = arith.constant 0 : index
    %23 = vector.load %arg1[%c2, %c0_13, %c0_14] : memref<8x256x27xf32, #tpu.memory_space<vmem>>, vector<1x256x27xf32>
    %24 = vector.shape_cast %23 : vector<1x256x27xf32> to vector<256x27xf32>
    %cst_15 = arith.constant dense<0.000000e+00> : vector<256x16xf32>
    %25 = tpu.matmul %24, %0, %cst_15 {dimension_numbers = #tpu.dot_dimension_numbers<[1], [0], [0], [1], [0, 0, 1, 1], [], []>} : vector<256x27xf32>, vector<27x16xf32>, vector<256x16xf32> -> vector<256x16xf32>
    %26 = vector.broadcast %1 : vector<1x16xf32> to vector<256x16xf32>
    %27 = arith.addf %25, %26 : vector<256x16xf32>
    %cst_16 = arith.constant 0.000000e+00 : f32
    %28 = vector.broadcast %cst_16 : f32 to vector<256x16xf32>
    %29 = arith.cmpf oge, %27, %28 : vector<256x16xf32>
    %cst_17 = arith.constant 0.00999999977 : f32
    %30 = vector.broadcast %cst_17 : f32 to vector<256x16xf32>
    %31 = arith.mulf %30, %27 : vector<256x16xf32>
    %32 = arith.select %29, %27, %31 : vector<256x16xi1>, vector<256x16xf32>
    %33 = arith.maximumf %22, %32 : vector<256x16xf32>
    %c3 = arith.constant 3 : index
    %c0_18 = arith.constant 0 : index
    %c0_19 = arith.constant 0 : index
    %34 = vector.load %arg1[%c3, %c0_18, %c0_19] : memref<8x256x27xf32, #tpu.memory_space<vmem>>, vector<1x256x27xf32>
    %35 = vector.shape_cast %34 : vector<1x256x27xf32> to vector<256x27xf32>
    %cst_20 = arith.constant dense<0.000000e+00> : vector<256x16xf32>
    %36 = tpu.matmul %35, %0, %cst_20 {dimension_numbers = #tpu.dot_dimension_numbers<[1], [0], [0], [1], [0, 0, 1, 1], [], []>} : vector<256x27xf32>, vector<27x16xf32>, vector<256x16xf32> -> vector<256x16xf32>
    %37 = vector.broadcast %1 : vector<1x16xf32> to vector<256x16xf32>
    %38 = arith.addf %36, %37 : vector<256x16xf32>
    %cst_21 = arith.constant 0.000000e+00 : f32
    %39 = vector.broadcast %cst_21 : f32 to vector<256x16xf32>
    %40 = arith.cmpf oge, %38, %39 : vector<256x16xf32>
    %cst_22 = arith.constant 0.00999999977 : f32
    %41 = vector.broadcast %cst_22 : f32 to vector<256x16xf32>
    %42 = arith.mulf %41, %38 : vector<256x16xf32>
    %43 = arith.select %40, %38, %42 : vector<256x16xi1>, vector<256x16xf32>
    %44 = arith.maximumf %33, %43 : vector<256x16xf32>
    %c4 = arith.constant 4 : index
    %c0_23 = arith.constant 0 : index
    %c0_24 = arith.constant 0 : index
    %45 = vector.load %arg1[%c4, %c0_23, %c0_24] : memref<8x256x27xf32, #tpu.memory_space<vmem>>, vector<1x256x27xf32>
    %46 = vector.shape_cast %45 : vector<1x256x27xf32> to vector<256x27xf32>
    %cst_25 = arith.constant dense<0.000000e+00> : vector<256x16xf32>
    %47 = tpu.matmul %46, %0, %cst_25 {dimension_numbers = #tpu.dot_dimension_numbers<[1], [0], [0], [1], [0, 0, 1, 1], [], []>} : vector<256x27xf32>, vector<27x16xf32>, vector<256x16xf32> -> vector<256x16xf32>
    %48 = vector.broadcast %1 : vector<1x16xf32> to vector<256x16xf32>
    %49 = arith.addf %47, %48 : vector<256x16xf32>
    %cst_26 = arith.constant 0.000000e+00 : f32
    %50 = vector.broadcast %cst_26 : f32 to vector<256x16xf32>
    %51 = arith.cmpf oge, %49, %50 : vector<256x16xf32>
    %cst_27 = arith.constant 0.00999999977 : f32
    %52 = vector.broadcast %cst_27 : f32 to vector<256x16xf32>
    %53 = arith.mulf %52, %49 : vector<256x16xf32>
    %54 = arith.select %51, %49, %53 : vector<256x16xi1>, vector<256x16xf32>
    %55 = arith.maximumf %44, %54 : vector<256x16xf32>
    %c5 = arith.constant 5 : index
    %c0_28 = arith.constant 0 : index
    %c0_29 = arith.constant 0 : index
    %56 = vector.load %arg1[%c5, %c0_28, %c0_29] : memref<8x256x27xf32, #tpu.memory_space<vmem>>, vector<1x256x27xf32>
    %57 = vector.shape_cast %56 : vector<1x256x27xf32> to vector<256x27xf32>
    %cst_30 = arith.constant dense<0.000000e+00> : vector<256x16xf32>
    %58 = tpu.matmul %57, %0, %cst_30 {dimension_numbers = #tpu.dot_dimension_numbers<[1], [0], [0], [1], [0, 0, 1, 1], [], []>} : vector<256x27xf32>, vector<27x16xf32>, vector<256x16xf32> -> vector<256x16xf32>
    %59 = vector.broadcast %1 : vector<1x16xf32> to vector<256x16xf32>
    %60 = arith.addf %58, %59 : vector<256x16xf32>
    %cst_31 = arith.constant 0.000000e+00 : f32
    %61 = vector.broadcast %cst_31 : f32 to vector<256x16xf32>
    %62 = arith.cmpf oge, %60, %61 : vector<256x16xf32>
    %cst_32 = arith.constant 0.00999999977 : f32
    %63 = vector.broadcast %cst_32 : f32 to vector<256x16xf32>
    %64 = arith.mulf %63, %60 : vector<256x16xf32>
    %65 = arith.select %62, %60, %64 : vector<256x16xi1>, vector<256x16xf32>
    %66 = arith.maximumf %55, %65 : vector<256x16xf32>
    %c6 = arith.constant 6 : index
    %c0_33 = arith.constant 0 : index
    %c0_34 = arith.constant 0 : index
    %67 = vector.load %arg1[%c6, %c0_33, %c0_34] : memref<8x256x27xf32, #tpu.memory_space<vmem>>, vector<1x256x27xf32>
    %68 = vector.shape_cast %67 : vector<1x256x27xf32> to vector<256x27xf32>
    %cst_35 = arith.constant dense<0.000000e+00> : vector<256x16xf32>
    %69 = tpu.matmul %68, %0, %cst_35 {dimension_numbers = #tpu.dot_dimension_numbers<[1], [0], [0], [1], [0, 0, 1, 1], [], []>} : vector<256x27xf32>, vector<27x16xf32>, vector<256x16xf32> -> vector<256x16xf32>
    %70 = vector.broadcast %1 : vector<1x16xf32> to vector<256x16xf32>
    %71 = arith.addf %69, %70 : vector<256x16xf32>
    %cst_36 = arith.constant 0.000000e+00 : f32
    %72 = vector.broadcast %cst_36 : f32 to vector<256x16xf32>
    %73 = arith.cmpf oge, %71, %72 : vector<256x16xf32>
    %cst_37 = arith.constant 0.00999999977 : f32
    %74 = vector.broadcast %cst_37 : f32 to vector<256x16xf32>
    %75 = arith.mulf %74, %71 : vector<256x16xf32>
    %76 = arith.select %73, %71, %75 : vector<256x16xi1>, vector<256x16xf32>
    %77 = arith.maximumf %66, %76 : vector<256x16xf32>
    %c7 = arith.constant 7 : index
    %c0_38 = arith.constant 0 : index
    %c0_39 = arith.constant 0 : index
    %78 = vector.load %arg1[%c7, %c0_38, %c0_39] : memref<8x256x27xf32, #tpu.memory_space<vmem>>, vector<1x256x27xf32>
    %79 = vector.shape_cast %78 : vector<1x256x27xf32> to vector<256x27xf32>
    %cst_40 = arith.constant dense<0.000000e+00> : vector<256x16xf32>
    %80 = tpu.matmul %79, %0, %cst_40 {dimension_numbers = #tpu.dot_dimension_numbers<[1], [0], [0], [1], [0, 0, 1, 1], [], []>} : vector<256x27xf32>, vector<27x16xf32>, vector<256x16xf32> -> vector<256x16xf32>
    %81 = vector.broadcast %1 : vector<1x16xf32> to vector<256x16xf32>
    %82 = arith.addf %80, %81 : vector<256x16xf32>
    %cst_41 = arith.constant 0.000000e+00 : f32
    %83 = vector.broadcast %cst_41 : f32 to vector<256x16xf32>
    %84 = arith.cmpf oge, %82, %83 : vector<256x16xf32>
    %cst_42 = arith.constant 0.00999999977 : f32
    %85 = vector.broadcast %cst_42 : f32 to vector<256x16xf32>
    %86 = arith.mulf %85, %82 : vector<256x16xf32>
    %87 = arith.select %84, %82, %86 : vector<256x16xi1>, vector<256x16xf32>
    %88 = arith.maximumf %77, %87 : vector<256x16xf32>
    %c0_43 = arith.constant 0 : index
    %c0_44 = arith.constant 0 : index
    %89 = vector.load %arg4[%c0_43, %c0_44] : memref<256x16xf32, #tpu.memory_space<vmem>>, vector<256x16xf32>
    tpu.vector_store %arg4[%c0_43, %c0_44], %88 {strides = array<i32>} : memref<256x16xf32, #tpu.memory_space<vmem>>, vector<256x16xf32>,
    return
  }
  func.func @transform_0(%arg0: i32) -> (i32, i32, i32) {
    %c0_i32 = arith.constant 0 : i32
    %c0_i32_0 = arith.constant 0 : i32
    %c0_i32_1 = arith.constant 0 : i32
    return %c0_i32, %arg0, %c0_i32_0 : i32, i32, i32
  }
  func.func @transform_1(%arg0: i32) -> (i32, i32) {
    %c0_i32 = arith.constant 0 : i32
    %c0_i32_0 = arith.constant 0 : i32
    %c0_i32_1 = arith.constant 0 : i32
    return %c0_i32, %c0_i32_0 : i32, i32
  }
  func.func @transform_2(%arg0: i32) -> (i32, i32) {
    %c0_i32 = arith.constant 0 : i32
    %c0_i32_0 = arith.constant 0 : i32
    %c0_i32_1 = arith.constant 0 : i32
    return %c0_i32, %c0_i32_0 : i32, i32
  }
  func.func @transform_3(%arg0: i32) -> (i32, i32) {
    %c0_i32 = arith.constant 0 : i32
    %c0_i32_0 = arith.constant 0 : i32
    return %arg0, %c0_i32 : i32, i32
  }
}

module attributes {stable_mosaic.version = 11 : i64} {
  func.func @_conv_pool_kernel(%arg0: i32, %arg1: memref<8x16x432xf32, #tpu.memory_space<vmem>>, %arg2: memref<432x64xf32, #tpu.memory_space<vmem>>, %arg3: memref<1x64xf32, #tpu.memory_space<vmem>>, %arg4: memref<16x64xf32, #tpu.memory_space<vmem>>) attributes {dimension_semantics = [#tpu.dimension_semantics<parallel>], iteration_bounds = array<i64: 1>, scalar_prefetch = 0 : i64, scratch_operands = 0 : i64, tpu.core_type = #tpu.core_type<tc>, window_params = [{transform_indices = @transform_0, window_bounds = array<i64: 8, 16, 432>}, {pipeline_mode = #tpu.pipeline_mode<synchronous>, transform_indices = @transform_1, window_bounds = array<i64: 432, 64>}, {pipeline_mode = #tpu.pipeline_mode<synchronous>, transform_indices = @transform_2, window_bounds = array<i64: 1, 64>}, {transform_indices = @transform_3, window_bounds = array<i64: 16, 64>}]} {
    %c0 = arith.constant 0 : index
    %c0_0 = arith.constant 0 : index
    %0 = vector.load %arg2[%c0, %c0_0] : memref<432x64xf32, #tpu.memory_space<vmem>>, vector<432x64xf32>
    %c0_1 = arith.constant 0 : index
    %c0_2 = arith.constant 0 : index
    %1 = vector.load %arg3[%c0_1, %c0_2] : memref<1x64xf32, #tpu.memory_space<vmem>>, vector<1x64xf32>
    %c0_3 = arith.constant 0 : index
    %c0_4 = arith.constant 0 : index
    %c0_5 = arith.constant 0 : index
    %2 = vector.load %arg1[%c0_3, %c0_4, %c0_5] : memref<8x16x432xf32, #tpu.memory_space<vmem>>, vector<1x16x432xf32>
    %3 = vector.shape_cast %2 : vector<1x16x432xf32> to vector<16x432xf32>
    %cst = arith.constant dense<0.000000e+00> : vector<16x64xf32>
    %4 = tpu.matmul %3, %0, %cst {dimension_numbers = #tpu.dot_dimension_numbers<[1], [0], [0], [1], [0, 0, 1, 1], [], []>} : vector<16x432xf32>, vector<432x64xf32>, vector<16x64xf32> -> vector<16x64xf32>
    %5 = vector.broadcast %1 : vector<1x64xf32> to vector<16x64xf32>
    %6 = arith.addf %4, %5 : vector<16x64xf32>
    %cst_6 = arith.constant 0.000000e+00 : f32
    %7 = vector.broadcast %cst_6 : f32 to vector<16x64xf32>
    %8 = arith.cmpf oge, %6, %7 : vector<16x64xf32>
    %cst_7 = arith.constant 0.00999999977 : f32
    %9 = vector.broadcast %cst_7 : f32 to vector<16x64xf32>
    %10 = arith.mulf %9, %6 : vector<16x64xf32>
    %11 = arith.select %8, %6, %10 : vector<16x64xi1>, vector<16x64xf32>
    %c1 = arith.constant 1 : index
    %c0_8 = arith.constant 0 : index
    %c0_9 = arith.constant 0 : index
    %12 = vector.load %arg1[%c1, %c0_8, %c0_9] : memref<8x16x432xf32, #tpu.memory_space<vmem>>, vector<1x16x432xf32>
    %13 = vector.shape_cast %12 : vector<1x16x432xf32> to vector<16x432xf32>
    %cst_10 = arith.constant dense<0.000000e+00> : vector<16x64xf32>
    %14 = tpu.matmul %13, %0, %cst_10 {dimension_numbers = #tpu.dot_dimension_numbers<[1], [0], [0], [1], [0, 0, 1, 1], [], []>} : vector<16x432xf32>, vector<432x64xf32>, vector<16x64xf32> -> vector<16x64xf32>
    %15 = vector.broadcast %1 : vector<1x64xf32> to vector<16x64xf32>
    %16 = arith.addf %14, %15 : vector<16x64xf32>
    %cst_11 = arith.constant 0.000000e+00 : f32
    %17 = vector.broadcast %cst_11 : f32 to vector<16x64xf32>
    %18 = arith.cmpf oge, %16, %17 : vector<16x64xf32>
    %cst_12 = arith.constant 0.00999999977 : f32
    %19 = vector.broadcast %cst_12 : f32 to vector<16x64xf32>
    %20 = arith.mulf %19, %16 : vector<16x64xf32>
    %21 = arith.select %18, %16, %20 : vector<16x64xi1>, vector<16x64xf32>
    %22 = arith.maximumf %11, %21 : vector<16x64xf32>
    %c2 = arith.constant 2 : index
    %c0_13 = arith.constant 0 : index
    %c0_14 = arith.constant 0 : index
    %23 = vector.load %arg1[%c2, %c0_13, %c0_14] : memref<8x16x432xf32, #tpu.memory_space<vmem>>, vector<1x16x432xf32>
    %24 = vector.shape_cast %23 : vector<1x16x432xf32> to vector<16x432xf32>
    %cst_15 = arith.constant dense<0.000000e+00> : vector<16x64xf32>
    %25 = tpu.matmul %24, %0, %cst_15 {dimension_numbers = #tpu.dot_dimension_numbers<[1], [0], [0], [1], [0, 0, 1, 1], [], []>} : vector<16x432xf32>, vector<432x64xf32>, vector<16x64xf32> -> vector<16x64xf32>
    %26 = vector.broadcast %1 : vector<1x64xf32> to vector<16x64xf32>
    %27 = arith.addf %25, %26 : vector<16x64xf32>
    %cst_16 = arith.constant 0.000000e+00 : f32
    %28 = vector.broadcast %cst_16 : f32 to vector<16x64xf32>
    %29 = arith.cmpf oge, %27, %28 : vector<16x64xf32>
    %cst_17 = arith.constant 0.00999999977 : f32
    %30 = vector.broadcast %cst_17 : f32 to vector<16x64xf32>
    %31 = arith.mulf %30, %27 : vector<16x64xf32>
    %32 = arith.select %29, %27, %31 : vector<16x64xi1>, vector<16x64xf32>
    %33 = arith.maximumf %22, %32 : vector<16x64xf32>
    %c3 = arith.constant 3 : index
    %c0_18 = arith.constant 0 : index
    %c0_19 = arith.constant 0 : index
    %34 = vector.load %arg1[%c3, %c0_18, %c0_19] : memref<8x16x432xf32, #tpu.memory_space<vmem>>, vector<1x16x432xf32>
    %35 = vector.shape_cast %34 : vector<1x16x432xf32> to vector<16x432xf32>
    %cst_20 = arith.constant dense<0.000000e+00> : vector<16x64xf32>
    %36 = tpu.matmul %35, %0, %cst_20 {dimension_numbers = #tpu.dot_dimension_numbers<[1], [0], [0], [1], [0, 0, 1, 1], [], []>} : vector<16x432xf32>, vector<432x64xf32>, vector<16x64xf32> -> vector<16x64xf32>
    %37 = vector.broadcast %1 : vector<1x64xf32> to vector<16x64xf32>
    %38 = arith.addf %36, %37 : vector<16x64xf32>
    %cst_21 = arith.constant 0.000000e+00 : f32
    %39 = vector.broadcast %cst_21 : f32 to vector<16x64xf32>
    %40 = arith.cmpf oge, %38, %39 : vector<16x64xf32>
    %cst_22 = arith.constant 0.00999999977 : f32
    %41 = vector.broadcast %cst_22 : f32 to vector<16x64xf32>
    %42 = arith.mulf %41, %38 : vector<16x64xf32>
    %43 = arith.select %40, %38, %42 : vector<16x64xi1>, vector<16x64xf32>
    %44 = arith.maximumf %33, %43 : vector<16x64xf32>
    %c4 = arith.constant 4 : index
    %c0_23 = arith.constant 0 : index
    %c0_24 = arith.constant 0 : index
    %45 = vector.load %arg1[%c4, %c0_23, %c0_24] : memref<8x16x432xf32, #tpu.memory_space<vmem>>, vector<1x16x432xf32>
    %46 = vector.shape_cast %45 : vector<1x16x432xf32> to vector<16x432xf32>
    %cst_25 = arith.constant dense<0.000000e+00> : vector<16x64xf32>
    %47 = tpu.matmul %46, %0, %cst_25 {dimension_numbers = #tpu.dot_dimension_numbers<[1], [0], [0], [1], [0, 0, 1, 1], [], []>} : vector<16x432xf32>, vector<432x64xf32>, vector<16x64xf32> -> vector<16x64xf32>
    %48 = vector.broadcast %1 : vector<1x64xf32> to vector<16x64xf32>
    %49 = arith.addf %47, %48 : vector<16x64xf32>
    %cst_26 = arith.constant 0.000000e+00 : f32
    %50 = vector.broadcast %cst_26 : f32 to vector<16x64xf32>
    %51 = arith.cmpf oge, %49, %50 : vector<16x64xf32>
    %cst_27 = arith.constant 0.00999999977 : f32
    %52 = vector.broadcast %cst_27 : f32 to vector<16x64xf32>
    %53 = arith.mulf %52, %49 : vector<16x64xf32>
    %54 = arith.select %51, %49, %53 : vector<16x64xi1>, vector<16x64xf32>
    %55 = arith.maximumf %44, %54 : vector<16x64xf32>
    %c5 = arith.constant 5 : index
    %c0_28 = arith.constant 0 : index
    %c0_29 = arith.constant 0 : index
    %56 = vector.load %arg1[%c5, %c0_28, %c0_29] : memref<8x16x432xf32, #tpu.memory_space<vmem>>, vector<1x16x432xf32>
    %57 = vector.shape_cast %56 : vector<1x16x432xf32> to vector<16x432xf32>
    %cst_30 = arith.constant dense<0.000000e+00> : vector<16x64xf32>
    %58 = tpu.matmul %57, %0, %cst_30 {dimension_numbers = #tpu.dot_dimension_numbers<[1], [0], [0], [1], [0, 0, 1, 1], [], []>} : vector<16x432xf32>, vector<432x64xf32>, vector<16x64xf32> -> vector<16x64xf32>
    %59 = vector.broadcast %1 : vector<1x64xf32> to vector<16x64xf32>
    %60 = arith.addf %58, %59 : vector<16x64xf32>
    %cst_31 = arith.constant 0.000000e+00 : f32
    %61 = vector.broadcast %cst_31 : f32 to vector<16x64xf32>
    %62 = arith.cmpf oge, %60, %61 : vector<16x64xf32>
    %cst_32 = arith.constant 0.00999999977 : f32
    %63 = vector.broadcast %cst_32 : f32 to vector<16x64xf32>
    %64 = arith.mulf %63, %60 : vector<16x64xf32>
    %65 = arith.select %62, %60, %64 : vector<16x64xi1>, vector<16x64xf32>
    %66 = arith.maximumf %55, %65 : vector<16x64xf32>
    %c6 = arith.constant 6 : index
    %c0_33 = arith.constant 0 : index
    %c0_34 = arith.constant 0 : index
    %67 = vector.load %arg1[%c6, %c0_33, %c0_34] : memref<8x16x432xf32, #tpu.memory_space<vmem>>, vector<1x16x432xf32>
    %68 = vector.shape_cast %67 : vector<1x16x432xf32> to vector<16x432xf32>
    %cst_35 = arith.constant dense<0.000000e+00> : vector<16x64xf32>
    %69 = tpu.matmul %68, %0, %cst_35 {dimension_numbers = #tpu.dot_dimension_numbers<[1], [0], [0], [1], [0, 0, 1, 1], [], []>} : vector<16x432xf32>, vector<432x64xf32>, vector<16x64xf32> -> vector<16x64xf32>
    %70 = vector.broadcast %1 : vector<1x64xf32> to vector<16x64xf32>
    %71 = arith.addf %69, %70 : vector<16x64xf32>
    %cst_36 = arith.constant 0.000000e+00 : f32
    %72 = vector.broadcast %cst_36 : f32 to vector<16x64xf32>
    %73 = arith.cmpf oge, %71, %72 : vector<16x64xf32>
    %cst_37 = arith.constant 0.00999999977 : f32
    %74 = vector.broadcast %cst_37 : f32 to vector<16x64xf32>
    %75 = arith.mulf %74, %71 : vector<16x64xf32>
    %76 = arith.select %73, %71, %75 : vector<16x64xi1>, vector<16x64xf32>
    %77 = arith.maximumf %66, %76 : vector<16x64xf32>
    %c7 = arith.constant 7 : index
    %c0_38 = arith.constant 0 : index
    %c0_39 = arith.constant 0 : index
    %78 = vector.load %arg1[%c7, %c0_38, %c0_39] : memref<8x16x432xf32, #tpu.memory_space<vmem>>, vector<1x16x432xf32>
    %79 = vector.shape_cast %78 : vector<1x16x432xf32> to vector<16x432xf32>
    %cst_40 = arith.constant dense<0.000000e+00> : vector<16x64xf32>
    %80 = tpu.matmul %79, %0, %cst_40 {dimension_numbers = #tpu.dot_dimension_numbers<[1], [0], [0], [1], [0, 0, 1, 1], [], []>} : vector<16x432xf32>, vector<432x64xf32>, vector<16x64xf32> -> vector<16x64xf32>
    %81 = vector.broadcast %1 : vector<1x64xf32> to vector<16x64xf32>
    %82 = arith.addf %80, %81 : vector<16x64xf32>
    %cst_41 = arith.constant 0.000000e+00 : f32
    %83 = vector.broadcast %cst_41 : f32 to vector<16x64xf32>
    %84 = arith.cmpf oge, %82, %83 : vector<16x64xf32>
    %cst_42 = arith.constant 0.00999999977 : f32
    %85 = vector.broadcast %cst_42 : f32 to vector<16x64xf32>
    %86 = arith.mulf %85, %82 : vector<16x64xf32>
    %87 = arith.select %84, %82, %86 : vector<16x64xi1>, vector<16x64xf32>
    %88 = arith.maximumf %77, %87 : vector<16x64xf32>
    %c0_43 = arith.constant 0 : index
    %c0_44 = arith.constant 0 : index
    %89 = vector.load %arg4[%c0_43, %c0_44] : memref<16x64xf32, #tpu.memory_space<vmem>>, vector<16x64xf32>
    tpu.vector_store %arg4[%c0_43, %c0_44], %88 {strides = array<i32>} : memref<16x64xf32, #tpu.memory_space<vmem>>, vector<16x64xf32>,
    return
  }
  func.func @transform_0(%arg0: i32) -> (i32, i32, i32) {
    %c0_i32 = arith.constant 0 : i32
    %c0_i32_0 = arith.constant 0 : i32
    %c0_i32_1 = arith.constant 0 : i32
    return %c0_i32, %arg0, %c0_i32_0 : i32, i32, i32
  }
  func.func @transform_1(%arg0: i32) -> (i32, i32) {
    %c0_i32 = arith.constant 0 : i32
    %c0_i32_0 = arith.constant 0 : i32
    %c0_i32_1 = arith.constant 0 : i32
    return %c0_i32, %c0_i32_0 : i32, i32
  }
  func.func @transform_2(%arg0: i32) -> (i32, i32) {
    %c0_i32 = arith.constant 0 : i32
    %c0_i32_0 = arith.constant 0 : i32
    %c0_i32_1 = arith.constant 0 : i32
    return %c0_i32, %c0_i32_0 : i32, i32
  }
  func.func @transform_3(%arg0: i32) -> (i32, i32) {
    %c0_i32 = arith.constant 0 : i32
    %c0_i32_0 = arith.constant 0 : i32
    return %arg0, %c0_i32 : i32, i32
  }
}

module attributes {stable_mosaic.version = 11 : i64} {
  func.func @_head_kernel(%arg0: memref<2x512xf32, #tpu.memory_space<vmem>>, %arg1: memref<512x128xf32, #tpu.memory_space<vmem>>, %arg2: memref<1x128xf32, #tpu.memory_space<vmem>>, %arg3: memref<1x128xf32, #tpu.memory_space<vmem>>, %arg4: memref<1x128xf32, #tpu.memory_space<vmem>>, %arg5: memref<1x128xf32, #tpu.memory_space<vmem>>, %arg6: memref<1x128xf32, #tpu.memory_space<vmem>>, %arg7: memref<128x9xf32, #tpu.memory_space<vmem>>, %arg8: memref<1x9xf32, #tpu.memory_space<vmem>>, %arg9: memref<2x9xf32, #tpu.memory_space<vmem>>) attributes {dimension_semantics = [], scalar_prefetch = 0 : i64, scratch_operands = 0 : i64, tpu.core_type = #tpu.core_type<tc>} {
    %c0 = arith.constant 0 : index
    %c0_0 = arith.constant 0 : index
    %0 = vector.load %arg0[%c0, %c0_0] : memref<2x512xf32, #tpu.memory_space<vmem>>, vector<2x512xf32>
    %c0_1 = arith.constant 0 : index
    %c0_2 = arith.constant 0 : index
    %1 = vector.load %arg1[%c0_1, %c0_2] : memref<512x128xf32, #tpu.memory_space<vmem>>, vector<512x128xf32>
    %cst = arith.constant dense<0.000000e+00> : vector<2x128xf32>
    %2 = tpu.matmul %0, %1, %cst {dimension_numbers = #tpu.dot_dimension_numbers<[1], [0], [0], [1], [0, 0, 1, 1], [], []>} : vector<2x512xf32>, vector<512x128xf32>, vector<2x128xf32> -> vector<2x128xf32>
    %c0_3 = arith.constant 0 : index
    %c0_4 = arith.constant 0 : index
    %3 = vector.load %arg2[%c0_3, %c0_4] : memref<1x128xf32, #tpu.memory_space<vmem>>, vector<1x128xf32>
    %4 = vector.broadcast %3 : vector<1x128xf32> to vector<2x128xf32>
    %5 = arith.addf %2, %4 : vector<2x128xf32>
    %cst_5 = arith.constant 0.000000e+00 : f32
    %6 = vector.broadcast %cst_5 : f32 to vector<2x128xf32>
    %7 = arith.cmpf oge, %5, %6 : vector<2x128xf32>
    %cst_6 = arith.constant 0.00999999977 : f32
    %8 = vector.broadcast %cst_6 : f32 to vector<2x128xf32>
    %9 = arith.mulf %8, %5 : vector<2x128xf32>
    %10 = arith.select %7, %5, %9 : vector<2x128xi1>, vector<2x128xf32>
    %c0_7 = arith.constant 0 : index
    %c0_8 = arith.constant 0 : index
    %11 = vector.load %arg5[%c0_7, %c0_8] : memref<1x128xf32, #tpu.memory_space<vmem>>, vector<1x128xf32>
    %12 = vector.broadcast %11 : vector<1x128xf32> to vector<2x128xf32>
    %13 = arith.subf %10, %12 : vector<2x128xf32>
    %c0_9 = arith.constant 0 : index
    %c0_10 = arith.constant 0 : index
    %14 = vector.load %arg6[%c0_9, %c0_10] : memref<1x128xf32, #tpu.memory_space<vmem>>, vector<1x128xf32>
    %cst_11 = arith.constant 9.99999974E-6 : f32
    %15 = vector.broadcast %cst_11 : f32 to vector<1x128xf32>
    %16 = arith.addf %14, %15 : vector<1x128xf32>
    %17 = math.rsqrt %16 : vector<1x128xf32>
    %18 = vector.broadcast %17 : vector<1x128xf32> to vector<2x128xf32>
    %19 = arith.mulf %13, %18 : vector<2x128xf32>
    %c0_12 = arith.constant 0 : index
    %c0_13 = arith.constant 0 : index
    %20 = vector.load %arg3[%c0_12, %c0_13] : memref<1x128xf32, #tpu.memory_space<vmem>>, vector<1x128xf32>
    %21 = vector.broadcast %20 : vector<1x128xf32> to vector<2x128xf32>
    %22 = arith.mulf %19, %21 : vector<2x128xf32>
    %c0_14 = arith.constant 0 : index
    %c0_15 = arith.constant 0 : index
    %23 = vector.load %arg4[%c0_14, %c0_15] : memref<1x128xf32, #tpu.memory_space<vmem>>, vector<1x128xf32>
    %24 = vector.broadcast %23 : vector<1x128xf32> to vector<2x128xf32>
    %25 = arith.addf %22, %24 : vector<2x128xf32>
    %c0_16 = arith.constant 0 : index
    %c0_17 = arith.constant 0 : index
    %26 = vector.load %arg7[%c0_16, %c0_17] : memref<128x9xf32, #tpu.memory_space<vmem>>, vector<128x9xf32>
    %cst_18 = arith.constant dense<0.000000e+00> : vector<2x9xf32>
    %27 = tpu.matmul %25, %26, %cst_18 {dimension_numbers = #tpu.dot_dimension_numbers<[1], [0], [0], [1], [0, 0, 1, 1], [], []>} : vector<2x128xf32>, vector<128x9xf32>, vector<2x9xf32> -> vector<2x9xf32>
    %c0_19 = arith.constant 0 : index
    %c0_20 = arith.constant 0 : index
    %28 = vector.load %arg8[%c0_19, %c0_20] : memref<1x9xf32, #tpu.memory_space<vmem>>, vector<1x9xf32>
    %29 = vector.broadcast %28 : vector<1x9xf32> to vector<2x9xf32>
    %30 = arith.addf %27, %29 : vector<2x9xf32>
    %c0_21 = arith.constant 0 : index
    %c0_22 = arith.constant 0 : index
    %31 = vector.load %arg9[%c0_21, %c0_22] : memref<2x9xf32, #tpu.memory_space<vmem>>, vector<2x9xf32>
    tpu.vector_store %arg9[%c0_21, %c0_22], %30 {strides = array<i32>} : memref<2x9xf32, #tpu.memory_space<vmem>>, vector<2x9xf32>,
    return
  }
}

</mosaic_0001>

<llo_original>
// kernel: cnn_forward.3
$region0: #{cnn_forward.3}
  #allocation0 [shape = 'u32[]', space=smem, size = 0x4, offset = 0x4, fixed_abs, tag = 'smem constant byte address 0x4 - core index']
  #allocation1 [shape = 'u32[144,128]{1,0:T(1,128)}', space=vmem, size = 0x12000, scoped, tag = 'internal scratch']
  %s0 = inlined_call_operand.vmem [shape: f32[8,768,27], index: 0, kind: input, shape index: {}]
  %s1 = inlined_call_operand.vmem [shape: f32[27,16], index: 1, kind: input, shape index: {}]
  %s2 = inlined_call_operand.vmem [shape: f32[1,16], index: 2, kind: input, shape index: {}]
  %s3 = inlined_call_operand.vmem [shape: f32[768,16], index: 3, kind: output, shape index: {}]
  %s4 = sld [smem:[#allocation0]]
  $region83: #{cnn_forward.3} parent=0
    _
  %s6 = ssub.s32 1, %s4
  %s7 = scalar_select 0, %s6, %s4
  $region1: #{cnn_forward.3} parent=0
    #allocation2 [shape = 'u8[2097152]{0}', space=vmem, size = 0x200000, scoped, tag = 'input window, operand 0']
    loop: start=0, step=1, limit=5
    $region2: #{cnn_forward.3} parent=1 // loop_pre_header
      _
    $region3: #{cnn_forward.3} parent=1 // loop_header
      %s9 = sphi 0, %s13
      %p10 = scmp.ge.s32.totalorder %s9, 5
      %s19 = sphi 0, %s21
      %s22 = sphi 0, %s19
      %s23 = sphi 0, %s22
      %s39 = sphi 0, %s23
      %s43 = sphi 0, %s43
      %s45 = sphi 0, %s43
      %s46 = sphi 0, %s45
      %s60 = sphi 0, %s46
      %s64 = sphi 0, %s64
      %s66 = sphi 0, %s64
      %s67 = sphi 0, %s66
      %s81 = sphi 0, %s67
      %s87 = sphi 0, %s89
      %s90 = sphi 0, %s87
      %s91 = sphi 0, %s90
      %s107 = sphi 0, %s91
    $region4: #{cnn_forward.3} parent=1 // loop_header_branch
      %12 = sbr.rel (%p10) target = $region8
    $region5: #{cnn_forward.3} parent=1 // loop_body
      %s14 = ssub.s32 %s9, 1
      %s15 = ssub.s32 %s9, 2
      %s16 = sadd.s32 %s9, 1
      %s17 = ssub.s32 %s9, %s16
      %p18 = scmp.eq.s32.totalorder %s17, 0
      %s20 = sadd.s32 %s19, 1
      %s21 = scalar_select %p18, %s19, %s20
      %p24 = pneg %p18
      %p25 = scmp.eq.s32.totalorder %s9, 2
      %p26 = por %p24, %p25
      %p27 = scmp.ne.s32.totalorder %s19, %s22
      %p28 = scmp.eq.s32.totalorder %s9, 0
      %p29 = por %p27, %p28
      %p30 = scmp.ne.s32.totalorder %s19, %s22
      %p31 = scmp.eq.s32.totalorder %s14, 2
      %p32 = por %p30, %p31
      %p33 = scmp.ne.s32.totalorder %s22, %s23
      %p34 = scmp.eq.s32.totalorder %s14, 0
      %p35 = por %p33, %p34
      %p36 = scmp.ne.s32.totalorder %s22, %s23
      %p37 = scmp.eq.s32.totalorder %s15, 2
      %p38 = por %p36, %p37
      %p40 = scmp.ne.s32.totalorder %s23, %s39
      %p41 = scmp.eq.s32.totalorder %s15, 0
      %p42 = por %p40, %p41
      %s44 = sadd.s32 %s43, 1
      %p47 = scmp.eq.s32.totalorder %s9, 2
      %p48 = scmp.ne.s32.totalorder %s43, %s45
      %p49 = scmp.eq.s32.totalorder %s9, 0
      %p50 = por %p48, %p49
      %p51 = scmp.ne.s32.totalorder %s43, %s45
      %p52 = scmp.eq.s32.totalorder %s14, 2
      %p53 = por %p51, %p52
      %p54 = scmp.ne.s32.totalorder %s45, %s46
      %p55 = scmp.eq.s32.totalorder %s14, 0
      %p56 = por %p54, %p55
      %p57 = scmp.ne.s32.totalorder %s45, %s46
      %p58 = scmp.eq.s32.totalorder %s15, 2
      %p59 = por %p57, %p58
      %p61 = scmp.ne.s32.totalorder %s46, %s60
      %p62 = scmp.eq.s32.totalorder %s15, 0
      %p63 = por %p61, %p62
      %s65 = sadd.s32 %s64, 1
      %p68 = scmp.eq.s32.totalorder %s9, 2
      %p69 = scmp.ne.s32.totalorder %s64, %s66
      %p70 = scmp.eq.s32.totalorder %s9, 0
      %p71 = por %p69, %p70
      %p72 = scmp.ne.s32.totalorder %s64, %s66
      %p73 = scmp.eq.s32.totalorder %s14, 2
      %p74 = por %p72, %p73
      %p75 = scmp.ne.s32.totalorder %s66, %s67
      %p76 = scmp.eq.s32.totalorder %s14, 0
      %p77 = por %p75, %p76
      %p78 = scmp.ne.s32.totalorder %s66, %s67
      %p79 = scmp.eq.s32.totalorder %s15, 2
      %p80 = por %p78, %p79
      %p82 = scmp.ne.s32.totalorder %s67, %s81
      %p83 = scmp.eq.s32.totalorder %s15, 0
      %p84 = por %p82, %p83
      %s85 = ssub.s32 %s9, %s16
      %p86 = scmp.eq.s32.totalorder %s85, 0
      %s88 = sadd.s32 %s87, 1
      %s89 = scalar_select %p86, %s87, %s88
      %p92 = pneg %p86
      %p93 = scmp.eq.s32.totalorder %s9, 2
      %p94 = por %p92, %p93
      %p95 = scmp.ne.s32.totalorder %s87, %s90
      %p96 = scmp.eq.s32.totalorder %s9, 0
      %p97 = por %p95, %p96
      %p98 = scmp.ne.s32.totalorder %s87, %s90
      %p99 = scmp.eq.s32.totalorder %s14, 2
      %p100 = por %p98, %p99
      %p101 = scmp.ne.s32.totalorder %s90, %s91
      %p102 = scmp.eq.s32.totalorder %s14, 0
      %p103 = por %p101, %p102
      %p104 = scmp.ne.s32.totalorder %s90, %s91
      %p105 = scmp.eq.s32.totalorder %s15, 2
      %p106 = por %p104, %p105
      %p108 = scmp.ne.s32.totalorder %s91, %s107
      %p109 = scmp.eq.s32.totalorder %s15, 0
      %p110 = por %p108, %p109
      %p111 = scmp.le.s32.totalorder 1, %s9
      %p112 = scmp.lt.s32.totalorder %s9, 4
      %p113 = pnand %p111, %p112
      %p114 = pneg %p113
      // Predicated region
      $region9: #{cnn_forward.3} parent=5 // pred_check
        _
      $region10: #{cnn_forward.3} parent=5 // pred_check_branch
        %116 = sbr.rel (%p113) target = $region12
      $region11: #{cnn_forward.3} parent=5 // pred_region
        %s117 = ssub.s32 %s9, 1
        // Predicated region
        $region13: #{cnn_forward.3} parent=11 // pred_check
          %p118 = pneg %p56
        $region14: #{cnn_forward.3} parent=11 // pred_check_branch
          %120 = sbr.rel (%p118) target = $region16
        $region15: #{cnn_forward.3} parent=11 // pred_region
          _
        $region16: #{cnn_forward.3} parent=11 // pred_fallthru
          _
        // Predicated region
        $region17: #{cnn_forward.3} parent=11 // pred_check
          %p121 = pneg %p77
        $region18: #{cnn_forward.3} parent=11 // pred_check_branch
          %123 = sbr.rel (%p121) target = $region20
        $region19: #{cnn_forward.3} parent=11 // pred_region
          _
        $region20: #{cnn_forward.3} parent=11 // pred_fallthru
          _
      $region12: #{cnn_forward.3} parent=5 // pred_fallthru
        _
      %p124 = scmp.lt.s32.totalorder %s9, 3
      // Predicated region
      $region21: #{cnn_forward.3} parent=5 // pred_check
        %p125 = pneg %p124
      $region22: #{cnn_forward.3} parent=5 // pred_check_branch
        %127 = sbr.rel (%p125) target = $region24
      $region23: #{cnn_forward.3} parent=5 // pred_region
        // Predicated region
        $region25: #{cnn_forward.3} parent=23 // pred_check
          %p128 = pneg %p29
        $region26: #{cnn_forward.3} parent=23 // pred_check_branch
          %130 = sbr.rel (%p128) target = $region28
        $region27: #{cnn_forward.3} parent=23 // pred_region
          %s131 = sand.u32 %s19, 1
          %s132 = sand.u32 %s19, 1
          %s133 = smul.addr %s132, 2048
          %s134 = scalar_lea.vmem [#allocation2], %s133
          %s135 = smul.u32 32, %s9
          %s136 = smul.addr %s135, 8
          %s137 = scalar_lea.vmem %s0, %s136
          // Predicated region
          $region29: #{cnn_forward.3} parent=27 // pred_check
            _
          $region30: #{cnn_forward.3} parent=27 // pred_check_branch
            %139 = sbr.rel (0) target = $region32
          $region31: #{cnn_forward.3} parent=27 // pred_region
            // Predicated region
            $region33: #{cnn_forward.3} parent=31 // pred_check
              _
            $region34: #{cnn_forward.3} parent=31 // pred_check_branch
              %141 = sbr.rel (0) target = $region36
            $region35: #{cnn_forward.3} parent=31 // pred_region
              // Predicated region
              $region48: #{cnn_forward.3} parent=35 // pred_check
                _
              $region49: #{cnn_forward.3} parent=35 // pred_check_branch
                %666 = sbr.rel (0) target = $region51
              $region50: #{cnn_forward.3} parent=35 // pred_region
                loop: start=0, step=1, limit=1
                $region52: #{cnn_forward.3} parent=50 // loop_pre_header
                  _
                $region53: #{cnn_forward.3} parent=50 // loop_header
                  %s668 = sphi 0, %s672
                  %p669 = scmp.ge.s32.totalorder %s668, 1
                  %s673 = sphi %s137, %s137
                  %s674 = sphi %s134, %s134
                $region54: #{cnn_forward.3} parent=50 // loop_header_branch
                  %671 = sbr.rel (%p669) target = $region58
                $region55: #{cnn_forward.3} parent=50 // loop_body
                  %v675 = vld [vmem:[%s673] sm:$0xff]
                  %676 = vst [vmem:[%s674] sm:$0xff] %v675
                  %v677 = vld [vmem:[%s673 + $0x8] sm:$0xff]
                  %678 = vst [vmem:[%s674 + $0x8] sm:$0xff] %v677
                  %v679 = vld [vmem:[%s673 + $0x10] sm:$0xff]
                  %680 = vst [vmem:[%s674 + $0x10] sm:$0xff] %v679
                  %v681 = vld [vmem:[%s673 + $0x18] sm:$0xff]
                  %682 = vst [vmem:[%s674 + $0x18] sm:$0xff] %v681
                  %v683 = vld [vmem:[%s673 + $0x20] sm:$0xff]
                  %684 = vst [vmem:[%s674 + $0x20] sm:$0xff] %v683
                  %v685 = vld [vmem:[%s673 + $0x28] sm:$0xff]
                  %686 = vst [vmem:[%s674 + $0x28] sm:$0xff] %v685
                  %v687 = vld [vmem:[%s673 + $0x30] sm:$0xff]
                  %688 = vst [vmem:[%s674 + $0x30] sm:$0xff] %v687
                  %v689 = vld [vmem:[%s673 + $0x38] sm:$0xff]
                  %690 = vst [vmem:[%s674 + $0x38] sm:$0xff] %v689
                  %v691 = vld [vmem:[%s673 + $0x40] sm:$0xff]
                  %692 = vst [vmem:[%s674 + $0x40] sm:$0xff] %v691
                  %v693 = vld [vmem:[%s673 + $0x48] sm:$0xff]
                  %694 = vst [vmem:[%s674 + $0x48] sm:$0xff] %v693
                  %v695 = vld [vmem:[%s673 + $0x50] sm:$0xff]
                  %696 = vst [vmem:[%s674 + $0x50] sm:$0xff] %v695
                  %v697 = vld [vmem:[%s673 + $0x58] sm:$0xff]
                  %698 = vst [vmem:[%s674 + $0x58] sm:$0xff] %v697
                  %v699 = vld [vmem:[%s673 + $0x60] sm:$0xff]
                  %700 = vst [vmem:[%s674 + $0x60] sm:$0xff] %v699
                  %v701 = vld [vmem:[%s673 + $0x68] sm:$0xff]
                  %702 = vst [vmem:[%s674 + $0x68] sm:$0xff] %v701
                  %v703 = vld [vmem:[%s673 + $0x70] sm:$0xff]
                  %704 = vst [vmem:[%s674 + $0x70] sm:$0xff] %v703
                  %v705 = vld [vmem:[%s673 + $0x78] sm:$0xff]
                  %706 = vst [vmem:[%s674 + $0x78] sm:$0xff] %v705
                  %v707 = vld [vmem:[%s673 + $0x80] sm:$0xff]
                  %708 = vst [vmem:[%s674 + $0x80] sm:$0xff] %v707
                  %v709 = vld [vmem:[%s673 + $0x88] sm:$0xff]
                  %710 = vst [vmem:[%s674 + $0x88] sm:$0xff] %v709
                  %v711 = vld [vmem:[%s673 + $0x90] sm:$0xff]
                  %712 = vst [vmem:[%s674 + $0x90] sm:$0xff] %v711
                  %v713 = vld [vmem:[%s673 + $0x98] sm:$0xff]
                  %714 = vst [vmem:[%s674 + $0x98] sm:$0xff] %v713
                  %v715 = vld [vmem:[%s673 + $0xa0] sm:$0xff]
                  %716 = vst [vmem:[%s674 + $0xa0] sm:$0xff] %v715
                  %v717 = vld [vmem:[%s673 + $0xa8] sm:$0xff]
                  %718 = vst [vmem:[%s674 + $0xa8] sm:$0xff] %v717
                  %v719 = vld [vmem:[%s673 + $0xb0] sm:$0xff]
                  %720 = vst [vmem:[%s674 + $0xb0] sm:$0xff] %v719
                  %v721 = vld [vmem:[%s673 + $0xb8] sm:$0xff]
                  %722 = vst [vmem:[%s674 + $0xb8] sm:$0xff] %v721
                  %v723 = vld [vmem:[%s673 + $0xc0] sm:$0xff]
                  %724 = vst [vmem:[%s674 + $0xc0] sm:$0xff] %v723
                  %v725 = vld [vmem:[%s673 + $0xc8] sm:$0xff]
                  %726 = vst [vmem:[%s674 + $0xc8] sm:$0xff] %v725
                  %v727 = vld [vmem:[%s673 + $0xd0] sm:$0xff]
                  %728 = vst [vmem:[%s674 + $0xd0] sm:$0xff] %v727
                  %v729 = vld [vmem:[%s673 + $0xd8] sm:$0xff]
                  %730 = vst [vmem:[%s674 + $0xd8] sm:$0xff] %v729
                  %v731 = vld [vmem:[%s673 + $0xe0] sm:$0xff]
                  %732 = vst [vmem:[%s674 + $0xe0] sm:$0xff] %v731
                  %v733 = vld [vmem:[%s673 + $0xe8] sm:$0xff]
                  %734 = vst [vmem:[%s674 + $0xe8] sm:$0xff] %v733
                  %v735 = vld [vmem:[%s673 + $0xf0] sm:$0xff]
                  %736 = vst [vmem:[%s674 + $0xf0] sm:$0xff] %v735
                  %v737 = vld [vmem:[%s673 + $0xf8] sm:$0xff]
                  %738 = vst [vmem:[%s674 + $0xf8] sm:$0xff] %v737
                  %v739 = vld [vmem:[%s673 + $0x300] sm:$0xff]
                  %740 = vst [vmem:[%s674 + $0x100] sm:$0xff] %v739
                  %v741 = vld [vmem:[%s673 + $0x308] sm:$0xff]
                  %742 = vst [vmem:[%s674 + $0x108] sm:$0xff] %v741
                  %v743 = vld [vmem:[%s673 + $0x310] sm:$0xff]
                  %744 = vst [vmem:[%s674 + $0x110] sm:$0xff] %v743
                  %v745 = vld [vmem:[%s673 + $0x318] sm:$0xff]
                  %746 = vst [vmem:[%s674 + $0x118] sm:$0xff] %v745
                  %v747 = vld [vmem:[%s673 + $0x320] sm:$0xff]
                  %748 = vst [vmem:[%s674 + $0x120] sm:$0xff] %v747
                  %v749 = vld [vmem:[%s673 + $0x328] sm:$0xff]
                  %750 = vst [vmem:[%s674 + $0x128] sm:$0xff] %v749
                  %v751 = vld [vmem:[%s673 + $0x330] sm:$0xff]
                  %752 = vst [vmem:[%s674 + $0x130] sm:$0xff] %v751
                  %v753 = vld [vmem:[%s673 + $0x338] sm:$0xff]
                  %754 = vst [vmem:[%s674 + $0x138] sm:$0xff] %v753
                  %v755 = vld [vmem:[%s673 + $0x340] sm:$0xff]
                  %756 = vst [vmem:[%s674 + $0x140] sm:$0xff] %v755
                  %v757 = vld [vmem:[%s673 + $0x348] sm:$0xff]
                  %758 = vst [vmem:[%s674 + $0x148] sm:$0xff] %v757
                  %v759 = vld [vmem:[%s673 + $0x350] sm:$0xff]
                  %760 = vst [vmem:[%s674 + $0x150] sm:$0xff] %v759
                  %v761 = vld [vmem:[%s673 + $0x358] sm:$0xff]
                  %762 = vst [vmem:[%s674 + $0x158] sm:$0xff] %v761
                  %v763 = vld [vmem:[%s673 + $0x360] sm:$0xff]
                  %764 = vst [vmem:[%s674 + $0x160] sm:$0xff] %v763
                  %v765 = vld [vmem:[%s673 + $0x368] sm:$0xff]
                  %766 = vst [vmem:[%s674 + $0x168] sm:$0xff] %v765
                  %v767 = vld [vmem:[%s673 + $0x370] sm:$0xff]
                  %768 = vst [vmem:[%s674 + $0x170] sm:$0xff] %v767
                  %v769 = vld [vmem:[%s673 + $0x378] sm:$0xff]
                  %770 = vst [vmem:[%s674 + $0x178] sm:$0xff] %v769
                  %v771 = vld [vmem:[%s673 + $0x380] sm:$0xff]
                  %772 = vst [vmem:[%s674 + $0x180] sm:$0xff] %v771
                  %v773 = vld [vmem:[%s673 + $0x388] sm:$0xff]
                  %774 = vst [vmem:[%s674 + $0x188] sm:$0xff] %v773
                  %v775 = vld [vmem:[%s673 + $0x390] sm:$0xff]
                  %776 = vst [vmem:[%s674 + $0x190] sm:$0xff] %v775
                  %v777 = vld [vmem:[%s673 + $0x398] sm:$0xff]
                  %778 = vst [vmem:[%s674 + $0x198] sm:$0xff] %v777
                  %v779 = vld [vmem:[%s673 + $0x3a0] sm:$0xff]
                  %780 = vst [vmem:[%s674 + $0x1a0] sm:$0xff] %v779
                  %v781 = vld [vmem:[%s673 + $0x3a8] sm:$0xff]
                  %782 = vst [vmem:[%s674 + $0x1a8] sm:$0xff] %v781
                  %v783 = vld [vmem:[%s673 + $0x3b0] sm:$0xff]
                  %784 = vst [vmem:[%s674 + $0x1b0] sm:$0xff] %v783
                  %v785 = vld [vmem:[%s673 + $0x3b8] sm:$0xff]
                  %786 = vst [vmem:[%s674 + $0x1b8] sm:$0xff] %v785
                  %v787 = vld [vmem:[%s673 + $0x3c0] sm:$0xff]
                  %788 = vst [vmem:[%s674 + $0x1c0] sm:$0xff] %v787
                  %v789 = vld [vmem:[%s673 + $0x3c8] sm:$0xff]
                  %790 = vst [vmem:[%s674 + $0x1c8] sm:$0xff] %v789
                  %v791 = vld [vmem:[%s673 + $0x3d0] sm:$0xff]
                  %792 = vst [vmem:[%s674 + $0x1d0] sm:$0xff] %v791
                  %v793 = vld [vmem:[%s673 + $0x3d8] sm:$0xff]
                  %794 = vst [vmem:[%s674 + $0x1d8] sm:$0xff] %v793
                  %v795 = vld [vmem:[%s673 + $0x3e0] sm:$0xff]
                  %796 = vst [vmem:[%s674 + $0x1e0] sm:$0xff] %v795
                  %v797 = vld [vmem:[%s673 + $0x3e8] sm:$0xff]
                  %798 = vst [vmem:[%s674 + $0x1e8] sm:$0xff] %v797
                  %v799 = vld [vmem:[%s673 + $0x3f0] sm:$0xff]
                  %800 = vst [vmem:[%s674 + $0x1f0] sm:$0xff] %v799
                  %v801 = vld [vmem:[%s673 + $0x3f8] sm:$0xff]
                  %802 = vst [vmem:[%s674 + $0x1f8] sm:$0xff] %v801
                  %v803 = vld [vmem:[%s673 + $0x600] sm:$0xff]
                  %804 = vst [vmem:[%s674 + $0x200] sm:$0xff] %v803
                  %v805 = vld [vmem:[%s673 + $0x608] sm:$0xff]
                  %806 = vst [vmem:[%s674 + $0x208] sm:$0xff] %v805
                  %v807 = vld [vmem:[%s673 + $0x610] sm:$0xff]
                  %808 = vst [vmem:[%s674 + $0x210] sm:$0xff] %v807
                  %v809 = vld [vmem:[%s673 + $0x618] sm:$0xff]
                  %810 = vst [vmem:[%s674 + $0x218] sm:$0xff] %v809
                  %v811 = vld [vmem:[%s673 + $0x620] sm:$0xff]
                  %812 = vst [vmem:[%s674 + $0x220] sm:$0xff] %v811
                  %v813 = vld [vmem:[%s673 + $0x628] sm:$0xff]
                  %814 = vst [vmem:[%s674 + $0x228] sm:$0xff] %v813
                  %v815 = vld [vmem:[%s673 + $0x630] sm:$0xff]
                  %816 = vst [vmem:[%s674 + $0x230] sm:$0xff] %v815
                  %v817 = vld [vmem:[%s673 + $0x638] sm:$0xff]
                  %818 = vst [vmem:[%s674 + $0x238] sm:$0xff] %v817
                  %v819 = vld [vmem:[%s673 + $0x640] sm:$0xff]
                  %820 = vst [vmem:[%s674 + $0x240] sm:$0xff] %v819
                  %v821 = vld [vmem:[%s673 + $0x648] sm:$0xff]
                  %822 = vst [vmem:[%s674 + $0x248] sm:$0xff] %v821
                  %v823 = vld [vmem:[%s673 + $0x650] sm:$0xff]
                  %824 = vst [vmem:[%s674 + $0x250] sm:$0xff] %v823
                  %v825 = vld [vmem:[%s673 + $0x658] sm:$0xff]
                  %826 = vst [vmem:[%s674 + $0x258] sm:$0xff] %v825
                  %v827 = vld [vmem:[%s673 + $0x660] sm:$0xff]
                  %828 = vst [vmem:[%s674 + $0x260] sm:$0xff] %v827
                  %v829 = vld [vmem:[%s673 + $0x668] sm:$0xff]
                  %830 = vst [vmem:[%s674 + $0x268] sm:$0xff] %v829
                  %v831 = vld [vmem:[%s673 + $0x670] sm:$0xff]
                  %832 = vst [vmem:[%s674 + $0x270] sm:$0xff] %v831
                  %v833 = vld [vmem:[%s673 + $0x678] sm:$0xff]
                  %834 = vst [vmem:[%s674 + $0x278] sm:$0xff] %v833
                  %v835 = vld [vmem:[%s673 + $0x680] sm:$0xff]
                  %836 = vst [vmem:[%s674 + $0x280] sm:$0xff] %v835
                  %v837 = vld [vmem:[%s673 + $0x688] sm:$0xff]
                  %838 = vst [vmem:[%s674 + $0x288] sm:$0xff] %v837
                  %v839 = vld [vmem:[%s673 + $0x690] sm:$0xff]
                  %840 = vst [vmem:[%s674 + $0x290] sm:$0xff] %v839
                  %v841 = vld [vmem:[%s673 + $0x698] sm:$0xff]
                  %842 = vst [vmem:[%s674 + $0x298] sm:$0xff] %v841
                  %v843 = vld [vmem:[%s673 + $0x6a0] sm:$0xff]
                  %844 = vst [vmem:[%s674 + $0x2a0] sm:$0xff] %v843
                  %v845 = vld [vmem:[%s673 + $0x6a8] sm:$0xff]
                  %846 = vst [vmem:[%s674 + $0x2a8] sm:$0xff] %v845
                  %v847 = vld [vmem:[%s673 + $0x6b0] sm:$0xff]
                  %848 = vst [vmem:[%s674 + $0x2b0] sm:$0xff] %v847
                  %v849 = vld [vmem:[%s673 + $0x6b8] sm:$0xff]
                  %850 = vst [vmem:[%s674 + $0x2b8] sm:$0xff] %v849
                  %v851 = vld [vmem:[%s673 + $0x6c0] sm:$0xff]
                  %852 = vst [vmem:[%s674 + $0x2c0] sm:$0xff] %v851
                  %v853 = vld [vmem:[%s673 + $0x6c8] sm:$0xff]
                  %854 = vst [vmem:[%s674 + $0x2c8] sm:$0xff] %v853
                  %v855 = vld [vmem:[%s673 + $0x6d0] sm:$0xff]
                  %856 = vst [vmem:[%s674 + $0x2d0] sm:$0xff] %v855
                  %v857 = vld [vmem:[%s673 + $0x6d8] sm:$0xff]
                  %858 = vst [vmem:[%s674 + $0x2d8] sm:$0xff] %v857
                  %v859 = vld [vmem:[%s673 + $0x6e0] sm:$0xff]
                  %860 = vst [vmem:[%s674 + $0x2e0] sm:$0xff] %v859
                  %v861 = vld [vmem:[%s673 + $0x6e8] sm:$0xff]
                  %862 = vst [vmem:[%s674 + $0x2e8] sm:$0xff] %v861
                  %v863 = vld [vmem:[%s673 + $0x6f0] sm:$0xff]
                  %864 = vst [vmem:[%s674 + $0x2f0] sm:$0xff] %v863
                  %v865 = vld [vmem:[%s673 + $0x6f8] sm:$0xff]
                  %866 = vst [vmem:[%s674 + $0x2f8] sm:$0xff] %v865
                  %v867 = vld [vmem:[%s673 + $0x900] sm:$0xff]
                  %868 = vst [vmem:[%s674 + $0x300] sm:$0xff] %v867
                  %v869 = vld [vmem:[%s673 + $0x908] sm:$0xff]
                  %870 = vst [vmem:[%s674 + $0x308] sm:$0xff] %v869
                  %v871 = vld [vmem:[%s673 + $0x910] sm:$0xff]
                  %872 = vst [vmem:[%s674 + $0x310] sm:$0xff] %v871
                  %v873 = vld [vmem:[%s673 + $0x918] sm:$0xff]
                  %874 = vst [vmem:[%s674 + $0x318] sm:$0xff] %v873
                  %v875 = vld [vmem:[%s673 + $0x920] sm:$0xff]
                  %876 = vst [vmem:[%s674 + $0x320] sm:$0xff] %v875
                  %v877 = vld [vmem:[%s673 + $0x928] sm:$0xff]
                  %878 = vst [vmem:[%s674 + $0x328] sm:$0xff] %v877
                  %v879 = vld [vmem:[%s673 + $0x930] sm:$0xff]
                  %880 = vst [vmem:[%s674 + $0x330] sm:$0xff] %v879
                  %v881 = vld [vmem:[%s673 + $0x938] sm:$0xff]
                  %882 = vst [vmem:[%s674 + $0x338] sm:$0xff] %v881
                  %v883 = vld [vmem:[%s673 + $0x940] sm:$0xff]
                  %884 = vst [vmem:[%s674 + $0x340] sm:$0xff] %v883
                  %v885 = vld [vmem:[%s673 + $0x948] sm:$0xff]
                  %886 = vst [vmem:[%s674 + $0x348] sm:$0xff] %v885
                  %v887 = vld [vmem:[%s673 + $0x950] sm:$0xff]
                  %888 = vst [vmem:[%s674 + $0x350] sm:$0xff] %v887
                  %v889 = vld [vmem:[%s673 + $0x958] sm:$0xff]
                  %890 = vst [vmem:[%s674 + $0x358] sm:$0xff] %v889
                  %v891 = vld [vmem:[%s673 + $0x960] sm:$0xff]
                  %892 = vst [vmem:[%s674 + $0x360] sm:$0xff] %v891
                  %v893 = vld [vmem:[%s673 + $0x968] sm:$0xff]
                  %894 = vst [vmem:[%s674 + $0x368] sm:$0xff] %v893
                  %v895 = vld [vmem:[%s673 + $0x970] sm:$0xff]
                  %896 = vst [vmem:[%s674 + $0x370] sm:$0xff] %v895
                  %v897 = vld [vmem:[%s673 + $0x978] sm:$0xff]
                  %898 = vst [vmem:[%s674 + $0x378] sm:$0xff] %v897
                  %v899 = vld [vmem:[%s673 + $0x980] sm:$0xff]
                  %900 = vst [vmem:[%s674 + $0x380] sm:$0xff] %v899
                  %v901 = vld [vmem:[%s673 + $0x988] sm:$0xff]
                  %902 = vst [vmem:[%s674 + $0x388] sm:$0xff] %v901
                  %v903 = vld [vmem:[%s673 + $0x990] sm:$0xff]
                  %904 = vst [vmem:[%s674 + $0x390] sm:$0xff] %v903
                  %v905 = vld [vmem:[%s673 + $0x998] sm:$0xff]
                  %906 = vst [vmem:[%s674 + $0x398] sm:$0xff] %v905
                  %v907 = vld [vmem:[%s673 + $0x9a0] sm:$0xff]
                  %908 = vst [vmem:[%s674 + $0x3a0] sm:$0xff] %v907
                  %v909 = vld [vmem:[%s673 + $0x9a8] sm:$0xff]
                  %910 = vst [vmem:[%s674 + $0x3a8] sm:$0xff] %v909
                  %v911 = vld [vmem:[%s673 + $0x9b0] sm:$0xff]
                  %912 = vst [vmem:[%s674 + $0x3b0] sm:$0xff] %v911
                  %v913 = vld [vmem:[%s673 + $0x9b8] sm:$0xff]
                  %914 = vst [vmem:[%s674 + $0x3b8] sm:$0xff] %v913
                  %v915 = vld [vmem:[%s673 + $0x9c0] sm:$0xff]
                  %916 = vst [vmem:[%s674 + $0x3c0] sm:$0xff] %v915
                  %v917 = vld [vmem:[%s673 + $0x9c8] sm:$0xff]
                  %918 = vst [vmem:[%s674 + $0x3c8] sm:$0xff] %v917
                  %v919 = vld [vmem:[%s673 + $0x9d0] sm:$0xff]
                  %920 = vst [vmem:[%s674 + $0x3d0] sm:$0xff] %v919
                  %v921 = vld [vmem:[%s673 + $0x9d8] sm:$0xff]
                  %922 = vst [vmem:[%s674 + $0x3d8] sm:$0xff] %v921
                  %v923 = vld [vmem:[%s673 + $0x9e0] sm:$0xff]
                  %924 = vst [vmem:[%s674 + $0x3e0] sm:$0xff] %v923
                  %v925 = vld [vmem:[%s673 + $0x9e8] sm:$0xff]
                  %926 = vst [vmem:[%s674 + $0x3e8] sm:$0xff] %v925
                  %v927 = vld [vmem:[%s673 + $0x9f0] sm:$0xff]
                  %928 = vst [vmem:[%s674 + $0x3f0] sm:$0xff] %v927
                  %v929 = vld [vmem:[%s673 + $0x9f8] sm:$0xff]
                  %930 = vst [vmem:[%s674 + $0x3f8] sm:$0xff] %v929
                  %v931 = vld [vmem:[%s673 + $0xc00] sm:$0xff]
                  %932 = vst [vmem:[%s674 + $0x400] sm:$0xff] %v931
                  %v933 = vld [vmem:[%s673 + $0xc08] sm:$0xff]
                  %934 = vst [vmem:[%s674 + $0x408] sm:$0xff] %v933
                  %v935 = vld [vmem:[%s673 + $0xc10] sm:$0xff]
                  %936 = vst [vmem:[%s674 + $0x410] sm:$0xff] %v935
                  %v937 = vld [vmem:[%s673 + $0xc18] sm:$0xff]
                  %938 = vst [vmem:[%s674 + $0x418] sm:$0xff] %v937
                  %v939 = vld [vmem:[%s673 + $0xc20] sm:$0xff]
                  %940 = vst [vmem:[%s674 + $0x420] sm:$0xff] %v939
                  %v941 = vld [vmem:[%s673 + $0xc28] sm:$0xff]
                  %942 = vst [vmem:[%s674 + $0x428] sm:$0xff] %v941
                  %v943 = vld [vmem:[%s673 + $0xc30] sm:$0xff]
                  %944 = vst [vmem:[%s674 + $0x430] sm:$0xff] %v943
                  %v945 = vld [vmem:[%s673 + $0xc38] sm:$0xff]
                  %946 = vst [vmem:[%s674 + $0x438] sm:$0xff] %v945
                  %v947 = vld [vmem:[%s673 + $0xc40] sm:$0xff]
                  %948 = vst [vmem:[%s674 + $0x440] sm:$0xff] %v947
                  %v949 = vld [vmem:[%s673 + $0xc48] sm:$0xff]
                  %950 = vst [vmem:[%s674 + $0x448] sm:$0xff] %v949
                  %v951 = vld [vmem:[%s673 + $0xc50] sm:$0xff]
                  %952 = vst [vmem:[%s674 + $0x450] sm:$0xff] %v951
                  %v953 = vld [vmem:[%s673 + $0xc58] sm:$0xff]
                  %954 = vst [vmem:[%s674 + $0x458] sm:$0xff] %v953
                  %v955 = vld [vmem:[%s673 + $0xc60] sm:$0xff]
                  %956 = vst [vmem:[%s674 + $0x460] sm:$0xff] %v955
                  %v957 = vld [vmem:[%s673 + $0xc68] sm:$0xff]
                  %958 = vst [vmem:[%s674 + $0x468] sm:$0xff] %v957
                  %v959 = vld [vmem:[%s673 + $0xc70] sm:$0xff]
                  %960 = vst [vmem:[%s674 + $0x470] sm:$0xff] %v959
                  %v961 = vld [vmem:[%s673 + $0xc78] sm:$0xff]
                  %962 = vst [vmem:[%s674 + $0x478] sm:$0xff] %v961
                  %v963 = vld [vmem:[%s673 + $0xc80] sm:$0xff]
                  %964 = vst [vmem:[%s674 + $0x480] sm:$0xff] %v963
                  %v965 = vld [vmem:[%s673 + $0xc88] sm:$0xff]
                  %966 = vst [vmem:[%s674 + $0x488] sm:$0xff] %v965
                  %v967 = vld [vmem:[%s673 + $0xc90] sm:$0xff]
                  %968 = vst [vmem:[%s674 + $0x490] sm:$0xff] %v967
                  %v969 = vld [vmem:[%s673 + $0xc98] sm:$0xff]
                  %970 = vst [vmem:[%s674 + $0x498] sm:$0xff] %v969
                  %v971 = vld [vmem:[%s673 + $0xca0] sm:$0xff]
                  %972 = vst [vmem:[%s674 + $0x4a0] sm:$0xff] %v971
                  %v973 = vld [vmem:[%s673 + $0xca8] sm:$0xff]
                  %974 = vst [vmem:[%s674 + $0x4a8] sm:$0xff] %v973
                  %v975 = vld [vmem:[%s673 + $0xcb0] sm:$0xff]
                  %976 = vst [vmem:[%s674 + $0x4b0] sm:$0xff] %v975
                  %v977 = vld [vmem:[%s673 + $0xcb8] sm:$0xff]
                  %978 = vst [vmem:[%s674 + $0x4b8] sm:$0xff] %v977
                  %v979 = vld [vmem:[%s673 + $0xcc0] sm:$0xff]
                  %980 = vst [vmem:[%s674 + $0x4c0] sm:$0xff] %v979
                  %v981 = vld [vmem:[%s673 + $0xcc8] sm:$0xff]
                  %982 = vst [vmem:[%s674 + $0x4c8] sm:$0xff] %v981
                  %v983 = vld [vmem:[%s673 + $0xcd0] sm:$0xff]
                  %984 = vst [vmem:[%s674 + $0x4d0] sm:$0xff] %v983
                  %v985 = vld [vmem:[%s673 + $0xcd8] sm:$0xff]
                  %986 = vst [vmem:[%s674 + $0x4d8] sm:$0xff] %v985
                  %v987 = vld [vmem:[%s673 + $0xce0] sm:$0xff]
                  %988 = vst [vmem:[%s674 + $0x4e0] sm:$0xff] %v987
                  %v989 = vld [vmem:[%s673 + $0xce8] sm:$0xff]
                  %990 = vst [vmem:[%s674 + $0x4e8] sm:$0xff] %v989
                  %v991 = vld [vmem:[%s673 + $0xcf0] sm:$0xff]
                  %992 = vst [vmem:[%s674 + $0x4f0] sm:$0xff] %v991
                  %v993 = vld [vmem:[%s673 + $0xcf8] sm:$0xff]
                  %994 = vst [vmem:[%s674 + $0x4f8] sm:$0xff] %v993
                  %v995 = vld [vmem:[%s673 + $0xf00] sm:$0xff]
                  %996 = vst [vmem:[%s674 + $0x500] sm:$0xff] %v995
                  %v997 = vld [vmem:[%s673 + $0xf08] sm:$0xff]
                  %998 = vst [vmem:[%s674 + $0x508] sm:$0xff] %v997
                  %v999 = vld [vmem:[%s673 + $0xf10] sm:$0xff]
                  %1000 = vst [vmem:[%s674 + $0x510] sm:$0xff] %v999
                  %v1001 = vld [vmem:[%s673 + $0xf18] sm:$0xff]
                  %1002 = vst [vmem:[%s674 + $0x518] sm:$0xff] %v1001
                  %v1003 = vld [vmem:[%s673 + $0xf20] sm:$0xff]
                  %1004 = vst [vmem:[%s674 + $0x520] sm:$0xff] %v1003
                  %v1005 = vld [vmem:[%s673 + $0xf28] sm:$0xff]
                  %1006 = vst [vmem:[%s674 + $0x528] sm:$0xff] %v1005
                  %v1007 = vld [vmem:[%s673 + $0xf30] sm:$0xff]
                  %1008 = vst [vmem:[%s674 + $0x530] sm:$0xff] %v1007
                  %v1009 = vld [vmem:[%s673 + $0xf38] sm:$0xff]
                  %1010 = vst [vmem:[%s674 + $0x538] sm:$0xff] %v1009
                  %v1011 = vld [vmem:[%s673 + $0xf40] sm:$0xff]
                  %1012 = vst [vmem:[%s674 + $0x540] sm:$0xff] %v1011
                  %v1013 = vld [vmem:[%s673 + $0xf48] sm:$0xff]
                  %1014 = vst [vmem:[%s674 + $0x548] sm:$0xff] %v1013
                  %v1015 = vld [vmem:[%s673 + $0xf50] sm:$0xff]
                  %1016 = vst [vmem:[%s674 + $0x550] sm:$0xff] %v1015
                  %v1017 = vld [vmem:[%s673 + $0xf58] sm:$0xff]
                  %1018 = vst [vmem:[%s674 + $0x558] sm:$0xff] %v1017
                  %v1019 = vld [vmem:[%s673 + $0xf60] sm:$0xff]
                  %1020 = vst [vmem:[%s674 + $0x560] sm:$0xff] %v1019
                  %v1021 = vld [vmem:[%s673 + $0xf68] sm:$0xff]
                  %1022 = vst [vmem:[%s674 + $0x568] sm:$0xff] %v1021
                  %v1023 = vld [vmem:[%s673 + $0xf70] sm:$0xff]
                  %1024 = vst [vmem:[%s674 + $0x570] sm:$0xff] %v1023
                  %v1025 = vld [vmem:[%s673 + $0xf78] sm:$0xff]
                  %1026 = vst [vmem:[%s674 + $0x578] sm:$0xff] %v1025
                  %v1027 = vld [vmem:[%s673 + $0xf80] sm:$0xff]
                  %1028 = vst [vmem:[%s674 + $0x580] sm:$0xff] %v1027
                  %v1029 = vld [vmem:[%s673 + $0xf88] sm:$0xff]
                  %1030 = vst [vmem:[%s674 + $0x588] sm:$0xff] %v1029
                  %v1031 = vld [vmem:[%s673 + $0xf90] sm:$0xff]
                  %1032 = vst [vmem:[%s674 + $0x590] sm:$0xff] %v1031
                  %v1033 = vld [vmem:[%s673 + $0xf98] sm:$0xff]
                  %1034 = vst [vmem:[%s674 + $0x598] sm:$0xff] %v1033
                  %v1035 = vld [vmem:[%s673 + $0xfa0] sm:$0xff]
                  %1036 = vst [vmem:[%s674 + $0x5a0] sm:$0xff] %v1035
                  %v1037 = vld [vmem:[%s673 + $0xfa8] sm:$0xff]
                  %1038 = vst [vmem:[%s674 + $0x5a8] sm:$0xff] %v1037
                  %v1039 = vld [vmem:[%s673 + $0xfb0] sm:$0xff]
                  %1040 = vst [vmem:[%s674 + $0x5b0] sm:$0xff] %v1039
                  %v1041 = vld [vmem:[%s673 + $0xfb8] sm:$0xff]
                  %1042 = vst [vmem:[%s674 + $0x5b8] sm:$0xff] %v1041
                  %v1043 = vld [vmem:[%s673 + $0xfc0] sm:$0xff]
                  %1044 = vst [vmem:[%s674 + $0x5c0] sm:$0xff] %v1043
                  %v1045 = vld [vmem:[%s673 + $0xfc8] sm:$0xff]
                  %1046 = vst [vmem:[%s674 + $0x5c8] sm:$0xff] %v1045
                  %v1047 = vld [vmem:[%s673 + $0xfd0] sm:$0xff]
                  %1048 = vst [vmem:[%s674 + $0x5d0] sm:$0xff] %v1047
                  %v1049 = vld [vmem:[%s673 + $0xfd8] sm:$0xff]
                  %1050 = vst [vmem:[%s674 + $0x5d8] sm:$0xff] %v1049
                  %v1051 = vld [vmem:[%s673 + $0xfe0] sm:$0xff]
                  %1052 = vst [vmem:[%s674 + $0x5e0] sm:$0xff] %v1051
                  %v1053 = vld [vmem:[%s673 + $0xfe8] sm:$0xff]
                  %1054 = vst [vmem:[%s674 + $0x5e8] sm:$0xff] %v1053
                  %v1055 = vld [vmem:[%s673 + $0xff0] sm:$0xff]
                  %1056 = vst [vmem:[%s674 + $0x5f0] sm:$0xff] %v1055
                  %v1057 = vld [vmem:[%s673 + $0xff8] sm:$0xff]
                  %1058 = vst [vmem:[%s674 + $0x5f8] sm:$0xff] %v1057
                  %v1059 = vld [vmem:[%s673 + $0x1200] sm:$0xff]
                  %1060 = vst [vmem:[%s674 + $0x600] sm:$0xff] %v1059
                  %v1061 = vld [vmem:[%s673 + $0x1208] sm:$0xff]
                  %1062 = vst [vmem:[%s674 + $0x608] sm:$0xff] %v1061
                  %v1063 = vld [vmem:[%s673 + $0x1210] sm:$0xff]
                  %1064 = vst [vmem:[%s674 + $0x610] sm:$0xff] %v1063
                  %v1065 = vld [vmem:[%s673 + $0x1218] sm:$0xff]
                  %1066 = vst [vmem:[%s674 + $0x618] sm:$0xff] %v1065
                  %v1067 = vld [vmem:[%s673 + $0x1220] sm:$0xff]
                  %1068 = vst [vmem:[%s674 + $0x620] sm:$0xff] %v1067
                  %v1069 = vld [vmem:[%s673 + $0x1228] sm:$0xff]
                  %1070 = vst [vmem:[%s674 + $0x628] sm:$0xff] %v1069
                  %v1071 = vld [vmem:[%s673 + $0x1230] sm:$0xff]
                  %1072 = vst [vmem:[%s674 + $0x630] sm:$0xff] %v1071
                  %v1073 = vld [vmem:[%s673 + $0x1238] sm:$0xff]
                  %1074 = vst [vmem:[%s674 + $0x638] sm:$0xff] %v1073
                  %v1075 = vld [vmem:[%s673 + $0x1240] sm:$0xff]
                  %1076 = vst [vmem:[%s674 + $0x640] sm:$0xff] %v1075
                  %v1077 = vld [vmem:[%s673 + $0x1248] sm:$0xff]
                  %1078 = vst [vmem:[%s674 + $0x648] sm:$0xff] %v1077
                  %v1079 = vld [vmem:[%s673 + $0x1250] sm:$0xff]
                  %1080 = vst [vmem:[%s674 + $0x650] sm:$0xff] %v1079
                  %v1081 = vld [vmem:[%s673 + $0x1258] sm:$0xff]
                  %1082 = vst [vmem:[%s674 + $0x658] sm:$0xff] %v1081
                  %v1083 = vld [vmem:[%s673 + $0x1260] sm:$0xff]
                  %1084 = vst [vmem:[%s674 + $0x660] sm:$0xff] %v1083
                  %v1085 = vld [vmem:[%s673 + $0x1268] sm:$0xff]
                  %1086 = vst [vmem:[%s674 + $0x668] sm:$0xff] %v1085
                  %v1087 = vld [vmem:[%s673 + $0x1270] sm:$0xff]
                  %1088 = vst [vmem:[%s674 + $0x670] sm:$0xff] %v1087
                  %v1089 = vld [vmem:[%s673 + $0x1278] sm:$0xff]
                  %1090 = vst [vmem:[%s674 + $0x678] sm:$0xff] %v1089
                  %v1091 = vld [vmem:[%s673 + $0x1280] sm:$0xff]
                  %1092 = vst [vmem:[%s674 + $0x680] sm:$0xff] %v1091
                  %v1093 = vld [vmem:[%s673 + $0x1288] sm:$0xff]
                  %1094 = vst [vmem:[%s674 + $0x688] sm:$0xff] %v1093
                  %v1095 = vld [vmem:[%s673 + $0x1290] sm:$0xff]
                  %1096 = vst [vmem:[%s674 + $0x690] sm:$0xff] %v1095
                  %v1097 = vld [vmem:[%s673 + $0x1298] sm:$0xff]
                  %1098 = vst [vmem:[%s674 + $0x698] sm:$0xff] %v1097
                  %v1099 = vld [vmem:[%s673 + $0x12a0] sm:$0xff]
                  %1100 = vst [vmem:[%s674 + $0x6a0] sm:$0xff] %v1099
                  %v1101 = vld [vmem:[%s673 + $0x12a8] sm:$0xff]
                  %1102 = vst [vmem:[%s674 + $0x6a8] sm:$0xff] %v1101
                  %v1103 = vld [vmem:[%s673 + $0x12b0] sm:$0xff]
                  %1104 = vst [vmem:[%s674 + $0x6b0] sm:$0xff] %v1103
                  %v1105 = vld [vmem:[%s673 + $0x12b8] sm:$0xff]
                  %1106 = vst [vmem:[%s674 + $0x6b8] sm:$0xff] %v1105
                  %v1107 = vld [vmem:[%s673 + $0x12c0] sm:$0xff]
                  %1108 = vst [vmem:[%s674 + $0x6c0] sm:$0xff] %v1107
                  %v1109 = vld [vmem:[%s673 + $0x12c8] sm:$0xff]
                  %1110 = vst [vmem:[%s674 + $0x6c8] sm:$0xff] %v1109
                  %v1111 = vld [vmem:[%s673 + $0x12d0] sm:$0xff]
                  %1112 = vst [vmem:[%s674 + $0x6d0] sm:$0xff] %v1111
                  %v1113 = vld [vmem:[%s673 + $0x12d8] sm:$0xff]
                  %1114 = vst [vmem:[%s674 + $0x6d8] sm:$0xff] %v1113
                  %v1115 = vld [vmem:[%s673 + $0x12e0] sm:$0xff]
                  %1116 = vst [vmem:[%s674 + $0x6e0] sm:$0xff] %v1115
                  %v1117 = vld [vmem:[%s673 + $0x12e8] sm:$0xff]
                  %1118 = vst [vmem:[%s674 + $0x6e8] sm:$0xff] %v1117
                  %v1119 = vld [vmem:[%s673 + $0x12f0] sm:$0xff]
                  %1120 = vst [vmem:[%s674 + $0x6f0] sm:$0xff] %v1119
                  %v1121 = vld [vmem:[%s673 + $0x12f8] sm:$0xff]
                  %1122 = vst [vmem:[%s674 + $0x6f8] sm:$0xff] %v1121
                  %v1123 = vld [vmem:[%s673 + $0x1500] sm:$0xff]
                  %1124 = vst [vmem:[%s674 + $0x700] sm:$0xff] %v1123
                  %v1125 = vld [vmem:[%s673 + $0x1508] sm:$0xff]
                  %1126 = vst [vmem:[%s674 + $0x708] sm:$0xff] %v1125
                  %v1127 = vld [vmem:[%s673 + $0x1510] sm:$0xff]
                  %1128 = vst [vmem:[%s674 + $0x710] sm:$0xff] %v1127
                  %v1129 = vld [vmem:[%s673 + $0x1518] sm:$0xff]
                  %1130 = vst [vmem:[%s674 + $0x718] sm:$0xff] %v1129
                  %v1131 = vld [vmem:[%s673 + $0x1520] sm:$0xff]
                  %1132 = vst [vmem:[%s674 + $0x720] sm:$0xff] %v1131
                  %v1133 = vld [vmem:[%s673 + $0x1528] sm:$0xff]
                  %1134 = vst [vmem:[%s674 + $0x728] sm:$0xff] %v1133
                  %v1135 = vld [vmem:[%s673 + $0x1530] sm:$0xff]
                  %1136 = vst [vmem:[%s674 + $0x730] sm:$0xff] %v1135
                  %v1137 = vld [vmem:[%s673 + $0x1538] sm:$0xff]
                  %1138 = vst [vmem:[%s674 + $0x738] sm:$0xff] %v1137
                  %v1139 = vld [vmem:[%s673 + $0x1540] sm:$0xff]
                  %1140 = vst [vmem:[%s674 + $0x740] sm:$0xff] %v1139
                  %v1141 = vld [vmem:[%s673 + $0x1548] sm:$0xff]
                  %1142 = vst [vmem:[%s674 + $0x748] sm:$0xff] %v1141
                  %v1143 = vld [vmem:[%s673 + $0x1550] sm:$0xff]
                  %1144 = vst [vmem:[%s674 + $0x750] sm:$0xff] %v1143
                  %v1145 = vld [vmem:[%s673 + $0x1558] sm:$0xff]
                  %1146 = vst [vmem:[%s674 + $0x758] sm:$0xff] %v1145
                  %v1147 = vld [vmem:[%s673 + $0x1560] sm:$0xff]
                  %1148 = vst [vmem:[%s674 + $0x760] sm:$0xff] %v1147
                  %v1149 = vld [vmem:[%s673 + $0x1568] sm:$0xff]
                  %1150 = vst [vmem:[%s674 + $0x768] sm:$0xff] %v1149
                  %v1151 = vld [vmem:[%s673 + $0x1570] sm:$0xff]
                  %1152 = vst [vmem:[%s674 + $0x770] sm:$0xff] %v1151
                  %v1153 = vld [vmem:[%s673 + $0x1578] sm:$0xff]
                  %1154 = vst [vmem:[%s674 + $0x778] sm:$0xff] %v1153
                  %v1155 = vld [vmem:[%s673 + $0x1580] sm:$0xff]
                  %1156 = vst [vmem:[%s674 + $0x780] sm:$0xff] %v1155
                  %v1157 = vld [vmem:[%s673 + $0x1588] sm:$0xff]
                  %1158 = vst [vmem:[%s674 + $0x788] sm:$0xff] %v1157
                  %v1159 = vld [vmem:[%s673 + $0x1590] sm:$0xff]
                  %1160 = vst [vmem:[%s674 + $0x790] sm:$0xff] %v1159
                  %v1161 = vld [vmem:[%s673 + $0x1598] sm:$0xff]
                  %1162 = vst [vmem:[%s674 + $0x798] sm:$0xff] %v1161
                  %v1163 = vld [vmem:[%s673 + $0x15a0] sm:$0xff]
                  %1164 = vst [vmem:[%s674 + $0x7a0] sm:$0xff] %v1163
                  %v1165 = vld [vmem:[%s673 + $0x15a8] sm:$0xff]
                  %1166 = vst [vmem:[%s674 + $0x7a8] sm:$0xff] %v1165
                  %v1167 = vld [vmem:[%s673 + $0x15b0] sm:$0xff]
                  %1168 = vst [vmem:[%s674 + $0x7b0] sm:$0xff] %v1167
                  %v1169 = vld [vmem:[%s673 + $0x15b8] sm:$0xff]
                  %1170 = vst [vmem:[%s674 + $0x7b8] sm:$0xff] %v1169
                  %v1171 = vld [vmem:[%s673 + $0x15c0] sm:$0xff]
                  %1172 = vst [vmem:[%s674 + $0x7c0] sm:$0xff] %v1171
                  %v1173 = vld [vmem:[%s673 + $0x15c8] sm:$0xff]
                  %1174 = vst [vmem:[%s674 + $0x7c8] sm:$0xff] %v1173
                  %v1175 = vld [vmem:[%s673 + $0x15d0] sm:$0xff]
                  %1176 = vst [vmem:[%s674 + $0x7d0] sm:$0xff] %v1175
                  %v1177 = vld [vmem:[%s673 + $0x15d8] sm:$0xff]
                  %1178 = vst [vmem:[%s674 + $0x7d8] sm:$0xff] %v1177
                  %v1179 = vld [vmem:[%s673 + $0x15e0] sm:$0xff]
                  %1180 = vst [vmem:[%s674 + $0x7e0] sm:$0xff] %v1179
                  %v1181 = vld [vmem:[%s673 + $0x15e8] sm:$0xff]
                  %1182 = vst [vmem:[%s674 + $0x7e8] sm:$0xff] %v1181
                  %v1183 = vld [vmem:[%s673 + $0x15f0] sm:$0xff]
                  %1184 = vst [vmem:[%s674 + $0x7f0] sm:$0xff] %v1183
                  %v1185 = vld [vmem:[%s673 + $0x15f8] sm:$0xff]
                  %1186 = vst [vmem:[%s674 + $0x7f8] sm:$0xff] %v1185
                $region56: #{cnn_forward.3} parent=50 // loop_footer
                  %s672 = sadd.s32 1, %s668
                $region57: #{cnn_forward.3} parent=50 // loop_footer_branch
                  %667 = sbr.rel target = $region53
                $region58: #{cnn_forward.3} parent=50 // loop_exit
                  _
              $region51: #{cnn_forward.3} parent=35 // pred_fallthru
                _
              // Predicated region
              $region59: #{cnn_forward.3} parent=35 // pred_check
                _
              $region60: #{cnn_forward.3} parent=35 // pred_check_branch
                %1188 = sbr.rel target = $region62
              $region61: #{cnn_forward.3} parent=35 // pred_region
                _
              $region62: #{cnn_forward.3} parent=35 // pred_fallthru
                _
            $region36: #{cnn_forward.3} parent=31 // pred_fallthru
              _
            // Predicated region
            $region37: #{cnn_forward.3} parent=31 // pred_check
              _
            $region38: #{cnn_forward.3} parent=31 // pred_check_branch
              %143 = sbr.rel target = $region40
            $region39: #{cnn_forward.3} parent=31 // pred_region
              loop: start=0, step=1, limit=1
              $region41: #{cnn_forward.3} parent=39 // loop_pre_header
                _
              $region42: #{cnn_forward.3} parent=39 // loop_header
                %s146 = sphi 0, %s150
                %p147 = scmp.ge.s32.totalorder %s146, 1
                %s151 = sphi %s137, %s137
                %s152 = sphi %s134, %s134
              $region43: #{cnn_forward.3} parent=39 // loop_header_branch
                %149 = sbr.rel (%p147) target = $region47
              $region44: #{cnn_forward.3} parent=39 // loop_body
                %v153 = vld [vmem:[%s151] sm:$0xff]
                %154 = vst [vmem:[%s152] sm:$0xff] %v153
                %v155 = vld [vmem:[%s151 + $0x8] sm:$0xff]
                %156 = vst [vmem:[%s152 + $0x8] sm:$0xff] %v155
                %v157 = vld [vmem:[%s151 + $0x10] sm:$0xff]
                %158 = vst [vmem:[%s152 + $0x10] sm:$0xff] %v157
                %v159 = vld [vmem:[%s151 + $0x18] sm:$0xff]
                %160 = vst [vmem:[%s152 + $0x18] sm:$0xff] %v159
                %v161 = vld [vmem:[%s151 + $0x20] sm:$0xff]
                %162 = vst [vmem:[%s152 + $0x20] sm:$0xff] %v161
                %v163 = vld [vmem:[%s151 + $0x28] sm:$0xff]
                %164 = vst [vmem:[%s152 + $0x28] sm:$0xff] %v163
                %v165 = vld [vmem:[%s151 + $0x30] sm:$0xff]
                %166 = vst [vmem:[%s152 + $0x30] sm:$0xff] %v165
                %v167 = vld [vmem:[%s151 + $0x38] sm:$0xff]
                %168 = vst [vmem:[%s152 + $0x38] sm:$0xff] %v167
                %v169 = vld [vmem:[%s151 + $0x40] sm:$0xff]
                %170 = vst [vmem:[%s152 + $0x40] sm:$0xff] %v169
                %v171 = vld [vmem:[%s151 + $0x48] sm:$0xff]
                %172 = vst [vmem:[%s152 + $0x48] sm:$0xff] %v171
                %v173 = vld [vmem:[%s151 + $0x50] sm:$0xff]
                %174 = vst [vmem:[%s152 + $0x50] sm:$0xff] %v173
                %v175 = vld [vmem:[%s151 + $0x58] sm:$0xff]
                %176 = vst [vmem:[%s152 + $0x58] sm:$0xff] %v175
                %v177 = vld [vmem:[%s151 + $0x60] sm:$0xff]
                %178 = vst [vmem:[%s152 + $0x60] sm:$0xff] %v177
                %v179 = vld [vmem:[%s151 + $0x68] sm:$0xff]
                %180 = vst [vmem:[%s152 + $0x68] sm:$0xff] %v179
                %v181 = vld [vmem:[%s151 + $0x70] sm:$0xff]
                %182 = vst [vmem:[%s152 + $0x70] sm:$0xff] %v181
                %v183 = vld [vmem:[%s151 + $0x78] sm:$0xff]
                %184 = vst [vmem:[%s152 + $0x78] sm:$0xff] %v183
                %v185 = vld [vmem:[%s151 + $0x80] sm:$0xff]
                %186 = vst [vmem:[%s152 + $0x80] sm:$0xff] %v185
                %v187 = vld [vmem:[%s151 + $0x88] sm:$0xff]
                %188 = vst [vmem:[%s152 + $0x88] sm:$0xff] %v187
                %v189 = vld [vmem:[%s151 + $0x90] sm:$0xff]
                %190 = vst [vmem:[%s152 + $0x90] sm:$0xff] %v189
                %v191 = vld [vmem:[%s151 + $0x98] sm:$0xff]
                %192 = vst [vmem:[%s152 + $0x98] sm:$0xff] %v191
                %v193 = vld [vmem:[%s151 + $0xa0] sm:$0xff]
                %194 = vst [vmem:[%s152 + $0xa0] sm:$0xff] %v193
                %v195 = vld [vmem:[%s151 + $0xa8] sm:$0xff]
                %196 = vst [vmem:[%s152 + $0xa8] sm:$0xff] %v195
                %v197 = vld [vmem:[%s151 + $0xb0] sm:$0xff]
                %198 = vst [vmem:[%s152 + $0xb0] sm:$0xff] %v197
                %v199 = vld [vmem:[%s151 + $0xb8] sm:$0xff]
                %200 = vst [vmem:[%s152 + $0xb8] sm:$0xff] %v199
                %v201 = vld [vmem:[%s151 + $0xc0] sm:$0xff]
                %202 = vst [vmem:[%s152 + $0xc0] sm:$0xff] %v201
                %v203 = vld [vmem:[%s151 + $0xc8] sm:$0xff]
                %204 = vst [vmem:[%s152 + $0xc8] sm:$0xff] %v203
                %v205 = vld [vmem:[%s151 + $0xd0] sm:$0xff]
                %206 = vst [vmem:[%s152 + $0xd0] sm:$0xff] %v205
                %v207 = vld [vmem:[%s151 + $0xd8] sm:$0xff]
                %208 = vst [vmem:[%s152 + $0xd8] sm:$0xff] %v207
                %v209 = vld [vmem:[%s151 + $0xe0] sm:$0xff]
                %210 = vst [vmem:[%s152 + $0xe0] sm:$0xff] %v209
                %v211 = vld [vmem:[%s151 + $0xe8] sm:$0xff]
                %212 = vst [vmem:[%s152 + $0xe8] sm:$0xff] %v211
                %v213 = vld [vmem:[%s151 + $0xf0] sm:$0xff]
                %214 = vst [vmem:[%s152 + $0xf0] sm:$0xff] %v213
                %v215 = vld [vmem:[%s151 + $0xf8] sm:$0xff]
                %216 = vst [vmem:[%s152 + $0xf8] sm:$0xff] %v215
                %v217 = vld [vmem:[%s151 + $0x300] sm:$0xff]
                %218 = vst [vmem:[%s152 + $0x100] sm:$0xff] %v217
                %v219 = vld [vmem:[%s151 + $0x308] sm:$0xff]
                %220 = vst [vmem:[%s152 + $0x108] sm:$0xff] %v219
                %v221 = vld [vmem:[%s151 + $0x310] sm:$0xff]
                %222 = vst [vmem:[%s152 + $0x110] sm:$0xff] %v221
                %v223 = vld [vmem:[%s151 + $0x318] sm:$0xff]
                %224 = vst [vmem:[%s152 + $0x118] sm:$0xff] %v223
                %v225 = vld [vmem:[%s151 + $0x320] sm:$0xff]
                %226 = vst [vmem:[%s152 + $0x120] sm:$0xff] %v225
                %v227 = vld [vmem:[%s151 + $0x328] sm:$0xff]
                %228 = vst [vmem:[%s152 + $0x128] sm:$0xff] %v227
                %v229 = vld [vmem:[%s151 + $0x330] sm:$0xff]
                %230 = vst [vmem:[%s152 + $0x130] sm:$0xff] %v229
                %v231 = vld [vmem:[%s151 + $0x338] sm:$0xff]
                %232 = vst [vmem:[%s152 + $0x138] sm:$0xff] %v231
                %v233 = vld [vmem:[%s151 + $0x340] sm:$0xff]
                %234 = vst [vmem:[%s152 + $0x140] sm:$0xff] %v233
                %v235 = vld [vmem:[%s151 + $0x348] sm:$0xff]
                %236 = vst [vmem:[%s152 + $0x148] sm:$0xff] %v235
                %v237 = vld [vmem:[%s151 + $0x350] sm:$0xff]
                %238 = vst [vmem:[%s152 + $0x150] sm:$0xff] %v237
                %v239 = vld [vmem:[%s151 + $0x358] sm:$0xff]
                %240 = vst [vmem:[%s152 + $0x158] sm:$0xff] %v239
                %v241 = vld [vmem:[%s151 + $0x360] sm:$0xff]
                %242 = vst [vmem:[%s152 + $0x160] sm:$0xff] %v241
                %v243 = vld [vmem:[%s151 + $0x368] sm:$0xff]
                %244 = vst [vmem:[%s152 + $0x168] sm:$0xff] %v243
                %v245 = vld [vmem:[%s151 + $0x370] sm:$0xff]
                %246 = vst [vmem:[%s152 + $0x170] sm:$0xff] %v245
                %v247 = vld [vmem:[%s151 + $0x378] sm:$0xff]
                %248 = vst [vmem:[%s152 + $0x178] sm:$0xff] %v247
                %v249 = vld [vmem:[%s151 + $0x380] sm:$0xff]
                %250 = vst [vmem:[%s152 + $0x180] sm:$0xff] %v249
                %v251 = vld [vmem:[%s151 + $0x388] sm:$0xff]
                %252 = vst [vmem:[%s152 + $0x188] sm:$0xff] %v251
                %v253 = vld [vmem:[%s151 + $0x390] sm:$0xff]
                %254 = vst [vmem:[%s152 + $0x190] sm:$0xff] %v253
                %v255 = vld [vmem:[%s151 + $0x398] sm:$0xff]
                %256 = vst [vmem:[%s152 + $0x198] sm:$0xff] %v255
                %v257 = vld [vmem:[%s151 + $0x3a0] sm:$0xff]
                %258 = vst [vmem:[%s152 + $0x1a0] sm:$0xff] %v257
                %v259 = vld [vmem:[%s151 + $0x3a8] sm:$0xff]
                %260 = vst [vmem:[%s152 + $0x1a8] sm:$0xff] %v259
                %v261 = vld [vmem:[%s151 + $0x3b0] sm:$0xff]
                %262 = vst [vmem:[%s152 + $0x1b0] sm:$0xff] %v261
                %v263 = vld [vmem:[%s151 + $0x3b8] sm:$0xff]
                %264 = vst [vmem:[%s152 + $0x1b8] sm:$0xff] %v263
                %v265 = vld [vmem:[%s151 + $0x3c0] sm:$0xff]
                %266 = vst [vmem:[%s152 + $0x1c0] sm:$0xff] %v265
                %v267 = vld [vmem:[%s151 + $0x3c8] sm:$0xff]
                %268 = vst [vmem:[%s152 + $0x1c8] sm:$0xff] %v267
                %v269 = vld [vmem:[%s151 + $0x3d0] sm:$0xff]
                %270 = vst [vmem:[%s152 + $0x1d0] sm:$0xff] %v269
                %v271 = vld [vmem:[%s151 + $0x3d8] sm:$0xff]
                %272 = vst [vmem:[%s152 + $0x1d8] sm:$0xff] %v271
                %v273 = vld [vmem:[%s151 + $0x3e0] sm:$0xff]
                %274 = vst [vmem:[%s152 + $0x1e0] sm:$0xff] %v273
                %v275 = vld [vmem:[%s151 + $0x3e8] sm:$0xff]
                %276 = vst [vmem:[%s152 + $0x1e8] sm:$0xff] %v275
                %v277 = vld [vmem:[%s151 + $0x3f0] sm:$0xff]
                %278 = vst [vmem:[%s152 + $0x1f0] sm:$0xff] %v277
                %v279 = vld [vmem:[%s151 + $0x3f8] sm:$0xff]
                %280 = vst [vmem:[%s152 + $0x1f8] sm:$0xff] %v279
                %v281 = vld [vmem:[%s151 + $0x600] sm:$0xff]
                %282 = vst [vmem:[%s152 + $0x200] sm:$0xff] %v281
                %v283 = vld [vmem:[%s151 + $0x608] sm:$0xff]
                %284 = vst [vmem:[%s152 + $0x208] sm:$0xff] %v283
                %v285 = vld [vmem:[%s151 + $0x610] sm:$0xff]
                %286 = vst [vmem:[%s152 + $0x210] sm:$0xff] %v285
                %v287 = vld [vmem:[%s151 + $0x618] sm:$0xff]
                %288 = vst [vmem:[%s152 + $0x218] sm:$0xff] %v287
                %v289 = vld [vmem:[%s151 + $0x620] sm:$0xff]
                %290 = vst [vmem:[%s152 + $0x220] sm:$0xff] %v289
                %v291 = vld [vmem:[%s151 + $0x628] sm:$0xff]
                %292 = vst [vmem:[%s152 + $0x228] sm:$0xff] %v291
                %v293 = vld [vmem:[%s151 + $0x630] sm:$0xff]
                %294 = vst [vmem:[%s152 + $0x230] sm:$0xff] %v293
                %v295 = vld [vmem:[%s151 + $0x638] sm:$0xff]
                %296 = vst [vmem:[%s152 + $0x238] sm:$0xff] %v295
                %v297 = vld [vmem:[%s151 + $0x640] sm:$0xff]
                %298 = vst [vmem:[%s152 + $0x240] sm:$0xff] %v297
                %v299 = vld [vmem:[%s151 + $0x648] sm:$0xff]
                %300 = vst [vmem:[%s152 + $0x248] sm:$0xff] %v299
                %v301 = vld [vmem:[%s151 + $0x650] sm:$0xff]
                %302 = vst [vmem:[%s152 + $0x250] sm:$0xff] %v301
                %v303 = vld [vmem:[%s151 + $0x658] sm:$0xff]
                %304 = vst [vmem:[%s152 + $0x258] sm:$0xff] %v303
                %v305 = vld [vmem:[%s151 + $0x660] sm:$0xff]
                %306 = vst [vmem:[%s152 + $0x260] sm:$0xff] %v305
                %v307 = vld [vmem:[%s151 + $0x668] sm:$0xff]
                %308 = vst [vmem:[%s152 + $0x268] sm:$0xff] %v307
                %v309 = vld [vmem:[%s151 + $0x670] sm:$0xff]
                %310 = vst [vmem:[%s152 + $0x270] sm:$0xff] %v309
                %v311 = vld [vmem:[%s151 + $0x678] sm:$0xff]
                %312 = vst [vmem:[%s152 + $0x278] sm:$0xff] %v311
                %v313 = vld [vmem:[%s151 + $0x680] sm:$0xff]
                %314 = vst [vmem:[%s152 + $0x280] sm:$0xff] %v313
                %v315 = vld [vmem:[%s151 + $0x688] sm:$0xff]
                %316 = vst [vmem:[%s152 + $0x288] sm:$0xff] %v315
                %v317 = vld [vmem:[%s151 + $0x690] sm:$0xff]
                %318 = vst [vmem:[%s152 + $0x290] sm:$0xff] %v317
                %v319 = vld [vmem:[%s151 + $0x698] sm:$0xff]
                %320 = vst [vmem:[%s152 + $0x298] sm:$0xff] %v319
                %v321 = vld [vmem:[%s151 + $0x6a0] sm:$0xff]
                %322 = vst [vmem:[%s152 + $0x2a0] sm:$0xff] %v321
                %v323 = vld [vmem:[%s151 + $0x6a8] sm:$0xff]
                %324 = vst [vmem:[%s152 + $0x2a8] sm:$0xff] %v323
                %v325 = vld [vmem:[%s151 + $0x6b0] sm:$0xff]
                %326 = vst [vmem:[%s152 + $0x2b0] sm:$0xff] %v325
                %v327 = vld [vmem:[%s151 + $0x6b8] sm:$0xff]
                %328 = vst [vmem:[%s152 + $0x2b8] sm:$0xff] %v327
                %v329 = vld [vmem:[%s151 + $0x6c0] sm:$0xff]
                %330 = vst [vmem:[%s152 + $0x2c0] sm:$0xff] %v329
                %v331 = vld [vmem:[%s151 + $0x6c8] sm:$0xff]
                %332 = vst [vmem:[%s152 + $0x2c8] sm:$0xff] %v331
                %v333 = vld [vmem:[%s151 + $0x6d0] sm:$0xff]
                %334 = vst [vmem:[%s152 + $0x2d0] sm:$0xff] %v333
                %v335 = vld [vmem:[%s151 + $0x6d8] sm:$0xff]
                %336 = vst [vmem:[%s152 + $0x2d8] sm:$0xff] %v335
                %v337 = vld [vmem:[%s151 + $0x6e0] sm:$0xff]
                %338 = vst [vmem:[%s152 + $0x2e0] sm:$0xff] %v337
                %v339 = vld [vmem:[%s151 + $0x6e8] sm:$0xff]
                %340 = vst [vmem:[%s152 + $0x2e8] sm:$0xff] %v339
                %v341 = vld [vmem:[%s151 + $0x6f0] sm:$0xff]
                %342 = vst [vmem:[%s152 + $0x2f0] sm:$0xff] %v341
                %v343 = vld [vmem:[%s151 + $0x6f8] sm:$0xff]
                %344 = vst [vmem:[%s152 + $0x2f8] sm:$0xff] %v343
                %v345 = vld [vmem:[%s151 + $0x900] sm:$0xff]
                %346 = vst [vmem:[%s152 + $0x300] sm:$0xff] %v345
                %v347 = vld [vmem:[%s151 + $0x908] sm:$0xff]
                %348 = vst [vmem:[%s152 + $0x308] sm:$0xff] %v347
                %v349 = vld [vmem:[%s151 + $0x910] sm:$0xff]
                %350 = vst [vmem:[%s152 + $0x310] sm:$0xff] %v349
                %v351 = vld [vmem:[%s151 + $0x918] sm:$0xff]
                %352 = vst [vmem:[%s152 + $0x318] sm:$0xff] %v351
                %v353 = vld [vmem:[%s151 + $0x920] sm:$0xff]
                %354 = vst [vmem:[%s152 + $0x320] sm:$0xff] %v353
                %v355 = vld [vmem:[%s151 + $0x928] sm:$0xff]
                %356 = vst [vmem:[%s152 + $0x328] sm:$0xff] %v355
                %v357 = vld [vmem:[%s151 + $0x930] sm:$0xff]
                %358 = vst [vmem:[%s152 + $0x330] sm:$0xff] %v357
                %v359 = vld [vmem:[%s151 + $0x938] sm:$0xff]
                %360 = vst [vmem:[%s152 + $0x338] sm:$0xff] %v359
                %v361 = vld [vmem:[%s151 + $0x940] sm:$0xff]
                %362 = vst [vmem:[%s152 + $0x340] sm:$0xff] %v361
                %v363 = vld [vmem:[%s151 + $0x948] sm:$0xff]
                %364 = vst [vmem:[%s152 + $0x348] sm:$0xff] %v363
                %v365 = vld [vmem:[%s151 + $0x950] sm:$0xff]
                %366 = vst [vmem:[%s152 + $0x350] sm:$0xff] %v365
                %v367 = vld [vmem:[%s151 + $0x958] sm:$0xff]
                %368 = vst [vmem:[%s152 + $0x358] sm:$0xff] %v367
                %v369 = vld [vmem:[%s151 + $0x960] sm:$0xff]
                %370 = vst [vmem:[%s152 + $0x360] sm:$0xff] %v369
                %v371 = vld [vmem:[%s151 + $0x968] sm:$0xff]
                %372 = vst [vmem:[%s152 + $0x368] sm:$0xff] %v371
                %v373 = vld [vmem:[%s151 + $0x970] sm:$0xff]
                %374 = vst [vmem:[%s152 + $0x370] sm:$0xff] %v373
                %v375 = vld [vmem:[%s151 + $0x978] sm:$0xff]
                %376 = vst [vmem:[%s152 + $0x378] sm:$0xff] %v375
                %v377 = vld [vmem:[%s151 + $0x980] sm:$0xff]
                %378 = vst [vmem:[%s152 + $0x380] sm:$0xff] %v377
                %v379 = vld [vmem:[%s151 + $0x988] sm:$0xff]
                %380 = vst [vmem:[%s152 + $0x388] sm:$0xff] %v379
                %v381 = vld [vmem:[%s151 + $0x990] sm:$0xff]
                %382 = vst [vmem:[%s152 + $0x390] sm:$0xff] %v381
                %v383 = vld [vmem:[%s151 + $0x998] sm:$0xff]
                %384 = vst [vmem:[%s152 + $0x398] sm:$0xff] %v383
                %v385 = vld [vmem:[%s151 + $0x9a0] sm:$0xff]
                %386 = vst [vmem:[%s152 + $0x3a0] sm:$0xff] %v385
                %v387 = vld [vmem:[%s151 + $0x9a8] sm:$0xff]
                %388 = vst [vmem:[%s152 + $0x3a8] sm:$0xff] %v387
                %v389 = vld [vmem:[%s151 + $0x9b0] sm:$0xff]
                %390 = vst [vmem:[%s152 + $0x3b0] sm:$0xff] %v389
                %v391 = vld [vmem:[%s151 + $0x9b8] sm:$0xff]
                %392 = vst [vmem:[%s152 + $0x3b8] sm:$0xff] %v391
                %v393 = vld [vmem:[%s151 + $0x9c0] sm:$0xff]
                %394 = vst [vmem:[%s152 + $0x3c0] sm:$0xff] %v393
                %v395 = vld [vmem:[%s151 + $0x9c8] sm:$0xff]
                %396 = vst [vmem:[%s152 + $0x3c8] sm:$0xff] %v395
                %v397 = vld [vmem:[%s151 + $0x9d0] sm:$0xff]
                %398 = vst [vmem:[%s152 + $0x3d0] sm:$0xff] %v397
                %v399 = vld [vmem:[%s151 + $0x9d8] sm:$0xff]
                %400 = vst [vmem:[%s152 + $0x3d8] sm:$0xff] %v399
                %v401 = vld [vmem:[%s151 + $0x9e0] sm:$0xff]
                %402 = vst [vmem:[%s152 + $0x3e0] sm:$0xff] %v401
                %v403 = vld [vmem:[%s151 + $0x9e8] sm:$0xff]
                %404 = vst [vmem:[%s152 + $0x3e8] sm:$0xff] %v403
                %v405 = vld [vmem:[%s151 + $0x9f0] sm:$0xff]
                %406 = vst [vmem:[%s152 + $0x3f0] sm:$0xff] %v405
                %v407 = vld [vmem:[%s151 + $0x9f8] sm:$0xff]
                %408 = vst [vmem:[%s152 + $0x3f8] sm:$0xff] %v407
                %v409 = vld [vmem:[%s151 + $0xc00] sm:$0xff]
                %410 = vst [vmem:[%s152 + $0x400] sm:$0xff] %v409
                %v411 = vld [vmem:[%s151 + $0xc08] sm:$0xff]
                %412 = vst [vmem:[%s152 + $0x408] sm:$0xff] %v411
                %v413 = vld [vmem:[%s151 + $0xc10] sm:$0xff]
                %414 = vst [vmem:[%s152 + $0x410] sm:$0xff] %v413
                %v415 = vld [vmem:[%s151 + $0xc18] sm:$0xff]
                %416 = vst [vmem:[%s152 + $0x418] sm:$0xff] %v415
                %v417 = vld [vmem:[%s151 + $0xc20] sm:$0xff]
                %418 = vst [vmem:[%s152 + $0x420] sm:$0xff] %v417
                %v419 = vld [vmem:[%s151 + $0xc28] sm:$0xff]
                %420 = vst [vmem:[%s152 + $0x428] sm:$0xff] %v419
                %v421 = vld [vmem:[%s151 + $0xc30] sm:$0xff]
                %422 = vst [vmem:[%s152 + $0x430] sm:$0xff] %v421
                %v423 = vld [vmem:[%s151 + $0xc38] sm:$0xff]
                %424 = vst [vmem:[%s152 + $0x438] sm:$0xff] %v423
                %v425 = vld [vmem:[%s151 + $0xc40] sm:$0xff]
                %426 = vst [vmem:[%s152 + $0x440] sm:$0xff] %v425
                %v427 = vld [vmem:[%s151 + $0xc48] sm:$0xff]
                %428 = vst [vmem:[%s152 + $0x448] sm:$0xff] %v427
                %v429 = vld [vmem:[%s151 + $0xc50] sm:$0xff]
                %430 = vst [vmem:[%s152 + $0x450] sm:$0xff] %v429
                %v431 = vld [vmem:[%s151 + $0xc58] sm:$0xff]
                %432 = vst [vmem:[%s152 + $0x458] sm:$0xff] %v431
                %v433 = vld [vmem:[%s151 + $0xc60] sm:$0xff]
                %434 = vst [vmem:[%s152 + $0x460] sm:$0xff] %v433
                %v435 = vld [vmem:[%s151 + $0xc68] sm:$0xff]
                %436 = vst [vmem:[%s152 + $0x468] sm:$0xff] %v435
                %v437 = vld [vmem:[%s151 + $0xc70] sm:$0xff]
                %438 = vst [vmem:[%s152 + $0x470] sm:$0xff] %v437
                %v439 = vld [vmem:[%s151 + $0xc78] sm:$0xff]
                %440 = vst [vmem:[%s152 + $0x478] sm:$0xff] %v439
                %v441 = vld [vmem:[%s151 + $0xc80] sm:$0xff]
                %442 = vst [vmem:[%s152 + $0x480] sm:$0xff] %v441
                %v443 = vld [vmem:[%s151 + $0xc88] sm:$0xff]
                %444 = vst [vmem:[%s152 + $0x488] sm:$0xff] %v443
                %v445 = vld [vmem:[%s151 + $0xc90] sm:$0xff]
                %446 = vst [vmem:[%s152 + $0x490] sm:$0xff] %v445
                %v447 = vld [vmem:[%s151 + $0xc98] sm:$0xff]
                %448 = vst [vmem:[%s152 + $0x498] sm:$0xff] %v447
                %v449 = vld [vmem:[%s151 + $0xca0] sm:$0xff]
                %450 = vst [vmem:[%s152 + $0x4a0] sm:$0xff] %v449
                %v451 = vld [vmem:[%s151 + $0xca8] sm:$0xff]
                %452 = vst [vmem:[%s152 + $0x4a8] sm:$0xff] %v451
                %v453 = vld [vmem:[%s151 + $0xcb0] sm:$0xff]
                %454 = vst [vmem:[%s152 + $0x4b0] sm:$0xff] %v453
                %v455 = vld [vmem:[%s151 + $0xcb8] sm:$0xff]
                %456 = vst [vmem:[%s152 + $0x4b8] sm:$0xff] %v455
                %v457 = vld [vmem:[%s151 + $0xcc0] sm:$0xff]
                %458 = vst [vmem:[%s152 + $0x4c0] sm:$0xff] %v457
                %v459 = vld [vmem:[%s151 + $0xcc8] sm:$0xff]
                %460 = vst [vmem:[%s152 + $0x4c8] sm:$0xff] %v459
                %v461 = vld [vmem:[%s151 + $0xcd0] sm:$0xff]
                %462 = vst [vmem:[%s152 + $0x4d0] sm:$0xff] %v461
                %v463 = vld [vmem:[%s151 + $0xcd8] sm:$0xff]
                %464 = vst [vmem:[%s152 + $0x4d8] sm:$0xff] %v463
                %v465 = vld [vmem:[%s151 + $0xce0] sm:$0xff]
                %466 = vst [vmem:[%s152 + $0x4e0] sm:$0xff] %v465
                %v467 = vld [vmem:[%s151 + $0xce8] sm:$0xff]
                %468 = vst [vmem:[%s152 + $0x4e8] sm:$0xff] %v467
                %v469 = vld [vmem:[%s151 + $0xcf0] sm:$0xff]
                %470 = vst [vmem:[%s152 + $0x4f0] sm:$0xff] %v469
                %v471 = vld [vmem:[%s151 + $0xcf8] sm:$0xff]
                %472 = vst [vmem:[%s152 + $0x4f8] sm:$0xff] %v471
                %v473 = vld [vmem:[%s151 + $0xf00] sm:$0xff]
                %474 = vst [vmem:[%s152 + $0x500] sm:$0xff] %v473
                %v475 = vld [vmem:[%s151 + $0xf08] sm:$0xff]
                %476 = vst [vmem:[%s152 + $0x508] sm:$0xff] %v475
                %v477 = vld [vmem:[%s151 + $0xf10] sm:$0xff]
                %478 = vst [vmem:[%s152 + $0x510] sm:$0xff] %v477
                %v479 = vld [vmem:[%s151 + $0xf18] sm:$0xff]
                %480 = vst [vmem:[%s152 + $0x518] sm:$0xff] %v479
                %v481 = vld [vmem:[%s151 + $0xf20] sm:$0xff]
                %482 = vst [vmem:[%s152 + $0x520] sm:$0xff] %v481
                %v483 = vld [vmem:[%s151 + $0xf28] sm:$0xff]
                %484 = vst [vmem:[%s152 + $0x528] sm:$0xff] %v483
                %v485 = vld [vmem:[%s151 + $0xf30] sm:$0xff]
                %486 = vst [vmem:[%s152 + $0x530] sm:$0xff] %v485
                %v487 = vld [vmem:[%s151 + $0xf38] sm:$0xff]
                %488 = vst [vmem:[%s152 + $0x538] sm:$0xff] %v487
                %v489 = vld [vmem:[%s151 + $0xf40] sm:$0xff]
                %490 = vst [vmem:[%s152 + $0x540] sm:$0xff] %v489
                %v491 = vld [vmem:[%s151 + $0xf48] sm:$0xff]
                %492 = vst [vmem:[%s152 + $0x548] sm:$0xff] %v491
                %v493 = vld [vmem:[%s151 + $0xf50] sm:$0xff]
                %494 = vst [vmem:[%s152 + $0x550] sm:$0xff] %v493
                %v495 = vld [vmem:[%s151 + $0xf58] sm:$0xff]
                %496 = vst [vmem:[%s152 + $0x558] sm:$0xff] %v495
                %v497 = vld [vmem:[%s151 + $0xf60] sm:$0xff]
                %498 = vst [vmem:[%s152 + $0x560] sm:$0xff] %v497
                %v499 = vld [vmem:[%s151 + $0xf68] sm:$0xff]
                %500 = vst [vmem:[%s152 + $0x568] sm:$0xff] %v499
                %v501 = vld [vmem:[%s151 + $0xf70] sm:$0xff]
                %502 = vst [vmem:[%s152 + $0x570] sm:$0xff] %v501
                %v503 = vld [vmem:[%s151 + $0xf78] sm:$0xff]
                %504 = vst [vmem:[%s152 + $0x578] sm:$0xff] %v503
                %v505 = vld [vmem:[%s151 + $0xf80] sm:$0xff]
                %506 = vst [vmem:[%s152 + $0x580] sm:$0xff] %v505
                %v507 = vld [vmem:[%s151 + $0xf88] sm:$0xff]
                %508 = vst [vmem:[%s152 + $0x588] sm:$0xff] %v507
                %v509 = vld [vmem:[%s151 + $0xf90] sm:$0xff]
                %510 = vst [vmem:[%s152 + $0x590] sm:$0xff] %v509
                %v511 = vld [vmem:[%s151 + $0xf98] sm:$0xff]
                %512 = vst [vmem:[%s152 + $0x598] sm:$0xff] %v511
                %v513 = vld [vmem:[%s151 + $0xfa0] sm:$0xff]
                %514 = vst [vmem:[%s152 + $0x5a0] sm:$0xff] %v513
                %v515 = vld [vmem:[%s151 + $0xfa8] sm:$0xff]
                %516 = vst [vmem:[%s152 + $0x5a8] sm:$0xff] %v515
                %v517 = vld [vmem:[%s151 + $0xfb0] sm:$0xff]
                %518 = vst [vmem:[%s152 + $0x5b0] sm:$0xff] %v517
                %v519 = vld [vmem:[%s151 + $0xfb8] sm:$0xff]
                %520 = vst [vmem:[%s152 + $0x5b8] sm:$0xff] %v519
                %v521 = vld [vmem:[%s151 + $0xfc0] sm:$0xff]
                %522 = vst [vmem:[%s152 + $0x5c0] sm:$0xff] %v521
                %v523 = vld [vmem:[%s151 + $0xfc8] sm:$0xff]
                %524 = vst [vmem:[%s152 + $0x5c8] sm:$0xff] %v523
                %v525 = vld [vmem:[%s151 + $0xfd0] sm:$0xff]
                %526 = vst [vmem:[%s152 + $0x5d0] sm:$0xff] %v525
                %v527 = vld [vmem:[%s151 + $0xfd8] sm:$0xff]
                %528 = vst [vmem:[%s152 + $0x5d8] sm:$0xff] %v527
                %v529 = vld [vmem:[%s151 + $0xfe0] sm:$0xff]
                %530 = vst [vmem:[%s152 + $0x5e0] sm:$0xff] %v529
                %v531 = vld [vmem:[%s151 + $0xfe8] sm:$0xff]
                %532 = vst [vmem:[%s152 + $0x5e8] sm:$0xff] %v531
                %v533 = vld [vmem:[%s151 + $0xff0] sm:$0xff]
                %534 = vst [vmem:[%s152 + $0x5f0] sm:$0xff] %v533
                %v535 = vld [vmem:[%s151 + $0xff8] sm:$0xff]
                %536 = vst [vmem:[%s152 + $0x5f8] sm:$0xff] %v535
                %v537 = vld [vmem:[%s151 + $0x1200] sm:$0xff]
                %538 = vst [vmem:[%s152 + $0x600] sm:$0xff] %v537
                %v539 = vld [vmem:[%s151 + $0x1208] sm:$0xff]
                %540 = vst [vmem:[%s152 + $0x608] sm:$0xff] %v539
                %v541 = vld [vmem:[%s151 + $0x1210] sm:$0xff]
                %542 = vst [vmem:[%s152 + $0x610] sm:$0xff] %v541
                %v543 = vld [vmem:[%s151 + $0x1218] sm:$0xff]
                %544 = vst [vmem:[%s152 + $0x618] sm:$0xff] %v543
                %v545 = vld [vmem:[%s151 + $0x1220] sm:$0xff]
                %546 = vst [vmem:[%s152 + $0x620] sm:$0xff] %v545
                %v547 = vld [vmem:[%s151 + $0x1228] sm:$0xff]
                %548 = vst [vmem:[%s152 + $0x628] sm:$0xff] %v547
                %v549 = vld [vmem:[%s151 + $0x1230] sm:$0xff]
                %550 = vst [vmem:[%s152 + $0x630] sm:$0xff] %v549
                %v551 = vld [vmem:[%s151 + $0x1238] sm:$0xff]
                %552 = vst [vmem:[%s152 + $0x638] sm:$0xff] %v551
                %v553 = vld [vmem:[%s151 + $0x1240] sm:$0xff]
                %554 = vst [vmem:[%s152 + $0x640] sm:$0xff] %v553
                %v555 = vld [vmem:[%s151 + $0x1248] sm:$0xff]
                %556 = vst [vmem:[%s152 + $0x648] sm:$0xff] %v555
                %v557 = vld [vmem:[%s151 + $0x1250] sm:$0xff]
                %558 = vst [vmem:[%s152 + $0x650] sm:$0xff] %v557
                %v559 = vld [vmem:[%s151 + $0x1258] sm:$0xff]
                %560 = vst [vmem:[%s152 + $0x658] sm:$0xff] %v559
                %v561 = vld [vmem:[%s151 + $0x1260] sm:$0xff]
                %562 = vst [vmem:[%s152 + $0x660] sm:$0xff] %v561
                %v563 = vld [vmem:[%s151 + $0x1268] sm:$0xff]
                %564 = vst [vmem:[%s152 + $0x668] sm:$0xff] %v563
                %v565 = vld [vmem:[%s151 + $0x1270] sm:$0xff]
                %566 = vst [vmem:[%s152 + $0x670] sm:$0xff] %v565
                %v567 = vld [vmem:[%s151 + $0x1278] sm:$0xff]
                %568 = vst [vmem:[%s152 + $0x678] sm:$0xff] %v567
                %v569 = vld [vmem:[%s151 + $0x1280] sm:$0xff]
                %570 = vst [vmem:[%s152 + $0x680] sm:$0xff] %v569
                %v571 = vld [vmem:[%s151 + $0x1288] sm:$0xff]
                %572 = vst [vmem:[%s152 + $0x688] sm:$0xff] %v571
                %v573 = vld [vmem:[%s151 + $0x1290] sm:$0xff]
                %574 = vst [vmem:[%s152 + $0x690] sm:$0xff] %v573
                %v575 = vld [vmem:[%s151 + $0x1298] sm:$0xff]
                %576 = vst [vmem:[%s152 + $0x698] sm:$0xff] %v575
                %v577 = vld [vmem:[%s151 + $0x12a0] sm:$0xff]
                %578 = vst [vmem:[%s152 + $0x6a0] sm:$0xff] %v577
                %v579 = vld [vmem:[%s151 + $0x12a8] sm:$0xff]
                %580 = vst [vmem:[%s152 + $0x6a8] sm:$0xff] %v579
                %v581 = vld [vmem:[%s151 + $0x12b0] sm:$0xff]
                %582 = vst [vmem:[%s152 + $0x6b0] sm:$0xff] %v581
                %v583 = vld [vmem:[%s151 + $0x12b8] sm:$0xff]
                %584 = vst [vmem:[%s152 + $0x6b8] sm:$0xff] %v583
                %v585 = vld [vmem:[%s151 + $0x12c0] sm:$0xff]
                %586 = vst [vmem:[%s152 + $0x6c0] sm:$0xff] %v585
                %v587 = vld [vmem:[%s151 + $0x12c8] sm:$0xff]
                %588 = vst [vmem:[%s152 + $0x6c8] sm:$0xff] %v587
                %v589 = vld [vmem:[%s151 + $0x12d0] sm:$0xff]
                %590 = vst [vmem:[%s152 + $0x6d0] sm:$0xff] %v589
                %v591 = vld [vmem:[%s151 + $0x12d8] sm:$0xff]
                %592 = vst [vmem:[%s152 + $0x6d8] sm:$0xff] %v591
                %v593 = vld [vmem:[%s151 + $0x12e0] sm:$0xff]
                %594 = vst [vmem:[%s152 + $0x6e0] sm:$0xff] %v593
                %v595 = vld [vmem:[%s151 + $0x12e8] sm:$0xff]
                %596 = vst [vmem:[%s152 + $0x6e8] sm:$0xff] %v595
                %v597 = vld [vmem:[%s151 + $0x12f0] sm:$0xff]
                %598 = vst [vmem:[%s152 + $0x6f0] sm:$0xff] %v597
                %v599 = vld [vmem:[%s151 + $0x12f8] sm:$0xff]
                %600 = vst [vmem:[%s152 + $0x6f8] sm:$0xff] %v599
                %v601 = vld [vmem:[%s151 + $0x1500] sm:$0xff]
                %602 = vst [vmem:[%s152 + $0x700] sm:$0xff] %v601
                %v603 = vld [vmem:[%s151 + $0x1508] sm:$0xff]
                %604 = vst [vmem:[%s152 + $0x708] sm:$0xff] %v603
                %v605 = vld [vmem:[%s151 + $0x1510] sm:$0xff]
                %606 = vst [vmem:[%s152 + $0x710] sm:$0xff] %v605
                %v607 = vld [vmem:[%s151 + $0x1518] sm:$0xff]
                %608 = vst [vmem:[%s152 + $0x718] sm:$0xff] %v607
                %v609 = vld [vmem:[%s151 + $0x1520] sm:$0xff]
                %610 = vst [vmem:[%s152 + $0x720] sm:$0xff] %v609
                %v611 = vld [vmem:[%s151 + $0x1528] sm:$0xff]
                %612 = vst [vmem:[%s152 + $0x728] sm:$0xff] %v611
                %v613 = vld [vmem:[%s151 + $0x1530] sm:$0xff]
                %614 = vst [vmem:[%s152 + $0x730] sm:$0xff] %v613
                %v615 = vld [vmem:[%s151 + $0x1538] sm:$0xff]
                %616 = vst [vmem:[%s152 + $0x738] sm:$0xff] %v615
                %v617 = vld [vmem:[%s151 + $0x1540] sm:$0xff]
                %618 = vst [vmem:[%s152 + $0x740] sm:$0xff] %v617
                %v619 = vld [vmem:[%s151 + $0x1548] sm:$0xff]
                %620 = vst [vmem:[%s152 + $0x748] sm:$0xff] %v619
                %v621 = vld [vmem:[%s151 + $0x1550] sm:$0xff]
                %622 = vst [vmem:[%s152 + $0x750] sm:$0xff] %v621
                %v623 = vld [vmem:[%s151 + $0x1558] sm:$0xff]
                %624 = vst [vmem:[%s152 + $0x758] sm:$0xff] %v623
                %v625 = vld [vmem:[%s151 + $0x1560] sm:$0xff]
                %626 = vst [vmem:[%s152 + $0x760] sm:$0xff] %v625
                %v627 = vld [vmem:[%s151 + $0x1568] sm:$0xff]
                %628 = vst [vmem:[%s152 + $0x768] sm:$0xff] %v627
                %v629 = vld [vmem:[%s151 + $0x1570] sm:$0xff]
                %630 = vst [vmem:[%s152 + $0x770] sm:$0xff] %v629
                %v631 = vld [vmem:[%s151 + $0x1578] sm:$0xff]
                %632 = vst [vmem:[%s152 + $0x778] sm:$0xff] %v631
                %v633 = vld [vmem:[%s151 + $0x1580] sm:$0xff]
                %634 = vst [vmem:[%s152 + $0x780] sm:$0xff] %v633
                %v635 = vld [vmem:[%s151 + $0x1588] sm:$0xff]
                %636 = vst [vmem:[%s152 + $0x788] sm:$0xff] %v635
                %v637 = vld [vmem:[%s151 + $0x1590] sm:$0xff]
                %638 = vst [vmem:[%s152 + $0x790] sm:$0xff] %v637
                %v639 = vld [vmem:[%s151 + $0x1598] sm:$0xff]
                %640 = vst [vmem:[%s152 + $0x798] sm:$0xff] %v639
                %v641 = vld [vmem:[%s151 + $0x15a0] sm:$0xff]
                %642 = vst [vmem:[%s152 + $0x7a0] sm:$0xff] %v641
                %v643 = vld [vmem:[%s151 + $0x15a8] sm:$0xff]
                %644 = vst [vmem:[%s152 + $0x7a8] sm:$0xff] %v643
                %v645 = vld [vmem:[%s151 + $0x15b0] sm:$0xff]
                %646 = vst [vmem:[%s152 + $0x7b0] sm:$0xff] %v645
                %v647 = vld [vmem:[%s151 + $0x15b8] sm:$0xff]
                %648 = vst [vmem:[%s152 + $0x7b8] sm:$0xff] %v647
                %v649 = vld [vmem:[%s151 + $0x15c0] sm:$0xff]
                %650 = vst [vmem:[%s152 + $0x7c0] sm:$0xff] %v649
                %v651 = vld [vmem:[%s151 + $0x15c8] sm:$0xff]
                %652 = vst [vmem:[%s152 + $0x7c8] sm:$0xff] %v651
                %v653 = vld [vmem:[%s151 + $0x15d0] sm:$0xff]
                %654 = vst [vmem:[%s152 + $0x7d0] sm:$0xff] %v653
                %v655 = vld [vmem:[%s151 + $0x15d8] sm:$0xff]
                %656 = vst [vmem:[%s152 + $0x7d8] sm:$0xff] %v655
                %v657 = vld [vmem:[%s151 + $0x15e0] sm:$0xff]
                %658 = vst [vmem:[%s152 + $0x7e0] sm:$0xff] %v657
                %v659 = vld [vmem:[%s151 + $0x15e8] sm:$0xff]
                %660 = vst [vmem:[%s152 + $0x7e8] sm:$0xff] %v659
                %v661 = vld [vmem:[%s151 + $0x15f0] sm:$0xff]
                %662 = vst [vmem:[%s152 + $0x7f0] sm:$0xff] %v661
                %v663 = vld [vmem:[%s151 + $0x15f8] sm:$0xff]
                %664 = vst [vmem:[%s152 + $0x7f8] sm:$0xff] %v663
              $region45: #{cnn_forward.3} parent=39 // loop_footer
                %s150 = sadd.s32 1, %s146
              $region46: #{cnn_forward.3} parent=39 // loop_footer_branch
                %145 = sbr.rel target = $region42
              $region47: #{cnn_forward.3} parent=39 // loop_exit
                _
            $region40: #{cnn_forward.3} parent=31 // pred_fallthru
              _
          $region32: #{cnn_forward.3} parent=27 // pred_fallthru
            _
          %1189 = vnop
        $region28: #{cnn_forward.3} parent=23 // pred_fallthru
          _
      $region24: #{cnn_forward.3} parent=5 // pred_fallthru
        _
      %p1190 = scmp.le.s32.totalorder 1, %s9
      %p1191 = scmp.lt.s32.totalorder %s9, 4
      %p1192 = pnand %p1190, %p1191
      %p1193 = pneg %p1192
      // Predicated region
      $region63: #{cnn_forward.3} parent=5 // pred_check
        _
      $region64: #{cnn_forward.3} parent=5 // pred_check_branch
        %1195 = sbr.rel (%p1192) target = $region66
      $region65: #{cnn_forward.3} parent=5 // pred_region
        %s1196 = ssub.s32 %s9, 1
        %s1197 = sand.u32 %s22, 1
        %s1198 = sand.u32 %s22, 1
        %s1199 = smul.addr %s1198, 2048
        %s1200 = scalar_lea.vmem [#allocation2], %s1199
        // Predicated region
        $region67: #{cnn_forward.3} parent=65 // pred_check
          %p1201 = pneg %p35
        $region68: #{cnn_forward.3} parent=65 // pred_check_branch
          %1203 = sbr.rel (%p1201) target = $region70
        $region69: #{cnn_forward.3} parent=65 // pred_region
          _
        $region70: #{cnn_forward.3} parent=65 // pred_fallthru
          _
        %s1204 = sand.u32 %s22, 1
        %s1205 = sand.u32 %s22, 1
        %s1206 = smul.addr %s1205, 2048
        %s1207 = scalar_lea.vmem [#allocation2], %s1206
        %p1208 = pneg %p35
        %p1209 = pneg %p32
        %p1210 = pneg %p56
        %p1211 = pneg %p53
        %p1212 = pneg %p77
        %p1213 = pneg %p74
        %p1214 = pneg %p103
        %p1215 = pneg %p100
        %s1216 = smul.u32 32, %s14
        %p1217 = scmp.lt.s32.totalorder %s1216, 95
        %s1218 = scalar_select %p1217, %s1216, 95
        %s1219 = smul.addr %s1218, 8
        %s1220 = scalar_lea.vmem %s3, %s1219
        %s1221 = smul.u32 32, %s14
        %s1222 = smul.u32 32, %s14
        %p1223 = scmp.lt.s32.totalorder %s1222, 95
        %s1224 = scalar_select %p1223, %s1222, 95
        %s1225 = smul.addr %s1224, 8
        %s1226 = scalar_lea.vmem %s3, %s1225
        %s1227 = smul.u32 32, %s14
        %v1228 = vld [vmem:[%s1] sm:$0xff]
        %v1229 = vld [vmem:[%s1 + $0x8] sm:$0xff]
        %v1230 = vld [vmem:[%s1 + $0x10] sm:$0xff]
        %v1231 = vld [vmem:[%s1 + $0x18] sm:$0x7]
        %v1232 = vld [vmem:[%s2] sm:$0x1]
        %v1233 = vld [vmem:[%s1200] sm:$0xff]
        %v1234 = vld [vmem:[%s1200 + $0x8] sm:$0xff]
        %v1235 = vld [vmem:[%s1200 + $0x10] sm:$0xff]
        %v1236 = vld [vmem:[%s1200 + $0x18] sm:$0xff]
        %v1237 = vld [vmem:[%s1200 + $0x20] sm:$0xff]
        %v1238 = vld [vmem:[%s1200 + $0x28] sm:$0xff]
        %v1239 = vld [vmem:[%s1200 + $0x30] sm:$0xff]
        %v1240 = vld [vmem:[%s1200 + $0x38] sm:$0xff]
        %v1241 = vld [vmem:[%s1200 + $0x40] sm:$0xff]
        %v1242 = vld [vmem:[%s1200 + $0x48] sm:$0xff]
        %v1243 = vld [vmem:[%s1200 + $0x50] sm:$0xff]
        %v1244 = vld [vmem:[%s1200 + $0x58] sm:$0xff]
        %v1245 = vld [vmem:[%s1200 + $0x60] sm:$0xff]
        %v1246 = vld [vmem:[%s1200 + $0x68] sm:$0xff]
        %v1247 = vld [vmem:[%s1200 + $0x70] sm:$0xff]
        %v1248 = vld [vmem:[%s1200 + $0x78] sm:$0xff]
        %v1249 = vld [vmem:[%s1200 + $0x80] sm:$0xff]
        %v1250 = vld [vmem:[%s1200 + $0x88] sm:$0xff]
        %v1251 = vld [vmem:[%s1200 + $0x90] sm:$0xff]
        %v1252 = vld [vmem:[%s1200 + $0x98] sm:$0xff]
        %v1253 = vld [vmem:[%s1200 + $0xa0] sm:$0xff]
        %v1254 = vld [vmem:[%s1200 + $0xa8] sm:$0xff]
        %v1255 = vld [vmem:[%s1200 + $0xb0] sm:$0xff]
        %v1256 = vld [vmem:[%s1200 + $0xb8] sm:$0xff]
        %v1257 = vld [vmem:[%s1200 + $0xc0] sm:$0xff]
        %v1258 = vld [vmem:[%s1200 + $0xc8] sm:$0xff]
        %v1259 = vld [vmem:[%s1200 + $0xd0] sm:$0xff]
        %v1260 = vld [vmem:[%s1200 + $0xd8] sm:$0xff]
        %v1261 = vld [vmem:[%s1200 + $0xe0] sm:$0xff]
        %v1262 = vld [vmem:[%s1200 + $0xe8] sm:$0xff]
        %v1263 = vld [vmem:[%s1200 + $0xf0] sm:$0xff]
        %v1264 = vld [vmem:[%s1200 + $0xf8] sm:$0xff]
        %v1266 = vlaneseq
        %v1267 = vshrl.u32 %v1266, 7
        %v1268 = vsub.s32 0, %v1267
        %v1269 = vrot.slane %v1232, %v1268
        %vm1271 = vcmask 220160
        %v1273 = vsel %vm1271, %v1233, 0
        %v1276 = vsel %vm1271, %v1234, 0
        %v1279 = vsel %vm1271, %v1235, 0
        %v1282 = vsel %vm1271, %v1236, 0
        %v1285 = vsel %vm1271, %v1237, 0
        %v1288 = vsel %vm1271, %v1238, 0
        %v1291 = vsel %vm1271, %v1239, 0
        %v1294 = vsel %vm1271, %v1240, 0
        %v1297 = vsel %vm1271, %v1241, 0
        %v1300 = vsel %vm1271, %v1242, 0
        %v1303 = vsel %vm1271, %v1243, 0
        %v1306 = vsel %vm1271, %v1244, 0
        %v1309 = vsel %vm1271, %v1245, 0
        %v1312 = vsel %vm1271, %v1246, 0
        %v1315 = vsel %vm1271, %v1247, 0
        %v1318 = vsel %vm1271, %v1248, 0
        %v1321 = vsel %vm1271, %v1249, 0
        %v1324 = vsel %vm1271, %v1250, 0
        %v1327 = vsel %vm1271, %v1251, 0
        %v1330 = vsel %vm1271, %v1252, 0
        %v1333 = vsel %vm1271, %v1253, 0
        %v1336 = vsel %vm1271, %v1254, 0
        %v1339 = vsel %vm1271, %v1255, 0
        %v1342 = vsel %vm1271, %v1256, 0
        %v1345 = vsel %vm1271, %v1257, 0
        %v1348 = vsel %vm1271, %v1258, 0
        %v1351 = vsel %vm1271, %v1259, 0
        %v1354 = vsel %vm1271, %v1260, 0
        %v1357 = vsel %vm1271, %v1261, 0
        %v1360 = vsel %vm1271, %v1262, 0
        %v1363 = vsel %vm1271, %v1263, 0
        %v1366 = vsel %vm1271, %v1264, 0
        %vm1368 = vcmask 1042432
        %v1370 = vsel %vm1368, %v1231, 0
        %1372 = vmatprep.subr.mxu0 0.0
        %1373 = vmatpush1.msra.mxu0 %v1228
        %1374 = vmatprep.subr.mxu0 0.0
        %1375 = vmatpush1.msra.mxu0 %v1229
        %1376 = vmatprep.subr.mxu0 0.0
        %1377 = vmatpush1.msra.mxu0 %v1230
        %1378 = vmatprep.subr.mxu0 0.0
        %1379 = vmatpush1.msra.mxu0 %v1370
        %1380 = vmatprep.subr.mxu0 0.0
        %1381 = vmatpush1.msra.mxu0 0.0
        %1382 = vmatprep.subr.mxu0 0.0
        %1383 = vmatpush1.msra.mxu0 0.0
        %1384 = vmatprep.subr.mxu0 0.0
        %1385 = vmatpush1.msra.mxu0 0.0
        %1386 = vmatprep.subr.mxu0 0.0
        %1387 = vmatpush1.msra.mxu0 0.0
        %1388 = vmatprep.subr.mxu0 0.0
        %1389 = vmatpush1.msra.mxu0 0.0
        %1390 = vmatprep.subr.mxu0 0.0
        %1391 = vmatpush1.msra.mxu0 0.0
        %1392 = vmatprep.subr.mxu0 0.0
        %1393 = vmatpush1.msra.mxu0 0.0
        %1394 = vmatprep.subr.mxu0 0.0
        %1395 = vmatpush1.msra.mxu0 0.0
        %1396 = vmatprep.subr.mxu0 0.0
        %1397 = vmatpush1.msra.mxu0 0.0
        %1398 = vmatprep.subr.mxu0 0.0
        %1399 = vmatpush1.msra.mxu0 0.0
        %1400 = vmatprep.subr.mxu0 0.0
        %1401 = vmatpush1.msra.mxu0 0.0
        %1402 = vmatprep.subr.mxu0 0.0
        %1403 = vmatpush1.msra.mxu0 0.0
        %1404 = vmatprep.subr.mxu0 0.0
        %1405 = vmatpush1.msra.mxu0 0.0
        %1406 = vmatprep.subr.mxu0 0.0
        %1407 = vmatpush1.msra.mxu0 0.0
        %1408 = vmatprep.subr.mxu0 0.0
        %1409 = vmatpush1.msra.mxu0 0.0
        %1410 = vmatprep.subr.mxu0 0.0
        %1411 = vmatpush1.msra.mxu0 0.0
        %1412 = vmatprep.subr.mxu0 0.0
        %1413 = vmatpush1.msra.mxu0 0.0
        %1414 = vmatprep.subr.mxu0 0.0
        %1415 = vmatpush1.msra.mxu0 0.0
        %1416 = vmatprep.subr.mxu0 0.0
        %1417 = vmatpush1.msra.mxu0 0.0
        %1418 = vmatprep.subr.mxu0 0.0
        %1419 = vmatpush1.msra.mxu0 0.0
        %1420 = vmatprep.subr.mxu0 0.0
        %1421 = vmatpush1.msra.mxu0 0.0
        %1422 = vmatprep.subr.mxu0 0.0
        %1423 = vmatpush1.msra.mxu0 0.0
        %1424 = vmatprep.subr.mxu0 0.0
        %1425 = vmatpush1.msra.mxu0 0.0
        %1426 = vmatprep.subr.mxu0 0.0
        %1427 = vmatpush1.msra.mxu0 0.0
        %1428 = vmatprep.subr.mxu0 0.0
        %1429 = vmatpush1.msra.mxu0 0.0
        %1430 = vmatprep.subr.mxu0 0.0
        %1431 = vmatpush1.msra.mxu0 0.0
        %1432 = vmatprep.subr.mxu0 0.0
        %1433 = vmatpush1.msra.mxu0 0.0
        %1434 = vmatprep.subr.mxu0 0.0
        %1435 = vmatpush1.msra.mxu0 0.0
        %1436 = vmatprep.mubr.f32.mxu0 0.0
        %1437 = vmatmul.mubr.f32.gmra.mrb[0].mxu0 %v1273
        %v1438 = vpop.f32.mrb[0].mxu0
        %v1439 = vadd.f32 %v1269, %v1438
        %v1440 = vpop.f32.mrb[0].mxu0
        %1441 = vmatprep.mubr.f32.mxu0 0.0
        %1442 = vmatmul.mubr.f32.gmra.mrb[0].mxu0 %v1276
        %v1443 = vpop.f32.mrb[0].mxu0
        %v1444 = vadd.f32 %v1269, %v1443
        %v1445 = vpop.f32.mrb[0].mxu0
        %1446 = vmatprep.mubr.f32.mxu0 0.0
        %1447 = vmatmul.mubr.f32.gmra.mrb[0].mxu0 %v1279
        %v1448 = vpop.f32.mrb[0].mxu0
        %v1449 = vadd.f32 %v1269, %v1448
        %v1450 = vpop.f32.mrb[0].mxu0
        %1451 = vmatprep.mubr.f32.mxu0 0.0
        %1452 = vmatmul.mubr.f32.gmra.mrb[0].mxu0 %v1282
        %v1453 = vpop.f32.mrb[0].mxu0
        %v1454 = vadd.f32 %v1269, %v1453
        %v1455 = vpop.f32.mrb[0].mxu0
        %1456 = vmatprep.mubr.f32.mxu0 0.0
        %1457 = vmatmul.mubr.f32.gmra.mrb[0].mxu0 %v1285
        %v1458 = vpop.f32.mrb[0].mxu0
        %v1459 = vadd.f32 %v1269, %v1458
        %v1460 = vpop.f32.mrb[0].mxu0
        %1461 = vmatprep.mubr.f32.mxu0 0.0
        %1462 = vmatmul.mubr.f32.gmra.mrb[0].mxu0 %v1288
        %v1463 = vpop.f32.mrb[0].mxu0
        %v1464 = vadd.f32 %v1269, %v1463
        %v1465 = vpop.f32.mrb[0].mxu0
        %1466 = vmatprep.mubr.f32.mxu0 0.0
        %1467 = vmatmul.mubr.f32.gmra.mrb[0].mxu0 %v1291
        %v1468 = vpop.f32.mrb[0].mxu0
        %v1469 = vadd.f32 %v1269, %v1468
        %v1470 = vpop.f32.mrb[0].mxu0
        %1471 = vmatprep.mubr.f32.mxu0 0.0
        %1472 = vmatmul.mubr.f32.gmra.mrb[0].mxu0 %v1294
        %v1473 = vpop.f32.mrb[0].mxu0
        %v1474 = vadd.f32 %v1269, %v1473
        %v1475 = vpop.f32.mrb[0].mxu0
        %1476 = vmatprep.mubr.f32.mxu0 0.0
        %1477 = vmatmul.mubr.f32.gmra.mrb[0].mxu0 %v1297
        %v1478 = vpop.f32.mrb[0].mxu0
        %v1479 = vadd.f32 %v1269, %v1478
        %v1480 = vpop.f32.mrb[0].mxu0
        %1481 = vmatprep.mubr.f32.mxu0 0.0
        %1482 = vmatmul.mubr.f32.gmra.mrb[0].mxu0 %v1300
        %v1483 = vpop.f32.mrb[0].mxu0
        %v1484 = vadd.f32 %v1269, %v1483
        %v1485 = vpop.f32.mrb[0].mxu0
        %1486 = vmatprep.mubr.f32.mxu0 0.0
        %1487 = vmatmul.mubr.f32.gmra.mrb[0].mxu0 %v1303
        %v1488 = vpop.f32.mrb[0].mxu0
        %v1489 = vadd.f32 %v1269, %v1488
        %v1490 = vpop.f32.mrb[0].mxu0
        %1491 = vmatprep.mubr.f32.mxu0 0.0
        %1492 = vmatmul.mubr.f32.gmra.mrb[0].mxu0 %v1306
        %v1493 = vpop.f32.mrb[0].mxu0
        %v1494 = vadd.f32 %v1269, %v1493
        %v1495 = vpop.f32.mrb[0].mxu0
        %1496 = vmatprep.mubr.f32.mxu0 0.0
        %1497 = vmatmul.mubr.f32.gmra.mrb[0].mxu0 %v1309
        %v1498 = vpop.f32.mrb[0].mxu0
        %v1499 = vadd.f32 %v1269, %v1498
        %v1500 = vpop.f32.mrb[0].mxu0
        %1501 = vmatprep.mubr.f32.mxu0 0.0
        %1502 = vmatmul.mubr.f32.gmra.mrb[0].mxu0 %v1312
        %v1503 = vpop.f32.mrb[0].mxu0
        %v1504 = vadd.f32 %v1269, %v1503
        %v1505 = vpop.f32.mrb[0].mxu0
        %1506 = vmatprep.mubr.f32.mxu0 0.0
        %1507 = vmatmul.mubr.f32.gmra.mrb[0].mxu0 %v1315
        %v1508 = vpop.f32.mrb[0].mxu0
        %v1509 = vadd.f32 %v1269, %v1508
        %v1510 = vpop.f32.mrb[0].mxu0
        %1511 = vmatprep.mubr.f32.mxu0 0.0
        %1512 = vmatmul.mubr.f32.gmra.mrb[0].mxu0 %v1318
        %v1513 = vpop.f32.mrb[0].mxu0
        %v1514 = vadd.f32 %v1269, %v1513
        %v1515 = vpop.f32.mrb[0].mxu0
        %1516 = vmatprep.mubr.f32.mxu0 0.0
        %1517 = vmatmul.mubr.f32.gmra.mrb[0].mxu0 %v1321
        %v1518 = vpop.f32.mrb[0].mxu0
        %v1519 = vadd.f32 %v1269, %v1518
        %v1520 = vpop.f32.mrb[0].mxu0
        %1521 = vmatprep.mubr.f32.mxu0 0.0
        %1522 = vmatmul.mubr.f32.gmra.mrb[0].mxu0 %v1324
        %v1523 = vpop.f32.mrb[0].mxu0
        %v1524 = vadd.f32 %v1269, %v1523
        %v1525 = vpop.f32.mrb[0].mxu0
        %1526 = vmatprep.mubr.f32.mxu0 0.0
        %1527 = vmatmul.mubr.f32.gmra.mrb[0].mxu0 %v1327
        %v1528 = vpop.f32.mrb[0].mxu0
        %v1529 = vadd.f32 %v1269, %v1528
        %v1530 = vpop.f32.mrb[0].mxu0
        %1531 = vmatprep.mubr.f32.mxu0 0.0
        %1532 = vmatmul.mubr.f32.gmra.mrb[0].mxu0 %v1330
        %v1533 = vpop.f32.mrb[0].mxu0
        %v1534 = vadd.f32 %v1269, %v1533
        %v1535 = vpop.f32.mrb[0].mxu0
        %1536 = vmatprep.mubr.f32.mxu0 0.0
        %1537 = vmatmul.mubr.f32.gmra.mrb[0].mxu0 %v1333
        %v1538 = vpop.f32.mrb[0].mxu0
        %v1539 = vadd.f32 %v1269, %v1538
        %v1540 = vpop.f32.mrb[0].mxu0
        %1541 = vmatprep.mubr.f32.mxu0 0.0
        %1542 = vmatmul.mubr.f32.gmra.mrb[0].mxu0 %v1336
        %v1543 = vpop.f32.mrb[0].mxu0
        %v1544 = vadd.f32 %v1269, %v1543
        %v1545 = vpop.f32.mrb[0].mxu0
        %1546 = vmatprep.mubr.f32.mxu0 0.0
        %1547 = vmatmul.mubr.f32.gmra.mrb[0].mxu0 %v1339
        %v1548 = vpop.f32.mrb[0].mxu0
        %v1549 = vadd.f32 %v1269, %v1548
        %v1550 = vpop.f32.mrb[0].mxu0
        %1551 = vmatprep.mubr.f32.mxu0 0.0
        %1552 = vmatmul.mubr.f32.gmra.mrb[0].mxu0 %v1342
        %v1553 = vpop.f32.mrb[0].mxu0
        %v1554 = vadd.f32 %v1269, %v1553
        %v1555 = vpop.f32.mrb[0].mxu0
        %1556 = vmatprep.mubr.f32.mxu0 0.0
        %1557 = vmatmul.mubr.f32.gmra.mrb[0].mxu0 %v1345
        %v1558 = vpop.f32.mrb[0].mxu0
        %v1559 = vadd.f32 %v1269, %v1558
        %v1560 = vpop.f32.mrb[0].mxu0
        %1561 = vmatprep.mubr.f32.mxu0 0.0
        %1562 = vmatmul.mubr.f32.gmra.mrb[0].mxu0 %v1348
        %v1563 = vpop.f32.mrb[0].mxu0
        %v1564 = vadd.f32 %v1269, %v1563
        %v1565 = vpop.f32.mrb[0].mxu0
        %1566 = vmatprep.mubr.f32.mxu0 0.0
        %1567 = vmatmul.mubr.f32.gmra.mrb[0].mxu0 %v1351
        %v1568 = vpop.f32.mrb[0].mxu0
        %v1569 = vadd.f32 %v1269, %v1568
        %v1570 = vpop.f32.mrb[0].mxu0
        %1571 = vmatprep.mubr.f32.mxu0 0.0
        %1572 = vmatmul.mubr.f32.gmra.mrb[0].mxu0 %v1354
        %v1573 = vpop.f32.mrb[0].mxu0
        %v1574 = vadd.f32 %v1269, %v1573
        %v1575 = vpop.f32.mrb[0].mxu0
        %1576 = vmatprep.mubr.f32.mxu0 0.0
        %1577 = vmatmul.mubr.f32.gmra.mrb[0].mxu0 %v1357
        %v1578 = vpop.f32.mrb[0].mxu0
        %v1579 = vadd.f32 %v1269, %v1578
        %v1580 = vpop.f32.mrb[0].mxu0
        %1581 = vmatprep.mubr.f32.mxu0 0.0
        %1582 = vmatmul.mubr.f32.gmra.mrb[0].mxu0 %v1360
        %v1583 = vpop.f32.mrb[0].mxu0
        %v1584 = vadd.f32 %v1269, %v1583
        %v1585 = vpop.f32.mrb[0].mxu0
        %1586 = vmatprep.mubr.f32.mxu0 0.0
        %1587 = vmatmul.mubr.f32.gmra.mrb[0].mxu0 %v1363
        %v1588 = vpop.f32.mrb[0].mxu0
        %v1589 = vadd.f32 %v1269, %v1588
        %v1590 = vpop.f32.mrb[0].mxu0
        %1591 = vmatprep.mubr.f32.mxu0 0.0
        %1592 = vmatmul.mubr.f32.gmra.mrb[0].mxu0 %v1366
        %v1593 = vpop.f32.mrb[0].mxu0
        %v1594 = vadd.f32 %v1269, %v1593
        %v1595 = vpop.f32.mrb[0].mxu0
        %1596 = vdwg.mxu0
        %vm1597 = vcmp.ge.f32.partialorder %v1439, 0.0
        %vm1598 = vcmp.ge.f32.partialorder %v1444, 0.0
        %vm1599 = vcmp.ge.f32.partialorder %v1449, 0.0
        %vm1600 = vcmp.ge.f32.partialorder %v1454, 0.0
        %vm1601 = vcmp.ge.f32.partialorder %v1459, 0.0
        %vm1602 = vcmp.ge.f32.partialorder %v1464, 0.0
        %vm1603 = vcmp.ge.f32.partialorder %v1469, 0.0
        %vm1604 = vcmp.ge.f32.partialorder %v1474, 0.0
        %vm1605 = vcmp.ge.f32.partialorder %v1479, 0.0
        %vm1606 = vcmp.ge.f32.partialorder %v1484, 0.0
        %vm1607 = vcmp.ge.f32.partialorder %v1489, 0.0
        %vm1608 = vcmp.ge.f32.partialorder %v1494, 0.0
        %vm1609 = vcmp.ge.f32.partialorder %v1499, 0.0
        %vm1610 = vcmp.ge.f32.partialorder %v1504, 0.0
        %vm1611 = vcmp.ge.f32.partialorder %v1509, 0.0
        %vm1612 = vcmp.ge.f32.partialorder %v1514, 0.0
        %vm1613 = vcmp.ge.f32.partialorder %v1519, 0.0
        %vm1614 = vcmp.ge.f32.partialorder %v1524, 0.0
        %vm1615 = vcmp.ge.f32.partialorder %v1529, 0.0
        %vm1616 = vcmp.ge.f32.partialorder %v1534, 0.0
        %vm1617 = vcmp.ge.f32.partialorder %v1539, 0.0
        %vm1618 = vcmp.ge.f32.partialorder %v1544, 0.0
        %vm1619 = vcmp.ge.f32.partialorder %v1549, 0.0
        %vm1620 = vcmp.ge.f32.partialorder %v1554, 0.0
        %vm1621 = vcmp.ge.f32.partialorder %v1559, 0.0
        %vm1622 = vcmp.ge.f32.partialorder %v1564, 0.0
        %vm1623 = vcmp.ge.f32.partialorder %v1569, 0.0
        %vm1624 = vcmp.ge.f32.partialorder %v1574, 0.0
        %vm1625 = vcmp.ge.f32.partialorder %v1579, 0.0
        %vm1626 = vcmp.ge.f32.partialorder %v1584, 0.0
        %vm1627 = vcmp.ge.f32.partialorder %v1589, 0.0
        %vm1628 = vcmp.ge.f32.partialorder %v1594, 0.0
        %v1629 = vmul.f32 %v1439, 0.01
        %v1630 = vmul.f32 %v1444, 0.01
        %v1631 = vmul.f32 %v1449, 0.01
        %v1632 = vmul.f32 %v1454, 0.01
        %v1633 = vmul.f32 %v1459, 0.01
        %v1634 = vmul.f32 %v1464, 0.01
        %v1635 = vmul.f32 %v1469, 0.01
        %v1636 = vmul.f32 %v1474, 0.01
        %v1637 = vmul.f32 %v1479, 0.01
        %v1638 = vmul.f32 %v1484, 0.01
        %v1639 = vmul.f32 %v1489, 0.01
        %v1640 = vmul.f32 %v1494, 0.01
        %v1641 = vmul.f32 %v1499, 0.01
        %v1642 = vmul.f32 %v1504, 0.01
        %v1643 = vmul.f32 %v1509, 0.01
        %v1644 = vmul.f32 %v1514, 0.01
        %v1645 = vmul.f32 %v1519, 0.01
        %v1646 = vmul.f32 %v1524, 0.01
        %v1647 = vmul.f32 %v1529, 0.01
        %v1648 = vmul.f32 %v1534, 0.01
        %v1649 = vmul.f32 %v1539, 0.01
        %v1650 = vmul.f32 %v1544, 0.01
        %v1651 = vmul.f32 %v1549, 0.01
        %v1652 = vmul.f32 %v1554, 0.01
        %v1653 = vmul.f32 %v1559, 0.01
        %v1654 = vmul.f32 %v1564, 0.01
        %v1655 = vmul.f32 %v1569, 0.01
        %v1656 = vmul.f32 %v1574, 0.01
        %v1657 = vmul.f32 %v1579, 0.01
        %v1658 = vmul.f32 %v1584, 0.01
        %v1659 = vmul.f32 %v1589, 0.01
        %v1660 = vmul.f32 %v1594, 0.01
        %v1661 = vsel %vm1597, %v1439, %v1629
        %v1662 = vsel %vm1598, %v1444, %v1630
        %v1663 = vsel %vm1599, %v1449, %v1631
        %v1664 = vsel %vm1600, %v1454, %v1632
        %v1665 = vsel %vm1601, %v1459, %v1633
        %v1666 = vsel %vm1602, %v1464, %v1634
        %v1667 = vsel %vm1603, %v1469, %v1635
        %v1668 = vsel %vm1604, %v1474, %v1636
        %v1669 = vsel %vm1605, %v1479, %v1637
        %v1670 = vsel %vm1606, %v1484, %v1638
        %v1671 = vsel %vm1607, %v1489, %v1639
        %v1672 = vsel %vm1608, %v1494, %v1640
        %v1673 = vsel %vm1609, %v1499, %v1641
        %v1674 = vsel %vm1610, %v1504, %v1642
        %v1675 = vsel %vm1611, %v1509, %v1643
        %v1676 = vsel %vm1612, %v1514, %v1644
        %v1677 = vsel %vm1613, %v1519, %v1645
        %v1678 = vsel %vm1614, %v1524, %v1646
        %v1679 = vsel %vm1615, %v1529, %v1647
        %v1680 = vsel %vm1616, %v1534, %v1648
        %v1681 = vsel %vm1617, %v1539, %v1649
        %v1682 = vsel %vm1618, %v1544, %v1650
        %v1683 = vsel %vm1619, %v1549, %v1651
        %v1684 = vsel %vm1620, %v1554, %v1652
        %v1685 = vsel %vm1621, %v1559, %v1653
        %v1686 = vsel %vm1622, %v1564, %v1654
        %v1687 = vsel %vm1623, %v1569, %v1655
        %v1688 = vsel %vm1624, %v1574, %v1656
        %v1689 = vsel %vm1625, %v1579, %v1657
        %v1690 = vsel %vm1626, %v1584, %v1658
        %v1691 = vsel %vm1627, %v1589, %v1659
        %v1692 = vsel %vm1628, %v1594, %v1660
        %s1693 = scalar_lea.vmem %s1200, 256 [#allocation2]
        %v1694 = vld [vmem:[%s1693] sm:$0xff]
        %v1695 = vld [vmem:[%s1693 + $0x8] sm:$0xff]
        %v1696 = vld [vmem:[%s1693 + $0x10] sm:$0xff]
        %v1697 = vld [vmem:[%s1693 + $0x18] sm:$0xff]
        %v1698 = vld [vmem:[%s1693 + $0x20] sm:$0xff]
        %v1699 = vld [vmem:[%s1693 + $0x28] sm:$0xff]
        %v1700 = vld [vmem:[%s1693 + $0x30] sm:$0xff]
        %v1701 = vld [vmem:[%s1693 + $0x38] sm:$0xff]
        %v1702 = vld [vmem:[%s1693 + $0x40] sm:$0xff]
        %v1703 = vld [vmem:[%s1693 + $0x48] sm:$0xff]
        %v1704 = vld [vmem:[%s1693 + $0x50] sm:$0xff]
        %v1705 = vld [vmem:[%s1693 + $0x58] sm:$0xff]
        %v1706 = vld [vmem:[%s1693 + $0x60] sm:$0xff]
        %v1707 = vld [vmem:[%s1693 + $0x68] sm:$0xff]
        %v1708 = vld [vmem:[%s1693 + $0x70] sm:$0xff]
        %v1709 = vld [vmem:[%s1693 + $0x78] sm:$0xff]
        %v1710 = vld [vmem:[%s1693 + $0x80] sm:$0xff]
        %v1711 = vld [vmem:[%s1693 + $0x88] sm:$0xff]
        %v1712 = vld [vmem:[%s1693 + $0x90] sm:$0xff]
        %v1713 = vld [vmem:[%s1693 + $0x98] sm:$0xff]
        %v1714 = vld [vmem:[%s1693 + $0xa0] sm:$0xff]
        %v1715 = vld [vmem:[%s1693 + $0xa8] sm:$0xff]
        %v1716 = vld [vmem:[%s1693 + $0xb0] sm:$0xff]
        %v1717 = vld [vmem:[%s1693 + $0xb8] sm:$0xff]
        %v1718 = vld [vmem:[%s1693 + $0xc0] sm:$0xff]
        %v1719 = vld [vmem:[%s1693 + $0xc8] sm:$0xff]
        %v1720 = vld [vmem:[%s1693 + $0xd0] sm:$0xff]
        %v1721 = vld [vmem:[%s1693 + $0xd8] sm:$0xff]
        %v1722 = vld [vmem:[%s1693 + $0xe0] sm:$0xff]
        %v1723 = vld [vmem:[%s1693 + $0xe8] sm:$0xff]
        %v1724 = vld [vmem:[%s1693 + $0xf0] sm:$0xff]
        %v1725 = vld [vmem:[%s1693 + $0xf8] sm:$0xff]
        %v1727 = vsel %vm1271, %v1694, 0
        %v1730 = vsel %vm1271, %v1695, 0
        %v1733 = vsel %vm1271, %v1696, 0
        %v1736 = vsel %vm1271, %v1697, 0
        %v1739 = vsel %vm1271, %v1698, 0
        %v1742 = vsel %vm1271, %v1699, 0
        %v1745 = vsel %vm1271, %v1700, 0
        %v1748 = vsel %vm1271, %v1701, 0
        %v1751 = vsel %vm1271, %v1702, 0
        %v1754 = vsel %vm1271, %v1703, 0
        %v1757 = vsel %vm1271, %v1704, 0
        %v1760 = vsel %vm1271, %v1705, 0
        %v1763 = vsel %vm1271, %v1706, 0
        %v1766 = vsel %vm1271, %v1707, 0
        %v1769 = vsel %vm1271, %v1708, 0
        %v1772 = vsel %vm1271, %v1709, 0
        %v1775 = vsel %vm1271, %v1710, 0
        %v1778 = vsel %vm1271, %v1711, 0
        %v1781 = vsel %vm1271, %v1712, 0
        %v1784 = vsel %vm1271, %v1713, 0
        %v1787 = vsel %vm1271, %v1714, 0
        %v1790 = vsel %vm1271, %v1715, 0
        %v1793 = vsel %vm1271, %v1716, 0
        %v1796 = vsel %vm1271, %v1717, 0
        %v1799 = vsel %vm1271, %v1718, 0
        %v1802 = vsel %vm1271, %v1719, 0
        %v1805 = vsel %vm1271, %v1720, 0
        %v1808 = vsel %vm1271, %v1721, 0
        %v1811 = vsel %vm1271, %v1722, 0
        %v1814 = vsel %vm1271, %v1723, 0
        %v1817 = vsel %vm1271, %v1724, 0
        %v1820 = vsel %vm1271, %v1725, 0
        %1822 = vmatprep.subr.mxu0 0.0
        %1823 = vmatpush1.msra.mxu0 %v1228
        %1824 = vmatprep.subr.mxu0 0.0
        %1825 = vmatpush1.msra.mxu0 %v1229
        %1826 = vmatprep.subr.mxu0 0.0
        %1827 = vmatpush1.msra.mxu0 %v1230
        %1828 = vmatprep.subr.mxu0 0.0
        %1829 = vmatpush1.msra.mxu0 %v1370
        %1830 = vmatprep.subr.mxu0 0.0
        %1831 = vmatpush1.msra.mxu0 0.0
        %1832 = vmatprep.subr.mxu0 0.0
        %1833 = vmatpush1.msra.mxu0 0.0
        %1834 = vmatprep.subr.mxu0 0.0
        %1835 = vmatpush1.msra.mxu0 0.0
        %1836 = vmatprep.subr.mxu0 0.0
        %1837 = vmatpush1.msra.mxu0 0.0
        %1838 = vmatprep.subr.mxu0 0.0
        %1839 = vmatpush1.msra.mxu0 0.0
        %1840 = vmatprep.subr.mxu0 0.0
        %1841 = vmatpush1.msra.mxu0 0.0
        %1842 = vmatprep.subr.mxu0 0.0
        %1843 = vmatpush1.msra.mxu0 0.0
        %1844 = vmatprep.subr.mxu0 0.0
        %1845 = vmatpush1.msra.mxu0 0.0
        %1846 = vmatprep.subr.mxu0 0.0
        %1847 = vmatpush1.msra.mxu0 0.0
        %1848 = vmatprep.subr.mxu0 0.0
        %1849 = vmatpush1.msra.mxu0 0.0
        %1850 = vmatprep.subr.mxu0 0.0
        %1851 = vmatpush1.msra.mxu0 0.0
        %1852 = vmatprep.subr.mxu0 0.0
        %1853 = vmatpush1.msra.mxu0 0.0
        %1854 = vmatprep.subr.mxu0 0.0
        %1855 = vmatpush1.msra.mxu0 0.0
        %1856 = vmatprep.subr.mxu0 0.0
        %1857 = vmatpush1.msra.mxu0 0.0
        %1858 = vmatprep.subr.mxu0 0.0
        %1859 = vmatpush1.msra.mxu0 0.0
        %1860 = vmatprep.subr.mxu0 0.0
        %1861 = vmatpush1.msra.mxu0 0.0
        %1862 = vmatprep.subr.mxu0 0.0
        %1863 = vmatpush1.msra.mxu0 0.0
        %1864 = vmatprep.subr.mxu0 0.0
        %1865 = vmatpush1.msra.mxu0 0.0
        %1866 = vmatprep.subr.mxu0 0.0
        %1867 = vmatpush1.msra.mxu0 0.0
        %1868 = vmatprep.subr.mxu0 0.0
        %1869 = vmatpush1.msra.mxu0 0.0
        %1870 = vmatprep.subr.mxu0 0.0
        %1871 = vmatpush1.msra.mxu0 0.0
        %1872 = vmatprep.subr.mxu0 0.0
        %1873 = vmatpush1.msra.mxu0 0.0
        %1874 = vmatprep.subr.mxu0 0.0
        %1875 = vmatpush1.msra.mxu0 0.0
        %1876 = vmatprep.subr.mxu0 0.0
        %1877 = vmatpush1.msra.mxu0 0.0
        %1878 = vmatprep.subr.mxu0 0.0
        %1879 = vmatpush1.msra.mxu0 0.0
        %1880 = vmatprep.subr.mxu0 0.0
        %1881 = vmatpush1.msra.mxu0 0.0
        %1882 = vmatprep.subr.mxu0 0.0
        %1883 = vmatpush1.msra.mxu0 0.0
        %1884 = vmatprep.subr.mxu0 0.0
        %1885 = vmatpush1.msra.mxu0 0.0
        %1886 = vmatprep.mubr.f32.mxu0 0.0
        %1887 = vmatmul.mubr.f32.gmra.mrb[0].mxu0 %v1727
        %v1888 = vpop.f32.mrb[0].mxu0
        %v1889 = vadd.f32 %v1269, %v1888
        %v1890 = vpop.f32.mrb[0].mxu0
        %1891 = vmatprep.mubr.f32.mxu0 0.0
        %1892 = vmatmul.mubr.f32.gmra.mrb[0].mxu0 %v1730
        %v1893 = vpop.f32.mrb[0].mxu0
        %v1894 = vadd.f32 %v1269, %v1893
        %v1895 = vpop.f32.mrb[0].mxu0
        %1896 = vmatprep.mubr.f32.mxu0 0.0
        %1897 = vmatmul.mubr.f32.gmra.mrb[0].mxu0 %v1733
        %v1898 = vpop.f32.mrb[0].mxu0
        %v1899 = vadd.f32 %v1269, %v1898
        %v1900 = vpop.f32.mrb[0].mxu0
        %1901 = vmatprep.mubr.f32.mxu0 0.0
        %1902 = vmatmul.mubr.f32.gmra.mrb[0].mxu0 %v1736
        %v1903 = vpop.f32.mrb[0].mxu0
        %v1904 = vadd.f32 %v1269, %v1903
        %v1905 = vpop.f32.mrb[0].mxu0
        %1906 = vmatprep.mubr.f32.mxu0 0.0
        %1907 = vmatmul.mubr.f32.gmra.mrb[0].mxu0 %v1739
        %v1908 = vpop.f32.mrb[0].mxu0
        %v1909 = vadd.f32 %v1269, %v1908
        %v1910 = vpop.f32.mrb[0].mxu0
        %1911 = vmatprep.mubr.f32.mxu0 0.0
        %1912 = vmatmul.mubr.f32.gmra.mrb[0].mxu0 %v1742
        %v1913 = vpop.f32.mrb[0].mxu0
        %v1914 = vadd.f32 %v1269, %v1913
        %v1915 = vpop.f32.mrb[0].mxu0
        %1916 = vmatprep.mubr.f32.mxu0 0.0
        %1917 = vmatmul.mubr.f32.gmra.mrb[0].mxu0 %v1745
        %v1918 = vpop.f32.mrb[0].mxu0
        %v1919 = vadd.f32 %v1269, %v1918
        %v1920 = vpop.f32.mrb[0].mxu0
        %1921 = vmatprep.mubr.f32.mxu0 0.0
        %1922 = vmatmul.mubr.f32.gmra.mrb[0].mxu0 %v1748
        %v1923 = vpop.f32.mrb[0].mxu0
        %v1924 = vadd.f32 %v1269, %v1923
        %v1925 = vpop.f32.mrb[0].mxu0
        %1926 = vmatprep.mubr.f32.mxu0 0.0
        %1927 = vmatmul.mubr.f32.gmra.mrb[0].mxu0 %v1751
        %v1928 = vpop.f32.mrb[0].mxu0
        %v1929 = vadd.f32 %v1269, %v1928
        %v1930 = vpop.f32.mrb[0].mxu0
        %1931 = vmatprep.mubr.f32.mxu0 0.0
        %1932 = vmatmul.mubr.f32.gmra.mrb[0].mxu0 %v1754
        %v1933 = vpop.f32.mrb[0].mxu0
        %v1934 = vadd.f32 %v1269, %v1933
        %v1935 = vpop.f32.mrb[0].mxu0
        %1936 = vmatprep.mubr.f32.mxu0 0.0
        %1937 = vmatmul.mubr.f32.gmra.mrb[0].mxu0 %v1757
        %v1938 = vpop.f32.mrb[0].mxu0
        %v1939 = vadd.f32 %v1269, %v1938
        %v1940 = vpop.f32.mrb[0].mxu0
        %1941 = vmatprep.mubr.f32.mxu0 0.0
        %1942 = vmatmul.mubr.f32.gmra.mrb[0].mxu0 %v1760
        %v1943 = vpop.f32.mrb[0].mxu0
        %v1944 = vadd.f32 %v1269, %v1943
        %v1945 = vpop.f32.mrb[0].mxu0
        %1946 = vmatprep.mubr.f32.mxu0 0.0
        %1947 = vmatmul.mubr.f32.gmra.mrb[0].mxu0 %v1763
        %v1948 = vpop.f32.mrb[0].mxu0
        %v1949 = vadd.f32 %v1269, %v1948
        %v1950 = vpop.f32.mrb[0].mxu0
        %1951 = vmatprep.mubr.f32.mxu0 0.0
        %1952 = vmatmul.mubr.f32.gmra.mrb[0].mxu0 %v1766
        %v1953 = vpop.f32.mrb[0].mxu0
        %v1954 = vadd.f32 %v1269, %v1953
        %v1955 = vpop.f32.mrb[0].mxu0
        %1956 = vmatprep.mubr.f32.mxu0 0.0
        %1957 = vmatmul.mubr.f32.gmra.mrb[0].mxu0 %v1769
        %v1958 = vpop.f32.mrb[0].mxu0
        %v1959 = vadd.f32 %v1269, %v1958
        %v1960 = vpop.f32.mrb[0].mxu0
        %1961 = vmatprep.mubr.f32.mxu0 0.0
        %1962 = vmatmul.mubr.f32.gmra.mrb[0].mxu0 %v1772
        %v1963 = vpop.f32.mrb[0].mxu0
        %v1964 = vadd.f32 %v1269, %v1963
        %v1965 = vpop.f32.mrb[0].mxu0
        %1966 = vmatprep.mubr.f32.mxu0 0.0
        %1967 = vmatmul.mubr.f32.gmra.mrb[0].mxu0 %v1775
        %v1968 = vpop.f32.mrb[0].mxu0
        %v1969 = vadd.f32 %v1269, %v1968
        %v1970 = vpop.f32.mrb[0].mxu0
        %1971 = vmatprep.mubr.f32.mxu0 0.0
        %1972 = vmatmul.mubr.f32.gmra.mrb[0].mxu0 %v1778
        %v1973 = vpop.f32.mrb[0].mxu0
        %v1974 = vadd.f32 %v1269, %v1973
        %v1975 = vpop.f32.mrb[0].mxu0
        %1976 = vmatprep.mubr.f32.mxu0 0.0
        %1977 = vmatmul.mubr.f32.gmra.mrb[0].mxu0 %v1781
        %v1978 = vpop.f32.mrb[0].mxu0
        %v1979 = vadd.f32 %v1269, %v1978
        %v1980 = vpop.f32.mrb[0].mxu0
        %1981 = vmatprep.mubr.f32.mxu0 0.0
        %1982 = vmatmul.mubr.f32.gmra.mrb[0].mxu0 %v1784
        %v1983 = vpop.f32.mrb[0].mxu0
        %v1984 = vadd.f32 %v1269, %v1983
        %v1985 = vpop.f32.mrb[0].mxu0
        %1986 = vmatprep.mubr.f32.mxu0 0.0
        %1987 = vmatmul.mubr.f32.gmra.mrb[0].mxu0 %v1787
        %v1988 = vpop.f32.mrb[0].mxu0
        %v1989 = vadd.f32 %v1269, %v1988
        %v1990 = vpop.f32.mrb[0].mxu0
        %1991 = vmatprep.mubr.f32.mxu0 0.0
        %1992 = vmatmul.mubr.f32.gmra.mrb[0].mxu0 %v1790
        %v1993 = vpop.f32.mrb[0].mxu0
        %v1994 = vadd.f32 %v1269, %v1993
        %v1995 = vpop.f32.mrb[0].mxu0
        %1996 = vmatprep.mubr.f32.mxu0 0.0
        %1997 = vmatmul.mubr.f32.gmra.mrb[0].mxu0 %v1793
        %v1998 = vpop.f32.mrb[0].mxu0
        %v1999 = vadd.f32 %v1269, %v1998
        %v2000 = vpop.f32.mrb[0].mxu0
        %2001 = vmatprep.mubr.f32.mxu0 0.0
        %2002 = vmatmul.mubr.f32.gmra.mrb[0].mxu0 %v1796
        %v2003 = vpop.f32.mrb[0].mxu0
        %v2004 = vadd.f32 %v1269, %v2003
        %v2005 = vpop.f32.mrb[0].mxu0
        %2006 = vmatprep.mubr.f32.mxu0 0.0
        %2007 = vmatmul.mubr.f32.gmra.mrb[0].mxu0 %v1799
        %v2008 = vpop.f32.mrb[0].mxu0
        %v2009 = vadd.f32 %v1269, %v2008
        %v2010 = vpop.f32.mrb[0].mxu0
        %2011 = vmatprep.mubr.f32.mxu0 0.0
        %2012 = vmatmul.mubr.f32.gmra.mrb[0].mxu0 %v1802
        %v2013 = vpop.f32.mrb[0].mxu0
        %v2014 = vadd.f32 %v1269, %v2013
        %v2015 = vpop.f32.mrb[0].mxu0
        %2016 = vmatprep.mubr.f32.mxu0 0.0
        %2017 = vmatmul.mubr.f32.gmra.mrb[0].mxu0 %v1805
        %v2018 = vpop.f32.mrb[0].mxu0
        %v2019 = vadd.f32 %v1269, %v2018
        %v2020 = vpop.f32.mrb[0].mxu0
        %2021 = vmatprep.mubr.f32.mxu0 0.0
        %2022 = vmatmul.mubr.f32.gmra.mrb[0].mxu0 %v1808
        %v2023 = vpop.f32.mrb[0].mxu0
        %v2024 = vadd.f32 %v1269, %v2023
        %v2025 = vpop.f32.mrb[0].mxu0
        %2026 = vmatprep.mubr.f32.mxu0 0.0
        %2027 = vmatmul.mubr.f32.gmra.mrb[0].mxu0 %v1811
        %v2028 = vpop.f32.mrb[0].mxu0
        %v2029 = vadd.f32 %v1269, %v2028
        %v2030 = vpop.f32.mrb[0].mxu0
        %2031 = vmatprep.mubr.f32.mxu0 0.0
        %2032 = vmatmul.mubr.f32.gmra.mrb[0].mxu0 %v1814
        %v2033 = vpop.f32.mrb[0].mxu0
        %v2034 = vadd.f32 %v1269, %v2033
        %v2035 = vpop.f32.mrb[0].mxu0
        %2036 = vmatprep.mubr.f32.mxu0 0.0
        %2037 = vmatmul.mubr.f32.gmra.mrb[0].mxu0 %v1817
        %v2038 = vpop.f32.mrb[0].mxu0
        %v2039 = vadd.f32 %v1269, %v2038
        %v2040 = vpop.f32.mrb[0].mxu0
        %2041 = vmatprep.mubr.f32.mxu0 0.0
        %2042 = vmatmul.mubr.f32.gmra.mrb[0].mxu0 %v1820
        %v2043 = vpop.f32.mrb[0].mxu0
        %v2044 = vadd.f32 %v1269, %v2043
        %v2045 = vpop.f32.mrb[0].mxu0
        %2046 = vdwg.mxu0
        %vm2047 = vcmp.ge.f32.partialorder %v1889, 0.0
        %vm2048 = vcmp.ge.f32.partialorder %v1894, 0.0
        %vm2049 = vcmp.ge.f32.partialorder %v1899, 0.0
        %vm2050 = vcmp.ge.f32.partialorder %v1904, 0.0
        %vm2051 = vcmp.ge.f32.partialorder %v1909, 0.0
        %vm2052 = vcmp.ge.f32.partialorder %v1914, 0.0
        %vm2053 = vcmp.ge.f32.partialorder %v1919, 0.0
        %vm2054 = vcmp.ge.f32.partialorder %v1924, 0.0
        %vm2055 = vcmp.ge.f32.partialorder %v1929, 0.0
        %vm2056 = vcmp.ge.f32.partialorder %v1934, 0.0
        %vm2057 = vcmp.ge.f32.partialorder %v1939, 0.0
        %vm2058 = vcmp.ge.f32.partialorder %v1944, 0.0
        %vm2059 = vcmp.ge.f32.partialorder %v1949, 0.0
        %vm2060 = vcmp.ge.f32.partialorder %v1954, 0.0
        %vm2061 = vcmp.ge.f32.partialorder %v1959, 0.0
        %vm2062 = vcmp.ge.f32.partialorder %v1964, 0.0
        %vm2063 = vcmp.ge.f32.partialorder %v1969, 0.0
        %vm2064 = vcmp.ge.f32.partialorder %v1974, 0.0
        %vm2065 = vcmp.ge.f32.partialorder %v1979, 0.0
        %vm2066 = vcmp.ge.f32.partialorder %v1984, 0.0
        %vm2067 = vcmp.ge.f32.partialorder %v1989, 0.0
        %vm2068 = vcmp.ge.f32.partialorder %v1994, 0.0
        %vm2069 = vcmp.ge.f32.partialorder %v1999, 0.0
        %vm2070 = vcmp.ge.f32.partialorder %v2004, 0.0
        %vm2071 = vcmp.ge.f32.partialorder %v2009, 0.0
        %vm2072 = vcmp.ge.f32.partialorder %v2014, 0.0
        %vm2073 = vcmp.ge.f32.partialorder %v2019, 0.0
        %vm2074 = vcmp.ge.f32.partialorder %v2024, 0.0
        %vm2075 = vcmp.ge.f32.partialorder %v2029, 0.0
        %vm2076 = vcmp.ge.f32.partialorder %v2034, 0.0
        %vm2077 = vcmp.ge.f32.partialorder %v2039, 0.0
        %vm2078 = vcmp.ge.f32.partialorder %v2044, 0.0
        %v2079 = vmul.f32 %v1889, 0.01
        %v2080 = vmul.f32 %v1894, 0.01
        %v2081 = vmul.f32 %v1899, 0.01
        %v2082 = vmul.f32 %v1904, 0.01
        %v2083 = vmul.f32 %v1909, 0.01
        %v2084 = vmul.f32 %v1914, 0.01
        %v2085 = vmul.f32 %v1919, 0.01
        %v2086 = vmul.f32 %v1924, 0.01
        %v2087 = vmul.f32 %v1929, 0.01
        %v2088 = vmul.f32 %v1934, 0.01
        %v2089 = vmul.f32 %v1939, 0.01
        %v2090 = vmul.f32 %v1944, 0.01
        %v2091 = vmul.f32 %v1949, 0.01
        %v2092 = vmul.f32 %v1954, 0.01
        %v2093 = vmul.f32 %v1959, 0.01
        %v2094 = vmul.f32 %v1964, 0.01
        %v2095 = vmul.f32 %v1969, 0.01
        %v2096 = vmul.f32 %v1974, 0.01
        %v2097 = vmul.f32 %v1979, 0.01
        %v2098 = vmul.f32 %v1984, 0.01
        %v2099 = vmul.f32 %v1989, 0.01
        %v2100 = vmul.f32 %v1994, 0.01
        %v2101 = vmul.f32 %v1999, 0.01
        %v2102 = vmul.f32 %v2004, 0.01
        %v2103 = vmul.f32 %v2009, 0.01
        %v2104 = vmul.f32 %v2014, 0.01
        %v2105 = vmul.f32 %v2019, 0.01
        %v2106 = vmul.f32 %v2024, 0.01
        %v2107 = vmul.f32 %v2029, 0.01
        %v2108 = vmul.f32 %v2034, 0.01
        %v2109 = vmul.f32 %v2039, 0.01
        %v2110 = vmul.f32 %v2044, 0.01
        %v2111 = vsel %vm2047, %v1889, %v2079
        %v2112 = vsel %vm2048, %v1894, %v2080
        %v2113 = vsel %vm2049, %v1899, %v2081
        %v2114 = vsel %vm2050, %v1904, %v2082
        %v2115 = vsel %vm2051, %v1909, %v2083
        %v2116 = vsel %vm2052, %v1914, %v2084
        %v2117 = vsel %vm2053, %v1919, %v2085
        %v2118 = vsel %vm2054, %v1924, %v2086
        %v2119 = vsel %vm2055, %v1929, %v2087
        %v2120 = vsel %vm2056, %v1934, %v2088
        %v2121 = vsel %vm2057, %v1939, %v2089
        %v2122 = vsel %vm2058, %v1944, %v2090
        %v2123 = vsel %vm2059, %v1949, %v2091
        %v2124 = vsel %vm2060, %v1954, %v2092
        %v2125 = vsel %vm2061, %v1959, %v2093
        %v2126 = vsel %vm2062, %v1964, %v2094
        %v2127 = vsel %vm2063, %v1969, %v2095
        %v2128 = vsel %vm2064, %v1974, %v2096
        %v2129 = vsel %vm2065, %v1979, %v2097
        %v2130 = vsel %vm2066, %v1984, %v2098
        %v2131 = vsel %vm2067, %v1989, %v2099
        %v2132 = vsel %vm2068, %v1994, %v2100
        %v2133 = vsel %vm2069, %v1999, %v2101
        %v2134 = vsel %vm2070, %v2004, %v2102
        %v2135 = vsel %vm2071, %v2009, %v2103
        %v2136 = vsel %vm2072, %v2014, %v2104
        %v2137 = vsel %vm2073, %v2019, %v2105
        %v2138 = vsel %vm2074, %v2024, %v2106
        %v2139 = vsel %vm2075, %v2029, %v2107
        %v2140 = vsel %vm2076, %v2034, %v2108
        %v2141 = vsel %vm2077, %v2039, %v2109
        %v2142 = vsel %vm2078, %v2044, %v2110
        %v2143 = vmax.f32 %v1661, %v2111
        %v2144 = vmax.f32 %v1662, %v2112
        %v2145 = vmax.f32 %v1663, %v2113
        %v2146 = vmax.f32 %v1664, %v2114
        %v2147 = vmax.f32 %v1665, %v2115
        %v2148 = vmax.f32 %v1666, %v2116
        %v2149 = vmax.f32 %v1667, %v2117
        %v2150 = vmax.f32 %v1668, %v2118
        %v2151 = vmax.f32 %v1669, %v2119
        %v2152 = vmax.f32 %v1670, %v2120
        %v2153 = vmax.f32 %v1671, %v2121
        %v2154 = vmax.f32 %v1672, %v2122
        %v2155 = vmax.f32 %v1673, %v2123
        %v2156 = vmax.f32 %v1674, %v2124
        %v2157 = vmax.f32 %v1675, %v2125
        %v2158 = vmax.f32 %v1676, %v2126
        %v2159 = vmax.f32 %v1677, %v2127
        %v2160 = vmax.f32 %v1678, %v2128
        %v2161 = vmax.f32 %v1679, %v2129
        %v2162 = vmax.f32 %v1680, %v2130
        %v2163 = vmax.f32 %v1681, %v2131
        %v2164 = vmax.f32 %v1682, %v2132
        %v2165 = vmax.f32 %v1683, %v2133
        %v2166 = vmax.f32 %v1684, %v2134
        %v2167 = vmax.f32 %v1685, %v2135
        %v2168 = vmax.f32 %v1686, %v2136
        %v2169 = vmax.f32 %v1687, %v2137
        %v2170 = vmax.f32 %v1688, %v2138
        %v2171 = vmax.f32 %v1689, %v2139
        %v2172 = vmax.f32 %v1690, %v2140
        %v2173 = vmax.f32 %v1691, %v2141
        %v2174 = vmax.f32 %v1692, %v2142
        %s2175 = scalar_lea.vmem %s1200, 512 [#allocation2]
        %v2176 = vld [vmem:[%s2175] sm:$0xff]
        %v2177 = vld [vmem:[%s2175 + $0x8] sm:$0xff]
        %v2178 = vld [vmem:[%s2175 + $0x10] sm:$0xff]
        %v2179 = vld [vmem:[%s2175 + $0x18] sm:$0xff]
        %v2180 = vld [vmem:[%s2175 + $0x20] sm:$0xff]
        %v2181 = vld [vmem:[%s2175 + $0x28] sm:$0xff]
        %v2182 = vld [vmem:[%s2175 + $0x30] sm:$0xff]
        %v2183 = vld [vmem:[%s2175 + $0x38] sm:$0xff]
        %v2184 = vld [vmem:[%s2175 + $0x40] sm:$0xff]
        %v2185 = vld [vmem:[%s2175 + $0x48] sm:$0xff]
        %v2186 = vld [vmem:[%s2175 + $0x50] sm:$0xff]
        %v2187 = vld [vmem:[%s2175 + $0x58] sm:$0xff]
        %v2188 = vld [vmem:[%s2175 + $0x60] sm:$0xff]
        %v2189 = vld [vmem:[%s2175 + $0x68] sm:$0xff]
        %v2190 = vld [vmem:[%s2175 + $0x70] sm:$0xff]
        %v2191 = vld [vmem:[%s2175 + $0x78] sm:$0xff]
        %v2192 = vld [vmem:[%s2175 + $0x80] sm:$0xff]
        %v2193 = vld [vmem:[%s2175 + $0x88] sm:$0xff]
        %v2194 = vld [vmem:[%s2175 + $0x90] sm:$0xff]
        %v2195 = vld [vmem:[%s2175 + $0x98] sm:$0xff]
        %v2196 = vld [vmem:[%s2175 + $0xa0] sm:$0xff]
        %v2197 = vld [vmem:[%s2175 + $0xa8] sm:$0xff]
        %v2198 = vld [vmem:[%s2175 + $0xb0] sm:$0xff]
        %v2199 = vld [vmem:[%s2175 + $0xb8] sm:$0xff]
        %v2200 = vld [vmem:[%s2175 + $0xc0] sm:$0xff]
        %v2201 = vld [vmem:[%s2175 + $0xc8] sm:$0xff]
        %v2202 = vld [vmem:[%s2175 + $0xd0] sm:$0xff]
        %v2203 = vld [vmem:[%s2175 + $0xd8] sm:$0xff]
        %v2204 = vld [vmem:[%s2175 + $0xe0] sm:$0xff]
        %v2205 = vld [vmem:[%s2175 + $0xe8] sm:$0xff]
        %v2206 = vld [vmem:[%s2175 + $0xf0] sm:$0xff]
        %v2207 = vld [vmem:[%s2175 + $0xf8] sm:$0xff]
        %v2209 = vsel %vm1271, %v2176, 0
        %v2212 = vsel %vm1271, %v2177, 0
        %v2215 = vsel %vm1271, %v2178, 0
        %v2218 = vsel %vm1271, %v2179, 0
        %v2221 = vsel %vm1271, %v2180, 0
        %v2224 = vsel %vm1271, %v2181, 0
        %v2227 = vsel %vm1271, %v2182, 0
        %v2230 = vsel %vm1271, %v2183, 0
        %v2233 = vsel %vm1271, %v2184, 0
        %v2236 = vsel %vm1271, %v2185, 0
        %v2239 = vsel %vm1271, %v2186, 0
        %v2242 = vsel %vm1271, %v2187, 0
        %v2245 = vsel %vm1271, %v2188, 0
        %v2248 = vsel %vm1271, %v2189, 0
        %v2251 = vsel %vm1271, %v2190, 0
        %v2254 = vsel %vm1271, %v2191, 0
        %v2257 = vsel %vm1271, %v2192, 0
        %v2260 = vsel %vm1271, %v2193, 0
        %v2263 = vsel %vm1271, %v2194, 0
        %v2266 = vsel %vm1271, %v2195, 0
        %v2269 = vsel %vm1271, %v2196, 0
        %v2272 = vsel %vm1271, %v2197, 0
        %v2275 = vsel %vm1271, %v2198, 0
        %v2278 = vsel %vm1271, %v2199, 0
        %v2281 = vsel %vm1271, %v2200, 0
        %v2284 = vsel %vm1271, %v2201, 0
        %v2287 = vsel %vm1271, %v2202, 0
        %v2290 = vsel %vm1271, %v2203, 0
        %v2293 = vsel %vm1271, %v2204, 0
        %v2296 = vsel %vm1271, %v2205, 0
        %v2299 = vsel %vm1271, %v2206, 0
        %v2302 = vsel %vm1271, %v2207, 0
        %2304 = vmatprep.subr.mxu0 0.0
        %2305 = vmatpush1.msra.mxu0 %v1228
        %2306 = vmatprep.subr.mxu0 0.0
        %2307 = vmatpush1.msra.mxu0 %v1229
        %2308 = vmatprep.subr.mxu0 0.0
        %2309 = vmatpush1.msra.mxu0 %v1230
        %2310 = vmatprep.subr.mxu0 0.0
        %2311 = vmatpush1.msra.mxu0 %v1370
        %2312 = vmatprep.subr.mxu0 0.0
        %2313 = vmatpush1.msra.mxu0 0.0
        %2314 = vmatprep.subr.mxu0 0.0
        %2315 = vmatpush1.msra.mxu0 0.0
        %2316 = vmatprep.subr.mxu0 0.0
        %2317 = vmatpush1.msra.mxu0 0.0
        %2318 = vmatprep.subr.mxu0 0.0
        %2319 = vmatpush1.msra.mxu0 0.0
        %2320 = vmatprep.subr.mxu0 0.0
        %2321 = vmatpush1.msra.mxu0 0.0
        %2322 = vmatprep.subr.mxu0 0.0
        %2323 = vmatpush1.msra.mxu0 0.0
        %2324 = vmatprep.subr.mxu0 0.0
        %2325 = vmatpush1.msra.mxu0 0.0
        %2326 = vmatprep.subr.mxu0 0.0
        %2327 = vmatpush1.msra.mxu0 0.0
        %2328 = vmatprep.subr.mxu0 0.0
        %2329 = vmatpush1.msra.mxu0 0.0
        %2330 = vmatprep.subr.mxu0 0.0
        %2331 = vmatpush1.msra.mxu0 0.0
        %2332 = vmatprep.subr.mxu0 0.0
        %2333 = vmatpush1.msra.mxu0 0.0
        %2334 = vmatprep.subr.mxu0 0.0
        %2335 = vmatpush1.msra.mxu0 0.0
        %2336 = vmatprep.subr.mxu0 0.0
        %2337 = vmatpush1.msra.mxu0 0.0
        %2338 = vmatprep.subr.mxu0 0.0
        %2339 = vmatpush1.msra.mxu0 0.0
        %2340 = vmatprep.subr.mxu0 0.0
        %2341 = vmatpush1.msra.mxu0 0.0
        %2342 = vmatprep.subr.mxu0 0.0
        %2343 = vmatpush1.msra.mxu0 0.0
        %2344 = vmatprep.subr.mxu0 0.0
        %2345 = vmatpush1.msra.mxu0 0.0
        %2346 = vmatprep.subr.mxu0 0.0
        %2347 = vmatpush1.msra.mxu0 0.0
        %2348 = vmatprep.subr.mxu0 0.0
        %2349 = vmatpush1.msra.mxu0 0.0
        %2350 = vmatprep.subr.mxu0 0.0
        %2351 = vmatpush1.msra.mxu0 0.0
        %2352 = vmatprep.subr.mxu0 0.0
        %2353 = vmatpush1.msra.mxu0 0.0
        %2354 = vmatprep.subr.mxu0 0.0
        %2355 = vmatpush1.msra.mxu0 0.0
        %2356 = vmatprep.subr.mxu0 0.0
        %2357 = vmatpush1.msra.mxu0 0.0
        %2358 = vmatprep.subr.mxu0 0.0
        %2359 = vmatpush1.msra.mxu0 0.0
        %2360 = vmatprep.subr.mxu0 0.0
        %2361 = vmatpush1.msra.mxu0 0.0
        %2362 = vmatprep.subr.mxu0 0.0
        %2363 = vmatpush1.msra.mxu0 0.0
        %2364 = vmatprep.subr.mxu0 0.0
        %2365 = vmatpush1.msra.mxu0 0.0
        %2366 = vmatprep.subr.mxu0 0.0
        %2367 = vmatpush1.msra.mxu0 0.0
        %2368 = vmatprep.mubr.f32.mxu0 0.0
        %2369 = vmatmul.mubr.f32.gmra.mrb[0].mxu0 %v2209
        %v2370 = vpop.f32.mrb[0].mxu0
        %v2371 = vadd.f32 %v1269, %v2370
        %v2372 = vpop.f32.mrb[0].mxu0
        %2373 = vmatprep.mubr.f32.mxu0 0.0
        %2374 = vmatmul.mubr.f32.gmra.mrb[0].mxu0 %v2212
        %v2375 = vpop.f32.mrb[0].mxu0
        %v2376 = vadd.f32 %v1269, %v2375
        %v2377 = vpop.f32.mrb[0].mxu0
        %2378 = vmatprep.mubr.f32.mxu0 0.0
        %2379 = vmatmul.mubr.f32.gmra.mrb[0].mxu0 %v2215
        %v2380 = vpop.f32.mrb[0].mxu0
        %v2381 = vadd.f32 %v1269, %v2380
        %v2382 = vpop.f32.mrb[0].mxu0
        %2383 = vmatprep.mubr.f32.mxu0 0.0
        %2384 = vmatmul.mubr.f32.gmra.mrb[0].mxu0 %v2218
        %v2385 = vpop.f32.mrb[0].mxu0
        %v2386 = vadd.f32 %v1269, %v2385
        %v2387 = vpop.f32.mrb[0].mxu0
        %2388 = vmatprep.mubr.f32.mxu0 0.0
        %2389 = vmatmul.mubr.f32.gmra.mrb[0].mxu0 %v2221
        %v2390 = vpop.f32.mrb[0].mxu0
        %v2391 = vadd.f32 %v1269, %v2390
        %v2392 = vpop.f32.mrb[0].mxu0
        %2393 = vmatprep.mubr.f32.mxu0 0.0
        %2394 = vmatmul.mubr.f32.gmra.mrb[0].mxu0 %v2224
        %v2395 = vpop.f32.mrb[0].mxu0
        %v2396 = vadd.f32 %v1269, %v2395
        %v2397 = vpop.f32.mrb[0].mxu0
        %2398 = vmatprep.mubr.f32.mxu0 0.0
        %2399 = vmatmul.mubr.f32.gmra.mrb[0].mxu0 %v2227
        %v2400 = vpop.f32.mrb[0].mxu0
        %v2401 = vadd.f32 %v1269, %v2400
        %v2402 = vpop.f32.mrb[0].mxu0
        %2403 = vmatprep.mubr.f32.mxu0 0.0
        %2404 = vmatmul.mubr.f32.gmra.mrb[0].mxu0 %v2230
        %v2405 = vpop.f32.mrb[0].mxu0
        %v2406 = vadd.f32 %v1269, %v2405
        %v2407 = vpop.f32.mrb[0].mxu0
        %2408 = vmatprep.mubr.f32.mxu0 0.0
        %2409 = vmatmul.mubr.f32.gmra.mrb[0].mxu0 %v2233
        %v2410 = vpop.f32.mrb[0].mxu0
        %v2411 = vadd.f32 %v1269, %v2410
        %v2412 = vpop.f32.mrb[0].mxu0
        %2413 = vmatprep.mubr.f32.mxu0 0.0
        %2414 = vmatmul.mubr.f32.gmra.mrb[0].mxu0 %v2236
        %v2415 = vpop.f32.mrb[0].mxu0
        %v2416 = vadd.f32 %v1269, %v2415
        %v2417 = vpop.f32.mrb[0].mxu0
        %2418 = vmatprep.mubr.f32.mxu0 0.0
        %2419 = vmatmul.mubr.f32.gmra.mrb[0].mxu0 %v2239
        %v2420 = vpop.f32.mrb[0].mxu0
        %v2421 = vadd.f32 %v1269, %v2420
        %v2422 = vpop.f32.mrb[0].mxu0
        %2423 = vmatprep.mubr.f32.mxu0 0.0
        %2424 = vmatmul.mubr.f32.gmra.mrb[0].mxu0 %v2242
        %v2425 = vpop.f32.mrb[0].mxu0
        %v2426 = vadd.f32 %v1269, %v2425
        %v2427 = vpop.f32.mrb[0].mxu0
        %2428 = vmatprep.mubr.f32.mxu0 0.0
        %2429 = vmatmul.mubr.f32.gmra.mrb[0].mxu0 %v2245
        %v2430 = vpop.f32.mrb[0].mxu0
        %v2431 = vadd.f32 %v1269, %v2430
        %v2432 = vpop.f32.mrb[0].mxu0
        %2433 = vmatprep.mubr.f32.mxu0 0.0
        %2434 = vmatmul.mubr.f32.gmra.mrb[0].mxu0 %v2248
        %v2435 = vpop.f32.mrb[0].mxu0
        %v2436 = vadd.f32 %v1269, %v2435
        %v2437 = vpop.f32.mrb[0].mxu0
        %2438 = vmatprep.mubr.f32.mxu0 0.0
        %2439 = vmatmul.mubr.f32.gmra.mrb[0].mxu0 %v2251
        %v2440 = vpop.f32.mrb[0].mxu0
        %v2441 = vadd.f32 %v1269, %v2440
        %v2442 = vpop.f32.mrb[0].mxu0
        %2443 = vmatprep.mubr.f32.mxu0 0.0
        %2444 = vmatmul.mubr.f32.gmra.mrb[0].mxu0 %v2254
        %v2445 = vpop.f32.mrb[0].mxu0
        %v2446 = vadd.f32 %v1269, %v2445
        %v2447 = vpop.f32.mrb[0].mxu0
        %2448 = vmatprep.mubr.f32.mxu0 0.0
        %2449 = vmatmul.mubr.f32.gmra.mrb[0].mxu0 %v2257
        %v2450 = vpop.f32.mrb[0].mxu0
        %v2451 = vadd.f32 %v1269, %v2450
        %v2452 = vpop.f32.mrb[0].mxu0
        %2453 = vmatprep.mubr.f32.mxu0 0.0
        %2454 = vmatmul.mubr.f32.gmra.mrb[0].mxu0 %v2260
        %v2455 = vpop.f32.mrb[0].mxu0
        %v2456 = vadd.f32 %v1269, %v2455
        %v2457 = vpop.f32.mrb[0].mxu0
        %2458 = vmatprep.mubr.f32.mxu0 0.0
        %2459 = vmatmul.mubr.f32.gmra.mrb[0].mxu0 %v2263
        %v2460 = vpop.f32.mrb[0].mxu0
        %v2461 = vadd.f32 %v1269, %v2460
        %v2462 = vpop.f32.mrb[0].mxu0
        %2463 = vmatprep.mubr.f32.mxu0 0.0
        %2464 = vmatmul.mubr.f32.gmra.mrb[0].mxu0 %v2266
        %v2465 = vpop.f32.mrb[0].mxu0
        %v2466 = vadd.f32 %v1269, %v2465
        %v2467 = vpop.f32.mrb[0].mxu0
        %2468 = vmatprep.mubr.f32.mxu0 0.0
        %2469 = vmatmul.mubr.f32.gmra.mrb[0].mxu0 %v2269
        %v2470 = vpop.f32.mrb[0].mxu0
        %v2471 = vadd.f32 %v1269, %v2470
        %v2472 = vpop.f32.mrb[0].mxu0
        %2473 = vmatprep.mubr.f32.mxu0 0.0
        %2474 = vmatmul.mubr.f32.gmra.mrb[0].mxu0 %v2272
        %v2475 = vpop.f32.mrb[0].mxu0
        %v2476 = vadd.f32 %v1269, %v2475
        %v2477 = vpop.f32.mrb[0].mxu0
        %2478 = vmatprep.mubr.f32.mxu0 0.0
        %2479 = vmatmul.mubr.f32.gmra.mrb[0].mxu0 %v2275
        %v2480 = vpop.f32.mrb[0].mxu0
        %v2481 = vadd.f32 %v1269, %v2480
        %v2482 = vpop.f32.mrb[0].mxu0
        %2483 = vmatprep.mubr.f32.mxu0 0.0
        %2484 = vmatmul.mubr.f32.gmra.mrb[0].mxu0 %v2278
        %v2485 = vpop.f32.mrb[0].mxu0
        %v2486 = vadd.f32 %v1269, %v2485
        %v2487 = vpop.f32.mrb[0].mxu0
        %2488 = vmatprep.mubr.f32.mxu0 0.0
        %2489 = vmatmul.mubr.f32.gmra.mrb[0].mxu0 %v2281
        %v2490 = vpop.f32.mrb[0].mxu0
        %v2491 = vadd.f32 %v1269, %v2490
        %v2492 = vpop.f32.mrb[0].mxu0
        %2493 = vmatprep.mubr.f32.mxu0 0.0
        %2494 = vmatmul.mubr.f32.gmra.mrb[0].mxu0 %v2284
        %v2495 = vpop.f32.mrb[0].mxu0
        %v2496 = vadd.f32 %v1269, %v2495
        %v2497 = vpop.f32.mrb[0].mxu0
        %2498 = vmatprep.mubr.f32.mxu0 0.0
        %2499 = vmatmul.mubr.f32.gmra.mrb[0].mxu0 %v2287
        %v2500 = vpop.f32.mrb[0].mxu0
        %v2501 = vadd.f32 %v1269, %v2500
        %v2502 = vpop.f32.mrb[0].mxu0
        %2503 = vmatprep.mubr.f32.mxu0 0.0
        %2504 = vmatmul.mubr.f32.gmra.mrb[0].mxu0 %v2290
        %v2505 = vpop.f32.mrb[0].mxu0
        %v2506 = vadd.f32 %v1269, %v2505
        %v2507 = vpop.f32.mrb[0].mxu0
        %2508 = vmatprep.mubr.f32.mxu0 0.0
        %2509 = vmatmul.mubr.f32.gmra.mrb[0].mxu0 %v2293
        %v2510 = vpop.f32.mrb[0].mxu0
        %v2511 = vadd.f32 %v1269, %v2510
        %v2512 = vpop.f32.mrb[0].mxu0
        %2513 = vmatprep.mubr.f32.mxu0 0.0
        %2514 = vmatmul.mubr.f32.gmra.mrb[0].mxu0 %v2296
        %v2515 = vpop.f32.mrb[0].mxu0
        %v2516 = vadd.f32 %v1269, %v2515
        %v2517 = vpop.f32.mrb[0].mxu0
        %2518 = vmatprep.mubr.f32.mxu0 0.0
        %2519 = vmatmul.mubr.f32.gmra.mrb[0].mxu0 %v2299
        %v2520 = vpop.f32.mrb[0].mxu0
        %v2521 = vadd.f32 %v1269, %v2520
        %v2522 = vpop.f32.mrb[0].mxu0
        %2523 = vmatprep.mubr.f32.mxu0 0.0
        %2524 = vmatmul.mubr.f32.gmra.mrb[0].mxu0 %v2302
        %v2525 = vpop.f32.mrb[0].mxu0
        %v2526 = vadd.f32 %v1269, %v2525
        %v2527 = vpop.f32.mrb[0].mxu0
        %2528 = vdwg.mxu0
        %vm2529 = vcmp.ge.f32.partialorder %v2371, 0.0
        %vm2530 = vcmp.ge.f32.partialorder %v2376, 0.0
        %vm2531 = vcmp.ge.f32.partialorder %v2381, 0.0
        %vm2532 = vcmp.ge.f32.partialorder %v2386, 0.0
        %vm2533 = vcmp.ge.f32.partialorder %v2391, 0.0
        %vm2534 = vcmp.ge.f32.partialorder %v2396, 0.0
        %vm2535 = vcmp.ge.f32.partialorder %v2401, 0.0
        %vm2536 = vcmp.ge.f32.partialorder %v2406, 0.0
        %vm2537 = vcmp.ge.f32.partialorder %v2411, 0.0
        %vm2538 = vcmp.ge.f32.partialorder %v2416, 0.0
        %vm2539 = vcmp.ge.f32.partialorder %v2421, 0.0
        %vm2540 = vcmp.ge.f32.partialorder %v2426, 0.0
        %vm2541 = vcmp.ge.f32.partialorder %v2431, 0.0
        %vm2542 = vcmp.ge.f32.partialorder %v2436, 0.0
        %vm2543 = vcmp.ge.f32.partialorder %v2441, 0.0
        %vm2544 = vcmp.ge.f32.partialorder %v2446, 0.0
        %vm2545 = vcmp.ge.f32.partialorder %v2451, 0.0
        %vm2546 = vcmp.ge.f32.partialorder %v2456, 0.0
        %vm2547 = vcmp.ge.f32.partialorder %v2461, 0.0
        %vm2548 = vcmp.ge.f32.partialorder %v2466, 0.0
        %vm2549 = vcmp.ge.f32.partialorder %v2471, 0.0
        %vm2550 = vcmp.ge.f32.partialorder %v2476, 0.0
        %vm2551 = vcmp.ge.f32.partialorder %v2481, 0.0
        %vm2552 = vcmp.ge.f32.partialorder %v2486, 0.0
        %vm2553 = vcmp.ge.f32.partialorder %v2491, 0.0
        %vm2554 = vcmp.ge.f32.partialorder %v2496, 0.0
        %vm2555 = vcmp.ge.f32.partialorder %v2501, 0.0
        %vm2556 = vcmp.ge.f32.partialorder %v2506, 0.0
        %vm2557 = vcmp.ge.f32.partialorder %v2511, 0.0
        %vm2558 = vcmp.ge.f32.partialorder %v2516, 0.0
        %vm2559 = vcmp.ge.f32.partialorder %v2521, 0.0
        %vm2560 = vcmp.ge.f32.partialorder %v2526, 0.0
        %v2561 = vmul.f32 %v2371, 0.01
        %v2562 = vmul.f32 %v2376, 0.01
        %v2563 = vmul.f32 %v2381, 0.01
        %v2564 = vmul.f32 %v2386, 0.01
        %v2565 = vmul.f32 %v2391, 0.01
        %v2566 = vmul.f32 %v2396, 0.01
        %v2567 = vmul.f32 %v2401, 0.01
        %v2568 = vmul.f32 %v2406, 0.01
        %v2569 = vmul.f32 %v2411, 0.01
        %v2570 = vmul.f32 %v2416, 0.01
        %v2571 = vmul.f32 %v2421, 0.01
        %v2572 = vmul.f32 %v2426, 0.01
        %v2573 = vmul.f32 %v2431, 0.01
        %v2574 = vmul.f32 %v2436, 0.01
        %v2575 = vmul.f32 %v2441, 0.01
        %v2576 = vmul.f32 %v2446, 0.01
        %v2577 = vmul.f32 %v2451, 0.01
        %v2578 = vmul.f32 %v2456, 0.01
        %v2579 = vmul.f32 %v2461, 0.01
        %v2580 = vmul.f32 %v2466, 0.01
        %v2581 = vmul.f32 %v2471, 0.01
        %v2582 = vmul.f32 %v2476, 0.01
        %v2583 = vmul.f32 %v2481, 0.01
        %v2584 = vmul.f32 %v2486, 0.01
        %v2585 = vmul.f32 %v2491, 0.01
        %v2586 = vmul.f32 %v2496, 0.01
        %v2587 = vmul.f32 %v2501, 0.01
        %v2588 = vmul.f32 %v2506, 0.01
        %v2589 = vmul.f32 %v2511, 0.01
        %v2590 = vmul.f32 %v2516, 0.01
        %v2591 = vmul.f32 %v2521, 0.01
        %v2592 = vmul.f32 %v2526, 0.01
        %v2593 = vsel %vm2529, %v2371, %v2561
        %v2594 = vsel %vm2530, %v2376, %v2562
        %v2595 = vsel %vm2531, %v2381, %v2563
        %v2596 = vsel %vm2532, %v2386, %v2564
        %v2597 = vsel %vm2533, %v2391, %v2565
        %v2598 = vsel %vm2534, %v2396, %v2566
        %v2599 = vsel %vm2535, %v2401, %v2567
        %v2600 = vsel %vm2536, %v2406, %v2568
        %v2601 = vsel %vm2537, %v2411, %v2569
        %v2602 = vsel %vm2538, %v2416, %v2570
        %v2603 = vsel %vm2539, %v2421, %v2571
        %v2604 = vsel %vm2540, %v2426, %v2572
        %v2605 = vsel %vm2541, %v2431, %v2573
        %v2606 = vsel %vm2542, %v2436, %v2574
        %v2607 = vsel %vm2543, %v2441, %v2575
        %v2608 = vsel %vm2544, %v2446, %v2576
        %v2609 = vsel %vm2545, %v2451, %v2577
        %v2610 = vsel %vm2546, %v2456, %v2578
        %v2611 = vsel %vm2547, %v2461, %v2579
        %v2612 = vsel %vm2548, %v2466, %v2580
        %v2613 = vsel %vm2549, %v2471, %v2581
        %v2614 = vsel %vm2550, %v2476, %v2582
        %v2615 = vsel %vm2551, %v2481, %v2583
        %v2616 = vsel %vm2552, %v2486, %v2584
        %v2617 = vsel %vm2553, %v2491, %v2585
        %v2618 = vsel %vm2554, %v2496, %v2586
        %v2619 = vsel %vm2555, %v2501, %v2587
        %v2620 = vsel %vm2556, %v2506, %v2588
        %v2621 = vsel %vm2557, %v2511, %v2589
        %v2622 = vsel %vm2558, %v2516, %v2590
        %v2623 = vsel %vm2559, %v2521, %v2591
        %v2624 = vsel %vm2560, %v2526, %v2592
        %v2625 = vmax.f32 %v2143, %v2593
        %v2626 = vmax.f32 %v2144, %v2594
        %v2627 = vmax.f32 %v2145, %v2595
        %v2628 = vmax.f32 %v2146, %v2596
        %v2629 = vmax.f32 %v2147, %v2597
        %v2630 = vmax.f32 %v2148, %v2598
        %v2631 = vmax.f32 %v2149, %v2599
        %v2632 = vmax.f32 %v2150, %v2600
        %v2633 = vmax.f32 %v2151, %v2601
        %v2634 = vmax.f32 %v2152, %v2602
        %v2635 = vmax.f32 %v2153, %v2603
        %v2636 = vmax.f32 %v2154, %v2604
        %v2637 = vmax.f32 %v2155, %v2605
        %v2638 = vmax.f32 %v2156, %v2606
        %v2639 = vmax.f32 %v2157, %v2607
        %v2640 = vmax.f32 %v2158, %v2608
        %v2641 = vmax.f32 %v2159, %v2609
        %v2642 = vmax.f32 %v2160, %v2610
        %v2643 = vmax.f32 %v2161, %v2611
        %v2644 = vmax.f32 %v2162, %v2612
        %v2645 = vmax.f32 %v2163, %v2613
        %v2646 = vmax.f32 %v2164, %v2614
        %v2647 = vmax.f32 %v2165, %v2615
        %v2648 = vmax.f32 %v2166, %v2616
        %v2649 = vmax.f32 %v2167, %v2617
        %v2650 = vmax.f32 %v2168, %v2618
        %v2651 = vmax.f32 %v2169, %v2619
        %v2652 = vmax.f32 %v2170, %v2620
        %v2653 = vmax.f32 %v2171, %v2621
        %v2654 = vmax.f32 %v2172, %v2622
        %v2655 = vmax.f32 %v2173, %v2623
        %v2656 = vmax.f32 %v2174, %v2624
        %s2657 = scalar_lea.vmem %s1200, 768 [#allocation2]
        %v2658 = vld [vmem:[%s2657] sm:$0xff]
        %v2659 = vld [vmem:[%s2657 + $0x8] sm:$0xff]
        %v2660 = vld [vmem:[%s2657 + $0x10] sm:$0xff]
        %v2661 = vld [vmem:[%s2657 + $0x18] sm:$0xff]
        %v2662 = vld [vmem:[%s2657 + $0x20] sm:$0xff]
        %v2663 = vld [vmem:[%s2657 + $0x28] sm:$0xff]
        %v2664 = vld [vmem:[%s2657 + $0x30] sm:$0xff]
        %v2665 = vld [vmem:[%s2657 + $0x38] sm:$0xff]
        %v2666 = vld [vmem:[%s2657 + $0x40] sm:$0xff]
        %v2667 = vld [vmem:[%s2657 + $0x48] sm:$0xff]
        %v2668 = vld [vmem:[%s2657 + $0x50] sm:$0xff]
        %v2669 = vld [vmem:[%s2657 + $0x58] sm:$0xff]
        %v2670 = vld [vmem:[%s2657 + $0x60] sm:$0xff]
        %v2671 = vld [vmem:[%s2657 + $0x68] sm:$0xff]
        %v2672 = vld [vmem:[%s2657 + $0x70] sm:$0xff]
        %v2673 = vld [vmem:[%s2657 + $0x78] sm:$0xff]
        %v2674 = vld [vmem:[%s2657 + $0x80] sm:$0xff]
        %v2675 = vld [vmem:[%s2657 + $0x88] sm:$0xff]
        %v2676 = vld [vmem:[%s2657 + $0x90] sm:$0xff]
        %v2677 = vld [vmem:[%s2657 + $0x98] sm:$0xff]
        %v2678 = vld [vmem:[%s2657 + $0xa0] sm:$0xff]
        %v2679 = vld [vmem:[%s2657 + $0xa8] sm:$0xff]
        %v2680 = vld [vmem:[%s2657 + $0xb0] sm:$0xff]
        %v2681 = vld [vmem:[%s2657 + $0xb8] sm:$0xff]
        %v2682 = vld [vmem:[%s2657 + $0xc0] sm:$0xff]
        %v2683 = vld [vmem:[%s2657 + $0xc8] sm:$0xff]
        %v2684 = vld [vmem:[%s2657 + $0xd0] sm:$0xff]
        %v2685 = vld [vmem:[%s2657 + $0xd8] sm:$0xff]
        %v2686 = vld [vmem:[%s2657 + $0xe0] sm:$0xff]
        %v2687 = vld [vmem:[%s2657 + $0xe8] sm:$0xff]
        %v2688 = vld [vmem:[%s2657 + $0xf0] sm:$0xff]
        %v2689 = vld [vmem:[%s2657 + $0xf8] sm:$0xff]
        %v2691 = vsel %vm1271, %v2658, 0
        %v2694 = vsel %vm1271, %v2659, 0
        %v2697 = vsel %vm1271, %v2660, 0
        %v2700 = vsel %vm1271, %v2661, 0
        %v2703 = vsel %vm1271, %v2662, 0
        %v2706 = vsel %vm1271, %v2663, 0
        %v2709 = vsel %vm1271, %v2664, 0
        %v2712 = vsel %vm1271, %v2665, 0
        %v2715 = vsel %vm1271, %v2666, 0
        %v2718 = vsel %vm1271, %v2667, 0
        %v2721 = vsel %vm1271, %v2668, 0
        %v2724 = vsel %vm1271, %v2669, 0
        %v2727 = vsel %vm1271, %v2670, 0
        %v2730 = vsel %vm1271, %v2671, 0
        %v2733 = vsel %vm1271, %v2672, 0
        %v2736 = vsel %vm1271, %v2673, 0
        %v2739 = vsel %vm1271, %v2674, 0
        %v2742 = vsel %vm1271, %v2675, 0
        %v2745 = vsel %vm1271, %v2676, 0
        %v2748 = vsel %vm1271, %v2677, 0
        %v2751 = vsel %vm1271, %v2678, 0
        %v2754 = vsel %vm1271, %v2679, 0
        %v2757 = vsel %vm1271, %v2680, 0
        %v2760 = vsel %vm1271, %v2681, 0
        %v2763 = vsel %vm1271, %v2682, 0
        %v2766 = vsel %vm1271, %v2683, 0
        %v2769 = vsel %vm1271, %v2684, 0
        %v2772 = vsel %vm1271, %v2685, 0
        %v2775 = vsel %vm1271, %v2686, 0
        %v2778 = vsel %vm1271, %v2687, 0
        %v2781 = vsel %vm1271, %v2688, 0
        %v2784 = vsel %vm1271, %v2689, 0
        %2786 = vmatprep.subr.mxu0 0.0
        %2787 = vmatpush1.msra.mxu0 %v1228
        %2788 = vmatprep.subr.mxu0 0.0
        %2789 = vmatpush1.msra.mxu0 %v1229
        %2790 = vmatprep.subr.mxu0 0.0
        %2791 = vmatpush1.msra.mxu0 %v1230
        %2792 = vmatprep.subr.mxu0 0.0
        %2793 = vmatpush1.msra.mxu0 %v1370
        %2794 = vmatprep.subr.mxu0 0.0
        %2795 = vmatpush1.msra.mxu0 0.0
        %2796 = vmatprep.subr.mxu0 0.0
        %2797 = vmatpush1.msra.mxu0 0.0
        %2798 = vmatprep.subr.mxu0 0.0
        %2799 = vmatpush1.msra.mxu0 0.0
        %2800 = vmatprep.subr.mxu0 0.0
        %2801 = vmatpush1.msra.mxu0 0.0
        %2802 = vmatprep.subr.mxu0 0.0
        %2803 = vmatpush1.msra.mxu0 0.0
        %2804 = vmatprep.subr.mxu0 0.0
        %2805 = vmatpush1.msra.mxu0 0.0
        %2806 = vmatprep.subr.mxu0 0.0
        %2807 = vmatpush1.msra.mxu0 0.0
        %2808 = vmatprep.subr.mxu0 0.0
        %2809 = vmatpush1.msra.mxu0 0.0
        %2810 = vmatprep.subr.mxu0 0.0
        %2811 = vmatpush1.msra.mxu0 0.0
        %2812 = vmatprep.subr.mxu0 0.0
        %2813 = vmatpush1.msra.mxu0 0.0
        %2814 = vmatprep.subr.mxu0 0.0
        %2815 = vmatpush1.msra.mxu0 0.0
        %2816 = vmatprep.subr.mxu0 0.0
        %2817 = vmatpush1.msra.mxu0 0.0
        %2818 = vmatprep.subr.mxu0 0.0
        %2819 = vmatpush1.msra.mxu0 0.0
        %2820 = vmatprep.subr.mxu0 0.0
        %2821 = vmatpush1.msra.mxu0 0.0
        %2822 = vmatprep.subr.mxu0 0.0
        %2823 = vmatpush1.msra.mxu0 0.0
        %2824 = vmatprep.subr.mxu0 0.0
        %2825 = vmatpush1.msra.mxu0 0.0
        %2826 = vmatprep.subr.mxu0 0.0
        %2827 = vmatpush1.msra.mxu0 0.0
        %2828 = vmatprep.subr.mxu0 0.0
        %2829 = vmatpush1.msra.mxu0 0.0
        %2830 = vmatprep.subr.mxu0 0.0
        %2831 = vmatpush1.msra.mxu0 0.0
        %2832 = vmatprep.subr.mxu0 0.0
        %2833 = vmatpush1.msra.mxu0 0.0
        %2834 = vmatprep.subr.mxu0 0.0
        %2835 = vmatpush1.msra.mxu0 0.0
        %2836 = vmatprep.subr.mxu0 0.0
        %2837 = vmatpush1.msra.mxu0 0.0
        %2838 = vmatprep.subr.mxu0 0.0
        %2839 = vmatpush1.msra.mxu0 0.0
        %2840 = vmatprep.subr.mxu0 0.0
        %2841 = vmatpush1.msra.mxu0 0.0
        %2842 = vmatprep.subr.mxu0 0.0
        %2843 = vmatpush1.msra.mxu0 0.0
        %2844 = vmatprep.subr.mxu0 0.0
        %2845 = vmatpush1.msra.mxu0 0.0
        %2846 = vmatprep.subr.mxu0 0.0
        %2847 = vmatpush1.msra.mxu0 0.0
        %2848 = vmatprep.subr.mxu0 0.0
        %2849 = vmatpush1.msra.mxu0 0.0
        %2850 = vmatprep.mubr.f32.mxu0 0.0
        %2851 = vmatmul.mubr.f32.gmra.mrb[0].mxu0 %v2691
        %v2852 = vpop.f32.mrb[0].mxu0
        %v2853 = vadd.f32 %v1269, %v2852
        %v2854 = vpop.f32.mrb[0].mxu0
        %2855 = vmatprep.mubr.f32.mxu0 0.0
        %2856 = vmatmul.mubr.f32.gmra.mrb[0].mxu0 %v2694
        %v2857 = vpop.f32.mrb[0].mxu0
        %v2858 = vadd.f32 %v1269, %v2857
        %v2859 = vpop.f32.mrb[0].mxu0
        %2860 = vmatprep.mubr.f32.mxu0 0.0
        %2861 = vmatmul.mubr.f32.gmra.mrb[0].mxu0 %v2697
        %v2862 = vpop.f32.mrb[0].mxu0
        %v2863 = vadd.f32 %v1269, %v2862
        %v2864 = vpop.f32.mrb[0].mxu0
        %2865 = vmatprep.mubr.f32.mxu0 0.0
        %2866 = vmatmul.mubr.f32.gmra.mrb[0].mxu0 %v2700
        %v2867 = vpop.f32.mrb[0].mxu0
        %v2868 = vadd.f32 %v1269, %v2867
        %v2869 = vpop.f32.mrb[0].mxu0
        %2870 = vmatprep.mubr.f32.mxu0 0.0
        %2871 = vmatmul.mubr.f32.gmra.mrb[0].mxu0 %v2703
        %v2872 = vpop.f32.mrb[0].mxu0
        %v2873 = vadd.f32 %v1269, %v2872
        %v2874 = vpop.f32.mrb[0].mxu0
        %2875 = vmatprep.mubr.f32.mxu0 0.0
        %2876 = vmatmul.mubr.f32.gmra.mrb[0].mxu0 %v2706
        %v2877 = vpop.f32.mrb[0].mxu0
        %v2878 = vadd.f32 %v1269, %v2877
        %v2879 = vpop.f32.mrb[0].mxu0
        %2880 = vmatprep.mubr.f32.mxu0 0.0
        %2881 = vmatmul.mubr.f32.gmra.mrb[0].mxu0 %v2709
        %v2882 = vpop.f32.mrb[0].mxu0
        %v2883 = vadd.f32 %v1269, %v2882
        %v2884 = vpop.f32.mrb[0].mxu0
        %2885 = vmatprep.mubr.f32.mxu0 0.0
        %2886 = vmatmul.mubr.f32.gmra.mrb[0].mxu0 %v2712
        %v2887 = vpop.f32.mrb[0].mxu0
        %v2888 = vadd.f32 %v1269, %v2887
        %v2889 = vpop.f32.mrb[0].mxu0
        %2890 = vmatprep.mubr.f32.mxu0 0.0
        %2891 = vmatmul.mubr.f32.gmra.mrb[0].mxu0 %v2715
        %v2892 = vpop.f32.mrb[0].mxu0
        %v2893 = vadd.f32 %v1269, %v2892
        %v2894 = vpop.f32.mrb[0].mxu0
        %2895 = vmatprep.mubr.f32.mxu0 0.0
        %2896 = vmatmul.mubr.f32.gmra.mrb[0].mxu0 %v2718
        %v2897 = vpop.f32.mrb[0].mxu0
        %v2898 = vadd.f32 %v1269, %v2897
        %v2899 = vpop.f32.mrb[0].mxu0
        %2900 = vmatprep.mubr.f32.mxu0 0.0
        %2901 = vmatmul.mubr.f32.gmra.mrb[0].mxu0 %v2721
        %v2902 = vpop.f32.mrb[0].mxu0
        %v2903 = vadd.f32 %v1269, %v2902
        %v2904 = vpop.f32.mrb[0].mxu0
        %2905 = vmatprep.mubr.f32.mxu0 0.0
        %2906 = vmatmul.mubr.f32.gmra.mrb[0].mxu0 %v2724
        %v2907 = vpop.f32.mrb[0].mxu0
        %v2908 = vadd.f32 %v1269, %v2907
        %v2909 = vpop.f32.mrb[0].mxu0
        %2910 = vmatprep.mubr.f32.mxu0 0.0
        %2911 = vmatmul.mubr.f32.gmra.mrb[0].mxu0 %v2727
        %v2912 = vpop.f32.mrb[0].mxu0
        %v2913 = vadd.f32 %v1269, %v2912
        %v2914 = vpop.f32.mrb[0].mxu0
        %2915 = vmatprep.mubr.f32.mxu0 0.0
        %2916 = vmatmul.mubr.f32.gmra.mrb[0].mxu0 %v2730
        %v2917 = vpop.f32.mrb[0].mxu0
        %v2918 = vadd.f32 %v1269, %v2917
        %v2919 = vpop.f32.mrb[0].mxu0
        %2920 = vmatprep.mubr.f32.mxu0 0.0
        %2921 = vmatmul.mubr.f32.gmra.mrb[0].mxu0 %v2733
        %v2922 = vpop.f32.mrb[0].mxu0
        %v2923 = vadd.f32 %v1269, %v2922
        %v2924 = vpop.f32.mrb[0].mxu0
        %2925 = vmatprep.mubr.f32.mxu0 0.0
        %2926 = vmatmul.mubr.f32.gmra.mrb[0].mxu0 %v2736
        %v2927 = vpop.f32.mrb[0].mxu0
        %v2928 = vadd.f32 %v1269, %v2927
        %v2929 = vpop.f32.mrb[0].mxu0
        %2930 = vmatprep.mubr.f32.mxu0 0.0
        %2931 = vmatmul.mubr.f32.gmra.mrb[0].mxu0 %v2739
        %v2932 = vpop.f32.mrb[0].mxu0
        %v2933 = vadd.f32 %v1269, %v2932
        %v2934 = vpop.f32.mrb[0].mxu0
        %2935 = vmatprep.mubr.f32.mxu0 0.0
        %2936 = vmatmul.mubr.f32.gmra.mrb[0].mxu0 %v2742
        %v2937 = vpop.f32.mrb[0].mxu0
        %v2938 = vadd.f32 %v1269, %v2937
        %v2939 = vpop.f32.mrb[0].mxu0
        %2940 = vmatprep.mubr.f32.mxu0 0.0
        %2941 = vmatmul.mubr.f32.gmra.mrb[0].mxu0 %v2745
        %v2942 = vpop.f32.mrb[0].mxu0
        %v2943 = vadd.f32 %v1269, %v2942
        %v2944 = vpop.f32.mrb[0].mxu0
        %2945 = vmatprep.mubr.f32.mxu0 0.0
        %2946 = vmatmul.mubr.f32.gmra.mrb[0].mxu0 %v2748
        %v2947 = vpop.f32.mrb[0].mxu0
        %v2948 = vadd.f32 %v1269, %v2947
        %v2949 = vpop.f32.mrb[0].mxu0
        %2950 = vmatprep.mubr.f32.mxu0 0.0
        %2951 = vmatmul.mubr.f32.gmra.mrb[0].mxu0 %v2751
        %v2952 = vpop.f32.mrb[0].mxu0
        %v2953 = vadd.f32 %v1269, %v2952
        %v2954 = vpop.f32.mrb[0].mxu0
        %2955 = vmatprep.mubr.f32.mxu0 0.0
        %2956 = vmatmul.mubr.f32.gmra.mrb[0].mxu0 %v2754
        %v2957 = vpop.f32.mrb[0].mxu0
        %v2958 = vadd.f32 %v1269, %v2957
        %v2959 = vpop.f32.mrb[0].mxu0
        %2960 = vmatprep.mubr.f32.mxu0 0.0
        %2961 = vmatmul.mubr.f32.gmra.mrb[0].mxu0 %v2757
        %v2962 = vpop.f32.mrb[0].mxu0
        %v2963 = vadd.f32 %v1269, %v2962
        %v2964 = vpop.f32.mrb[0].mxu0
        %2965 = vmatprep.mubr.f32.mxu0 0.0
        %2966 = vmatmul.mubr.f32.gmra.mrb[0].mxu0 %v2760
        %v2967 = vpop.f32.mrb[0].mxu0
        %v2968 = vadd.f32 %v1269, %v2967
        %v2969 = vpop.f32.mrb[0].mxu0
        %2970 = vmatprep.mubr.f32.mxu0 0.0
        %2971 = vmatmul.mubr.f32.gmra.mrb[0].mxu0 %v2763
        %v2972 = vpop.f32.mrb[0].mxu0
        %v2973 = vadd.f32 %v1269, %v2972
        %v2974 = vpop.f32.mrb[0].mxu0
        %2975 = vmatprep.mubr.f32.mxu0 0.0
        %2976 = vmatmul.mubr.f32.gmra.mrb[0].mxu0 %v2766
        %v2977 = vpop.f32.mrb[0].mxu0
        %v2978 = vadd.f32 %v1269, %v2977
        %v2979 = vpop.f32.mrb[0].mxu0
        %2980 = vmatprep.mubr.f32.mxu0 0.0
        %2981 = vmatmul.mubr.f32.gmra.mrb[0].mxu0 %v2769
        %v2982 = vpop.f32.mrb[0].mxu0
        %v2983 = vadd.f32 %v1269, %v2982
        %v2984 = vpop.f32.mrb[0].mxu0
        %2985 = vmatprep.mubr.f32.mxu0 0.0
        %2986 = vmatmul.mubr.f32.gmra.mrb[0].mxu0 %v2772
        %v2987 = vpop.f32.mrb[0].mxu0
        %v2988 = vadd.f32 %v1269, %v2987
        %v2989 = vpop.f32.mrb[0].mxu0
        %2990 = vmatprep.mubr.f32.mxu0 0.0
        %2991 = vmatmul.mubr.f32.gmra.mrb[0].mxu0 %v2775
        %v2992 = vpop.f32.mrb[0].mxu0
        %v2993 = vadd.f32 %v1269, %v2992
        %v2994 = vpop.f32.mrb[0].mxu0
        %2995 = vmatprep.mubr.f32.mxu0 0.0
        %2996 = vmatmul.mubr.f32.gmra.mrb[0].mxu0 %v2778
        %v2997 = vpop.f32.mrb[0].mxu0
        %v2998 = vadd.f32 %v1269, %v2997
        %v2999 = vpop.f32.mrb[0].mxu0
        %3000 = vmatprep.mubr.f32.mxu0 0.0
        %3001 = vmatmul.mubr.f32.gmra.mrb[0].mxu0 %v2781
        %v3002 = vpop.f32.mrb[0].mxu0
        %v3003 = vadd.f32 %v1269, %v3002
        %v3004 = vpop.f32.mrb[0].mxu0
        %3005 = vmatprep.mubr.f32.mxu0 0.0
        %3006 = vmatmul.mubr.f32.gmra.mrb[0].mxu0 %v2784
        %v3007 = vpop.f32.mrb[0].mxu0
        %v3008 = vadd.f32 %v1269, %v3007
        %v3009 = vpop.f32.mrb[0].mxu0
        %3010 = vdwg.mxu0
        %vm3011 = vcmp.ge.f32.partialorder %v2853, 0.0
        %vm3012 = vcmp.ge.f32.partialorder %v2858, 0.0
        %vm3013 = vcmp.ge.f32.partialorder %v2863, 0.0
        %vm3014 = vcmp.ge.f32.partialorder %v2868, 0.0
        %vm3015 = vcmp.ge.f32.partialorder %v2873, 0.0
        %vm3016 = vcmp.ge.f32.partialorder %v2878, 0.0
        %vm3017 = vcmp.ge.f32.partialorder %v2883, 0.0
        %vm3018 = vcmp.ge.f32.partialorder %v2888, 0.0
        %vm3019 = vcmp.ge.f32.partialorder %v2893, 0.0
        %vm3020 = vcmp.ge.f32.partialorder %v2898, 0.0
        %vm3021 = vcmp.ge.f32.partialorder %v2903, 0.0
        %vm3022 = vcmp.ge.f32.partialorder %v2908, 0.0
        %vm3023 = vcmp.ge.f32.partialorder %v2913, 0.0
        %vm3024 = vcmp.ge.f32.partialorder %v2918, 0.0
        %vm3025 = vcmp.ge.f32.partialorder %v2923, 0.0
        %vm3026 = vcmp.ge.f32.partialorder %v2928, 0.0
        %vm3027 = vcmp.ge.f32.partialorder %v2933, 0.0
        %vm3028 = vcmp.ge.f32.partialorder %v2938, 0.0
        %vm3029 = vcmp.ge.f32.partialorder %v2943, 0.0
        %vm3030 = vcmp.ge.f32.partialorder %v2948, 0.0
        %vm3031 = vcmp.ge.f32.partialorder %v2953, 0.0
        %vm3032 = vcmp.ge.f32.partialorder %v2958, 0.0
        %vm3033 = vcmp.ge.f32.partialorder %v2963, 0.0
        %vm3034 = vcmp.ge.f32.partialorder %v2968, 0.0
        %vm3035 = vcmp.ge.f32.partialorder %v2973, 0.0
        %vm3036 = vcmp.ge.f32.partialorder %v2978, 0.0
        %vm3037 = vcmp.ge.f32.partialorder %v2983, 0.0
        %vm3038 = vcmp.ge.f32.partialorder %v2988, 0.0
        %vm3039 = vcmp.ge.f32.partialorder %v2993, 0.0
        %vm3040 = vcmp.ge.f32.partialorder %v2998, 0.0
        %vm3041 = vcmp.ge.f32.partialorder %v3003, 0.0
        %vm3042 = vcmp.ge.f32.partialorder %v3008, 0.0
        %v3043 = vmul.f32 %v2853, 0.01
        %v3044 = vmul.f32 %v2858, 0.01
        %v3045 = vmul.f32 %v2863, 0.01
        %v3046 = vmul.f32 %v2868, 0.01
        %v3047 = vmul.f32 %v2873, 0.01
        %v3048 = vmul.f32 %v2878, 0.01
        %v3049 = vmul.f32 %v2883, 0.01
        %v3050 = vmul.f32 %v2888, 0.01
        %v3051 = vmul.f32 %v2893, 0.01
        %v3052 = vmul.f32 %v2898, 0.01
        %v3053 = vmul.f32 %v2903, 0.01
        %v3054 = vmul.f32 %v2908, 0.01
        %v3055 = vmul.f32 %v2913, 0.01
        %v3056 = vmul.f32 %v2918, 0.01
        %v3057 = vmul.f32 %v2923, 0.01
        %v3058 = vmul.f32 %v2928, 0.01
        %v3059 = vmul.f32 %v2933, 0.01
        %v3060 = vmul.f32 %v2938, 0.01
        %v3061 = vmul.f32 %v2943, 0.01
        %v3062 = vmul.f32 %v2948, 0.01
        %v3063 = vmul.f32 %v2953, 0.01
        %v3064 = vmul.f32 %v2958, 0.01
        %v3065 = vmul.f32 %v2963, 0.01
        %v3066 = vmul.f32 %v2968, 0.01
        %v3067 = vmul.f32 %v2973, 0.01
        %v3068 = vmul.f32 %v2978, 0.01
        %v3069 = vmul.f32 %v2983, 0.01
        %v3070 = vmul.f32 %v2988, 0.01
        %v3071 = vmul.f32 %v2993, 0.01
        %v3072 = vmul.f32 %v2998, 0.01
        %v3073 = vmul.f32 %v3003, 0.01
        %v3074 = vmul.f32 %v3008, 0.01
        %v3075 = vsel %vm3011, %v2853, %v3043
        %v3076 = vsel %vm3012, %v2858, %v3044
        %v3077 = vsel %vm3013, %v2863, %v3045
        %v3078 = vsel %vm3014, %v2868, %v3046
        %v3079 = vsel %vm3015, %v2873, %v3047
        %v3080 = vsel %vm3016, %v2878, %v3048
        %v3081 = vsel %vm3017, %v2883, %v3049
        %v3082 = vsel %vm3018, %v2888, %v3050
        %v3083 = vsel %vm3019, %v2893, %v3051
        %v3084 = vsel %vm3020, %v2898, %v3052
        %v3085 = vsel %vm3021, %v2903, %v3053
        %v3086 = vsel %vm3022, %v2908, %v3054
        %v3087 = vsel %vm3023, %v2913, %v3055
        %v3088 = vsel %vm3024, %v2918, %v3056
        %v3089 = vsel %vm3025, %v2923, %v3057
        %v3090 = vsel %vm3026, %v2928, %v3058
        %v3091 = vsel %vm3027, %v2933, %v3059
        %v3092 = vsel %vm3028, %v2938, %v3060
        %v3093 = vsel %vm3029, %v2943, %v3061
        %v3094 = vsel %vm3030, %v2948, %v3062
        %v3095 = vsel %vm3031, %v2953, %v3063
        %v3096 = vsel %vm3032, %v2958, %v3064
        %v3097 = vsel %vm3033, %v2963, %v3065
        %v3098 = vsel %vm3034, %v2968, %v3066
        %v3099 = vsel %vm3035, %v2973, %v3067
        %v3100 = vsel %vm3036, %v2978, %v3068
        %v3101 = vsel %vm3037, %v2983, %v3069
        %v3102 = vsel %vm3038, %v2988, %v3070
        %v3103 = vsel %vm3039, %v2993, %v3071
        %v3104 = vsel %vm3040, %v2998, %v3072
        %v3105 = vsel %vm3041, %v3003, %v3073
        %v3106 = vsel %vm3042, %v3008, %v3074
        %v3107 = vmax.f32 %v2625, %v3075
        %v3108 = vmax.f32 %v2626, %v3076
        %v3109 = vmax.f32 %v2627, %v3077
        %v3110 = vmax.f32 %v2628, %v3078
        %v3111 = vmax.f32 %v2629, %v3079
        %v3112 = vmax.f32 %v2630, %v3080
        %v3113 = vmax.f32 %v2631, %v3081
        %v3114 = vmax.f32 %v2632, %v3082
        %v3115 = vmax.f32 %v2633, %v3083
        %v3116 = vmax.f32 %v2634, %v3084
        %v3117 = vmax.f32 %v2635, %v3085
        %v3118 = vmax.f32 %v2636, %v3086
        %v3119 = vmax.f32 %v2637, %v3087
        %v3120 = vmax.f32 %v2638, %v3088
        %v3121 = vmax.f32 %v2639, %v3089
        %v3122 = vmax.f32 %v2640, %v3090
        %v3123 = vmax.f32 %v2641, %v3091
        %v3124 = vmax.f32 %v2642, %v3092
        %v3125 = vmax.f32 %v2643, %v3093
        %v3126 = vmax.f32 %v2644, %v3094
        %v3127 = vmax.f32 %v2645, %v3095
        %v3128 = vmax.f32 %v2646, %v3096
        %v3129 = vmax.f32 %v2647, %v3097
        %v3130 = vmax.f32 %v2648, %v3098
        %v3131 = vmax.f32 %v2649, %v3099
        %v3132 = vmax.f32 %v2650, %v3100
        %v3133 = vmax.f32 %v2651, %v3101
        %v3134 = vmax.f32 %v2652, %v3102
        %v3135 = vmax.f32 %v2653, %v3103
        %v3136 = vmax.f32 %v2654, %v3104
        %v3137 = vmax.f32 %v2655, %v3105
        %v3138 = vmax.f32 %v2656, %v3106
        %s3139 = scalar_lea.vmem %s1200, 1024 [#allocation2]
        %v3140 = vld [vmem:[%s3139] sm:$0xff]
        %v3141 = vld [vmem:[%s3139 + $0x8] sm:$0xff]
        %v3142 = vld [vmem:[%s3139 + $0x10] sm:$0xff]
        %v3143 = vld [vmem:[%s3139 + $0x18] sm:$0xff]
        %v3144 = vld [vmem:[%s3139 + $0x20] sm:$0xff]
        %v3145 = vld [vmem:[%s3139 + $0x28] sm:$0xff]
        %v3146 = vld [vmem:[%s3139 + $0x30] sm:$0xff]
        %v3147 = vld [vmem:[%s3139 + $0x38] sm:$0xff]
        %v3148 = vld [vmem:[%s3139 + $0x40] sm:$0xff]
        %v3149 = vld [vmem:[%s3139 + $0x48] sm:$0xff]
        %v3150 = vld [vmem:[%s3139 + $0x50] sm:$0xff]
        %v3151 = vld [vmem:[%s3139 + $0x58] sm:$0xff]
        %v3152 = vld [vmem:[%s3139 + $0x60] sm:$0xff]
        %v3153 = vld [vmem:[%s3139 + $0x68] sm:$0xff]
        %v3154 = vld [vmem:[%s3139 + $0x70] sm:$0xff]
        %v3155 = vld [vmem:[%s3139 + $0x78] sm:$0xff]
        %v3156 = vld [vmem:[%s3139 + $0x80] sm:$0xff]
        %v3157 = vld [vmem:[%s3139 + $0x88] sm:$0xff]
        %v3158 = vld [vmem:[%s3139 + $0x90] sm:$0xff]
        %v3159 = vld [vmem:[%s3139 + $0x98] sm:$0xff]
        %v3160 = vld [vmem:[%s3139 + $0xa0] sm:$0xff]
        %v3161 = vld [vmem:[%s3139 + $0xa8] sm:$0xff]
        %v3162 = vld [vmem:[%s3139 + $0xb0] sm:$0xff]
        %v3163 = vld [vmem:[%s3139 + $0xb8] sm:$0xff]
        %v3164 = vld [vmem:[%s3139 + $0xc0] sm:$0xff]
        %v3165 = vld [vmem:[%s3139 + $0xc8] sm:$0xff]
        %v3166 = vld [vmem:[%s3139 + $0xd0] sm:$0xff]
        %v3167 = vld [vmem:[%s3139 + $0xd8] sm:$0xff]
        %v3168 = vld [vmem:[%s3139 + $0xe0] sm:$0xff]
        %v3169 = vld [vmem:[%s3139 + $0xe8] sm:$0xff]
        %v3170 = vld [vmem:[%s3139 + $0xf0] sm:$0xff]
        %v3171 = vld [vmem:[%s3139 + $0xf8] sm:$0xff]
        %v3173 = vsel %vm1271, %v3140, 0
        %v3176 = vsel %vm1271, %v3141, 0
        %v3179 = vsel %vm1271, %v3142, 0
        %v3182 = vsel %vm1271, %v3143, 0
        %v3185 = vsel %vm1271, %v3144, 0
        %v3188 = vsel %vm1271, %v3145, 0
        %v3191 = vsel %vm1271, %v3146, 0
        %v3194 = vsel %vm1271, %v3147, 0
        %v3197 = vsel %vm1271, %v3148, 0
        %v3200 = vsel %vm1271, %v3149, 0
        %v3203 = vsel %vm1271, %v3150, 0
        %v3206 = vsel %vm1271, %v3151, 0
        %v3209 = vsel %vm1271, %v3152, 0
        %v3212 = vsel %vm1271, %v3153, 0
        %v3215 = vsel %vm1271, %v3154, 0
        %v3218 = vsel %vm1271, %v3155, 0
        %v3221 = vsel %vm1271, %v3156, 0
        %v3224 = vsel %vm1271, %v3157, 0
        %v3227 = vsel %vm1271, %v3158, 0
        %v3230 = vsel %vm1271, %v3159, 0
        %v3233 = vsel %vm1271, %v3160, 0
        %v3236 = vsel %vm1271, %v3161, 0
        %v3239 = vsel %vm1271, %v3162, 0
        %v3242 = vsel %vm1271, %v3163, 0
        %v3245 = vsel %vm1271, %v3164, 0
        %v3248 = vsel %vm1271, %v3165, 0
        %v3251 = vsel %vm1271, %v3166, 0
        %v3254 = vsel %vm1271, %v3167, 0
        %v3257 = vsel %vm1271, %v3168, 0
        %v3260 = vsel %vm1271, %v3169, 0
        %v3263 = vsel %vm1271, %v3170, 0
        %v3266 = vsel %vm1271, %v3171, 0
        %3268 = vmatprep.subr.mxu0 0.0
        %3269 = vmatpush1.msra.mxu0 %v1228
        %3270 = vmatprep.subr.mxu0 0.0
        %3271 = vmatpush1.msra.mxu0 %v1229
        %3272 = vmatprep.subr.mxu0 0.0
        %3273 = vmatpush1.msra.mxu0 %v1230
        %3274 = vmatprep.subr.mxu0 0.0
        %3275 = vmatpush1.msra.mxu0 %v1370
        %3276 = vmatprep.subr.mxu0 0.0
        %3277 = vmatpush1.msra.mxu0 0.0
        %3278 = vmatprep.subr.mxu0 0.0
        %3279 = vmatpush1.msra.mxu0 0.0
        %3280 = vmatprep.subr.mxu0 0.0
        %3281 = vmatpush1.msra.mxu0 0.0
        %3282 = vmatprep.subr.mxu0 0.0
        %3283 = vmatpush1.msra.mxu0 0.0
        %3284 = vmatprep.subr.mxu0 0.0
        %3285 = vmatpush1.msra.mxu0 0.0
        %3286 = vmatprep.subr.mxu0 0.0
        %3287 = vmatpush1.msra.mxu0 0.0
        %3288 = vmatprep.subr.mxu0 0.0
        %3289 = vmatpush1.msra.mxu0 0.0
        %3290 = vmatprep.subr.mxu0 0.0
        %3291 = vmatpush1.msra.mxu0 0.0
        %3292 = vmatprep.subr.mxu0 0.0
        %3293 = vmatpush1.msra.mxu0 0.0
        %3294 = vmatprep.subr.mxu0 0.0
        %3295 = vmatpush1.msra.mxu0 0.0
        %3296 = vmatprep.subr.mxu0 0.0
        %3297 = vmatpush1.msra.mxu0 0.0
        %3298 = vmatprep.subr.mxu0 0.0
        %3299 = vmatpush1.msra.mxu0 0.0
        %3300 = vmatprep.subr.mxu0 0.0
        %3301 = vmatpush1.msra.mxu0 0.0
        %3302 = vmatprep.subr.mxu0 0.0
        %3303 = vmatpush1.msra.mxu0 0.0
        %3304 = vmatprep.subr.mxu0 0.0
        %3305 = vmatpush1.msra.mxu0 0.0
        %3306 = vmatprep.subr.mxu0 0.0
        %3307 = vmatpush1.msra.mxu0 0.0
        %3308 = vmatprep.subr.mxu0 0.0
        %3309 = vmatpush1.msra.mxu0 0.0
        %3310 = vmatprep.subr.mxu0 0.0
        %3311 = vmatpush1.msra.mxu0 0.0
        %3312 = vmatprep.subr.mxu0 0.0
        %3313 = vmatpush1.msra.mxu0 0.0
        %3314 = vmatprep.subr.mxu0 0.0
        %3315 = vmatpush1.msra.mxu0 0.0
        %3316 = vmatprep.subr.mxu0 0.0
        %3317 = vmatpush1.msra.mxu0 0.0
        %3318 = vmatprep.subr.mxu0 0.0
        %3319 = vmatpush1.msra.mxu0 0.0
        %3320 = vmatprep.subr.mxu0 0.0
        %3321 = vmatpush1.msra.mxu0 0.0
        %3322 = vmatprep.subr.mxu0 0.0
        %3323 = vmatpush1.msra.mxu0 0.0
        %3324 = vmatprep.subr.mxu0 0.0
        %3325 = vmatpush1.msra.mxu0 0.0
        %3326 = vmatprep.subr.mxu0 0.0
        %3327 = vmatpush1.msra.mxu0 0.0
        %3328 = vmatprep.subr.mxu0 0.0
        %3329 = vmatpush1.msra.mxu0 0.0
        %3330 = vmatprep.subr.mxu0 0.0
        %3331 = vmatpush1.msra.mxu0 0.0
        %3332 = vmatprep.mubr.f32.mxu0 0.0
        %3333 = vmatmul.mubr.f32.gmra.mrb[0].mxu0 %v3173
        %v3334 = vpop.f32.mrb[0].mxu0
        %v3335 = vadd.f32 %v1269, %v3334
        %v3336 = vpop.f32.mrb[0].mxu0
        %3337 = vmatprep.mubr.f32.mxu0 0.0
        %3338 = vmatmul.mubr.f32.gmra.mrb[0].mxu0 %v3176
        %v3339 = vpop.f32.mrb[0].mxu0
        %v3340 = vadd.f32 %v1269, %v3339
        %v3341 = vpop.f32.mrb[0].mxu0
        %3342 = vmatprep.mubr.f32.mxu0 0.0
        %3343 = vmatmul.mubr.f32.gmra.mrb[0].mxu0 %v3179
        %v3344 = vpop.f32.mrb[0].mxu0
        %v3345 = vadd.f32 %v1269, %v3344
        %v3346 = vpop.f32.mrb[0].mxu0
        %3347 = vmatprep.mubr.f32.mxu0 0.0
        %3348 = vmatmul.mubr.f32.gmra.mrb[0].mxu0 %v3182
        %v3349 = vpop.f32.mrb[0].mxu0
        %v3350 = vadd.f32 %v1269, %v3349
        %v3351 = vpop.f32.mrb[0].mxu0
        %3352 = vmatprep.mubr.f32.mxu0 0.0
        %3353 = vmatmul.mubr.f32.gmra.mrb[0].mxu0 %v3185
        %v3354 = vpop.f32.mrb[0].mxu0
        %v3355 = vadd.f32 %v1269, %v3354
        %v3356 = vpop.f32.mrb[0].mxu0
        %3357 = vmatprep.mubr.f32.mxu0 0.0
        %3358 = vmatmul.mubr.f32.gmra.mrb[0].mxu0 %v3188
        %v3359 = vpop.f32.mrb[0].mxu0
        %v3360 = vadd.f32 %v1269, %v3359
        %v3361 = vpop.f32.mrb[0].mxu0
        %3362 = vmatprep.mubr.f32.mxu0 0.0
        %3363 = vmatmul.mubr.f32.gmra.mrb[0].mxu0 %v3191
        %v3364 = vpop.f32.mrb[0].mxu0
        %v3365 = vadd.f32 %v1269, %v3364
        %v3366 = vpop.f32.mrb[0].mxu0
        %3367 = vmatprep.mubr.f32.mxu0 0.0
        %3368 = vmatmul.mubr.f32.gmra.mrb[0].mxu0 %v3194
        %v3369 = vpop.f32.mrb[0].mxu0
        %v3370 = vadd.f32 %v1269, %v3369
        %v3371 = vpop.f32.mrb[0].mxu0
        %3372 = vmatprep.mubr.f32.mxu0 0.0
        %3373 = vmatmul.mubr.f32.gmra.mrb[0].mxu0 %v3197
        %v3374 = vpop.f32.mrb[0].mxu0
        %v3375 = vadd.f32 %v1269, %v3374
        %v3376 = vpop.f32.mrb[0].mxu0
        %3377 = vmatprep.mubr.f32.mxu0 0.0
        %3378 = vmatmul.mubr.f32.gmra.mrb[0].mxu0 %v3200
        %v3379 = vpop.f32.mrb[0].mxu0
        %v3380 = vadd.f32 %v1269, %v3379
        %v3381 = vpop.f32.mrb[0].mxu0
        %3382 = vmatprep.mubr.f32.mxu0 0.0
        %3383 = vmatmul.mubr.f32.gmra.mrb[0].mxu0 %v3203
        %v3384 = vpop.f32.mrb[0].mxu0
        %v3385 = vadd.f32 %v1269, %v3384
        %v3386 = vpop.f32.mrb[0].mxu0
        %3387 = vmatprep.mubr.f32.mxu0 0.0
        %3388 = vmatmul.mubr.f32.gmra.mrb[0].mxu0 %v3206
        %v3389 = vpop.f32.mrb[0].mxu0
        %v3390 = vadd.f32 %v1269, %v3389
        %v3391 = vpop.f32.mrb[0].mxu0
        %3392 = vmatprep.mubr.f32.mxu0 0.0
        %3393 = vmatmul.mubr.f32.gmra.mrb[0].mxu0 %v3209
        %v3394 = vpop.f32.mrb[0].mxu0
        %v3395 = vadd.f32 %v1269, %v3394
        %v3396 = vpop.f32.mrb[0].mxu0
        %3397 = vmatprep.mubr.f32.mxu0 0.0
        %3398 = vmatmul.mubr.f32.gmra.mrb[0].mxu0 %v3212
        %v3399 = vpop.f32.mrb[0].mxu0
        %v3400 = vadd.f32 %v1269, %v3399
        %v3401 = vpop.f32.mrb[0].mxu0
        %3402 = vmatprep.mubr.f32.mxu0 0.0
        %3403 = vmatmul.mubr.f32.gmra.mrb[0].mxu0 %v3215
        %v3404 = vpop.f32.mrb[0].mxu0
        %v3405 = vadd.f32 %v1269, %v3404
        %v3406 = vpop.f32.mrb[0].mxu0
        %3407 = vmatprep.mubr.f32.mxu0 0.0
        %3408 = vmatmul.mubr.f32.gmra.mrb[0].mxu0 %v3218
        %v3409 = vpop.f32.mrb[0].mxu0
        %v3410 = vadd.f32 %v1269, %v3409
        %v3411 = vpop.f32.mrb[0].mxu0
        %3412 = vmatprep.mubr.f32.mxu0 0.0
        %3413 = vmatmul.mubr.f32.gmra.mrb[0].mxu0 %v3221
        %v3414 = vpop.f32.mrb[0].mxu0
        %v3415 = vadd.f32 %v1269, %v3414
        %v3416 = vpop.f32.mrb[0].mxu0
        %3417 = vmatprep.mubr.f32.mxu0 0.0
        %3418 = vmatmul.mubr.f32.gmra.mrb[0].mxu0 %v3224
        %v3419 = vpop.f32.mrb[0].mxu0
        %v3420 = vadd.f32 %v1269, %v3419
        %v3421 = vpop.f32.mrb[0].mxu0
        %3422 = vmatprep.mubr.f32.mxu0 0.0
        %3423 = vmatmul.mubr.f32.gmra.mrb[0].mxu0 %v3227
        %v3424 = vpop.f32.mrb[0].mxu0
        %v3425 = vadd.f32 %v1269, %v3424
        %v3426 = vpop.f32.mrb[0].mxu0
        %3427 = vmatprep.mubr.f32.mxu0 0.0
        %3428 = vmatmul.mubr.f32.gmra.mrb[0].mxu0 %v3230
        %v3429 = vpop.f32.mrb[0].mxu0
        %v3430 = vadd.f32 %v1269, %v3429
        %v3431 = vpop.f32.mrb[0].mxu0
        %3432 = vmatprep.mubr.f32.mxu0 0.0
        %3433 = vmatmul.mubr.f32.gmra.mrb[0].mxu0 %v3233
        %v3434 = vpop.f32.mrb[0].mxu0
        %v3435 = vadd.f32 %v1269, %v3434
        %v3436 = vpop.f32.mrb[0].mxu0
        %3437 = vmatprep.mubr.f32.mxu0 0.0
        %3438 = vmatmul.mubr.f32.gmra.mrb[0].mxu0 %v3236
        %v3439 = vpop.f32.mrb[0].mxu0
        %v3440 = vadd.f32 %v1269, %v3439
        %v3441 = vpop.f32.mrb[0].mxu0
        %3442 = vmatprep.mubr.f32.mxu0 0.0
        %3443 = vmatmul.mubr.f32.gmra.mrb[0].mxu0 %v3239
        %v3444 = vpop.f32.mrb[0].mxu0
        %v3445 = vadd.f32 %v1269, %v3444
        %v3446 = vpop.f32.mrb[0].mxu0
        %3447 = vmatprep.mubr.f32.mxu0 0.0
        %3448 = vmatmul.mubr.f32.gmra.mrb[0].mxu0 %v3242
        %v3449 = vpop.f32.mrb[0].mxu0
        %v3450 = vadd.f32 %v1269, %v3449
        %v3451 = vpop.f32.mrb[0].mxu0
        %3452 = vmatprep.mubr.f32.mxu0 0.0
        %3453 = vmatmul.mubr.f32.gmra.mrb[0].mxu0 %v3245
        %v3454 = vpop.f32.mrb[0].mxu0
        %v3455 = vadd.f32 %v1269, %v3454
        %v3456 = vpop.f32.mrb[0].mxu0
        %3457 = vmatprep.mubr.f32.mxu0 0.0
        %3458 = vmatmul.mubr.f32.gmra.mrb[0].mxu0 %v3248
        %v3459 = vpop.f32.mrb[0].mxu0
        %v3460 = vadd.f32 %v1269, %v3459
        %v3461 = vpop.f32.mrb[0].mxu0
        %3462 = vmatprep.mubr.f32.mxu0 0.0
        %3463 = vmatmul.mubr.f32.gmra.mrb[0].mxu0 %v3251
        %v3464 = vpop.f32.mrb[0].mxu0
        %v3465 = vadd.f32 %v1269, %v3464
        %v3466 = vpop.f32.mrb[0].mxu0
        %3467 = vmatprep.mubr.f32.mxu0 0.0
        %3468 = vmatmul.mubr.f32.gmra.mrb[0].mxu0 %v3254
        %v3469 = vpop.f32.mrb[0].mxu0
        %v3470 = vadd.f32 %v1269, %v3469
        %v3471 = vpop.f32.mrb[0].mxu0
        %3472 = vmatprep.mubr.f32.mxu0 0.0
        %3473 = vmatmul.mubr.f32.gmra.mrb[0].mxu0 %v3257
        %v3474 = vpop.f32.mrb[0].mxu0
        %v3475 = vadd.f32 %v1269, %v3474
        %v3476 = vpop.f32.mrb[0].mxu0
        %3477 = vmatprep.mubr.f32.mxu0 0.0
        %3478 = vmatmul.mubr.f32.gmra.mrb[0].mxu0 %v3260
        %v3479 = vpop.f32.mrb[0].mxu0
        %v3480 = vadd.f32 %v1269, %v3479
        %v3481 = vpop.f32.mrb[0].mxu0
        %3482 = vmatprep.mubr.f32.mxu0 0.0
        %3483 = vmatmul.mubr.f32.gmra.mrb[0].mxu0 %v3263
        %v3484 = vpop.f32.mrb[0].mxu0
        %v3485 = vadd.f32 %v1269, %v3484
        %v3486 = vpop.f32.mrb[0].mxu0
        %3487 = vmatprep.mubr.f32.mxu0 0.0
        %3488 = vmatmul.mubr.f32.gmra.mrb[0].mxu0 %v3266
        %v3489 = vpop.f32.mrb[0].mxu0
        %v3490 = vadd.f32 %v1269, %v3489
        %v3491 = vpop.f32.mrb[0].mxu0
        %3492 = vdwg.mxu0
        %vm3493 = vcmp.ge.f32.partialorder %v3335, 0.0
        %vm3494 = vcmp.ge.f32.partialorder %v3340, 0.0
        %vm3495 = vcmp.ge.f32.partialorder %v3345, 0.0
        %vm3496 = vcmp.ge.f32.partialorder %v3350, 0.0
        %vm3497 = vcmp.ge.f32.partialorder %v3355, 0.0
        %vm3498 = vcmp.ge.f32.partialorder %v3360, 0.0
        %vm3499 = vcmp.ge.f32.partialorder %v3365, 0.0
        %vm3500 = vcmp.ge.f32.partialorder %v3370, 0.0
        %vm3501 = vcmp.ge.f32.partialorder %v3375, 0.0
        %vm3502 = vcmp.ge.f32.partialorder %v3380, 0.0
        %vm3503 = vcmp.ge.f32.partialorder %v3385, 0.0
        %vm3504 = vcmp.ge.f32.partialorder %v3390, 0.0
        %vm3505 = vcmp.ge.f32.partialorder %v3395, 0.0
        %vm3506 = vcmp.ge.f32.partialorder %v3400, 0.0
        %vm3507 = vcmp.ge.f32.partialorder %v3405, 0.0
        %vm3508 = vcmp.ge.f32.partialorder %v3410, 0.0
        %vm3509 = vcmp.ge.f32.partialorder %v3415, 0.0
        %vm3510 = vcmp.ge.f32.partialorder %v3420, 0.0
        %vm3511 = vcmp.ge.f32.partialorder %v3425, 0.0
        %vm3512 = vcmp.ge.f32.partialorder %v3430, 0.0
        %vm3513 = vcmp.ge.f32.partialorder %v3435, 0.0
        %vm3514 = vcmp.ge.f32.partialorder %v3440, 0.0
        %vm3515 = vcmp.ge.f32.partialorder %v3445, 0.0
        %vm3516 = vcmp.ge.f32.partialorder %v3450, 0.0
        %vm3517 = vcmp.ge.f32.partialorder %v3455, 0.0
        %vm3518 = vcmp.ge.f32.partialorder %v3460, 0.0
        %vm3519 = vcmp.ge.f32.partialorder %v3465, 0.0
        %vm3520 = vcmp.ge.f32.partialorder %v3470, 0.0
        %vm3521 = vcmp.ge.f32.partialorder %v3475, 0.0
        %vm3522 = vcmp.ge.f32.partialorder %v3480, 0.0
        %vm3523 = vcmp.ge.f32.partialorder %v3485, 0.0
        %vm3524 = vcmp.ge.f32.partialorder %v3490, 0.0
        %v3525 = vmul.f32 %v3335, 0.01
        %v3526 = vmul.f32 %v3340, 0.01
        %v3527 = vmul.f32 %v3345, 0.01
        %v3528 = vmul.f32 %v3350, 0.01
        %v3529 = vmul.f32 %v3355, 0.01
        %v3530 = vmul.f32 %v3360, 0.01
        %v3531 = vmul.f32 %v3365, 0.01
        %v3532 = vmul.f32 %v3370, 0.01
        %v3533 = vmul.f32 %v3375, 0.01
        %v3534 = vmul.f32 %v3380, 0.01
        %v3535 = vmul.f32 %v3385, 0.01
        %v3536 = vmul.f32 %v3390, 0.01
        %v3537 = vmul.f32 %v3395, 0.01
        %v3538 = vmul.f32 %v3400, 0.01
        %v3539 = vmul.f32 %v3405, 0.01
        %v3540 = vmul.f32 %v3410, 0.01
        %v3541 = vmul.f32 %v3415, 0.01
        %v3542 = vmul.f32 %v3420, 0.01
        %v3543 = vmul.f32 %v3425, 0.01
        %v3544 = vmul.f32 %v3430, 0.01
        %v3545 = vmul.f32 %v3435, 0.01
        %v3546 = vmul.f32 %v3440, 0.01
        %v3547 = vmul.f32 %v3445, 0.01
        %v3548 = vmul.f32 %v3450, 0.01
        %v3549 = vmul.f32 %v3455, 0.01
        %v3550 = vmul.f32 %v3460, 0.01
        %v3551 = vmul.f32 %v3465, 0.01
        %v3552 = vmul.f32 %v3470, 0.01
        %v3553 = vmul.f32 %v3475, 0.01
        %v3554 = vmul.f32 %v3480, 0.01
        %v3555 = vmul.f32 %v3485, 0.01
        %v3556 = vmul.f32 %v3490, 0.01
        %v3557 = vsel %vm3493, %v3335, %v3525
        %v3558 = vsel %vm3494, %v3340, %v3526
        %v3559 = vsel %vm3495, %v3345, %v3527
        %v3560 = vsel %vm3496, %v3350, %v3528
        %v3561 = vsel %vm3497, %v3355, %v3529
        %v3562 = vsel %vm3498, %v3360, %v3530
        %v3563 = vsel %vm3499, %v3365, %v3531
        %v3564 = vsel %vm3500, %v3370, %v3532
        %v3565 = vsel %vm3501, %v3375, %v3533
        %v3566 = vsel %vm3502, %v3380, %v3534
        %v3567 = vsel %vm3503, %v3385, %v3535
        %v3568 = vsel %vm3504, %v3390, %v3536
        %v3569 = vsel %vm3505, %v3395, %v3537
        %v3570 = vsel %vm3506, %v3400, %v3538
        %v3571 = vsel %vm3507, %v3405, %v3539
        %v3572 = vsel %vm3508, %v3410, %v3540
        %v3573 = vsel %vm3509, %v3415, %v3541
        %v3574 = vsel %vm3510, %v3420, %v3542
        %v3575 = vsel %vm3511, %v3425, %v3543
        %v3576 = vsel %vm3512, %v3430, %v3544
        %v3577 = vsel %vm3513, %v3435, %v3545
        %v3578 = vsel %vm3514, %v3440, %v3546
        %v3579 = vsel %vm3515, %v3445, %v3547
        %v3580 = vsel %vm3516, %v3450, %v3548
        %v3581 = vsel %vm3517, %v3455, %v3549
        %v3582 = vsel %vm3518, %v3460, %v3550
        %v3583 = vsel %vm3519, %v3465, %v3551
        %v3584 = vsel %vm3520, %v3470, %v3552
        %v3585 = vsel %vm3521, %v3475, %v3553
        %v3586 = vsel %vm3522, %v3480, %v3554
        %v3587 = vsel %vm3523, %v3485, %v3555
        %v3588 = vsel %vm3524, %v3490, %v3556
        %v3589 = vmax.f32 %v3107, %v3557
        %v3590 = vmax.f32 %v3108, %v3558
        %v3591 = vmax.f32 %v3109, %v3559
        %v3592 = vmax.f32 %v3110, %v3560
        %v3593 = vmax.f32 %v3111, %v3561
        %v3594 = vmax.f32 %v3112, %v3562
        %v3595 = vmax.f32 %v3113, %v3563
        %v3596 = vmax.f32 %v3114, %v3564
        %v3597 = vmax.f32 %v3115, %v3565
        %v3598 = vmax.f32 %v3116, %v3566
        %v3599 = vmax.f32 %v3117, %v3567
        %v3600 = vmax.f32 %v3118, %v3568
        %v3601 = vmax.f32 %v3119, %v3569
        %v3602 = vmax.f32 %v3120, %v3570
        %v3603 = vmax.f32 %v3121, %v3571
        %v3604 = vmax.f32 %v3122, %v3572
        %v3605 = vmax.f32 %v3123, %v3573
        %v3606 = vmax.f32 %v3124, %v3574
        %v3607 = vmax.f32 %v3125, %v3575
        %v3608 = vmax.f32 %v3126, %v3576
        %v3609 = vmax.f32 %v3127, %v3577
        %v3610 = vmax.f32 %v3128, %v3578
        %v3611 = vmax.f32 %v3129, %v3579
        %v3612 = vmax.f32 %v3130, %v3580
        %v3613 = vmax.f32 %v3131, %v3581
        %v3614 = vmax.f32 %v3132, %v3582
        %v3615 = vmax.f32 %v3133, %v3583
        %v3616 = vmax.f32 %v3134, %v3584
        %v3617 = vmax.f32 %v3135, %v3585
        %v3618 = vmax.f32 %v3136, %v3586
        %v3619 = vmax.f32 %v3137, %v3587
        %v3620 = vmax.f32 %v3138, %v3588
        %s3621 = scalar_lea.vmem %s1200, 1280 [#allocation2]
        %v3622 = vld [vmem:[%s3621] sm:$0xff]
        %v3623 = vld [vmem:[%s3621 + $0x8] sm:$0xff]
        %v3624 = vld [vmem:[%s3621 + $0x10] sm:$0xff]
        %v3625 = vld [vmem:[%s3621 + $0x18] sm:$0xff]
        %v3626 = vld [vmem:[%s3621 + $0x20] sm:$0xff]
        %v3627 = vld [vmem:[%s3621 + $0x28] sm:$0xff]
        %v3628 = vld [vmem:[%s3621 + $0x30] sm:$0xff]
        %v3629 = vld [vmem:[%s3621 + $0x38] sm:$0xff]
        %v3630 = vld [vmem:[%s3621 + $0x40] sm:$0xff]
        %v3631 = vld [vmem:[%s3621 + $0x48] sm:$0xff]
        %v3632 = vld [vmem:[%s3621 + $0x50] sm:$0xff]
        %v3633 = vld [vmem:[%s3621 + $0x58] sm:$0xff]
        %v3634 = vld [vmem:[%s3621 + $0x60] sm:$0xff]
        %v3635 = vld [vmem:[%s3621 + $0x68] sm:$0xff]
        %v3636 = vld [vmem:[%s3621 + $0x70] sm:$0xff]
        %v3637 = vld [vmem:[%s3621 + $0x78] sm:$0xff]
        %v3638 = vld [vmem:[%s3621 + $0x80] sm:$0xff]
        %v3639 = vld [vmem:[%s3621 + $0x88] sm:$0xff]
        %v3640 = vld [vmem:[%s3621 + $0x90] sm:$0xff]
        %v3641 = vld [vmem:[%s3621 + $0x98] sm:$0xff]
        %v3642 = vld [vmem:[%s3621 + $0xa0] sm:$0xff]
        %v3643 = vld [vmem:[%s3621 + $0xa8] sm:$0xff]
        %v3644 = vld [vmem:[%s3621 + $0xb0] sm:$0xff]
        %v3645 = vld [vmem:[%s3621 + $0xb8] sm:$0xff]
        %v3646 = vld [vmem:[%s3621 + $0xc0] sm:$0xff]
        %v3647 = vld [vmem:[%s3621 + $0xc8] sm:$0xff]
        %v3648 = vld [vmem:[%s3621 + $0xd0] sm:$0xff]
        %v3649 = vld [vmem:[%s3621 + $0xd8] sm:$0xff]
        %v3650 = vld [vmem:[%s3621 + $0xe0] sm:$0xff]
        %v3651 = vld [vmem:[%s3621 + $0xe8] sm:$0xff]
        %v3652 = vld [vmem:[%s3621 + $0xf0] sm:$0xff]
        %v3653 = vld [vmem:[%s3621 + $0xf8] sm:$0xff]
        %v3655 = vsel %vm1271, %v3622, 0
        %v3658 = vsel %vm1271, %v3623, 0
        %v3661 = vsel %vm1271, %v3624, 0
        %v3664 = vsel %vm1271, %v3625, 0
        %v3667 = vsel %vm1271, %v3626, 0
        %v3670 = vsel %vm1271, %v3627, 0
        %v3673 = vsel %vm1271, %v3628, 0
        %v3676 = vsel %vm1271, %v3629, 0
        %v3679 = vsel %vm1271, %v3630, 0
        %v3682 = vsel %vm1271, %v3631, 0
        %v3685 = vsel %vm1271, %v3632, 0
        %v3688 = vsel %vm1271, %v3633, 0
        %v3691 = vsel %vm1271, %v3634, 0
        %v3694 = vsel %vm1271, %v3635, 0
        %v3697 = vsel %vm1271, %v3636, 0
        %v3700 = vsel %vm1271, %v3637, 0
        %v3703 = vsel %vm1271, %v3638, 0
        %v3706 = vsel %vm1271, %v3639, 0
        %v3709 = vsel %vm1271, %v3640, 0
        %v3712 = vsel %vm1271, %v3641, 0
        %v3715 = vsel %vm1271, %v3642, 0
        %v3718 = vsel %vm1271, %v3643, 0
        %v3721 = vsel %vm1271, %v3644, 0
        %v3724 = vsel %vm1271, %v3645, 0
        %v3727 = vsel %vm1271, %v3646, 0
        %v3730 = vsel %vm1271, %v3647, 0
        %v3733 = vsel %vm1271, %v3648, 0
        %v3736 = vsel %vm1271, %v3649, 0
        %v3739 = vsel %vm1271, %v3650, 0
        %v3742 = vsel %vm1271, %v3651, 0
        %v3745 = vsel %vm1271, %v3652, 0
        %v3748 = vsel %vm1271, %v3653, 0
        %3750 = vmatprep.subr.mxu0 0.0
        %3751 = vmatpush1.msra.mxu0 %v1228
        %3752 = vmatprep.subr.mxu0 0.0
        %3753 = vmatpush1.msra.mxu0 %v1229
        %3754 = vmatprep.subr.mxu0 0.0
        %3755 = vmatpush1.msra.mxu0 %v1230
        %3756 = vmatprep.subr.mxu0 0.0
        %3757 = vmatpush1.msra.mxu0 %v1370
        %3758 = vmatprep.subr.mxu0 0.0
        %3759 = vmatpush1.msra.mxu0 0.0
        %3760 = vmatprep.subr.mxu0 0.0
        %3761 = vmatpush1.msra.mxu0 0.0
        %3762 = vmatprep.subr.mxu0 0.0
        %3763 = vmatpush1.msra.mxu0 0.0
        %3764 = vmatprep.subr.mxu0 0.0
        %3765 = vmatpush1.msra.mxu0 0.0
        %3766 = vmatprep.subr.mxu0 0.0
        %3767 = vmatpush1.msra.mxu0 0.0
        %3768 = vmatprep.subr.mxu0 0.0
        %3769 = vmatpush1.msra.mxu0 0.0
        %3770 = vmatprep.subr.mxu0 0.0
        %3771 = vmatpush1.msra.mxu0 0.0
        %3772 = vmatprep.subr.mxu0 0.0
        %3773 = vmatpush1.msra.mxu0 0.0
        %3774 = vmatprep.subr.mxu0 0.0
        %3775 = vmatpush1.msra.mxu0 0.0
        %3776 = vmatprep.subr.mxu0 0.0
        %3777 = vmatpush1.msra.mxu0 0.0
        %3778 = vmatprep.subr.mxu0 0.0
        %3779 = vmatpush1.msra.mxu0 0.0
        %3780 = vmatprep.subr.mxu0 0.0
        %3781 = vmatpush1.msra.mxu0 0.0
        %3782 = vmatprep.subr.mxu0 0.0
        %3783 = vmatpush1.msra.mxu0 0.0
        %3784 = vmatprep.subr.mxu0 0.0
        %3785 = vmatpush1.msra.mxu0 0.0
        %3786 = vmatprep.subr.mxu0 0.0
        %3787 = vmatpush1.msra.mxu0 0.0
        %3788 = vmatprep.subr.mxu0 0.0
        %3789 = vmatpush1.msra.mxu0 0.0
        %3790 = vmatprep.subr.mxu0 0.0
        %3791 = vmatpush1.msra.mxu0 0.0
        %3792 = vmatprep.subr.mxu0 0.0
        %3793 = vmatpush1.msra.mxu0 0.0
        %3794 = vmatprep.subr.mxu0 0.0
        %3795 = vmatpush1.msra.mxu0 0.0
        %3796 = vmatprep.subr.mxu0 0.0
        %3797 = vmatpush1.msra.mxu0 0.0
        %3798 = vmatprep.subr.mxu0 0.0
        %3799 = vmatpush1.msra.mxu0 0.0
        %3800 = vmatprep.subr.mxu0 0.0
        %3801 = vmatpush1.msra.mxu0 0.0
        %3802 = vmatprep.subr.mxu0 0.0
        %3803 = vmatpush1.msra.mxu0 0.0
        %3804 = vmatprep.subr.mxu0 0.0
        %3805 = vmatpush1.msra.mxu0 0.0
        %3806 = vmatprep.subr.mxu0 0.0
        %3807 = vmatpush1.msra.mxu0 0.0
        %3808 = vmatprep.subr.mxu0 0.0
        %3809 = vmatpush1.msra.mxu0 0.0
        %3810 = vmatprep.subr.mxu0 0.0
        %3811 = vmatpush1.msra.mxu0 0.0
        %3812 = vmatprep.subr.mxu0 0.0
        %3813 = vmatpush1.msra.mxu0 0.0
        %3814 = vmatprep.mubr.f32.mxu0 0.0
        %3815 = vmatmul.mubr.f32.gmra.mrb[0].mxu0 %v3655
        %v3816 = vpop.f32.mrb[0].mxu0
        %v3817 = vadd.f32 %v1269, %v3816
        %v3818 = vpop.f32.mrb[0].mxu0
        %3819 = vmatprep.mubr.f32.mxu0 0.0
        %3820 = vmatmul.mubr.f32.gmra.mrb[0].mxu0 %v3658
        %v3821 = vpop.f32.mrb[0].mxu0
        %v3822 = vadd.f32 %v1269, %v3821
        %v3823 = vpop.f32.mrb[0].mxu0
        %3824 = vmatprep.mubr.f32.mxu0 0.0
        %3825 = vmatmul.mubr.f32.gmra.mrb[0].mxu0 %v3661
        %v3826 = vpop.f32.mrb[0].mxu0
        %v3827 = vadd.f32 %v1269, %v3826
        %v3828 = vpop.f32.mrb[0].mxu0
        %3829 = vmatprep.mubr.f32.mxu0 0.0
        %3830 = vmatmul.mubr.f32.gmra.mrb[0].mxu0 %v3664
        %v3831 = vpop.f32.mrb[0].mxu0
        %v3832 = vadd.f32 %v1269, %v3831
        %v3833 = vpop.f32.mrb[0].mxu0
        %3834 = vmatprep.mubr.f32.mxu0 0.0
        %3835 = vmatmul.mubr.f32.gmra.mrb[0].mxu0 %v3667
        %v3836 = vpop.f32.mrb[0].mxu0
        %v3837 = vadd.f32 %v1269, %v3836
        %v3838 = vpop.f32.mrb[0].mxu0
        %3839 = vmatprep.mubr.f32.mxu0 0.0
        %3840 = vmatmul.mubr.f32.gmra.mrb[0].mxu0 %v3670
        %v3841 = vpop.f32.mrb[0].mxu0
        %v3842 = vadd.f32 %v1269, %v3841
        %v3843 = vpop.f32.mrb[0].mxu0
        %3844 = vmatprep.mubr.f32.mxu0 0.0
        %3845 = vmatmul.mubr.f32.gmra.mrb[0].mxu0 %v3673
        %v3846 = vpop.f32.mrb[0].mxu0
        %v3847 = vadd.f32 %v1269, %v3846
        %v3848 = vpop.f32.mrb[0].mxu0
        %3849 = vmatprep.mubr.f32.mxu0 0.0
        %3850 = vmatmul.mubr.f32.gmra.mrb[0].mxu0 %v3676
        %v3851 = vpop.f32.mrb[0].mxu0
        %v3852 = vadd.f32 %v1269, %v3851
        %v3853 = vpop.f32.mrb[0].mxu0
        %3854 = vmatprep.mubr.f32.mxu0 0.0
        %3855 = vmatmul.mubr.f32.gmra.mrb[0].mxu0 %v3679
        %v3856 = vpop.f32.mrb[0].mxu0
        %v3857 = vadd.f32 %v1269, %v3856
        %v3858 = vpop.f32.mrb[0].mxu0
        %3859 = vmatprep.mubr.f32.mxu0 0.0
        %3860 = vmatmul.mubr.f32.gmra.mrb[0].mxu0 %v3682
        %v3861 = vpop.f32.mrb[0].mxu0
        %v3862 = vadd.f32 %v1269, %v3861
        %v3863 = vpop.f32.mrb[0].mxu0
        %3864 = vmatprep.mubr.f32.mxu0 0.0
        %3865 = vmatmul.mubr.f32.gmra.mrb[0].mxu0 %v3685
        %v3866 = vpop.f32.mrb[0].mxu0
        %v3867 = vadd.f32 %v1269, %v3866
        %v3868 = vpop.f32.mrb[0].mxu0
        %3869 = vmatprep.mubr.f32.mxu0 0.0
        %3870 = vmatmul.mubr.f32.gmra.mrb[0].mxu0 %v3688
        %v3871 = vpop.f32.mrb[0].mxu0
        %v3872 = vadd.f32 %v1269, %v3871
        %v3873 = vpop.f32.mrb[0].mxu0
        %3874 = vmatprep.mubr.f32.mxu0 0.0
        %3875 = vmatmul.mubr.f32.gmra.mrb[0].mxu0 %v3691
        %v3876 = vpop.f32.mrb[0].mxu0
        %v3877 = vadd.f32 %v1269, %v3876
        %v3878 = vpop.f32.mrb[0].mxu0
        %3879 = vmatprep.mubr.f32.mxu0 0.0
        %3880 = vmatmul.mubr.f32.gmra.mrb[0].mxu0 %v3694
        %v3881 = vpop.f32.mrb[0].mxu0
        %v3882 = vadd.f32 %v1269, %v3881
        %v3883 = vpop.f32.mrb[0].mxu0
        %3884 = vmatprep.mubr.f32.mxu0 0.0
        %3885 = vmatmul.mubr.f32.gmra.mrb[0].mxu0 %v3697
        %v3886 = vpop.f32.mrb[0].mxu0
        %v3887 = vadd.f32 %v1269, %v3886
        %v3888 = vpop.f32.mrb[0].mxu0
        %3889 = vmatprep.mubr.f32.mxu0 0.0
        %3890 = vmatmul.mubr.f32.gmra.mrb[0].mxu0 %v3700
        %v3891 = vpop.f32.mrb[0].mxu0
        %v3892 = vadd.f32 %v1269, %v3891
        %v3893 = vpop.f32.mrb[0].mxu0
        %3894 = vmatprep.mubr.f32.mxu0 0.0
        %3895 = vmatmul.mubr.f32.gmra.mrb[0].mxu0 %v3703
        %v3896 = vpop.f32.mrb[0].mxu0
        %v3897 = vadd.f32 %v1269, %v3896
        %v3898 = vpop.f32.mrb[0].mxu0
        %3899 = vmatprep.mubr.f32.mxu0 0.0
        %3900 = vmatmul.mubr.f32.gmra.mrb[0].mxu0 %v3706
        %v3901 = vpop.f32.mrb[0].mxu0
        %v3902 = vadd.f32 %v1269, %v3901
        %v3903 = vpop.f32.mrb[0].mxu0
        %3904 = vmatprep.mubr.f32.mxu0 0.0
        %3905 = vmatmul.mubr.f32.gmra.mrb[0].mxu0 %v3709
        %v3906 = vpop.f32.mrb[0].mxu0
        %v3907 = vadd.f32 %v1269, %v3906
        %v3908 = vpop.f32.mrb[0].mxu0
        %3909 = vmatprep.mubr.f32.mxu0 0.0
        %3910 = vmatmul.mubr.f32.gmra.mrb[0].mxu0 %v3712
        %v3911 = vpop.f32.mrb[0].mxu0
        %v3912 = vadd.f32 %v1269, %v3911
        %v3913 = vpop.f32.mrb[0].mxu0
        %3914 = vmatprep.mubr.f32.mxu0 0.0
        %3915 = vmatmul.mubr.f32.gmra.mrb[0].mxu0 %v3715
        %v3916 = vpop.f32.mrb[0].mxu0
        %v3917 = vadd.f32 %v1269, %v3916
        %v3918 = vpop.f32.mrb[0].mxu0
        %3919 = vmatprep.mubr.f32.mxu0 0.0
        %3920 = vmatmul.mubr.f32.gmra.mrb[0].mxu0 %v3718
        %v3921 = vpop.f32.mrb[0].mxu0
        %v3922 = vadd.f32 %v1269, %v3921
        %v3923 = vpop.f32.mrb[0].mxu0
        %3924 = vmatprep.mubr.f32.mxu0 0.0
        %3925 = vmatmul.mubr.f32.gmra.mrb[0].mxu0 %v3721
        %v3926 = vpop.f32.mrb[0].mxu0
        %v3927 = vadd.f32 %v1269, %v3926
        %v3928 = vpop.f32.mrb[0].mxu0
        %3929 = vmatprep.mubr.f32.mxu0 0.0
        %3930 = vmatmul.mubr.f32.gmra.mrb[0].mxu0 %v3724
        %v3931 = vpop.f32.mrb[0].mxu0
        %v3932 = vadd.f32 %v1269, %v3931
        %v3933 = vpop.f32.mrb[0].mxu0
        %3934 = vmatprep.mubr.f32.mxu0 0.0
        %3935 = vmatmul.mubr.f32.gmra.mrb[0].mxu0 %v3727
        %v3936 = vpop.f32.mrb[0].mxu0
        %v3937 = vadd.f32 %v1269, %v3936
        %v3938 = vpop.f32.mrb[0].mxu0
        %3939 = vmatprep.mubr.f32.mxu0 0.0
        %3940 = vmatmul.mubr.f32.gmra.mrb[0].mxu0 %v3730
        %v3941 = vpop.f32.mrb[0].mxu0
        %v3942 = vadd.f32 %v1269, %v3941
        %v3943 = vpop.f32.mrb[0].mxu0
        %3944 = vmatprep.mubr.f32.mxu0 0.0
        %3945 = vmatmul.mubr.f32.gmra.mrb[0].mxu0 %v3733
        %v3946 = vpop.f32.mrb[0].mxu0
        %v3947 = vadd.f32 %v1269, %v3946
        %v3948 = vpop.f32.mrb[0].mxu0
        %3949 = vmatprep.mubr.f32.mxu0 0.0
        %3950 = vmatmul.mubr.f32.gmra.mrb[0].mxu0 %v3736
        %v3951 = vpop.f32.mrb[0].mxu0
        %v3952 = vadd.f32 %v1269, %v3951
        %v3953 = vpop.f32.mrb[0].mxu0
        %3954 = vmatprep.mubr.f32.mxu0 0.0
        %3955 = vmatmul.mubr.f32.gmra.mrb[0].mxu0 %v3739
        %v3956 = vpop.f32.mrb[0].mxu0
        %v3957 = vadd.f32 %v1269, %v3956
        %v3958 = vpop.f32.mrb[0].mxu0
        %3959 = vmatprep.mubr.f32.mxu0 0.0
        %3960 = vmatmul.mubr.f32.gmra.mrb[0].mxu0 %v3742
        %v3961 = vpop.f32.mrb[0].mxu0
        %v3962 = vadd.f32 %v1269, %v3961
        %v3963 = vpop.f32.mrb[0].mxu0
        %3964 = vmatprep.mubr.f32.mxu0 0.0
        %3965 = vmatmul.mubr.f32.gmra.mrb[0].mxu0 %v3745
        %v3966 = vpop.f32.mrb[0].mxu0
        %v3967 = vadd.f32 %v1269, %v3966
        %v3968 = vpop.f32.mrb[0].mxu0
        %3969 = vmatprep.mubr.f32.mxu0 0.0
        %3970 = vmatmul.mubr.f32.gmra.mrb[0].mxu0 %v3748
        %v3971 = vpop.f32.mrb[0].mxu0
        %v3972 = vadd.f32 %v1269, %v3971
        %v3973 = vpop.f32.mrb[0].mxu0
        %3974 = vdwg.mxu0
        %vm3975 = vcmp.ge.f32.partialorder %v3817, 0.0
        %vm3976 = vcmp.ge.f32.partialorder %v3822, 0.0
        %vm3977 = vcmp.ge.f32.partialorder %v3827, 0.0
        %vm3978 = vcmp.ge.f32.partialorder %v3832, 0.0
        %vm3979 = vcmp.ge.f32.partialorder %v3837, 0.0
        %vm3980 = vcmp.ge.f32.partialorder %v3842, 0.0
        %vm3981 = vcmp.ge.f32.partialorder %v3847, 0.0
        %vm3982 = vcmp.ge.f32.partialorder %v3852, 0.0
        %vm3983 = vcmp.ge.f32.partialorder %v3857, 0.0
        %vm3984 = vcmp.ge.f32.partialorder %v3862, 0.0
        %vm3985 = vcmp.ge.f32.partialorder %v3867, 0.0
        %vm3986 = vcmp.ge.f32.partialorder %v3872, 0.0
        %vm3987 = vcmp.ge.f32.partialorder %v3877, 0.0
        %vm3988 = vcmp.ge.f32.partialorder %v3882, 0.0
        %vm3989 = vcmp.ge.f32.partialorder %v3887, 0.0
        %vm3990 = vcmp.ge.f32.partialorder %v3892, 0.0
        %vm3991 = vcmp.ge.f32.partialorder %v3897, 0.0
        %vm3992 = vcmp.ge.f32.partialorder %v3902, 0.0
        %vm3993 = vcmp.ge.f32.partialorder %v3907, 0.0
        %vm3994 = vcmp.ge.f32.partialorder %v3912, 0.0
        %vm3995 = vcmp.ge.f32.partialorder %v3917, 0.0
        %vm3996 = vcmp.ge.f32.partialorder %v3922, 0.0
        %vm3997 = vcmp.ge.f32.partialorder %v3927, 0.0
        %vm3998 = vcmp.ge.f32.partialorder %v3932, 0.0
        %vm3999 = vcmp.ge.f32.partialorder %v3937, 0.0
        %vm4000 = vcmp.ge.f32.partialorder %v3942, 0.0
        %vm4001 = vcmp.ge.f32.partialorder %v3947, 0.0
        %vm4002 = vcmp.ge.f32.partialorder %v3952, 0.0
        %vm4003 = vcmp.ge.f32.partialorder %v3957, 0.0
        %vm4004 = vcmp.ge.f32.partialorder %v3962, 0.0
        %vm4005 = vcmp.ge.f32.partialorder %v3967, 0.0
        %vm4006 = vcmp.ge.f32.partialorder %v3972, 0.0
        %v4007 = vmul.f32 %v3817, 0.01
        %v4008 = vmul.f32 %v3822, 0.01
        %v4009 = vmul.f32 %v3827, 0.01
        %v4010 = vmul.f32 %v3832, 0.01
        %v4011 = vmul.f32 %v3837, 0.01
        %v4012 = vmul.f32 %v3842, 0.01
        %v4013 = vmul.f32 %v3847, 0.01
        %v4014 = vmul.f32 %v3852, 0.01
        %v4015 = vmul.f32 %v3857, 0.01
        %v4016 = vmul.f32 %v3862, 0.01
        %v4017 = vmul.f32 %v3867, 0.01
        %v4018 = vmul.f32 %v3872, 0.01
        %v4019 = vmul.f32 %v3877, 0.01
        %v4020 = vmul.f32 %v3882, 0.01
        %v4021 = vmul.f32 %v3887, 0.01
        %v4022 = vmul.f32 %v3892, 0.01
        %v4023 = vmul.f32 %v3897, 0.01
        %v4024 = vmul.f32 %v3902, 0.01
        %v4025 = vmul.f32 %v3907, 0.01
        %v4026 = vmul.f32 %v3912, 0.01
        %v4027 = vmul.f32 %v3917, 0.01
        %v4028 = vmul.f32 %v3922, 0.01
        %v4029 = vmul.f32 %v3927, 0.01
        %v4030 = vmul.f32 %v3932, 0.01
        %v4031 = vmul.f32 %v3937, 0.01
        %v4032 = vmul.f32 %v3942, 0.01
        %v4033 = vmul.f32 %v3947, 0.01
        %v4034 = vmul.f32 %v3952, 0.01
        %v4035 = vmul.f32 %v3957, 0.01
        %v4036 = vmul.f32 %v3962, 0.01
        %v4037 = vmul.f32 %v3967, 0.01
        %v4038 = vmul.f32 %v3972, 0.01
        %v4039 = vsel %vm3975, %v3817, %v4007
        %v4040 = vsel %vm3976, %v3822, %v4008
        %v4041 = vsel %vm3977, %v3827, %v4009
        %v4042 = vsel %vm3978, %v3832, %v4010
        %v4043 = vsel %vm3979, %v3837, %v4011
        %v4044 = vsel %vm3980, %v3842, %v4012
        %v4045 = vsel %vm3981, %v3847, %v4013
        %v4046 = vsel %vm3982, %v3852, %v4014
        %v4047 = vsel %vm3983, %v3857, %v4015
        %v4048 = vsel %vm3984, %v3862, %v4016
        %v4049 = vsel %vm3985, %v3867, %v4017
        %v4050 = vsel %vm3986, %v3872, %v4018
        %v4051 = vsel %vm3987, %v3877, %v4019
        %v4052 = vsel %vm3988, %v3882, %v4020
        %v4053 = vsel %vm3989, %v3887, %v4021
        %v4054 = vsel %vm3990, %v3892, %v4022
        %v4055 = vsel %vm3991, %v3897, %v4023
        %v4056 = vsel %vm3992, %v3902, %v4024
        %v4057 = vsel %vm3993, %v3907, %v4025
        %v4058 = vsel %vm3994, %v3912, %v4026
        %v4059 = vsel %vm3995, %v3917, %v4027
        %v4060 = vsel %vm3996, %v3922, %v4028
        %v4061 = vsel %vm3997, %v3927, %v4029
        %v4062 = vsel %vm3998, %v3932, %v4030
        %v4063 = vsel %vm3999, %v3937, %v4031
        %v4064 = vsel %vm4000, %v3942, %v4032
        %v4065 = vsel %vm4001, %v3947, %v4033
        %v4066 = vsel %vm4002, %v3952, %v4034
        %v4067 = vsel %vm4003, %v3957, %v4035
        %v4068 = vsel %vm4004, %v3962, %v4036
        %v4069 = vsel %vm4005, %v3967, %v4037
        %v4070 = vsel %vm4006, %v3972, %v4038
        %v4071 = vmax.f32 %v3589, %v4039
        %v4072 = vmax.f32 %v3590, %v4040
        %v4073 = vmax.f32 %v3591, %v4041
        %v4074 = vmax.f32 %v3592, %v4042
        %v4075 = vmax.f32 %v3593, %v4043
        %v4076 = vmax.f32 %v3594, %v4044
        %v4077 = vmax.f32 %v3595, %v4045
        %v4078 = vmax.f32 %v3596, %v4046
        %v4079 = vmax.f32 %v3597, %v4047
        %v4080 = vmax.f32 %v3598, %v4048
        %v4081 = vmax.f32 %v3599, %v4049
        %v4082 = vmax.f32 %v3600, %v4050
        %v4083 = vmax.f32 %v3601, %v4051
        %v4084 = vmax.f32 %v3602, %v4052
        %v4085 = vmax.f32 %v3603, %v4053
        %v4086 = vmax.f32 %v3604, %v4054
        %v4087 = vmax.f32 %v3605, %v4055
        %v4088 = vmax.f32 %v3606, %v4056
        %v4089 = vmax.f32 %v3607, %v4057
        %v4090 = vmax.f32 %v3608, %v4058
        %v4091 = vmax.f32 %v3609, %v4059
        %v4092 = vmax.f32 %v3610, %v4060
        %v4093 = vmax.f32 %v3611, %v4061
        %v4094 = vmax.f32 %v3612, %v4062
        %v4095 = vmax.f32 %v3613, %v4063
        %v4096 = vmax.f32 %v3614, %v4064
        %v4097 = vmax.f32 %v3615, %v4065
        %v4098 = vmax.f32 %v3616, %v4066
        %v4099 = vmax.f32 %v3617, %v4067
        %v4100 = vmax.f32 %v3618, %v4068
        %v4101 = vmax.f32 %v3619, %v4069
        %v4102 = vmax.f32 %v3620, %v4070
        %s4103 = scalar_lea.vmem %s1200, 1536 [#allocation2]
        %v4104 = vld [vmem:[%s4103] sm:$0xff]
        %v4105 = vld [vmem:[%s4103 + $0x8] sm:$0xff]
        %v4106 = vld [vmem:[%s4103 + $0x10] sm:$0xff]
        %v4107 = vld [vmem:[%s4103 + $0x18] sm:$0xff]
        %v4108 = vld [vmem:[%s4103 + $0x20] sm:$0xff]
        %v4109 = vld [vmem:[%s4103 + $0x28] sm:$0xff]
        %v4110 = vld [vmem:[%s4103 + $0x30] sm:$0xff]
        %v4111 = vld [vmem:[%s4103 + $0x38] sm:$0xff]
        %v4112 = vld [vmem:[%s4103 + $0x40] sm:$0xff]
        %v4113 = vld [vmem:[%s4103 + $0x48] sm:$0xff]
        %v4114 = vld [vmem:[%s4103 + $0x50] sm:$0xff]
        %v4115 = vld [vmem:[%s4103 + $0x58] sm:$0xff]
        %v4116 = vld [vmem:[%s4103 + $0x60] sm:$0xff]
        %v4117 = vld [vmem:[%s4103 + $0x68] sm:$0xff]
        %v4118 = vld [vmem:[%s4103 + $0x70] sm:$0xff]
        %v4119 = vld [vmem:[%s4103 + $0x78] sm:$0xff]
        %v4120 = vld [vmem:[%s4103 + $0x80] sm:$0xff]
        %v4121 = vld [vmem:[%s4103 + $0x88] sm:$0xff]
        %v4122 = vld [vmem:[%s4103 + $0x90] sm:$0xff]
        %v4123 = vld [vmem:[%s4103 + $0x98] sm:$0xff]
        %v4124 = vld [vmem:[%s4103 + $0xa0] sm:$0xff]
        %v4125 = vld [vmem:[%s4103 + $0xa8] sm:$0xff]
        %v4126 = vld [vmem:[%s4103 + $0xb0] sm:$0xff]
        %v4127 = vld [vmem:[%s4103 + $0xb8] sm:$0xff]
        %v4128 = vld [vmem:[%s4103 + $0xc0] sm:$0xff]
        %v4129 = vld [vmem:[%s4103 + $0xc8] sm:$0xff]
        %v4130 = vld [vmem:[%s4103 + $0xd0] sm:$0xff]
        %v4131 = vld [vmem:[%s4103 + $0xd8] sm:$0xff]
        %v4132 = vld [vmem:[%s4103 + $0xe0] sm:$0xff]
        %v4133 = vld [vmem:[%s4103 + $0xe8] sm:$0xff]
        %v4134 = vld [vmem:[%s4103 + $0xf0] sm:$0xff]
        %v4135 = vld [vmem:[%s4103 + $0xf8] sm:$0xff]
        %v4137 = vsel %vm1271, %v4104, 0
        %v4140 = vsel %vm1271, %v4105, 0
        %v4143 = vsel %vm1271, %v4106, 0
        %v4146 = vsel %vm1271, %v4107, 0
        %v4149 = vsel %vm1271, %v4108, 0
        %v4152 = vsel %vm1271, %v4109, 0
        %v4155 = vsel %vm1271, %v4110, 0
        %v4158 = vsel %vm1271, %v4111, 0
        %v4161 = vsel %vm1271, %v4112, 0
        %v4164 = vsel %vm1271, %v4113, 0
        %v4167 = vsel %vm1271, %v4114, 0
        %v4170 = vsel %vm1271, %v4115, 0
        %v4173 = vsel %vm1271, %v4116, 0
        %v4176 = vsel %vm1271, %v4117, 0
        %v4179 = vsel %vm1271, %v4118, 0
        %v4182 = vsel %vm1271, %v4119, 0
        %v4185 = vsel %vm1271, %v4120, 0
        %v4188 = vsel %vm1271, %v4121, 0
        %v4191 = vsel %vm1271, %v4122, 0
        %v4194 = vsel %vm1271, %v4123, 0
        %v4197 = vsel %vm1271, %v4124, 0
        %v4200 = vsel %vm1271, %v4125, 0
        %v4203 = vsel %vm1271, %v4126, 0
        %v4206 = vsel %vm1271, %v4127, 0
        %v4209 = vsel %vm1271, %v4128, 0
        %v4212 = vsel %vm1271, %v4129, 0
        %v4215 = vsel %vm1271, %v4130, 0
        %v4218 = vsel %vm1271, %v4131, 0
        %v4221 = vsel %vm1271, %v4132, 0
        %v4224 = vsel %vm1271, %v4133, 0
        %v4227 = vsel %vm1271, %v4134, 0
        %v4230 = vsel %vm1271, %v4135, 0
        %4232 = vmatprep.subr.mxu0 0.0
        %4233 = vmatpush1.msra.mxu0 %v1228
        %4234 = vmatprep.subr.mxu0 0.0
        %4235 = vmatpush1.msra.mxu0 %v1229
        %4236 = vmatprep.subr.mxu0 0.0
        %4237 = vmatpush1.msra.mxu0 %v1230
        %4238 = vmatprep.subr.mxu0 0.0
        %4239 = vmatpush1.msra.mxu0 %v1370
        %4240 = vmatprep.subr.mxu0 0.0
        %4241 = vmatpush1.msra.mxu0 0.0
        %4242 = vmatprep.subr.mxu0 0.0
        %4243 = vmatpush1.msra.mxu0 0.0
        %4244 = vmatprep.subr.mxu0 0.0
        %4245 = vmatpush1.msra.mxu0 0.0
        %4246 = vmatprep.subr.mxu0 0.0
        %4247 = vmatpush1.msra.mxu0 0.0
        %4248 = vmatprep.subr.mxu0 0.0
        %4249 = vmatpush1.msra.mxu0 0.0
        %4250 = vmatprep.subr.mxu0 0.0
        %4251 = vmatpush1.msra.mxu0 0.0
        %4252 = vmatprep.subr.mxu0 0.0
        %4253 = vmatpush1.msra.mxu0 0.0
        %4254 = vmatprep.subr.mxu0 0.0
        %4255 = vmatpush1.msra.mxu0 0.0
        %4256 = vmatprep.subr.mxu0 0.0
        %4257 = vmatpush1.msra.mxu0 0.0
        %4258 = vmatprep.subr.mxu0 0.0
        %4259 = vmatpush1.msra.mxu0 0.0
        %4260 = vmatprep.subr.mxu0 0.0
        %4261 = vmatpush1.msra.mxu0 0.0
        %4262 = vmatprep.subr.mxu0 0.0
        %4263 = vmatpush1.msra.mxu0 0.0
        %4264 = vmatprep.subr.mxu0 0.0
        %4265 = vmatpush1.msra.mxu0 0.0
        %4266 = vmatprep.subr.mxu0 0.0
        %4267 = vmatpush1.msra.mxu0 0.0
        %4268 = vmatprep.subr.mxu0 0.0
        %4269 = vmatpush1.msra.mxu0 0.0
        %4270 = vmatprep.subr.mxu0 0.0
        %4271 = vmatpush1.msra.mxu0 0.0
        %4272 = vmatprep.subr.mxu0 0.0
        %4273 = vmatpush1.msra.mxu0 0.0
        %4274 = vmatprep.subr.mxu0 0.0
        %4275 = vmatpush1.msra.mxu0 0.0
        %4276 = vmatprep.subr.mxu0 0.0
        %4277 = vmatpush1.msra.mxu0 0.0
        %4278 = vmatprep.subr.mxu0 0.0
        %4279 = vmatpush1.msra.mxu0 0.0
        %4280 = vmatprep.subr.mxu0 0.0
        %4281 = vmatpush1.msra.mxu0 0.0
        %4282 = vmatprep.subr.mxu0 0.0
        %4283 = vmatpush1.msra.mxu0 0.0
        %4284 = vmatprep.subr.mxu0 0.0
        %4285 = vmatpush1.msra.mxu0 0.0
        %4286 = vmatprep.subr.mxu0 0.0
        %4287 = vmatpush1.msra.mxu0 0.0
        %4288 = vmatprep.subr.mxu0 0.0
        %4289 = vmatpush1.msra.mxu0 0.0
        %4290 = vmatprep.subr.mxu0 0.0
        %4291 = vmatpush1.msra.mxu0 0.0
        %4292 = vmatprep.subr.mxu0 0.0
        %4293 = vmatpush1.msra.mxu0 0.0
        %4294 = vmatprep.subr.mxu0 0.0
        %4295 = vmatpush1.msra.mxu0 0.0
        %4296 = vmatprep.mubr.f32.mxu0 0.0
        %4297 = vmatmul.mubr.f32.gmra.mrb[0].mxu0 %v4137
        %v4298 = vpop.f32.mrb[0].mxu0
        %v4299 = vadd.f32 %v1269, %v4298
        %v4300 = vpop.f32.mrb[0].mxu0
        %4301 = vmatprep.mubr.f32.mxu0 0.0
        %4302 = vmatmul.mubr.f32.gmra.mrb[0].mxu0 %v4140
        %v4303 = vpop.f32.mrb[0].mxu0
        %v4304 = vadd.f32 %v1269, %v4303
        %v4305 = vpop.f32.mrb[0].mxu0
        %4306 = vmatprep.mubr.f32.mxu0 0.0
        %4307 = vmatmul.mubr.f32.gmra.mrb[0].mxu0 %v4143
        %v4308 = vpop.f32.mrb[0].mxu0
        %v4309 = vadd.f32 %v1269, %v4308
        %v4310 = vpop.f32.mrb[0].mxu0
        %4311 = vmatprep.mubr.f32.mxu0 0.0
        %4312 = vmatmul.mubr.f32.gmra.mrb[0].mxu0 %v4146
        %v4313 = vpop.f32.mrb[0].mxu0
        %v4314 = vadd.f32 %v1269, %v4313
        %v4315 = vpop.f32.mrb[0].mxu0
        %4316 = vmatprep.mubr.f32.mxu0 0.0
        %4317 = vmatmul.mubr.f32.gmra.mrb[0].mxu0 %v4149
        %v4318 = vpop.f32.mrb[0].mxu0
        %v4319 = vadd.f32 %v1269, %v4318
        %v4320 = vpop.f32.mrb[0].mxu0
        %4321 = vmatprep.mubr.f32.mxu0 0.0
        %4322 = vmatmul.mubr.f32.gmra.mrb[0].mxu0 %v4152
        %v4323 = vpop.f32.mrb[0].mxu0
        %v4324 = vadd.f32 %v1269, %v4323
        %v4325 = vpop.f32.mrb[0].mxu0
        %4326 = vmatprep.mubr.f32.mxu0 0.0
        %4327 = vmatmul.mubr.f32.gmra.mrb[0].mxu0 %v4155
        %v4328 = vpop.f32.mrb[0].mxu0
        %v4329 = vadd.f32 %v1269, %v4328
        %v4330 = vpop.f32.mrb[0].mxu0
        %4331 = vmatprep.mubr.f32.mxu0 0.0
        %4332 = vmatmul.mubr.f32.gmra.mrb[0].mxu0 %v4158
        %v4333 = vpop.f32.mrb[0].mxu0
        %v4334 = vadd.f32 %v1269, %v4333
        %v4335 = vpop.f32.mrb[0].mxu0
        %4336 = vmatprep.mubr.f32.mxu0 0.0
        %4337 = vmatmul.mubr.f32.gmra.mrb[0].mxu0 %v4161
        %v4338 = vpop.f32.mrb[0].mxu0
        %v4339 = vadd.f32 %v1269, %v4338
        %v4340 = vpop.f32.mrb[0].mxu0
        %4341 = vmatprep.mubr.f32.mxu0 0.0
        %4342 = vmatmul.mubr.f32.gmra.mrb[0].mxu0 %v4164
        %v4343 = vpop.f32.mrb[0].mxu0
        %v4344 = vadd.f32 %v1269, %v4343
        %v4345 = vpop.f32.mrb[0].mxu0
        %4346 = vmatprep.mubr.f32.mxu0 0.0
        %4347 = vmatmul.mubr.f32.gmra.mrb[0].mxu0 %v4167
        %v4348 = vpop.f32.mrb[0].mxu0
        %v4349 = vadd.f32 %v1269, %v4348
        %v4350 = vpop.f32.mrb[0].mxu0
        %4351 = vmatprep.mubr.f32.mxu0 0.0
        %4352 = vmatmul.mubr.f32.gmra.mrb[0].mxu0 %v4170
        %v4353 = vpop.f32.mrb[0].mxu0
        %v4354 = vadd.f32 %v1269, %v4353
        %v4355 = vpop.f32.mrb[0].mxu0
        %4356 = vmatprep.mubr.f32.mxu0 0.0
        %4357 = vmatmul.mubr.f32.gmra.mrb[0].mxu0 %v4173
        %v4358 = vpop.f32.mrb[0].mxu0
        %v4359 = vadd.f32 %v1269, %v4358
        %v4360 = vpop.f32.mrb[0].mxu0
        %4361 = vmatprep.mubr.f32.mxu0 0.0
        %4362 = vmatmul.mubr.f32.gmra.mrb[0].mxu0 %v4176
        %v4363 = vpop.f32.mrb[0].mxu0
        %v4364 = vadd.f32 %v1269, %v4363
        %v4365 = vpop.f32.mrb[0].mxu0
        %4366 = vmatprep.mubr.f32.mxu0 0.0
        %4367 = vmatmul.mubr.f32.gmra.mrb[0].mxu0 %v4179
        %v4368 = vpop.f32.mrb[0].mxu0
        %v4369 = vadd.f32 %v1269, %v4368
        %v4370 = vpop.f32.mrb[0].mxu0
        %4371 = vmatprep.mubr.f32.mxu0 0.0
        %4372 = vmatmul.mubr.f32.gmra.mrb[0].mxu0 %v4182
        %v4373 = vpop.f32.mrb[0].mxu0
        %v4374 = vadd.f32 %v1269, %v4373
        %v4375 = vpop.f32.mrb[0].mxu0
        %4376 = vmatprep.mubr.f32.mxu0 0.0
        %4377 = vmatmul.mubr.f32.gmra.mrb[0].mxu0 %v4185
        %v4378 = vpop.f32.mrb[0].mxu0
        %v4379 = vadd.f32 %v1269, %v4378
        %v4380 = vpop.f32.mrb[0].mxu0
        %4381 = vmatprep.mubr.f32.mxu0 0.0
        %4382 = vmatmul.mubr.f32.gmra.mrb[0].mxu0 %v4188
        %v4383 = vpop.f32.mrb[0].mxu0
        %v4384 = vadd.f32 %v1269, %v4383
        %v4385 = vpop.f32.mrb[0].mxu0
        %4386 = vmatprep.mubr.f32.mxu0 0.0
        %4387 = vmatmul.mubr.f32.gmra.mrb[0].mxu0 %v4191
        %v4388 = vpop.f32.mrb[0].mxu0
        %v4389 = vadd.f32 %v1269, %v4388
        %v4390 = vpop.f32.mrb[0].mxu0
        %4391 = vmatprep.mubr.f32.mxu0 0.0
        %4392 = vmatmul.mubr.f32.gmra.mrb[0].mxu0 %v4194
        %v4393 = vpop.f32.mrb[0].mxu0
        %v4394 = vadd.f32 %v1269, %v4393
        %v4395 = vpop.f32.mrb[0].mxu0
        %4396 = vmatprep.mubr.f32.mxu0 0.0
        %4397 = vmatmul.mubr.f32.gmra.mrb[0].mxu0 %v4197
        %v4398 = vpop.f32.mrb[0].mxu0
        %v4399 = vadd.f32 %v1269, %v4398
        %v4400 = vpop.f32.mrb[0].mxu0
        %4401 = vmatprep.mubr.f32.mxu0 0.0
        %4402 = vmatmul.mubr.f32.gmra.mrb[0].mxu0 %v4200
        %v4403 = vpop.f32.mrb[0].mxu0
        %v4404 = vadd.f32 %v1269, %v4403
        %v4405 = vpop.f32.mrb[0].mxu0
        %4406 = vmatprep.mubr.f32.mxu0 0.0
        %4407 = vmatmul.mubr.f32.gmra.mrb[0].mxu0 %v4203
        %v4408 = vpop.f32.mrb[0].mxu0
        %v4409 = vadd.f32 %v1269, %v4408
        %v4410 = vpop.f32.mrb[0].mxu0
        %4411 = vmatprep.mubr.f32.mxu0 0.0
        %4412 = vmatmul.mubr.f32.gmra.mrb[0].mxu0 %v4206
        %v4413 = vpop.f32.mrb[0].mxu0
        %v4414 = vadd.f32 %v1269, %v4413
        %v4415 = vpop.f32.mrb[0].mxu0
        %4416 = vmatprep.mubr.f32.mxu0 0.0
        %4417 = vmatmul.mubr.f32.gmra.mrb[0].mxu0 %v4209
        %v4418 = vpop.f32.mrb[0].mxu0
        %v4419 = vadd.f32 %v1269, %v4418
        %v4420 = vpop.f32.mrb[0].mxu0
        %4421 = vmatprep.mubr.f32.mxu0 0.0
        %4422 = vmatmul.mubr.f32.gmra.mrb[0].mxu0 %v4212
        %v4423 = vpop.f32.mrb[0].mxu0
        %v4424 = vadd.f32 %v1269, %v4423
        %v4425 = vpop.f32.mrb[0].mxu0
        %4426 = vmatprep.mubr.f32.mxu0 0.0
        %4427 = vmatmul.mubr.f32.gmra.mrb[0].mxu0 %v4215
        %v4428 = vpop.f32.mrb[0].mxu0
        %v4429 = vadd.f32 %v1269, %v4428
        %v4430 = vpop.f32.mrb[0].mxu0
        %4431 = vmatprep.mubr.f32.mxu0 0.0
        %4432 = vmatmul.mubr.f32.gmra.mrb[0].mxu0 %v4218
        %v4433 = vpop.f32.mrb[0].mxu0
        %v4434 = vadd.f32 %v1269, %v4433
        %v4435 = vpop.f32.mrb[0].mxu0
        %4436 = vmatprep.mubr.f32.mxu0 0.0
        %4437 = vmatmul.mubr.f32.gmra.mrb[0].mxu0 %v4221
        %v4438 = vpop.f32.mrb[0].mxu0
        %v4439 = vadd.f32 %v1269, %v4438
        %v4440 = vpop.f32.mrb[0].mxu0
        %4441 = vmatprep.mubr.f32.mxu0 0.0
        %4442 = vmatmul.mubr.f32.gmra.mrb[0].mxu0 %v4224
        %v4443 = vpop.f32.mrb[0].mxu0
        %v4444 = vadd.f32 %v1269, %v4443
        %v4445 = vpop.f32.mrb[0].mxu0
        %4446 = vmatprep.mubr.f32.mxu0 0.0
        %4447 = vmatmul.mubr.f32.gmra.mrb[0].mxu0 %v4227
        %v4448 = vpop.f32.mrb[0].mxu0
        %v4449 = vadd.f32 %v1269, %v4448
        %v4450 = vpop.f32.mrb[0].mxu0
        %4451 = vmatprep.mubr.f32.mxu0 0.0
        %4452 = vmatmul.mubr.f32.gmra.mrb[0].mxu0 %v4230
        %v4453 = vpop.f32.mrb[0].mxu0
        %v4454 = vadd.f32 %v1269, %v4453
        %v4455 = vpop.f32.mrb[0].mxu0
        %4456 = vdwg.mxu0
        %vm4457 = vcmp.ge.f32.partialorder %v4299, 0.0
        %vm4458 = vcmp.ge.f32.partialorder %v4304, 0.0
        %vm4459 = vcmp.ge.f32.partialorder %v4309, 0.0
        %vm4460 = vcmp.ge.f32.partialorder %v4314, 0.0
        %vm4461 = vcmp.ge.f32.partialorder %v4319, 0.0
        %vm4462 = vcmp.ge.f32.partialorder %v4324, 0.0
        %vm4463 = vcmp.ge.f32.partialorder %v4329, 0.0
        %vm4464 = vcmp.ge.f32.partialorder %v4334, 0.0
        %vm4465 = vcmp.ge.f32.partialorder %v4339, 0.0
        %vm4466 = vcmp.ge.f32.partialorder %v4344, 0.0
        %vm4467 = vcmp.ge.f32.partialorder %v4349, 0.0
        %vm4468 = vcmp.ge.f32.partialorder %v4354, 0.0
        %vm4469 = vcmp.ge.f32.partialorder %v4359, 0.0
        %vm4470 = vcmp.ge.f32.partialorder %v4364, 0.0
        %vm4471 = vcmp.ge.f32.partialorder %v4369, 0.0
        %vm4472 = vcmp.ge.f32.partialorder %v4374, 0.0
        %vm4473 = vcmp.ge.f32.partialorder %v4379, 0.0
        %vm4474 = vcmp.ge.f32.partialorder %v4384, 0.0
        %vm4475 = vcmp.ge.f32.partialorder %v4389, 0.0
        %vm4476 = vcmp.ge.f32.partialorder %v4394, 0.0
        %vm4477 = vcmp.ge.f32.partialorder %v4399, 0.0
        %vm4478 = vcmp.ge.f32.partialorder %v4404, 0.0
        %vm4479 = vcmp.ge.f32.partialorder %v4409, 0.0
        %vm4480 = vcmp.ge.f32.partialorder %v4414, 0.0
        %vm4481 = vcmp.ge.f32.partialorder %v4419, 0.0
        %vm4482 = vcmp.ge.f32.partialorder %v4424, 0.0
        %vm4483 = vcmp.ge.f32.partialorder %v4429, 0.0
        %vm4484 = vcmp.ge.f32.partialorder %v4434, 0.0
        %vm4485 = vcmp.ge.f32.partialorder %v4439, 0.0
        %vm4486 = vcmp.ge.f32.partialorder %v4444, 0.0
        %vm4487 = vcmp.ge.f32.partialorder %v4449, 0.0
        %vm4488 = vcmp.ge.f32.partialorder %v4454, 0.0
        %v4489 = vmul.f32 %v4299, 0.01
        %v4490 = vmul.f32 %v4304, 0.01
        %v4491 = vmul.f32 %v4309, 0.01
        %v4492 = vmul.f32 %v4314, 0.01
        %v4493 = vmul.f32 %v4319, 0.01
        %v4494 = vmul.f32 %v4324, 0.01
        %v4495 = vmul.f32 %v4329, 0.01
        %v4496 = vmul.f32 %v4334, 0.01
        %v4497 = vmul.f32 %v4339, 0.01
        %v4498 = vmul.f32 %v4344, 0.01
        %v4499 = vmul.f32 %v4349, 0.01
        %v4500 = vmul.f32 %v4354, 0.01
        %v4501 = vmul.f32 %v4359, 0.01
        %v4502 = vmul.f32 %v4364, 0.01
        %v4503 = vmul.f32 %v4369, 0.01
        %v4504 = vmul.f32 %v4374, 0.01
        %v4505 = vmul.f32 %v4379, 0.01
        %v4506 = vmul.f32 %v4384, 0.01
        %v4507 = vmul.f32 %v4389, 0.01
        %v4508 = vmul.f32 %v4394, 0.01
        %v4509 = vmul.f32 %v4399, 0.01
        %v4510 = vmul.f32 %v4404, 0.01
        %v4511 = vmul.f32 %v4409, 0.01
        %v4512 = vmul.f32 %v4414, 0.01
        %v4513 = vmul.f32 %v4419, 0.01
        %v4514 = vmul.f32 %v4424, 0.01
        %v4515 = vmul.f32 %v4429, 0.01
        %v4516 = vmul.f32 %v4434, 0.01
        %v4517 = vmul.f32 %v4439, 0.01
        %v4518 = vmul.f32 %v4444, 0.01
        %v4519 = vmul.f32 %v4449, 0.01
        %v4520 = vmul.f32 %v4454, 0.01
        %v4521 = vsel %vm4457, %v4299, %v4489
        %v4522 = vsel %vm4458, %v4304, %v4490
        %v4523 = vsel %vm4459, %v4309, %v4491
        %v4524 = vsel %vm4460, %v4314, %v4492
        %v4525 = vsel %vm4461, %v4319, %v4493
        %v4526 = vsel %vm4462, %v4324, %v4494
        %v4527 = vsel %vm4463, %v4329, %v4495
        %v4528 = vsel %vm4464, %v4334, %v4496
        %v4529 = vsel %vm4465, %v4339, %v4497
        %v4530 = vsel %vm4466, %v4344, %v4498
        %v4531 = vsel %vm4467, %v4349, %v4499
        %v4532 = vsel %vm4468, %v4354, %v4500
        %v4533 = vsel %vm4469, %v4359, %v4501
        %v4534 = vsel %vm4470, %v4364, %v4502
        %v4535 = vsel %vm4471, %v4369, %v4503
        %v4536 = vsel %vm4472, %v4374, %v4504
        %v4537 = vsel %vm4473, %v4379, %v4505
        %v4538 = vsel %vm4474, %v4384, %v4506
        %v4539 = vsel %vm4475, %v4389, %v4507
        %v4540 = vsel %vm4476, %v4394, %v4508
        %v4541 = vsel %vm4477, %v4399, %v4509
        %v4542 = vsel %vm4478, %v4404, %v4510
        %v4543 = vsel %vm4479, %v4409, %v4511
        %v4544 = vsel %vm4480, %v4414, %v4512
        %v4545 = vsel %vm4481, %v4419, %v4513
        %v4546 = vsel %vm4482, %v4424, %v4514
        %v4547 = vsel %vm4483, %v4429, %v4515
        %v4548 = vsel %vm4484, %v4434, %v4516
        %v4549 = vsel %vm4485, %v4439, %v4517
        %v4550 = vsel %vm4486, %v4444, %v4518
        %v4551 = vsel %vm4487, %v4449, %v4519
        %v4552 = vsel %vm4488, %v4454, %v4520
        %v4553 = vmax.f32 %v4071, %v4521
        %v4554 = vmax.f32 %v4072, %v4522
        %v4555 = vmax.f32 %v4073, %v4523
        %v4556 = vmax.f32 %v4074, %v4524
        %v4557 = vmax.f32 %v4075, %v4525
        %v4558 = vmax.f32 %v4076, %v4526
        %v4559 = vmax.f32 %v4077, %v4527
        %v4560 = vmax.f32 %v4078, %v4528
        %v4561 = vmax.f32 %v4079, %v4529
        %v4562 = vmax.f32 %v4080, %v4530
        %v4563 = vmax.f32 %v4081, %v4531
        %v4564 = vmax.f32 %v4082, %v4532
        %v4565 = vmax.f32 %v4083, %v4533
        %v4566 = vmax.f32 %v4084, %v4534
        %v4567 = vmax.f32 %v4085, %v4535
        %v4568 = vmax.f32 %v4086, %v4536
        %v4569 = vmax.f32 %v4087, %v4537
        %v4570 = vmax.f32 %v4088, %v4538
        %v4571 = vmax.f32 %v4089, %v4539
        %v4572 = vmax.f32 %v4090, %v4540
        %v4573 = vmax.f32 %v4091, %v4541
        %v4574 = vmax.f32 %v4092, %v4542
        %v4575 = vmax.f32 %v4093, %v4543
        %v4576 = vmax.f32 %v4094, %v4544
        %v4577 = vmax.f32 %v4095, %v4545
        %v4578 = vmax.f32 %v4096, %v4546
        %v4579 = vmax.f32 %v4097, %v4547
        %v4580 = vmax.f32 %v4098, %v4548
        %v4581 = vmax.f32 %v4099, %v4549
        %v4582 = vmax.f32 %v4100, %v4550
        %v4583 = vmax.f32 %v4101, %v4551
        %v4584 = vmax.f32 %v4102, %v4552
        %s4585 = scalar_lea.vmem %s1200, 1792 [#allocation2]
        %v4586 = vld [vmem:[%s4585] sm:$0xff]
        %v4587 = vld [vmem:[%s4585 + $0x8] sm:$0xff]
        %v4588 = vld [vmem:[%s4585 + $0x10] sm:$0xff]
        %v4589 = vld [vmem:[%s4585 + $0x18] sm:$0xff]
        %v4590 = vld [vmem:[%s4585 + $0x20] sm:$0xff]
        %v4591 = vld [vmem:[%s4585 + $0x28] sm:$0xff]
        %v4592 = vld [vmem:[%s4585 + $0x30] sm:$0xff]
        %v4593 = vld [vmem:[%s4585 + $0x38] sm:$0xff]
        %v4594 = vld [vmem:[%s4585 + $0x40] sm:$0xff]
        %v4595 = vld [vmem:[%s4585 + $0x48] sm:$0xff]
        %v4596 = vld [vmem:[%s4585 + $0x50] sm:$0xff]
        %v4597 = vld [vmem:[%s4585 + $0x58] sm:$0xff]
        %v4598 = vld [vmem:[%s4585 + $0x60] sm:$0xff]
        %v4599 = vld [vmem:[%s4585 + $0x68] sm:$0xff]
        %v4600 = vld [vmem:[%s4585 + $0x70] sm:$0xff]
        %v4601 = vld [vmem:[%s4585 + $0x78] sm:$0xff]
        %v4602 = vld [vmem:[%s4585 + $0x80] sm:$0xff]
        %v4603 = vld [vmem:[%s4585 + $0x88] sm:$0xff]
        %v4604 = vld [vmem:[%s4585 + $0x90] sm:$0xff]
        %v4605 = vld [vmem:[%s4585 + $0x98] sm:$0xff]
        %v4606 = vld [vmem:[%s4585 + $0xa0] sm:$0xff]
        %v4607 = vld [vmem:[%s4585 + $0xa8] sm:$0xff]
        %v4608 = vld [vmem:[%s4585 + $0xb0] sm:$0xff]
        %v4609 = vld [vmem:[%s4585 + $0xb8] sm:$0xff]
        %v4610 = vld [vmem:[%s4585 + $0xc0] sm:$0xff]
        %v4611 = vld [vmem:[%s4585 + $0xc8] sm:$0xff]
        %v4612 = vld [vmem:[%s4585 + $0xd0] sm:$0xff]
        %v4613 = vld [vmem:[%s4585 + $0xd8] sm:$0xff]
        %v4614 = vld [vmem:[%s4585 + $0xe0] sm:$0xff]
        %v4615 = vld [vmem:[%s4585 + $0xe8] sm:$0xff]
        %v4616 = vld [vmem:[%s4585 + $0xf0] sm:$0xff]
        %v4617 = vld [vmem:[%s4585 + $0xf8] sm:$0xff]
        %v4619 = vsel %vm1271, %v4586, 0
        %v4622 = vsel %vm1271, %v4587, 0
        %v4625 = vsel %vm1271, %v4588, 0
        %v4628 = vsel %vm1271, %v4589, 0
        %v4631 = vsel %vm1271, %v4590, 0
        %v4634 = vsel %vm1271, %v4591, 0
        %v4637 = vsel %vm1271, %v4592, 0
        %v4640 = vsel %vm1271, %v4593, 0
        %v4643 = vsel %vm1271, %v4594, 0
        %v4646 = vsel %vm1271, %v4595, 0
        %v4649 = vsel %vm1271, %v4596, 0
        %v4652 = vsel %vm1271, %v4597, 0
        %v4655 = vsel %vm1271, %v4598, 0
        %v4658 = vsel %vm1271, %v4599, 0
        %v4661 = vsel %vm1271, %v4600, 0
        %v4664 = vsel %vm1271, %v4601, 0
        %v4667 = vsel %vm1271, %v4602, 0
        %v4670 = vsel %vm1271, %v4603, 0
        %v4673 = vsel %vm1271, %v4604, 0
        %v4676 = vsel %vm1271, %v4605, 0
        %v4679 = vsel %vm1271, %v4606, 0
        %v4682 = vsel %vm1271, %v4607, 0
        %v4685 = vsel %vm1271, %v4608, 0
        %v4688 = vsel %vm1271, %v4609, 0
        %v4691 = vsel %vm1271, %v4610, 0
        %v4694 = vsel %vm1271, %v4611, 0
        %v4697 = vsel %vm1271, %v4612, 0
        %v4700 = vsel %vm1271, %v4613, 0
        %v4703 = vsel %vm1271, %v4614, 0
        %v4706 = vsel %vm1271, %v4615, 0
        %v4709 = vsel %vm1271, %v4616, 0
        %v4712 = vsel %vm1271, %v4617, 0
        %4714 = vmatprep.subr.mxu0 0.0
        %4715 = vmatpush1.msra.mxu0 %v1228
        %4716 = vmatprep.subr.mxu0 0.0
        %4717 = vmatpush1.msra.mxu0 %v1229
        %4718 = vmatprep.subr.mxu0 0.0
        %4719 = vmatpush1.msra.mxu0 %v1230
        %4720 = vmatprep.subr.mxu0 0.0
        %4721 = vmatpush1.msra.mxu0 %v1370
        %4722 = vmatprep.subr.mxu0 0.0
        %4723 = vmatpush1.msra.mxu0 0.0
        %4724 = vmatprep.subr.mxu0 0.0
        %4725 = vmatpush1.msra.mxu0 0.0
        %4726 = vmatprep.subr.mxu0 0.0
        %4727 = vmatpush1.msra.mxu0 0.0
        %4728 = vmatprep.subr.mxu0 0.0
        %4729 = vmatpush1.msra.mxu0 0.0
        %4730 = vmatprep.subr.mxu0 0.0
        %4731 = vmatpush1.msra.mxu0 0.0
        %4732 = vmatprep.subr.mxu0 0.0
        %4733 = vmatpush1.msra.mxu0 0.0
        %4734 = vmatprep.subr.mxu0 0.0
        %4735 = vmatpush1.msra.mxu0 0.0
        %4736 = vmatprep.subr.mxu0 0.0
        %4737 = vmatpush1.msra.mxu0 0.0
        %4738 = vmatprep.subr.mxu0 0.0
        %4739 = vmatpush1.msra.mxu0 0.0
        %4740 = vmatprep.subr.mxu0 0.0
        %4741 = vmatpush1.msra.mxu0 0.0
        %4742 = vmatprep.subr.mxu0 0.0
        %4743 = vmatpush1.msra.mxu0 0.0
        %4744 = vmatprep.subr.mxu0 0.0
        %4745 = vmatpush1.msra.mxu0 0.0
        %4746 = vmatprep.subr.mxu0 0.0
        %4747 = vmatpush1.msra.mxu0 0.0
        %4748 = vmatprep.subr.mxu0 0.0
        %4749 = vmatpush1.msra.mxu0 0.0
        %4750 = vmatprep.subr.mxu0 0.0
        %4751 = vmatpush1.msra.mxu0 0.0
        %4752 = vmatprep.subr.mxu0 0.0
        %4753 = vmatpush1.msra.mxu0 0.0
        %4754 = vmatprep.subr.mxu0 0.0
        %4755 = vmatpush1.msra.mxu0 0.0
        %4756 = vmatprep.subr.mxu0 0.0
        %4757 = vmatpush1.msra.mxu0 0.0
        %4758 = vmatprep.subr.mxu0 0.0
        %4759 = vmatpush1.msra.mxu0 0.0
        %4760 = vmatprep.subr.mxu0 0.0
        %4761 = vmatpush1.msra.mxu0 0.0
        %4762 = vmatprep.subr.mxu0 0.0
        %4763 = vmatpush1.msra.mxu0 0.0
        %4764 = vmatprep.subr.mxu0 0.0
        %4765 = vmatpush1.msra.mxu0 0.0
        %4766 = vmatprep.subr.mxu0 0.0
        %4767 = vmatpush1.msra.mxu0 0.0
        %4768 = vmatprep.subr.mxu0 0.0
        %4769 = vmatpush1.msra.mxu0 0.0
        %4770 = vmatprep.subr.mxu0 0.0
        %4771 = vmatpush1.msra.mxu0 0.0
        %4772 = vmatprep.subr.mxu0 0.0
        %4773 = vmatpush1.msra.mxu0 0.0
        %4774 = vmatprep.subr.mxu0 0.0
        %4775 = vmatpush1.msra.mxu0 0.0
        %4776 = vmatprep.subr.mxu0 0.0
        %4777 = vmatpush1.msra.mxu0 0.0
        %4778 = vmatprep.mubr.f32.mxu0 0.0
        %4779 = vmatmul.mubr.f32.gmra.mrb[0].mxu0 %v4619
        %v4780 = vpop.f32.mrb[0].mxu0
        %v4781 = vadd.f32 %v1269, %v4780
        %v4782 = vpop.f32.mrb[0].mxu0
        %4783 = vmatprep.mubr.f32.mxu0 0.0
        %4784 = vmatmul.mubr.f32.gmra.mrb[0].mxu0 %v4622
        %v4785 = vpop.f32.mrb[0].mxu0
        %v4786 = vadd.f32 %v1269, %v4785
        %v4787 = vpop.f32.mrb[0].mxu0
        %4788 = vmatprep.mubr.f32.mxu0 0.0
        %4789 = vmatmul.mubr.f32.gmra.mrb[0].mxu0 %v4625
        %v4790 = vpop.f32.mrb[0].mxu0
        %v4791 = vadd.f32 %v1269, %v4790
        %v4792 = vpop.f32.mrb[0].mxu0
        %4793 = vmatprep.mubr.f32.mxu0 0.0
        %4794 = vmatmul.mubr.f32.gmra.mrb[0].mxu0 %v4628
        %v4795 = vpop.f32.mrb[0].mxu0
        %v4796 = vadd.f32 %v1269, %v4795
        %v4797 = vpop.f32.mrb[0].mxu0
        %4798 = vmatprep.mubr.f32.mxu0 0.0
        %4799 = vmatmul.mubr.f32.gmra.mrb[0].mxu0 %v4631
        %v4800 = vpop.f32.mrb[0].mxu0
        %v4801 = vadd.f32 %v1269, %v4800
        %v4802 = vpop.f32.mrb[0].mxu0
        %4803 = vmatprep.mubr.f32.mxu0 0.0
        %4804 = vmatmul.mubr.f32.gmra.mrb[0].mxu0 %v4634
        %v4805 = vpop.f32.mrb[0].mxu0
        %v4806 = vadd.f32 %v1269, %v4805
        %v4807 = vpop.f32.mrb[0].mxu0
        %4808 = vmatprep.mubr.f32.mxu0 0.0
        %4809 = vmatmul.mubr.f32.gmra.mrb[0].mxu0 %v4637
        %v4810 = vpop.f32.mrb[0].mxu0
        %v4811 = vadd.f32 %v1269, %v4810
        %v4812 = vpop.f32.mrb[0].mxu0
        %4813 = vmatprep.mubr.f32.mxu0 0.0
        %4814 = vmatmul.mubr.f32.gmra.mrb[0].mxu0 %v4640
        %v4815 = vpop.f32.mrb[0].mxu0
        %v4816 = vadd.f32 %v1269, %v4815
        %v4817 = vpop.f32.mrb[0].mxu0
        %4818 = vmatprep.mubr.f32.mxu0 0.0
        %4819 = vmatmul.mubr.f32.gmra.mrb[0].mxu0 %v4643
        %v4820 = vpop.f32.mrb[0].mxu0
        %v4821 = vadd.f32 %v1269, %v4820
        %v4822 = vpop.f32.mrb[0].mxu0
        %4823 = vmatprep.mubr.f32.mxu0 0.0
        %4824 = vmatmul.mubr.f32.gmra.mrb[0].mxu0 %v4646
        %v4825 = vpop.f32.mrb[0].mxu0
        %v4826 = vadd.f32 %v1269, %v4825
        %v4827 = vpop.f32.mrb[0].mxu0
        %4828 = vmatprep.mubr.f32.mxu0 0.0
        %4829 = vmatmul.mubr.f32.gmra.mrb[0].mxu0 %v4649
        %v4830 = vpop.f32.mrb[0].mxu0
        %v4831 = vadd.f32 %v1269, %v4830
        %v4832 = vpop.f32.mrb[0].mxu0
        %4833 = vmatprep.mubr.f32.mxu0 0.0
        %4834 = vmatmul.mubr.f32.gmra.mrb[0].mxu0 %v4652
        %v4835 = vpop.f32.mrb[0].mxu0
        %v4836 = vadd.f32 %v1269, %v4835
        %v4837 = vpop.f32.mrb[0].mxu0
        %4838 = vmatprep.mubr.f32.mxu0 0.0
        %4839 = vmatmul.mubr.f32.gmra.mrb[0].mxu0 %v4655
        %v4840 = vpop.f32.mrb[0].mxu0
        %v4841 = vadd.f32 %v1269, %v4840
        %v4842 = vpop.f32.mrb[0].mxu0
        %4843 = vmatprep.mubr.f32.mxu0 0.0
        %4844 = vmatmul.mubr.f32.gmra.mrb[0].mxu0 %v4658
        %v4845 = vpop.f32.mrb[0].mxu0
        %v4846 = vadd.f32 %v1269, %v4845
        %v4847 = vpop.f32.mrb[0].mxu0
        %4848 = vmatprep.mubr.f32.mxu0 0.0
        %4849 = vmatmul.mubr.f32.gmra.mrb[0].mxu0 %v4661
        %v4850 = vpop.f32.mrb[0].mxu0
        %v4851 = vadd.f32 %v1269, %v4850
        %v4852 = vpop.f32.mrb[0].mxu0
        %4853 = vmatprep.mubr.f32.mxu0 0.0
        %4854 = vmatmul.mubr.f32.gmra.mrb[0].mxu0 %v4664
        %v4855 = vpop.f32.mrb[0].mxu0
        %v4856 = vadd.f32 %v1269, %v4855
        %v4857 = vpop.f32.mrb[0].mxu0
        %4858 = vmatprep.mubr.f32.mxu0 0.0
        %4859 = vmatmul.mubr.f32.gmra.mrb[0].mxu0 %v4667
        %v4860 = vpop.f32.mrb[0].mxu0
        %v4861 = vadd.f32 %v1269, %v4860
        %v4862 = vpop.f32.mrb[0].mxu0
        %4863 = vmatprep.mubr.f32.mxu0 0.0
        %4864 = vmatmul.mubr.f32.gmra.mrb[0].mxu0 %v4670
        %v4865 = vpop.f32.mrb[0].mxu0
        %v4866 = vadd.f32 %v1269, %v4865
        %v4867 = vpop.f32.mrb[0].mxu0
        %4868 = vmatprep.mubr.f32.mxu0 0.0
        %4869 = vmatmul.mubr.f32.gmra.mrb[0].mxu0 %v4673
        %v4870 = vpop.f32.mrb[0].mxu0
        %v4871 = vadd.f32 %v1269, %v4870
        %v4872 = vpop.f32.mrb[0].mxu0
        %4873 = vmatprep.mubr.f32.mxu0 0.0
        %4874 = vmatmul.mubr.f32.gmra.mrb[0].mxu0 %v4676
        %v4875 = vpop.f32.mrb[0].mxu0
        %v4876 = vadd.f32 %v1269, %v4875
        %v4877 = vpop.f32.mrb[0].mxu0
        %4878 = vmatprep.mubr.f32.mxu0 0.0
        %4879 = vmatmul.mubr.f32.gmra.mrb[0].mxu0 %v4679
        %v4880 = vpop.f32.mrb[0].mxu0
        %v4881 = vadd.f32 %v1269, %v4880
        %v4882 = vpop.f32.mrb[0].mxu0
        %4883 = vmatprep.mubr.f32.mxu0 0.0
        %4884 = vmatmul.mubr.f32.gmra.mrb[0].mxu0 %v4682
        %v4885 = vpop.f32.mrb[0].mxu0
        %v4886 = vadd.f32 %v1269, %v4885
        %v4887 = vpop.f32.mrb[0].mxu0
        %4888 = vmatprep.mubr.f32.mxu0 0.0
        %4889 = vmatmul.mubr.f32.gmra.mrb[0].mxu0 %v4685
        %v4890 = vpop.f32.mrb[0].mxu0
        %v4891 = vadd.f32 %v1269, %v4890
        %v4892 = vpop.f32.mrb[0].mxu0
        %4893 = vmatprep.mubr.f32.mxu0 0.0
        %4894 = vmatmul.mubr.f32.gmra.mrb[0].mxu0 %v4688
        %v4895 = vpop.f32.mrb[0].mxu0
        %v4896 = vadd.f32 %v1269, %v4895
        %v4897 = vpop.f32.mrb[0].mxu0
        %4898 = vmatprep.mubr.f32.mxu0 0.0
        %4899 = vmatmul.mubr.f32.gmra.mrb[0].mxu0 %v4691
        %v4900 = vpop.f32.mrb[0].mxu0
        %v4901 = vadd.f32 %v1269, %v4900
        %v4902 = vpop.f32.mrb[0].mxu0
        %4903 = vmatprep.mubr.f32.mxu0 0.0
        %4904 = vmatmul.mubr.f32.gmra.mrb[0].mxu0 %v4694
        %v4905 = vpop.f32.mrb[0].mxu0
        %v4906 = vadd.f32 %v1269, %v4905
        %v4907 = vpop.f32.mrb[0].mxu0
        %4908 = vmatprep.mubr.f32.mxu0 0.0
        %4909 = vmatmul.mubr.f32.gmra.mrb[0].mxu0 %v4697
        %v4910 = vpop.f32.mrb[0].mxu0
        %v4911 = vadd.f32 %v1269, %v4910
        %v4912 = vpop.f32.mrb[0].mxu0
        %4913 = vmatprep.mubr.f32.mxu0 0.0
        %4914 = vmatmul.mubr.f32.gmra.mrb[0].mxu0 %v4700
        %v4915 = vpop.f32.mrb[0].mxu0
        %v4916 = vadd.f32 %v1269, %v4915
        %v4917 = vpop.f32.mrb[0].mxu0
        %4918 = vmatprep.mubr.f32.mxu0 0.0
        %4919 = vmatmul.mubr.f32.gmra.mrb[0].mxu0 %v4703
        %v4920 = vpop.f32.mrb[0].mxu0
        %v4921 = vadd.f32 %v1269, %v4920
        %v4922 = vpop.f32.mrb[0].mxu0
        %4923 = vmatprep.mubr.f32.mxu0 0.0
        %4924 = vmatmul.mubr.f32.gmra.mrb[0].mxu0 %v4706
        %v4925 = vpop.f32.mrb[0].mxu0
        %v4926 = vadd.f32 %v1269, %v4925
        %v4927 = vpop.f32.mrb[0].mxu0
        %4928 = vmatprep.mubr.f32.mxu0 0.0
        %4929 = vmatmul.mubr.f32.gmra.mrb[0].mxu0 %v4709
        %v4930 = vpop.f32.mrb[0].mxu0
        %v4931 = vadd.f32 %v1269, %v4930
        %v4932 = vpop.f32.mrb[0].mxu0
        %4933 = vmatprep.mubr.f32.mxu0 0.0
        %4934 = vmatmul.mubr.f32.gmra.mrb[0].mxu0 %v4712
        %v4935 = vpop.f32.mrb[0].mxu0
        %v4936 = vadd.f32 %v1269, %v4935
        %v4937 = vpop.f32.mrb[0].mxu0
        %4938 = vdwg.mxu0
        %vm4939 = vcmp.ge.f32.partialorder %v4781, 0.0
        %vm4940 = vcmp.ge.f32.partialorder %v4786, 0.0
        %vm4941 = vcmp.ge.f32.partialorder %v4791, 0.0
        %vm4942 = vcmp.ge.f32.partialorder %v4796, 0.0
        %vm4943 = vcmp.ge.f32.partialorder %v4801, 0.0
        %vm4944 = vcmp.ge.f32.partialorder %v4806, 0.0
        %vm4945 = vcmp.ge.f32.partialorder %v4811, 0.0
        %vm4946 = vcmp.ge.f32.partialorder %v4816, 0.0
        %vm4947 = vcmp.ge.f32.partialorder %v4821, 0.0
        %vm4948 = vcmp.ge.f32.partialorder %v4826, 0.0
        %vm4949 = vcmp.ge.f32.partialorder %v4831, 0.0
        %vm4950 = vcmp.ge.f32.partialorder %v4836, 0.0
        %vm4951 = vcmp.ge.f32.partialorder %v4841, 0.0
        %vm4952 = vcmp.ge.f32.partialorder %v4846, 0.0
        %vm4953 = vcmp.ge.f32.partialorder %v4851, 0.0
        %vm4954 = vcmp.ge.f32.partialorder %v4856, 0.0
        %vm4955 = vcmp.ge.f32.partialorder %v4861, 0.0
        %vm4956 = vcmp.ge.f32.partialorder %v4866, 0.0
        %vm4957 = vcmp.ge.f32.partialorder %v4871, 0.0
        %vm4958 = vcmp.ge.f32.partialorder %v4876, 0.0
        %vm4959 = vcmp.ge.f32.partialorder %v4881, 0.0
        %vm4960 = vcmp.ge.f32.partialorder %v4886, 0.0
        %vm4961 = vcmp.ge.f32.partialorder %v4891, 0.0
        %vm4962 = vcmp.ge.f32.partialorder %v4896, 0.0
        %vm4963 = vcmp.ge.f32.partialorder %v4901, 0.0
        %vm4964 = vcmp.ge.f32.partialorder %v4906, 0.0
        %vm4965 = vcmp.ge.f32.partialorder %v4911, 0.0
        %vm4966 = vcmp.ge.f32.partialorder %v4916, 0.0
        %vm4967 = vcmp.ge.f32.partialorder %v4921, 0.0
        %vm4968 = vcmp.ge.f32.partialorder %v4926, 0.0
        %vm4969 = vcmp.ge.f32.partialorder %v4931, 0.0
        %vm4970 = vcmp.ge.f32.partialorder %v4936, 0.0
        %v4971 = vmul.f32 %v4781, 0.01
        %v4972 = vmul.f32 %v4786, 0.01
        %v4973 = vmul.f32 %v4791, 0.01
        %v4974 = vmul.f32 %v4796, 0.01
        %v4975 = vmul.f32 %v4801, 0.01
        %v4976 = vmul.f32 %v4806, 0.01
        %v4977 = vmul.f32 %v4811, 0.01
        %v4978 = vmul.f32 %v4816, 0.01
        %v4979 = vmul.f32 %v4821, 0.01
        %v4980 = vmul.f32 %v4826, 0.01
        %v4981 = vmul.f32 %v4831, 0.01
        %v4982 = vmul.f32 %v4836, 0.01
        %v4983 = vmul.f32 %v4841, 0.01
        %v4984 = vmul.f32 %v4846, 0.01
        %v4985 = vmul.f32 %v4851, 0.01
        %v4986 = vmul.f32 %v4856, 0.01
        %v4987 = vmul.f32 %v4861, 0.01
        %v4988 = vmul.f32 %v4866, 0.01
        %v4989 = vmul.f32 %v4871, 0.01
        %v4990 = vmul.f32 %v4876, 0.01
        %v4991 = vmul.f32 %v4881, 0.01
        %v4992 = vmul.f32 %v4886, 0.01
        %v4993 = vmul.f32 %v4891, 0.01
        %v4994 = vmul.f32 %v4896, 0.01
        %v4995 = vmul.f32 %v4901, 0.01
        %v4996 = vmul.f32 %v4906, 0.01
        %v4997 = vmul.f32 %v4911, 0.01
        %v4998 = vmul.f32 %v4916, 0.01
        %v4999 = vmul.f32 %v4921, 0.01
        %v5000 = vmul.f32 %v4926, 0.01
        %v5001 = vmul.f32 %v4931, 0.01
        %v5002 = vmul.f32 %v4936, 0.01
        %v5003 = vsel %vm4939, %v4781, %v4971
        %v5004 = vsel %vm4940, %v4786, %v4972
        %v5005 = vsel %vm4941, %v4791, %v4973
        %v5006 = vsel %vm4942, %v4796, %v4974
        %v5007 = vsel %vm4943, %v4801, %v4975
        %v5008 = vsel %vm4944, %v4806, %v4976
        %v5009 = vsel %vm4945, %v4811, %v4977
        %v5010 = vsel %vm4946, %v4816, %v4978
        %v5011 = vsel %vm4947, %v4821, %v4979
        %v5012 = vsel %vm4948, %v4826, %v4980
        %v5013 = vsel %vm4949, %v4831, %v4981
        %v5014 = vsel %vm4950, %v4836, %v4982
        %v5015 = vsel %vm4951, %v4841, %v4983
        %v5016 = vsel %vm4952, %v4846, %v4984
        %v5017 = vsel %vm4953, %v4851, %v4985
        %v5018 = vsel %vm4954, %v4856, %v4986
        %v5019 = vsel %vm4955, %v4861, %v4987
        %v5020 = vsel %vm4956, %v4866, %v4988
        %v5021 = vsel %vm4957, %v4871, %v4989
        %v5022 = vsel %vm4958, %v4876, %v4990
        %v5023 = vsel %vm4959, %v4881, %v4991
        %v5024 = vsel %vm4960, %v4886, %v4992
        %v5025 = vsel %vm4961, %v4891, %v4993
        %v5026 = vsel %vm4962, %v4896, %v4994
        %v5027 = vsel %vm4963, %v4901, %v4995
        %v5028 = vsel %vm4964, %v4906, %v4996
        %v5029 = vsel %vm4965, %v4911, %v4997
        %v5030 = vsel %vm4966, %v4916, %v4998
        %v5031 = vsel %vm4967, %v4921, %v4999
        %v5032 = vsel %vm4968, %v4926, %v5000
        %v5033 = vsel %vm4969, %v4931, %v5001
        %v5034 = vsel %vm4970, %v4936, %v5002
        %v5035 = vmax.f32 %v4553, %v5003
        %v5036 = vmax.f32 %v4554, %v5004
        %v5037 = vmax.f32 %v4555, %v5005
        %v5038 = vmax.f32 %v4556, %v5006
        %v5039 = vmax.f32 %v4557, %v5007
        %v5040 = vmax.f32 %v4558, %v5008
        %v5041 = vmax.f32 %v4559, %v5009
        %v5042 = vmax.f32 %v4560, %v5010
        %v5043 = vmax.f32 %v4561, %v5011
        %v5044 = vmax.f32 %v4562, %v5012
        %v5045 = vmax.f32 %v4563, %v5013
        %v5046 = vmax.f32 %v4564, %v5014
        %v5047 = vmax.f32 %v4565, %v5015
        %v5048 = vmax.f32 %v4566, %v5016
        %v5049 = vmax.f32 %v4567, %v5017
        %v5050 = vmax.f32 %v4568, %v5018
        %v5051 = vmax.f32 %v4569, %v5019
        %v5052 = vmax.f32 %v4570, %v5020
        %v5053 = vmax.f32 %v4571, %v5021
        %v5054 = vmax.f32 %v4572, %v5022
        %v5055 = vmax.f32 %v4573, %v5023
        %v5056 = vmax.f32 %v4574, %v5024
        %v5057 = vmax.f32 %v4575, %v5025
        %v5058 = vmax.f32 %v4576, %v5026
        %v5059 = vmax.f32 %v4577, %v5027
        %v5060 = vmax.f32 %v4578, %v5028
        %v5061 = vmax.f32 %v4579, %v5029
        %v5062 = vmax.f32 %v4580, %v5030
        %v5063 = vmax.f32 %v4581, %v5031
        %v5064 = vmax.f32 %v4582, %v5032
        %v5065 = vmax.f32 %v4583, %v5033
        %v5066 = vmax.f32 %v4584, %v5034
        %vm5067 = vcmask 130048
        %5068 = vst.msk [vmem:[%s1226] sm:$0xff] %vm5067, %v5035
        %5069 = vst.msk [vmem:[%s1226 + $0x8] sm:$0xff] %vm5067, %v5036
        %5070 = vst.msk [vmem:[%s1226 + $0x10] sm:$0xff] %vm5067, %v5037
        %5071 = vst.msk [vmem:[%s1226 + $0x18] sm:$0xff] %vm5067, %v5038
        %5072 = vst.msk [vmem:[%s1226 + $0x20] sm:$0xff] %vm5067, %v5039
        %5073 = vst.msk [vmem:[%s1226 + $0x28] sm:$0xff] %vm5067, %v5040
        %5074 = vst.msk [vmem:[%s1226 + $0x30] sm:$0xff] %vm5067, %v5041
        %5075 = vst.msk [vmem:[%s1226 + $0x38] sm:$0xff] %vm5067, %v5042
        %5076 = vst.msk [vmem:[%s1226 + $0x40] sm:$0xff] %vm5067, %v5043
        %5077 = vst.msk [vmem:[%s1226 + $0x48] sm:$0xff] %vm5067, %v5044
        %5078 = vst.msk [vmem:[%s1226 + $0x50] sm:$0xff] %vm5067, %v5045
        %5079 = vst.msk [vmem:[%s1226 + $0x58] sm:$0xff] %vm5067, %v5046
        %5080 = vst.msk [vmem:[%s1226 + $0x60] sm:$0xff] %vm5067, %v5047
        %5081 = vst.msk [vmem:[%s1226 + $0x68] sm:$0xff] %vm5067, %v5048
        %5082 = vst.msk [vmem:[%s1226 + $0x70] sm:$0xff] %vm5067, %v5049
        %5083 = vst.msk [vmem:[%s1226 + $0x78] sm:$0xff] %vm5067, %v5050
        %5084 = vst.msk [vmem:[%s1226 + $0x80] sm:$0xff] %vm5067, %v5051
        %5085 = vst.msk [vmem:[%s1226 + $0x88] sm:$0xff] %vm5067, %v5052
        %5086 = vst.msk [vmem:[%s1226 + $0x90] sm:$0xff] %vm5067, %v5053
        %5087 = vst.msk [vmem:[%s1226 + $0x98] sm:$0xff] %vm5067, %v5054
        %5088 = vst.msk [vmem:[%s1226 + $0xa0] sm:$0xff] %vm5067, %v5055
        %5089 = vst.msk [vmem:[%s1226 + $0xa8] sm:$0xff] %vm5067, %v5056
        %5090 = vst.msk [vmem:[%s1226 + $0xb0] sm:$0xff] %vm5067, %v5057
        %5091 = vst.msk [vmem:[%s1226 + $0xb8] sm:$0xff] %vm5067, %v5058
        %5092 = vst.msk [vmem:[%s1226 + $0xc0] sm:$0xff] %vm5067, %v5059
        %5093 = vst.msk [vmem:[%s1226 + $0xc8] sm:$0xff] %vm5067, %v5060
        %5094 = vst.msk [vmem:[%s1226 + $0xd0] sm:$0xff] %vm5067, %v5061
        %5095 = vst.msk [vmem:[%s1226 + $0xd8] sm:$0xff] %vm5067, %v5062
        %5096 = vst.msk [vmem:[%s1226 + $0xe0] sm:$0xff] %vm5067, %v5063
        %5097 = vst.msk [vmem:[%s1226 + $0xe8] sm:$0xff] %vm5067, %v5064
        %5098 = vst.msk [vmem:[%s1226 + $0xf0] sm:$0xff] %vm5067, %v5065
        %5099 = vst.msk [vmem:[%s1226 + $0xf8] sm:$0xff] %vm5067, %v5066
        %s5100 = smul.u32 32, %s14
        %p5101 = scmp.lt.s32.totalorder %s5100, 95
        %s5102 = scalar_select %p5101, %s5100, 95
        %s5103 = smul.addr %s5102, 8
        %s5104 = scalar_lea.vmem %s3, %s5103
        // Predicated region
        $region71: #{cnn_forward.3} parent=65 // pred_check
          %p5105 = pneg %p100
        $region72: #{cnn_forward.3} parent=65 // pred_check_branch
          %5107 = sbr.rel (%p5105) target = $region74
        $region73: #{cnn_forward.3} parent=65 // pred_region
          %s5108 = smul.u32 32, %s14
        $region74: #{cnn_forward.3} parent=65 // pred_fallthru
          _
      $region66: #{cnn_forward.3} parent=5 // pred_fallthru
        _
      %p5109 = scmp.le.s32.totalorder 2, %s9
      // Predicated region
      $region75: #{cnn_forward.3} parent=5 // pred_check
        %p5110 = pneg %p5109
      $region76: #{cnn_forward.3} parent=5 // pred_check_branch
        %5112 = sbr.rel (%p5110) target = $region78
      $region77: #{cnn_forward.3} parent=5 // pred_region
        %s5113 = ssub.s32 %s9, 2
        // Predicated region
        $region79: #{cnn_forward.3} parent=77 // pred_check
          %p5114 = pneg %p106
        $region80: #{cnn_forward.3} parent=77 // pred_check_branch
          %5116 = sbr.rel (%p5114) target = $region82
        $region81: #{cnn_forward.3} parent=77 // pred_region
          %s5117 = smul.u32 32, %s15
          %p5118 = scmp.lt.s32.totalorder %s5117, 95
          %s5119 = scalar_select %p5118, %s5117, 95
          %s5120 = smul.addr %s5119, 8
          %s5121 = scalar_lea.vmem %s3, %s5120
        $region82: #{cnn_forward.3} parent=77 // pred_fallthru
          _
      $region78: #{cnn_forward.3} parent=5 // pred_fallthru
        _
    $region6: #{cnn_forward.3} parent=1 // loop_footer
      %s13 = sadd.s32 1, %s9
    $region7: #{cnn_forward.3} parent=1 // loop_footer_branch
      %8 = sbr.rel target = $region3
    $region8: #{cnn_forward.3} parent=1 // loop_exit
      _

// kernel: cnn_forward.4
$region0: #{cnn_forward.4}
  #allocation0 [shape = 'u32[]', space=smem, size = 0x4, offset = 0x4, fixed_abs, tag = 'smem constant byte address 0x4 - core index']
  #allocation1 [shape = 'u32[144,128]{1,0:T(1,128)}', space=vmem, size = 0x12000, scoped, tag = 'internal scratch']
  %s0 = inlined_call_operand.vmem [shape: f32[8,16,432], index: 0, kind: input, shape index: {}]
  %s1 = inlined_call_operand.vmem [shape: f32[432,64], index: 1, kind: input, shape index: {}]
  %s2 = inlined_call_operand.vmem [shape: f32[1,64], index: 2, kind: input, shape index: {}]
  %s3 = inlined_call_operand.vmem [shape: f32[16,64], index: 3, kind: output, shape index: {}]
  %s4 = sld [smem:[#allocation0]]
  $region22: #{cnn_forward.4} parent=0
    _
  %s6 = ssub.s32 1, %s4
  %s7 = scalar_select 0, %s6, %s4
  // Predicated region
  $region2: #{cnn_forward.4} parent=0 // pred_check
    _
  $region3: #{cnn_forward.4} parent=0 // pred_check_branch
    %9 = sbr.rel (0) target = $region5
  $region4: #{cnn_forward.4} parent=0 // pred_region
    _
  $region5: #{cnn_forward.4} parent=0 // pred_fallthru
    _
  // Predicated region
  $region6: #{cnn_forward.4} parent=0 // pred_check
    _
  $region7: #{cnn_forward.4} parent=0 // pred_check_branch
    %11 = sbr.rel (0) target = $region9
  $region8: #{cnn_forward.4} parent=0 // pred_region
    _
  $region9: #{cnn_forward.4} parent=0 // pred_fallthru
    _
  // Predicated region
  $region10: #{cnn_forward.4} parent=0 // pred_check
    _
  $region11: #{cnn_forward.4} parent=0 // pred_check_branch
    %13 = sbr.rel (0) target = $region13
  $region12: #{cnn_forward.4} parent=0 // pred_region
    _
  $region13: #{cnn_forward.4} parent=0 // pred_fallthru
    _
  %v14 = vld [vmem:[%s1] sm:$0xff]
  %v15 = vld [vmem:[%s1 + $0x8] sm:$0xff]
  %v16 = vld [vmem:[%s1 + $0x10] sm:$0xff]
  %v17 = vld [vmem:[%s1 + $0x18] sm:$0xff]
  %v18 = vld [vmem:[%s1 + $0x20] sm:$0xff]
  %v19 = vld [vmem:[%s1 + $0x28] sm:$0xff]
  %v20 = vld [vmem:[%s1 + $0x30] sm:$0xff]
  %v21 = vld [vmem:[%s1 + $0x38] sm:$0xff]
  %v22 = vld [vmem:[%s1 + $0x40] sm:$0xff]
  %v23 = vld [vmem:[%s1 + $0x48] sm:$0xff]
  %v24 = vld [vmem:[%s1 + $0x50] sm:$0xff]
  %v25 = vld [vmem:[%s1 + $0x58] sm:$0xff]
  %v26 = vld [vmem:[%s1 + $0x60] sm:$0xff]
  %v27 = vld [vmem:[%s1 + $0x68] sm:$0xff]
  %v28 = vld [vmem:[%s1 + $0x70] sm:$0xff]
  %v29 = vld [vmem:[%s1 + $0x78] sm:$0xff]
  %v30 = vld [vmem:[%s1 + $0x80] sm:$0xff]
  %v31 = vld [vmem:[%s1 + $0x88] sm:$0xff]
  %v32 = vld [vmem:[%s1 + $0x90] sm:$0xff]
  %v33 = vld [vmem:[%s1 + $0x98] sm:$0xff]
  %v34 = vld [vmem:[%s1 + $0xa0] sm:$0xff]
  %v35 = vld [vmem:[%s1 + $0xa8] sm:$0xff]
  %v36 = vld [vmem:[%s1 + $0xb0] sm:$0xff]
  %v37 = vld [vmem:[%s1 + $0xb8] sm:$0xff]
  %v38 = vld [vmem:[%s1 + $0xc0] sm:$0xff]
  %v39 = vld [vmem:[%s1 + $0xc8] sm:$0xff]
  %v40 = vld [vmem:[%s1 + $0xd0] sm:$0xff]
  %v41 = vld [vmem:[%s1 + $0xd8] sm:$0xff]
  %v42 = vld [vmem:[%s1 + $0xe0] sm:$0xff]
  %v43 = vld [vmem:[%s1 + $0xe8] sm:$0xff]
  %v44 = vld [vmem:[%s1 + $0xf0] sm:$0xff]
  %v45 = vld [vmem:[%s1 + $0xf8] sm:$0xff]
  %v46 = vld [vmem:[%s1 + $0x100] sm:$0xff]
  %v47 = vld [vmem:[%s1 + $0x108] sm:$0xff]
  %v48 = vld [vmem:[%s1 + $0x110] sm:$0xff]
  %v49 = vld [vmem:[%s1 + $0x118] sm:$0xff]
  %v50 = vld [vmem:[%s1 + $0x120] sm:$0xff]
  %v51 = vld [vmem:[%s1 + $0x128] sm:$0xff]
  %v52 = vld [vmem:[%s1 + $0x130] sm:$0xff]
  %v53 = vld [vmem:[%s1 + $0x138] sm:$0xff]
  %v54 = vld [vmem:[%s1 + $0x140] sm:$0xff]
  %v55 = vld [vmem:[%s1 + $0x148] sm:$0xff]
  %v56 = vld [vmem:[%s1 + $0x150] sm:$0xff]
  %v57 = vld [vmem:[%s1 + $0x158] sm:$0xff]
  %v58 = vld [vmem:[%s1 + $0x160] sm:$0xff]
  %v59 = vld [vmem:[%s1 + $0x168] sm:$0xff]
  %v60 = vld [vmem:[%s1 + $0x170] sm:$0xff]
  %v61 = vld [vmem:[%s1 + $0x178] sm:$0xff]
  %v62 = vld [vmem:[%s1 + $0x180] sm:$0xff]
  %v63 = vld [vmem:[%s1 + $0x188] sm:$0xff]
  %v64 = vld [vmem:[%s1 + $0x190] sm:$0xff]
  %v65 = vld [vmem:[%s1 + $0x198] sm:$0xff]
  %v66 = vld [vmem:[%s1 + $0x1a0] sm:$0xff]
  %v67 = vld [vmem:[%s1 + $0x1a8] sm:$0xff]
  %v68 = vld [vmem:[%s2] sm:$0x1]
  %v69 = vld [vmem:[%s0] sm:$0xff]
  %v70 = vld [vmem:[%s0 + $0x8] sm:$0xff]
  %v71 = vld [vmem:[%s0 + $0x10] sm:$0xff]
  %v72 = vld [vmem:[%s0 + $0x18] sm:$0xff]
  %v73 = vld [vmem:[%s0 + $0x20] sm:$0xff]
  %v74 = vld [vmem:[%s0 + $0x28] sm:$0xff]
  %v75 = vld [vmem:[%s0 + $0x30] sm:$0xff]
  %v76 = vld [vmem:[%s0 + $0x38] sm:$0xff]
  %v78 = vlaneseq
  %v79 = vshrl.u32 %v78, 7
  %v80 = vsub.s32 0, %v79
  %v81 = vrot.slane %v68, %v80
  %vm83 = vcmask 392192
  %v85 = vsel %vm83, %v72, 0
  %v88 = vsel %vm83, %v76, 0
  %90 = vmatprep.subr.mxu0 0.0
  %91 = vmatpush1.msra.mxu0 %v14
  %92 = vmatprep.subr.mxu0 0.0
  %93 = vmatpush1.msra.mxu0 %v15
  %94 = vmatprep.subr.mxu0 0.0
  %95 = vmatpush1.msra.mxu0 %v16
  %96 = vmatprep.subr.mxu0 0.0
  %97 = vmatpush1.msra.mxu0 %v17
  %98 = vmatprep.subr.mxu0 0.0
  %99 = vmatpush1.msra.mxu0 %v18
  %100 = vmatprep.subr.mxu0 0.0
  %101 = vmatpush1.msra.mxu0 %v19
  %102 = vmatprep.subr.mxu0 0.0
  %103 = vmatpush1.msra.mxu0 %v20
  %104 = vmatprep.subr.mxu0 0.0
  %105 = vmatpush1.msra.mxu0 %v21
  %106 = vmatprep.subr.mxu0 0.0
  %107 = vmatpush1.msra.mxu0 %v22
  %108 = vmatprep.subr.mxu0 0.0
  %109 = vmatpush1.msra.mxu0 %v23
  %110 = vmatprep.subr.mxu0 0.0
  %111 = vmatpush1.msra.mxu0 %v24
  %112 = vmatprep.subr.mxu0 0.0
  %113 = vmatpush1.msra.mxu0 %v25
  %114 = vmatprep.subr.mxu0 0.0
  %115 = vmatpush1.msra.mxu0 %v26
  %116 = vmatprep.subr.mxu0 0.0
  %117 = vmatpush1.msra.mxu0 %v27
  %118 = vmatprep.subr.mxu0 0.0
  %119 = vmatpush1.msra.mxu0 %v28
  %120 = vmatprep.subr.mxu0 0.0
  %121 = vmatpush1.msra.mxu0 %v29
  %122 = vmatprep.subr.mxu0 0.0
  %123 = vmatpush1.msra.mxu0 %v30
  %124 = vmatprep.subr.mxu0 0.0
  %125 = vmatpush1.msra.mxu0 %v31
  %126 = vmatprep.subr.mxu0 0.0
  %127 = vmatpush1.msra.mxu0 %v32
  %128 = vmatprep.subr.mxu0 0.0
  %129 = vmatpush1.msra.mxu0 %v33
  %130 = vmatprep.subr.mxu0 0.0
  %131 = vmatpush1.msra.mxu0 %v34
  %132 = vmatprep.subr.mxu0 0.0
  %133 = vmatpush1.msra.mxu0 %v35
  %134 = vmatprep.subr.mxu0 0.0
  %135 = vmatpush1.msra.mxu0 %v36
  %136 = vmatprep.subr.mxu0 0.0
  %137 = vmatpush1.msra.mxu0 %v37
  %138 = vmatprep.subr.mxu0 0.0
  %139 = vmatpush1.msra.mxu0 %v38
  %140 = vmatprep.subr.mxu0 0.0
  %141 = vmatpush1.msra.mxu0 %v39
  %142 = vmatprep.subr.mxu0 0.0
  %143 = vmatpush1.msra.mxu0 %v40
  %144 = vmatprep.subr.mxu0 0.0
  %145 = vmatpush1.msra.mxu0 %v41
  %146 = vmatprep.subr.mxu0 0.0
  %147 = vmatpush1.msra.mxu0 %v42
  %148 = vmatprep.subr.mxu0 0.0
  %149 = vmatpush1.msra.mxu0 %v43
  %150 = vmatprep.subr.mxu0 0.0
  %151 = vmatpush1.msra.mxu0 %v44
  %152 = vmatprep.subr.mxu0 0.0
  %153 = vmatpush1.msra.mxu0 %v45
  %154 = vmatprep.mubr.f32.mxu0 %v70
  %155 = vmatmul.mubr.f32.gmra.mrb[0].mxu0 %v69
  %v156 = vpop.f32.mrb[0].mxu0
  %v157 = vadd.f32 %v81, %v156
  %v158 = vpop.f32.mrb[0].mxu0
  %159 = vmatprep.mubr.f32.mxu0 %v74
  %160 = vmatmul.mubr.f32.gmra.mrb[0].mxu0 %v73
  %v161 = vpop.f32.mrb[0].mxu0
  %v162 = vadd.f32 %v81, %v161
  %v163 = vpop.f32.mrb[0].mxu0
  %164 = vdwg.mxu0
  %165 = vmatprep.subr.mxu0 0.0
  %166 = vmatpush1.msra.mxu0 %v46
  %167 = vmatprep.subr.mxu0 0.0
  %168 = vmatpush1.msra.mxu0 %v47
  %169 = vmatprep.subr.mxu0 0.0
  %170 = vmatpush1.msra.mxu0 %v48
  %171 = vmatprep.subr.mxu0 0.0
  %172 = vmatpush1.msra.mxu0 %v49
  %173 = vmatprep.subr.mxu0 0.0
  %174 = vmatpush1.msra.mxu0 %v50
  %175 = vmatprep.subr.mxu0 0.0
  %176 = vmatpush1.msra.mxu0 %v51
  %177 = vmatprep.subr.mxu0 0.0
  %178 = vmatpush1.msra.mxu0 %v52
  %179 = vmatprep.subr.mxu0 0.0
  %180 = vmatpush1.msra.mxu0 %v53
  %181 = vmatprep.subr.mxu0 0.0
  %182 = vmatpush1.msra.mxu0 %v54
  %183 = vmatprep.subr.mxu0 0.0
  %184 = vmatpush1.msra.mxu0 %v55
  %185 = vmatprep.subr.mxu0 0.0
  %186 = vmatpush1.msra.mxu0 %v56
  %187 = vmatprep.subr.mxu0 0.0
  %188 = vmatpush1.msra.mxu0 %v57
  %189 = vmatprep.subr.mxu0 0.0
  %190 = vmatpush1.msra.mxu0 %v58
  %191 = vmatprep.subr.mxu0 0.0
  %192 = vmatpush1.msra.mxu0 %v59
  %193 = vmatprep.subr.mxu0 0.0
  %194 = vmatpush1.msra.mxu0 %v60
  %195 = vmatprep.subr.mxu0 0.0
  %196 = vmatpush1.msra.mxu0 %v61
  %197 = vmatprep.subr.mxu0 0.0
  %198 = vmatpush1.msra.mxu0 %v62
  %199 = vmatprep.subr.mxu0 0.0
  %200 = vmatpush1.msra.mxu0 %v63
  %201 = vmatprep.subr.mxu0 0.0
  %202 = vmatpush1.msra.mxu0 %v64
  %203 = vmatprep.subr.mxu0 0.0
  %204 = vmatpush1.msra.mxu0 %v65
  %205 = vmatprep.subr.mxu0 0.0
  %206 = vmatpush1.msra.mxu0 %v66
  %207 = vmatprep.subr.mxu0 0.0
  %208 = vmatpush1.msra.mxu0 %v67
  %209 = vmatprep.subr.mxu0 0.0
  %210 = vmatpush1.msra.mxu0 0.0
  %211 = vmatprep.subr.mxu0 0.0
  %212 = vmatpush1.msra.mxu0 0.0
  %213 = vmatprep.subr.mxu0 0.0
  %214 = vmatpush1.msra.mxu0 0.0
  %215 = vmatprep.subr.mxu0 0.0
  %216 = vmatpush1.msra.mxu0 0.0
  %217 = vmatprep.subr.mxu0 0.0
  %218 = vmatpush1.msra.mxu0 0.0
  %219 = vmatprep.subr.mxu0 0.0
  %220 = vmatpush1.msra.mxu0 0.0
  %221 = vmatprep.subr.mxu0 0.0
  %222 = vmatpush1.msra.mxu0 0.0
  %223 = vmatprep.subr.mxu0 0.0
  %224 = vmatpush1.msra.mxu0 0.0
  %225 = vmatprep.subr.mxu0 0.0
  %226 = vmatpush1.msra.mxu0 0.0
  %227 = vmatprep.subr.mxu0 0.0
  %228 = vmatpush1.msra.mxu0 0.0
  %229 = vmatprep.mubr.f32.mxu0 %v85
  %230 = vmatmul.mubr.f32.gmra.mrb[0].mxu0 %v71
  %v231 = vpop.f32.mrb[0].mxu0
  %v232 = vadd.f32 %v157, %v231
  %v233 = vpop.f32.mrb[0].mxu0
  %234 = vmatprep.mubr.f32.mxu0 %v88
  %235 = vmatmul.mubr.f32.gmra.mrb[0].mxu0 %v75
  %v236 = vpop.f32.mrb[0].mxu0
  %v237 = vadd.f32 %v162, %v236
  %v238 = vpop.f32.mrb[0].mxu0
  %239 = vdwg.mxu0
  %vm240 = vcmp.ge.f32.partialorder %v232, 0.0
  %vm241 = vcmp.ge.f32.partialorder %v237, 0.0
  %v242 = vmul.f32 %v232, 0.01
  %v243 = vmul.f32 %v237, 0.01
  %v244 = vsel %vm240, %v232, %v242
  %v245 = vsel %vm241, %v237, %v243
  %s246 = scalar_lea.vmem %s0, 64
  %v247 = vld [vmem:[%s246] sm:$0xff]
  %v248 = vld [vmem:[%s246 + $0x8] sm:$0xff]
  %v249 = vld [vmem:[%s246 + $0x10] sm:$0xff]
  %v250 = vld [vmem:[%s246 + $0x18] sm:$0xff]
  %v251 = vld [vmem:[%s246 + $0x20] sm:$0xff]
  %v252 = vld [vmem:[%s246 + $0x28] sm:$0xff]
  %v253 = vld [vmem:[%s246 + $0x30] sm:$0xff]
  %v254 = vld [vmem:[%s246 + $0x38] sm:$0xff]
  %v256 = vsel %vm83, %v250, 0
  %v259 = vsel %vm83, %v254, 0
  %261 = vmatprep.subr.mxu0 0.0
  %262 = vmatpush1.msra.mxu0 %v14
  %263 = vmatprep.subr.mxu0 0.0
  %264 = vmatpush1.msra.mxu0 %v15
  %265 = vmatprep.subr.mxu0 0.0
  %266 = vmatpush1.msra.mxu0 %v16
  %267 = vmatprep.subr.mxu0 0.0
  %268 = vmatpush1.msra.mxu0 %v17
  %269 = vmatprep.subr.mxu0 0.0
  %270 = vmatpush1.msra.mxu0 %v18
  %271 = vmatprep.subr.mxu0 0.0
  %272 = vmatpush1.msra.mxu0 %v19
  %273 = vmatprep.subr.mxu0 0.0
  %274 = vmatpush1.msra.mxu0 %v20
  %275 = vmatprep.subr.mxu0 0.0
  %276 = vmatpush1.msra.mxu0 %v21
  %277 = vmatprep.subr.mxu0 0.0
  %278 = vmatpush1.msra.mxu0 %v22
  %279 = vmatprep.subr.mxu0 0.0
  %280 = vmatpush1.msra.mxu0 %v23
  %281 = vmatprep.subr.mxu0 0.0
  %282 = vmatpush1.msra.mxu0 %v24
  %283 = vmatprep.subr.mxu0 0.0
  %284 = vmatpush1.msra.mxu0 %v25
  %285 = vmatprep.subr.mxu0 0.0
  %286 = vmatpush1.msra.mxu0 %v26
  %287 = vmatprep.subr.mxu0 0.0
  %288 = vmatpush1.msra.mxu0 %v27
  %289 = vmatprep.subr.mxu0 0.0
  %290 = vmatpush1.msra.mxu0 %v28
  %291 = vmatprep.subr.mxu0 0.0
  %292 = vmatpush1.msra.mxu0 %v29
  %293 = vmatprep.subr.mxu0 0.0
  %294 = vmatpush1.msra.mxu0 %v30
  %295 = vmatprep.subr.mxu0 0.0
  %296 = vmatpush1.msra.mxu0 %v31
  %297 = vmatprep.subr.mxu0 0.0
  %298 = vmatpush1.msra.mxu0 %v32
  %299 = vmatprep.subr.mxu0 0.0
  %300 = vmatpush1.msra.mxu0 %v33
  %301 = vmatprep.subr.mxu0 0.0
  %302 = vmatpush1.msra.mxu0 %v34
  %303 = vmatprep.subr.mxu0 0.0
  %304 = vmatpush1.msra.mxu0 %v35
  %305 = vmatprep.subr.mxu0 0.0
  %306 = vmatpush1.msra.mxu0 %v36
  %307 = vmatprep.subr.mxu0 0.0
  %308 = vmatpush1.msra.mxu0 %v37
  %309 = vmatprep.subr.mxu0 0.0
  %310 = vmatpush1.msra.mxu0 %v38
  %311 = vmatprep.subr.mxu0 0.0
  %312 = vmatpush1.msra.mxu0 %v39
  %313 = vmatprep.subr.mxu0 0.0
  %314 = vmatpush1.msra.mxu0 %v40
  %315 = vmatprep.subr.mxu0 0.0
  %316 = vmatpush1.msra.mxu0 %v41
  %317 = vmatprep.subr.mxu0 0.0
  %318 = vmatpush1.msra.mxu0 %v42
  %319 = vmatprep.subr.mxu0 0.0
  %320 = vmatpush1.msra.mxu0 %v43
  %321 = vmatprep.subr.mxu0 0.0
  %322 = vmatpush1.msra.mxu0 %v44
  %323 = vmatprep.subr.mxu0 0.0
  %324 = vmatpush1.msra.mxu0 %v45
  %325 = vmatprep.mubr.f32.mxu0 %v248
  %326 = vmatmul.mubr.f32.gmra.mrb[0].mxu0 %v247
  %v327 = vpop.f32.mrb[0].mxu0
  %v328 = vadd.f32 %v81, %v327
  %v329 = vpop.f32.mrb[0].mxu0
  %330 = vmatprep.mubr.f32.mxu0 %v252
  %331 = vmatmul.mubr.f32.gmra.mrb[0].mxu0 %v251
  %v332 = vpop.f32.mrb[0].mxu0
  %v333 = vadd.f32 %v81, %v332
  %v334 = vpop.f32.mrb[0].mxu0
  %335 = vdwg.mxu0
  %336 = vmatprep.subr.mxu0 0.0
  %337 = vmatpush1.msra.mxu0 %v46
  %338 = vmatprep.subr.mxu0 0.0
  %339 = vmatpush1.msra.mxu0 %v47
  %340 = vmatprep.subr.mxu0 0.0
  %341 = vmatpush1.msra.mxu0 %v48
  %342 = vmatprep.subr.mxu0 0.0
  %343 = vmatpush1.msra.mxu0 %v49
  %344 = vmatprep.subr.mxu0 0.0
  %345 = vmatpush1.msra.mxu0 %v50
  %346 = vmatprep.subr.mxu0 0.0
  %347 = vmatpush1.msra.mxu0 %v51
  %348 = vmatprep.subr.mxu0 0.0
  %349 = vmatpush1.msra.mxu0 %v52
  %350 = vmatprep.subr.mxu0 0.0
  %351 = vmatpush1.msra.mxu0 %v53
  %352 = vmatprep.subr.mxu0 0.0
  %353 = vmatpush1.msra.mxu0 %v54
  %354 = vmatprep.subr.mxu0 0.0
  %355 = vmatpush1.msra.mxu0 %v55
  %356 = vmatprep.subr.mxu0 0.0
  %357 = vmatpush1.msra.mxu0 %v56
  %358 = vmatprep.subr.mxu0 0.0
  %359 = vmatpush1.msra.mxu0 %v57
  %360 = vmatprep.subr.mxu0 0.0
  %361 = vmatpush1.msra.mxu0 %v58
  %362 = vmatprep.subr.mxu0 0.0
  %363 = vmatpush1.msra.mxu0 %v59
  %364 = vmatprep.subr.mxu0 0.0
  %365 = vmatpush1.msra.mxu0 %v60
  %366 = vmatprep.subr.mxu0 0.0
  %367 = vmatpush1.msra.mxu0 %v61
  %368 = vmatprep.subr.mxu0 0.0
  %369 = vmatpush1.msra.mxu0 %v62
  %370 = vmatprep.subr.mxu0 0.0
  %371 = vmatpush1.msra.mxu0 %v63
  %372 = vmatprep.subr.mxu0 0.0
  %373 = vmatpush1.msra.mxu0 %v64
  %374 = vmatprep.subr.mxu0 0.0
  %375 = vmatpush1.msra.mxu0 %v65
  %376 = vmatprep.subr.mxu0 0.0
  %377 = vmatpush1.msra.mxu0 %v66
  %378 = vmatprep.subr.mxu0 0.0
  %379 = vmatpush1.msra.mxu0 %v67
  %380 = vmatprep.subr.mxu0 0.0
  %381 = vmatpush1.msra.mxu0 0.0
  %382 = vmatprep.subr.mxu0 0.0
  %383 = vmatpush1.msra.mxu0 0.0
  %384 = vmatprep.subr.mxu0 0.0
  %385 = vmatpush1.msra.mxu0 0.0
  %386 = vmatprep.subr.mxu0 0.0
  %387 = vmatpush1.msra.mxu0 0.0
  %388 = vmatprep.subr.mxu0 0.0
  %389 = vmatpush1.msra.mxu0 0.0
  %390 = vmatprep.subr.mxu0 0.0
  %391 = vmatpush1.msra.mxu0 0.0
  %392 = vmatprep.subr.mxu0 0.0
  %393 = vmatpush1.msra.mxu0 0.0
  %394 = vmatprep.subr.mxu0 0.0
  %395 = vmatpush1.msra.mxu0 0.0
  %396 = vmatprep.subr.mxu0 0.0
  %397 = vmatpush1.msra.mxu0 0.0
  %398 = vmatprep.subr.mxu0 0.0
  %399 = vmatpush1.msra.mxu0 0.0
  %400 = vmatprep.mubr.f32.mxu0 %v256
  %401 = vmatmul.mubr.f32.gmra.mrb[0].mxu0 %v249
  %v402 = vpop.f32.mrb[0].mxu0
  %v403 = vadd.f32 %v328, %v402
  %v404 = vpop.f32.mrb[0].mxu0
  %405 = vmatprep.mubr.f32.mxu0 %v259
  %406 = vmatmul.mubr.f32.gmra.mrb[0].mxu0 %v253
  %v407 = vpop.f32.mrb[0].mxu0
  %v408 = vadd.f32 %v333, %v407
  %v409 = vpop.f32.mrb[0].mxu0
  %410 = vdwg.mxu0
  %vm411 = vcmp.ge.f32.partialorder %v403, 0.0
  %vm412 = vcmp.ge.f32.partialorder %v408, 0.0
  %v413 = vmul.f32 %v403, 0.01
  %v414 = vmul.f32 %v408, 0.01
  %v415 = vsel %vm411, %v403, %v413
  %v416 = vsel %vm412, %v408, %v414
  %v417 = vmax.f32 %v244, %v415
  %v418 = vmax.f32 %v245, %v416
  %s419 = scalar_lea.vmem %s0, 128
  %v420 = vld [vmem:[%s419] sm:$0xff]
  %v421 = vld [vmem:[%s419 + $0x8] sm:$0xff]
  %v422 = vld [vmem:[%s419 + $0x10] sm:$0xff]
  %v423 = vld [vmem:[%s419 + $0x18] sm:$0xff]
  %v424 = vld [vmem:[%s419 + $0x20] sm:$0xff]
  %v425 = vld [vmem:[%s419 + $0x28] sm:$0xff]
  %v426 = vld [vmem:[%s419 + $0x30] sm:$0xff]
  %v427 = vld [vmem:[%s419 + $0x38] sm:$0xff]
  %v429 = vsel %vm83, %v423, 0
  %v432 = vsel %vm83, %v427, 0
  %434 = vmatprep.subr.mxu0 0.0
  %435 = vmatpush1.msra.mxu0 %v14
  %436 = vmatprep.subr.mxu0 0.0
  %437 = vmatpush1.msra.mxu0 %v15
  %438 = vmatprep.subr.mxu0 0.0
  %439 = vmatpush1.msra.mxu0 %v16
  %440 = vmatprep.subr.mxu0 0.0
  %441 = vmatpush1.msra.mxu0 %v17
  %442 = vmatprep.subr.mxu0 0.0
  %443 = vmatpush1.msra.mxu0 %v18
  %444 = vmatprep.subr.mxu0 0.0
  %445 = vmatpush1.msra.mxu0 %v19
  %446 = vmatprep.subr.mxu0 0.0
  %447 = vmatpush1.msra.mxu0 %v20
  %448 = vmatprep.subr.mxu0 0.0
  %449 = vmatpush1.msra.mxu0 %v21
  %450 = vmatprep.subr.mxu0 0.0
  %451 = vmatpush1.msra.mxu0 %v22
  %452 = vmatprep.subr.mxu0 0.0
  %453 = vmatpush1.msra.mxu0 %v23
  %454 = vmatprep.subr.mxu0 0.0
  %455 = vmatpush1.msra.mxu0 %v24
  %456 = vmatprep.subr.mxu0 0.0
  %457 = vmatpush1.msra.mxu0 %v25
  %458 = vmatprep.subr.mxu0 0.0
  %459 = vmatpush1.msra.mxu0 %v26
  %460 = vmatprep.subr.mxu0 0.0
  %461 = vmatpush1.msra.mxu0 %v27
  %462 = vmatprep.subr.mxu0 0.0
  %463 = vmatpush1.msra.mxu0 %v28
  %464 = vmatprep.subr.mxu0 0.0
  %465 = vmatpush1.msra.mxu0 %v29
  %466 = vmatprep.subr.mxu0 0.0
  %467 = vmatpush1.msra.mxu0 %v30
  %468 = vmatprep.subr.mxu0 0.0
  %469 = vmatpush1.msra.mxu0 %v31
  %470 = vmatprep.subr.mxu0 0.0
  %471 = vmatpush1.msra.mxu0 %v32
  %472 = vmatprep.subr.mxu0 0.0
  %473 = vmatpush1.msra.mxu0 %v33
  %474 = vmatprep.subr.mxu0 0.0
  %475 = vmatpush1.msra.mxu0 %v34
  %476 = vmatprep.subr.mxu0 0.0
  %477 = vmatpush1.msra.mxu0 %v35
  %478 = vmatprep.subr.mxu0 0.0
  %479 = vmatpush1.msra.mxu0 %v36
  %480 = vmatprep.subr.mxu0 0.0
  %481 = vmatpush1.msra.mxu0 %v37
  %482 = vmatprep.subr.mxu0 0.0
  %483 = vmatpush1.msra.mxu0 %v38
  %484 = vmatprep.subr.mxu0 0.0
  %485 = vmatpush1.msra.mxu0 %v39
  %486 = vmatprep.subr.mxu0 0.0
  %487 = vmatpush1.msra.mxu0 %v40
  %488 = vmatprep.subr.mxu0 0.0
  %489 = vmatpush1.msra.mxu0 %v41
  %490 = vmatprep.subr.mxu0 0.0
  %491 = vmatpush1.msra.mxu0 %v42
  %492 = vmatprep.subr.mxu0 0.0
  %493 = vmatpush1.msra.mxu0 %v43
  %494 = vmatprep.subr.mxu0 0.0
  %495 = vmatpush1.msra.mxu0 %v44
  %496 = vmatprep.subr.mxu0 0.0
  %497 = vmatpush1.msra.mxu0 %v45
  %498 = vmatprep.mubr.f32.mxu0 %v421
  %499 = vmatmul.mubr.f32.gmra.mrb[0].mxu0 %v420
  %v500 = vpop.f32.mrb[0].mxu0
  %v501 = vadd.f32 %v81, %v500
  %v502 = vpop.f32.mrb[0].mxu0
  %503 = vmatprep.mubr.f32.mxu0 %v425
  %504 = vmatmul.mubr.f32.gmra.mrb[0].mxu0 %v424
  %v505 = vpop.f32.mrb[0].mxu0
  %v506 = vadd.f32 %v81, %v505
  %v507 = vpop.f32.mrb[0].mxu0
  %508 = vdwg.mxu0
  %509 = vmatprep.subr.mxu0 0.0
  %510 = vmatpush1.msra.mxu0 %v46
  %511 = vmatprep.subr.mxu0 0.0
  %512 = vmatpush1.msra.mxu0 %v47
  %513 = vmatprep.subr.mxu0 0.0
  %514 = vmatpush1.msra.mxu0 %v48
  %515 = vmatprep.subr.mxu0 0.0
  %516 = vmatpush1.msra.mxu0 %v49
  %517 = vmatprep.subr.mxu0 0.0
  %518 = vmatpush1.msra.mxu0 %v50
  %519 = vmatprep.subr.mxu0 0.0
  %520 = vmatpush1.msra.mxu0 %v51
  %521 = vmatprep.subr.mxu0 0.0
  %522 = vmatpush1.msra.mxu0 %v52
  %523 = vmatprep.subr.mxu0 0.0
  %524 = vmatpush1.msra.mxu0 %v53
  %525 = vmatprep.subr.mxu0 0.0
  %526 = vmatpush1.msra.mxu0 %v54
  %527 = vmatprep.subr.mxu0 0.0
  %528 = vmatpush1.msra.mxu0 %v55
  %529 = vmatprep.subr.mxu0 0.0
  %530 = vmatpush1.msra.mxu0 %v56
  %531 = vmatprep.subr.mxu0 0.0
  %532 = vmatpush1.msra.mxu0 %v57
  %533 = vmatprep.subr.mxu0 0.0
  %534 = vmatpush1.msra.mxu0 %v58
  %535 = vmatprep.subr.mxu0 0.0
  %536 = vmatpush1.msra.mxu0 %v59
  %537 = vmatprep.subr.mxu0 0.0
  %538 = vmatpush1.msra.mxu0 %v60
  %539 = vmatprep.subr.mxu0 0.0
  %540 = vmatpush1.msra.mxu0 %v61
  %541 = vmatprep.subr.mxu0 0.0
  %542 = vmatpush1.msra.mxu0 %v62
  %543 = vmatprep.subr.mxu0 0.0
  %544 = vmatpush1.msra.mxu0 %v63
  %545 = vmatprep.subr.mxu0 0.0
  %546 = vmatpush1.msra.mxu0 %v64
  %547 = vmatprep.subr.mxu0 0.0
  %548 = vmatpush1.msra.mxu0 %v65
  %549 = vmatprep.subr.mxu0 0.0
  %550 = vmatpush1.msra.mxu0 %v66
  %551 = vmatprep.subr.mxu0 0.0
  %552 = vmatpush1.msra.mxu0 %v67
  %553 = vmatprep.subr.mxu0 0.0
  %554 = vmatpush1.msra.mxu0 0.0
  %555 = vmatprep.subr.mxu0 0.0
  %556 = vmatpush1.msra.mxu0 0.0
  %557 = vmatprep.subr.mxu0 0.0
  %558 = vmatpush1.msra.mxu0 0.0
  %559 = vmatprep.subr.mxu0 0.0
  %560 = vmatpush1.msra.mxu0 0.0
  %561 = vmatprep.subr.mxu0 0.0
  %562 = vmatpush1.msra.mxu0 0.0
  %563 = vmatprep.subr.mxu0 0.0
  %564 = vmatpush1.msra.mxu0 0.0
  %565 = vmatprep.subr.mxu0 0.0
  %566 = vmatpush1.msra.mxu0 0.0
  %567 = vmatprep.subr.mxu0 0.0
  %568 = vmatpush1.msra.mxu0 0.0
  %569 = vmatprep.subr.mxu0 0.0
  %570 = vmatpush1.msra.mxu0 0.0
  %571 = vmatprep.subr.mxu0 0.0
  %572 = vmatpush1.msra.mxu0 0.0
  %573 = vmatprep.mubr.f32.mxu0 %v429
  %574 = vmatmul.mubr.f32.gmra.mrb[0].mxu0 %v422
  %v575 = vpop.f32.mrb[0].mxu0
  %v576 = vadd.f32 %v501, %v575
  %v577 = vpop.f32.mrb[0].mxu0
  %578 = vmatprep.mubr.f32.mxu0 %v432
  %579 = vmatmul.mubr.f32.gmra.mrb[0].mxu0 %v426
  %v580 = vpop.f32.mrb[0].mxu0
  %v581 = vadd.f32 %v506, %v580
  %v582 = vpop.f32.mrb[0].mxu0
  %583 = vdwg.mxu0
  %vm584 = vcmp.ge.f32.partialorder %v576, 0.0
  %vm585 = vcmp.ge.f32.partialorder %v581, 0.0
  %v586 = vmul.f32 %v576, 0.01
  %v587 = vmul.f32 %v581, 0.01
  %v588 = vsel %vm584, %v576, %v586
  %v589 = vsel %vm585, %v581, %v587
  %v590 = vmax.f32 %v417, %v588
  %v591 = vmax.f32 %v418, %v589
  %s592 = scalar_lea.vmem %s0, 192
  %v593 = vld [vmem:[%s592] sm:$0xff]
  %v594 = vld [vmem:[%s592 + $0x8] sm:$0xff]
  %v595 = vld [vmem:[%s592 + $0x10] sm:$0xff]
  %v596 = vld [vmem:[%s592 + $0x18] sm:$0xff]
  %v597 = vld [vmem:[%s592 + $0x20] sm:$0xff]
  %v598 = vld [vmem:[%s592 + $0x28] sm:$0xff]
  %v599 = vld [vmem:[%s592 + $0x30] sm:$0xff]
  %v600 = vld [vmem:[%s592 + $0x38] sm:$0xff]
  %v602 = vsel %vm83, %v596, 0
  %v605 = vsel %vm83, %v600, 0
  %607 = vmatprep.subr.mxu0 0.0
  %608 = vmatpush1.msra.mxu0 %v14
  %609 = vmatprep.subr.mxu0 0.0
  %610 = vmatpush1.msra.mxu0 %v15
  %611 = vmatprep.subr.mxu0 0.0
  %612 = vmatpush1.msra.mxu0 %v16
  %613 = vmatprep.subr.mxu0 0.0
  %614 = vmatpush1.msra.mxu0 %v17
  %615 = vmatprep.subr.mxu0 0.0
  %616 = vmatpush1.msra.mxu0 %v18
  %617 = vmatprep.subr.mxu0 0.0
  %618 = vmatpush1.msra.mxu0 %v19
  %619 = vmatprep.subr.mxu0 0.0
  %620 = vmatpush1.msra.mxu0 %v20
  %621 = vmatprep.subr.mxu0 0.0
  %622 = vmatpush1.msra.mxu0 %v21
  %623 = vmatprep.subr.mxu0 0.0
  %624 = vmatpush1.msra.mxu0 %v22
  %625 = vmatprep.subr.mxu0 0.0
  %626 = vmatpush1.msra.mxu0 %v23
  %627 = vmatprep.subr.mxu0 0.0
  %628 = vmatpush1.msra.mxu0 %v24
  %629 = vmatprep.subr.mxu0 0.0
  %630 = vmatpush1.msra.mxu0 %v25
  %631 = vmatprep.subr.mxu0 0.0
  %632 = vmatpush1.msra.mxu0 %v26
  %633 = vmatprep.subr.mxu0 0.0
  %634 = vmatpush1.msra.mxu0 %v27
  %635 = vmatprep.subr.mxu0 0.0
  %636 = vmatpush1.msra.mxu0 %v28
  %637 = vmatprep.subr.mxu0 0.0
  %638 = vmatpush1.msra.mxu0 %v29
  %639 = vmatprep.subr.mxu0 0.0
  %640 = vmatpush1.msra.mxu0 %v30
  %641 = vmatprep.subr.mxu0 0.0
  %642 = vmatpush1.msra.mxu0 %v31
  %643 = vmatprep.subr.mxu0 0.0
  %644 = vmatpush1.msra.mxu0 %v32
  %645 = vmatprep.subr.mxu0 0.0
  %646 = vmatpush1.msra.mxu0 %v33
  %647 = vmatprep.subr.mxu0 0.0
  %648 = vmatpush1.msra.mxu0 %v34
  %649 = vmatprep.subr.mxu0 0.0
  %650 = vmatpush1.msra.mxu0 %v35
  %651 = vmatprep.subr.mxu0 0.0
  %652 = vmatpush1.msra.mxu0 %v36
  %653 = vmatprep.subr.mxu0 0.0
  %654 = vmatpush1.msra.mxu0 %v37
  %655 = vmatprep.subr.mxu0 0.0
  %656 = vmatpush1.msra.mxu0 %v38
  %657 = vmatprep.subr.mxu0 0.0
  %658 = vmatpush1.msra.mxu0 %v39
  %659 = vmatprep.subr.mxu0 0.0
  %660 = vmatpush1.msra.mxu0 %v40
  %661 = vmatprep.subr.mxu0 0.0
  %662 = vmatpush1.msra.mxu0 %v41
  %663 = vmatprep.subr.mxu0 0.0
  %664 = vmatpush1.msra.mxu0 %v42
  %665 = vmatprep.subr.mxu0 0.0
  %666 = vmatpush1.msra.mxu0 %v43
  %667 = vmatprep.subr.mxu0 0.0
  %668 = vmatpush1.msra.mxu0 %v44
  %669 = vmatprep.subr.mxu0 0.0
  %670 = vmatpush1.msra.mxu0 %v45
  %671 = vmatprep.mubr.f32.mxu0 %v594
  %672 = vmatmul.mubr.f32.gmra.mrb[0].mxu0 %v593
  %v673 = vpop.f32.mrb[0].mxu0
  %v674 = vadd.f32 %v81, %v673
  %v675 = vpop.f32.mrb[0].mxu0
  %676 = vmatprep.mubr.f32.mxu0 %v598
  %677 = vmatmul.mubr.f32.gmra.mrb[0].mxu0 %v597
  %v678 = vpop.f32.mrb[0].mxu0
  %v679 = vadd.f32 %v81, %v678
  %v680 = vpop.f32.mrb[0].mxu0
  %681 = vdwg.mxu0
  %682 = vmatprep.subr.mxu0 0.0
  %683 = vmatpush1.msra.mxu0 %v46
  %684 = vmatprep.subr.mxu0 0.0
  %685 = vmatpush1.msra.mxu0 %v47
  %686 = vmatprep.subr.mxu0 0.0
  %687 = vmatpush1.msra.mxu0 %v48
  %688 = vmatprep.subr.mxu0 0.0
  %689 = vmatpush1.msra.mxu0 %v49
  %690 = vmatprep.subr.mxu0 0.0
  %691 = vmatpush1.msra.mxu0 %v50
  %692 = vmatprep.subr.mxu0 0.0
  %693 = vmatpush1.msra.mxu0 %v51
  %694 = vmatprep.subr.mxu0 0.0
  %695 = vmatpush1.msra.mxu0 %v52
  %696 = vmatprep.subr.mxu0 0.0
  %697 = vmatpush1.msra.mxu0 %v53
  %698 = vmatprep.subr.mxu0 0.0
  %699 = vmatpush1.msra.mxu0 %v54
  %700 = vmatprep.subr.mxu0 0.0
  %701 = vmatpush1.msra.mxu0 %v55
  %702 = vmatprep.subr.mxu0 0.0
  %703 = vmatpush1.msra.mxu0 %v56
  %704 = vmatprep.subr.mxu0 0.0
  %705 = vmatpush1.msra.mxu0 %v57
  %706 = vmatprep.subr.mxu0 0.0
  %707 = vmatpush1.msra.mxu0 %v58
  %708 = vmatprep.subr.mxu0 0.0
  %709 = vmatpush1.msra.mxu0 %v59
  %710 = vmatprep.subr.mxu0 0.0
  %711 = vmatpush1.msra.mxu0 %v60
  %712 = vmatprep.subr.mxu0 0.0
  %713 = vmatpush1.msra.mxu0 %v61
  %714 = vmatprep.subr.mxu0 0.0
  %715 = vmatpush1.msra.mxu0 %v62
  %716 = vmatprep.subr.mxu0 0.0
  %717 = vmatpush1.msra.mxu0 %v63
  %718 = vmatprep.subr.mxu0 0.0
  %719 = vmatpush1.msra.mxu0 %v64
  %720 = vmatprep.subr.mxu0 0.0
  %721 = vmatpush1.msra.mxu0 %v65
  %722 = vmatprep.subr.mxu0 0.0
  %723 = vmatpush1.msra.mxu0 %v66
  %724 = vmatprep.subr.mxu0 0.0
  %725 = vmatpush1.msra.mxu0 %v67
  %726 = vmatprep.subr.mxu0 0.0
  %727 = vmatpush1.msra.mxu0 0.0
  %728 = vmatprep.subr.mxu0 0.0
  %729 = vmatpush1.msra.mxu0 0.0
  %730 = vmatprep.subr.mxu0 0.0
  %731 = vmatpush1.msra.mxu0 0.0
  %732 = vmatprep.subr.mxu0 0.0
  %733 = vmatpush1.msra.mxu0 0.0
  %734 = vmatprep.subr.mxu0 0.0
  %735 = vmatpush1.msra.mxu0 0.0
  %736 = vmatprep.subr.mxu0 0.0
  %737 = vmatpush1.msra.mxu0 0.0
  %738 = vmatprep.subr.mxu0 0.0
  %739 = vmatpush1.msra.mxu0 0.0
  %740 = vmatprep.subr.mxu0 0.0
  %741 = vmatpush1.msra.mxu0 0.0
  %742 = vmatprep.subr.mxu0 0.0
  %743 = vmatpush1.msra.mxu0 0.0
  %744 = vmatprep.subr.mxu0 0.0
  %745 = vmatpush1.msra.mxu0 0.0
  %746 = vmatprep.mubr.f32.mxu0 %v602
  %747 = vmatmul.mubr.f32.gmra.mrb[0].mxu0 %v595
  %v748 = vpop.f32.mrb[0].mxu0
  %v749 = vadd.f32 %v674, %v748
  %v750 = vpop.f32.mrb[0].mxu0
  %751 = vmatprep.mubr.f32.mxu0 %v605
  %752 = vmatmul.mubr.f32.gmra.mrb[0].mxu0 %v599
  %v753 = vpop.f32.mrb[0].mxu0
  %v754 = vadd.f32 %v679, %v753
  %v755 = vpop.f32.mrb[0].mxu0
  %756 = vdwg.mxu0
  %vm757 = vcmp.ge.f32.partialorder %v749, 0.0
  %vm758 = vcmp.ge.f32.partialorder %v754, 0.0
  %v759 = vmul.f32 %v749, 0.01
  %v760 = vmul.f32 %v754, 0.01
  %v761 = vsel %vm757, %v749, %v759
  %v762 = vsel %vm758, %v754, %v760
  %v763 = vmax.f32 %v590, %v761
  %v764 = vmax.f32 %v591, %v762
  %s765 = scalar_lea.vmem %s0, 256
  %v766 = vld [vmem:[%s765] sm:$0xff]
  %v767 = vld [vmem:[%s765 + $0x8] sm:$0xff]
  %v768 = vld [vmem:[%s765 + $0x10] sm:$0xff]
  %v769 = vld [vmem:[%s765 + $0x18] sm:$0xff]
  %v770 = vld [vmem:[%s765 + $0x20] sm:$0xff]
  %v771 = vld [vmem:[%s765 + $0x28] sm:$0xff]
  %v772 = vld [vmem:[%s765 + $0x30] sm:$0xff]
  %v773 = vld [vmem:[%s765 + $0x38] sm:$0xff]
  %v775 = vsel %vm83, %v769, 0
  %v778 = vsel %vm83, %v773, 0
  %780 = vmatprep.subr.mxu0 0.0
  %781 = vmatpush1.msra.mxu0 %v14
  %782 = vmatprep.subr.mxu0 0.0
  %783 = vmatpush1.msra.mxu0 %v15
  %784 = vmatprep.subr.mxu0 0.0
  %785 = vmatpush1.msra.mxu0 %v16
  %786 = vmatprep.subr.mxu0 0.0
  %787 = vmatpush1.msra.mxu0 %v17
  %788 = vmatprep.subr.mxu0 0.0
  %789 = vmatpush1.msra.mxu0 %v18
  %790 = vmatprep.subr.mxu0 0.0
  %791 = vmatpush1.msra.mxu0 %v19
  %792 = vmatprep.subr.mxu0 0.0
  %793 = vmatpush1.msra.mxu0 %v20
  %794 = vmatprep.subr.mxu0 0.0
  %795 = vmatpush1.msra.mxu0 %v21
  %796 = vmatprep.subr.mxu0 0.0
  %797 = vmatpush1.msra.mxu0 %v22
  %798 = vmatprep.subr.mxu0 0.0
  %799 = vmatpush1.msra.mxu0 %v23
  %800 = vmatprep.subr.mxu0 0.0
  %801 = vmatpush1.msra.mxu0 %v24
  %802 = vmatprep.subr.mxu0 0.0
  %803 = vmatpush1.msra.mxu0 %v25
  %804 = vmatprep.subr.mxu0 0.0
  %805 = vmatpush1.msra.mxu0 %v26
  %806 = vmatprep.subr.mxu0 0.0
  %807 = vmatpush1.msra.mxu0 %v27
  %808 = vmatprep.subr.mxu0 0.0
  %809 = vmatpush1.msra.mxu0 %v28
  %810 = vmatprep.subr.mxu0 0.0
  %811 = vmatpush1.msra.mxu0 %v29
  %812 = vmatprep.subr.mxu0 0.0
  %813 = vmatpush1.msra.mxu0 %v30
  %814 = vmatprep.subr.mxu0 0.0
  %815 = vmatpush1.msra.mxu0 %v31
  %816 = vmatprep.subr.mxu0 0.0
  %817 = vmatpush1.msra.mxu0 %v32
  %818 = vmatprep.subr.mxu0 0.0
  %819 = vmatpush1.msra.mxu0 %v33
  %820 = vmatprep.subr.mxu0 0.0
  %821 = vmatpush1.msra.mxu0 %v34
  %822 = vmatprep.subr.mxu0 0.0
  %823 = vmatpush1.msra.mxu0 %v35
  %824 = vmatprep.subr.mxu0 0.0
  %825 = vmatpush1.msra.mxu0 %v36
  %826 = vmatprep.subr.mxu0 0.0
  %827 = vmatpush1.msra.mxu0 %v37
  %828 = vmatprep.subr.mxu0 0.0
  %829 = vmatpush1.msra.mxu0 %v38
  %830 = vmatprep.subr.mxu0 0.0
  %831 = vmatpush1.msra.mxu0 %v39
  %832 = vmatprep.subr.mxu0 0.0
  %833 = vmatpush1.msra.mxu0 %v40
  %834 = vmatprep.subr.mxu0 0.0
  %835 = vmatpush1.msra.mxu0 %v41
  %836 = vmatprep.subr.mxu0 0.0
  %837 = vmatpush1.msra.mxu0 %v42
  %838 = vmatprep.subr.mxu0 0.0
  %839 = vmatpush1.msra.mxu0 %v43
  %840 = vmatprep.subr.mxu0 0.0
  %841 = vmatpush1.msra.mxu0 %v44
  %842 = vmatprep.subr.mxu0 0.0
  %843 = vmatpush1.msra.mxu0 %v45
  %844 = vmatprep.mubr.f32.mxu0 %v767
  %845 = vmatmul.mubr.f32.gmra.mrb[0].mxu0 %v766
  %v846 = vpop.f32.mrb[0].mxu0
  %v847 = vadd.f32 %v81, %v846
  %v848 = vpop.f32.mrb[0].mxu0
  %849 = vmatprep.mubr.f32.mxu0 %v771
  %850 = vmatmul.mubr.f32.gmra.mrb[0].mxu0 %v770
  %v851 = vpop.f32.mrb[0].mxu0
  %v852 = vadd.f32 %v81, %v851
  %v853 = vpop.f32.mrb[0].mxu0
  %854 = vdwg.mxu0
  %855 = vmatprep.subr.mxu0 0.0
  %856 = vmatpush1.msra.mxu0 %v46
  %857 = vmatprep.subr.mxu0 0.0
  %858 = vmatpush1.msra.mxu0 %v47
  %859 = vmatprep.subr.mxu0 0.0
  %860 = vmatpush1.msra.mxu0 %v48
  %861 = vmatprep.subr.mxu0 0.0
  %862 = vmatpush1.msra.mxu0 %v49
  %863 = vmatprep.subr.mxu0 0.0
  %864 = vmatpush1.msra.mxu0 %v50
  %865 = vmatprep.subr.mxu0 0.0
  %866 = vmatpush1.msra.mxu0 %v51
  %867 = vmatprep.subr.mxu0 0.0
  %868 = vmatpush1.msra.mxu0 %v52
  %869 = vmatprep.subr.mxu0 0.0
  %870 = vmatpush1.msra.mxu0 %v53
  %871 = vmatprep.subr.mxu0 0.0
  %872 = vmatpush1.msra.mxu0 %v54
  %873 = vmatprep.subr.mxu0 0.0
  %874 = vmatpush1.msra.mxu0 %v55
  %875 = vmatprep.subr.mxu0 0.0
  %876 = vmatpush1.msra.mxu0 %v56
  %877 = vmatprep.subr.mxu0 0.0
  %878 = vmatpush1.msra.mxu0 %v57
  %879 = vmatprep.subr.mxu0 0.0
  %880 = vmatpush1.msra.mxu0 %v58
  %881 = vmatprep.subr.mxu0 0.0
  %882 = vmatpush1.msra.mxu0 %v59
  %883 = vmatprep.subr.mxu0 0.0
  %884 = vmatpush1.msra.mxu0 %v60
  %885 = vmatprep.subr.mxu0 0.0
  %886 = vmatpush1.msra.mxu0 %v61
  %887 = vmatprep.subr.mxu0 0.0
  %888 = vmatpush1.msra.mxu0 %v62
  %889 = vmatprep.subr.mxu0 0.0
  %890 = vmatpush1.msra.mxu0 %v63
  %891 = vmatprep.subr.mxu0 0.0
  %892 = vmatpush1.msra.mxu0 %v64
  %893 = vmatprep.subr.mxu0 0.0
  %894 = vmatpush1.msra.mxu0 %v65
  %895 = vmatprep.subr.mxu0 0.0
  %896 = vmatpush1.msra.mxu0 %v66
  %897 = vmatprep.subr.mxu0 0.0
  %898 = vmatpush1.msra.mxu0 %v67
  %899 = vmatprep.subr.mxu0 0.0
  %900 = vmatpush1.msra.mxu0 0.0
  %901 = vmatprep.subr.mxu0 0.0
  %902 = vmatpush1.msra.mxu0 0.0
  %903 = vmatprep.subr.mxu0 0.0
  %904 = vmatpush1.msra.mxu0 0.0
  %905 = vmatprep.subr.mxu0 0.0
  %906 = vmatpush1.msra.mxu0 0.0
  %907 = vmatprep.subr.mxu0 0.0
  %908 = vmatpush1.msra.mxu0 0.0
  %909 = vmatprep.subr.mxu0 0.0
  %910 = vmatpush1.msra.mxu0 0.0
  %911 = vmatprep.subr.mxu0 0.0
  %912 = vmatpush1.msra.mxu0 0.0
  %913 = vmatprep.subr.mxu0 0.0
  %914 = vmatpush1.msra.mxu0 0.0
  %915 = vmatprep.subr.mxu0 0.0
  %916 = vmatpush1.msra.mxu0 0.0
  %917 = vmatprep.subr.mxu0 0.0
  %918 = vmatpush1.msra.mxu0 0.0
  %919 = vmatprep.mubr.f32.mxu0 %v775
  %920 = vmatmul.mubr.f32.gmra.mrb[0].mxu0 %v768
  %v921 = vpop.f32.mrb[0].mxu0
  %v922 = vadd.f32 %v847, %v921
  %v923 = vpop.f32.mrb[0].mxu0
  %924 = vmatprep.mubr.f32.mxu0 %v778
  %925 = vmatmul.mubr.f32.gmra.mrb[0].mxu0 %v772
  %v926 = vpop.f32.mrb[0].mxu0
  %v927 = vadd.f32 %v852, %v926
  %v928 = vpop.f32.mrb[0].mxu0
  %929 = vdwg.mxu0
  %vm930 = vcmp.ge.f32.partialorder %v922, 0.0
  %vm931 = vcmp.ge.f32.partialorder %v927, 0.0
  %v932 = vmul.f32 %v922, 0.01
  %v933 = vmul.f32 %v927, 0.01
  %v934 = vsel %vm930, %v922, %v932
  %v935 = vsel %vm931, %v927, %v933
  %v936 = vmax.f32 %v763, %v934
  %v937 = vmax.f32 %v764, %v935
  %s938 = scalar_lea.vmem %s0, 320
  %v939 = vld [vmem:[%s938] sm:$0xff]
  %v940 = vld [vmem:[%s938 + $0x8] sm:$0xff]
  %v941 = vld [vmem:[%s938 + $0x10] sm:$0xff]
  %v942 = vld [vmem:[%s938 + $0x18] sm:$0xff]
  %v943 = vld [vmem:[%s938 + $0x20] sm:$0xff]
  %v944 = vld [vmem:[%s938 + $0x28] sm:$0xff]
  %v945 = vld [vmem:[%s938 + $0x30] sm:$0xff]
  %v946 = vld [vmem:[%s938 + $0x38] sm:$0xff]
  %v948 = vsel %vm83, %v942, 0
  %v951 = vsel %vm83, %v946, 0
  %953 = vmatprep.subr.mxu0 0.0
  %954 = vmatpush1.msra.mxu0 %v14
  %955 = vmatprep.subr.mxu0 0.0
  %956 = vmatpush1.msra.mxu0 %v15
  %957 = vmatprep.subr.mxu0 0.0
  %958 = vmatpush1.msra.mxu0 %v16
  %959 = vmatprep.subr.mxu0 0.0
  %960 = vmatpush1.msra.mxu0 %v17
  %961 = vmatprep.subr.mxu0 0.0
  %962 = vmatpush1.msra.mxu0 %v18
  %963 = vmatprep.subr.mxu0 0.0
  %964 = vmatpush1.msra.mxu0 %v19
  %965 = vmatprep.subr.mxu0 0.0
  %966 = vmatpush1.msra.mxu0 %v20
  %967 = vmatprep.subr.mxu0 0.0
  %968 = vmatpush1.msra.mxu0 %v21
  %969 = vmatprep.subr.mxu0 0.0
  %970 = vmatpush1.msra.mxu0 %v22
  %971 = vmatprep.subr.mxu0 0.0
  %972 = vmatpush1.msra.mxu0 %v23
  %973 = vmatprep.subr.mxu0 0.0
  %974 = vmatpush1.msra.mxu0 %v24
  %975 = vmatprep.subr.mxu0 0.0
  %976 = vmatpush1.msra.mxu0 %v25
  %977 = vmatprep.subr.mxu0 0.0
  %978 = vmatpush1.msra.mxu0 %v26
  %979 = vmatprep.subr.mxu0 0.0
  %980 = vmatpush1.msra.mxu0 %v27
  %981 = vmatprep.subr.mxu0 0.0
  %982 = vmatpush1.msra.mxu0 %v28
  %983 = vmatprep.subr.mxu0 0.0
  %984 = vmatpush1.msra.mxu0 %v29
  %985 = vmatprep.subr.mxu0 0.0
  %986 = vmatpush1.msra.mxu0 %v30
  %987 = vmatprep.subr.mxu0 0.0
  %988 = vmatpush1.msra.mxu0 %v31
  %989 = vmatprep.subr.mxu0 0.0
  %990 = vmatpush1.msra.mxu0 %v32
  %991 = vmatprep.subr.mxu0 0.0
  %992 = vmatpush1.msra.mxu0 %v33
  %993 = vmatprep.subr.mxu0 0.0
  %994 = vmatpush1.msra.mxu0 %v34
  %995 = vmatprep.subr.mxu0 0.0
  %996 = vmatpush1.msra.mxu0 %v35
  %997 = vmatprep.subr.mxu0 0.0
  %998 = vmatpush1.msra.mxu0 %v36
  %999 = vmatprep.subr.mxu0 0.0
  %1000 = vmatpush1.msra.mxu0 %v37
  %1001 = vmatprep.subr.mxu0 0.0
  %1002 = vmatpush1.msra.mxu0 %v38
  %1003 = vmatprep.subr.mxu0 0.0
  %1004 = vmatpush1.msra.mxu0 %v39
  %1005 = vmatprep.subr.mxu0 0.0
  %1006 = vmatpush1.msra.mxu0 %v40
  %1007 = vmatprep.subr.mxu0 0.0
  %1008 = vmatpush1.msra.mxu0 %v41
  %1009 = vmatprep.subr.mxu0 0.0
  %1010 = vmatpush1.msra.mxu0 %v42
  %1011 = vmatprep.subr.mxu0 0.0
  %1012 = vmatpush1.msra.mxu0 %v43
  %1013 = vmatprep.subr.mxu0 0.0
  %1014 = vmatpush1.msra.mxu0 %v44
  %1015 = vmatprep.subr.mxu0 0.0
  %1016 = vmatpush1.msra.mxu0 %v45
  %1017 = vmatprep.mubr.f32.mxu0 %v940
  %1018 = vmatmul.mubr.f32.gmra.mrb[0].mxu0 %v939
  %v1019 = vpop.f32.mrb[0].mxu0
  %v1020 = vadd.f32 %v81, %v1019
  %v1021 = vpop.f32.mrb[0].mxu0
  %1022 = vmatprep.mubr.f32.mxu0 %v944
  %1023 = vmatmul.mubr.f32.gmra.mrb[0].mxu0 %v943
  %v1024 = vpop.f32.mrb[0].mxu0
  %v1025 = vadd.f32 %v81, %v1024
  %v1026 = vpop.f32.mrb[0].mxu0
  %1027 = vdwg.mxu0
  %1028 = vmatprep.subr.mxu0 0.0
  %1029 = vmatpush1.msra.mxu0 %v46
  %1030 = vmatprep.subr.mxu0 0.0
  %1031 = vmatpush1.msra.mxu0 %v47
  %1032 = vmatprep.subr.mxu0 0.0
  %1033 = vmatpush1.msra.mxu0 %v48
  %1034 = vmatprep.subr.mxu0 0.0
  %1035 = vmatpush1.msra.mxu0 %v49
  %1036 = vmatprep.subr.mxu0 0.0
  %1037 = vmatpush1.msra.mxu0 %v50
  %1038 = vmatprep.subr.mxu0 0.0
  %1039 = vmatpush1.msra.mxu0 %v51
  %1040 = vmatprep.subr.mxu0 0.0
  %1041 = vmatpush1.msra.mxu0 %v52
  %1042 = vmatprep.subr.mxu0 0.0
  %1043 = vmatpush1.msra.mxu0 %v53
  %1044 = vmatprep.subr.mxu0 0.0
  %1045 = vmatpush1.msra.mxu0 %v54
  %1046 = vmatprep.subr.mxu0 0.0
  %1047 = vmatpush1.msra.mxu0 %v55
  %1048 = vmatprep.subr.mxu0 0.0
  %1049 = vmatpush1.msra.mxu0 %v56
  %1050 = vmatprep.subr.mxu0 0.0
  %1051 = vmatpush1.msra.mxu0 %v57
  %1052 = vmatprep.subr.mxu0 0.0
  %1053 = vmatpush1.msra.mxu0 %v58
  %1054 = vmatprep.subr.mxu0 0.0
  %1055 = vmatpush1.msra.mxu0 %v59
  %1056 = vmatprep.subr.mxu0 0.0
  %1057 = vmatpush1.msra.mxu0 %v60
  %1058 = vmatprep.subr.mxu0 0.0
  %1059 = vmatpush1.msra.mxu0 %v61
  %1060 = vmatprep.subr.mxu0 0.0
  %1061 = vmatpush1.msra.mxu0 %v62
  %1062 = vmatprep.subr.mxu0 0.0
  %1063 = vmatpush1.msra.mxu0 %v63
  %1064 = vmatprep.subr.mxu0 0.0
  %1065 = vmatpush1.msra.mxu0 %v64
  %1066 = vmatprep.subr.mxu0 0.0
  %1067 = vmatpush1.msra.mxu0 %v65
  %1068 = vmatprep.subr.mxu0 0.0
  %1069 = vmatpush1.msra.mxu0 %v66
  %1070 = vmatprep.subr.mxu0 0.0
  %1071 = vmatpush1.msra.mxu0 %v67
  %1072 = vmatprep.subr.mxu0 0.0
  %1073 = vmatpush1.msra.mxu0 0.0
  %1074 = vmatprep.subr.mxu0 0.0
  %1075 = vmatpush1.msra.mxu0 0.0
  %1076 = vmatprep.subr.mxu0 0.0
  %1077 = vmatpush1.msra.mxu0 0.0
  %1078 = vmatprep.subr.mxu0 0.0
  %1079 = vmatpush1.msra.mxu0 0.0
  %1080 = vmatprep.subr.mxu0 0.0
  %1081 = vmatpush1.msra.mxu0 0.0
  %1082 = vmatprep.subr.mxu0 0.0
  %1083 = vmatpush1.msra.mxu0 0.0
  %1084 = vmatprep.subr.mxu0 0.0
  %1085 = vmatpush1.msra.mxu0 0.0
  %1086 = vmatprep.subr.mxu0 0.0
  %1087 = vmatpush1.msra.mxu0 0.0
  %1088 = vmatprep.subr.mxu0 0.0
  %1089 = vmatpush1.msra.mxu0 0.0
  %1090 = vmatprep.subr.mxu0 0.0
  %1091 = vmatpush1.msra.mxu0 0.0
  %1092 = vmatprep.mubr.f32.mxu0 %v948
  %1093 = vmatmul.mubr.f32.gmra.mrb[0].mxu0 %v941
  %v1094 = vpop.f32.mrb[0].mxu0
  %v1095 = vadd.f32 %v1020, %v1094
  %v1096 = vpop.f32.mrb[0].mxu0
  %1097 = vmatprep.mubr.f32.mxu0 %v951
  %1098 = vmatmul.mubr.f32.gmra.mrb[0].mxu0 %v945
  %v1099 = vpop.f32.mrb[0].mxu0
  %v1100 = vadd.f32 %v1025, %v1099
  %v1101 = vpop.f32.mrb[0].mxu0
  %1102 = vdwg.mxu0
  %vm1103 = vcmp.ge.f32.partialorder %v1095, 0.0
  %vm1104 = vcmp.ge.f32.partialorder %v1100, 0.0
  %v1105 = vmul.f32 %v1095, 0.01
  %v1106 = vmul.f32 %v1100, 0.01
  %v1107 = vsel %vm1103, %v1095, %v1105
  %v1108 = vsel %vm1104, %v1100, %v1106
  %v1109 = vmax.f32 %v936, %v1107
  %v1110 = vmax.f32 %v937, %v1108
  %s1111 = scalar_lea.vmem %s0, 384
  %v1112 = vld [vmem:[%s1111] sm:$0xff]
  %v1113 = vld [vmem:[%s1111 + $0x8] sm:$0xff]
  %v1114 = vld [vmem:[%s1111 + $0x10] sm:$0xff]
  %v1115 = vld [vmem:[%s1111 + $0x18] sm:$0xff]
  %v1116 = vld [vmem:[%s1111 + $0x20] sm:$0xff]
  %v1117 = vld [vmem:[%s1111 + $0x28] sm:$0xff]
  %v1118 = vld [vmem:[%s1111 + $0x30] sm:$0xff]
  %v1119 = vld [vmem:[%s1111 + $0x38] sm:$0xff]
  %v1121 = vsel %vm83, %v1115, 0
  %v1124 = vsel %vm83, %v1119, 0
  %1126 = vmatprep.subr.mxu0 0.0
  %1127 = vmatpush1.msra.mxu0 %v14
  %1128 = vmatprep.subr.mxu0 0.0
  %1129 = vmatpush1.msra.mxu0 %v15
  %1130 = vmatprep.subr.mxu0 0.0
  %1131 = vmatpush1.msra.mxu0 %v16
  %1132 = vmatprep.subr.mxu0 0.0
  %1133 = vmatpush1.msra.mxu0 %v17
  %1134 = vmatprep.subr.mxu0 0.0
  %1135 = vmatpush1.msra.mxu0 %v18
  %1136 = vmatprep.subr.mxu0 0.0
  %1137 = vmatpush1.msra.mxu0 %v19
  %1138 = vmatprep.subr.mxu0 0.0
  %1139 = vmatpush1.msra.mxu0 %v20
  %1140 = vmatprep.subr.mxu0 0.0
  %1141 = vmatpush1.msra.mxu0 %v21
  %1142 = vmatprep.subr.mxu0 0.0
  %1143 = vmatpush1.msra.mxu0 %v22
  %1144 = vmatprep.subr.mxu0 0.0
  %1145 = vmatpush1.msra.mxu0 %v23
  %1146 = vmatprep.subr.mxu0 0.0
  %1147 = vmatpush1.msra.mxu0 %v24
  %1148 = vmatprep.subr.mxu0 0.0
  %1149 = vmatpush1.msra.mxu0 %v25
  %1150 = vmatprep.subr.mxu0 0.0
  %1151 = vmatpush1.msra.mxu0 %v26
  %1152 = vmatprep.subr.mxu0 0.0
  %1153 = vmatpush1.msra.mxu0 %v27
  %1154 = vmatprep.subr.mxu0 0.0
  %1155 = vmatpush1.msra.mxu0 %v28
  %1156 = vmatprep.subr.mxu0 0.0
  %1157 = vmatpush1.msra.mxu0 %v29
  %1158 = vmatprep.subr.mxu0 0.0
  %1159 = vmatpush1.msra.mxu0 %v30
  %1160 = vmatprep.subr.mxu0 0.0
  %1161 = vmatpush1.msra.mxu0 %v31
  %1162 = vmatprep.subr.mxu0 0.0
  %1163 = vmatpush1.msra.mxu0 %v32
  %1164 = vmatprep.subr.mxu0 0.0
  %1165 = vmatpush1.msra.mxu0 %v33
  %1166 = vmatprep.subr.mxu0 0.0
  %1167 = vmatpush1.msra.mxu0 %v34
  %1168 = vmatprep.subr.mxu0 0.0
  %1169 = vmatpush1.msra.mxu0 %v35
  %1170 = vmatprep.subr.mxu0 0.0
  %1171 = vmatpush1.msra.mxu0 %v36
  %1172 = vmatprep.subr.mxu0 0.0
  %1173 = vmatpush1.msra.mxu0 %v37
  %1174 = vmatprep.subr.mxu0 0.0
  %1175 = vmatpush1.msra.mxu0 %v38
  %1176 = vmatprep.subr.mxu0 0.0
  %1177 = vmatpush1.msra.mxu0 %v39
  %1178 = vmatprep.subr.mxu0 0.0
  %1179 = vmatpush1.msra.mxu0 %v40
  %1180 = vmatprep.subr.mxu0 0.0
  %1181 = vmatpush1.msra.mxu0 %v41
  %1182 = vmatprep.subr.mxu0 0.0
  %1183 = vmatpush1.msra.mxu0 %v42
  %1184 = vmatprep.subr.mxu0 0.0
  %1185 = vmatpush1.msra.mxu0 %v43
  %1186 = vmatprep.subr.mxu0 0.0
  %1187 = vmatpush1.msra.mxu0 %v44
  %1188 = vmatprep.subr.mxu0 0.0
  %1189 = vmatpush1.msra.mxu0 %v45
  %1190 = vmatprep.mubr.f32.mxu0 %v1113
  %1191 = vmatmul.mubr.f32.gmra.mrb[0].mxu0 %v1112
  %v1192 = vpop.f32.mrb[0].mxu0
  %v1193 = vadd.f32 %v81, %v1192
  %v1194 = vpop.f32.mrb[0].mxu0
  %1195 = vmatprep.mubr.f32.mxu0 %v1117
  %1196 = vmatmul.mubr.f32.gmra.mrb[0].mxu0 %v1116
  %v1197 = vpop.f32.mrb[0].mxu0
  %v1198 = vadd.f32 %v81, %v1197
  %v1199 = vpop.f32.mrb[0].mxu0
  %1200 = vdwg.mxu0
  %1201 = vmatprep.subr.mxu0 0.0
  %1202 = vmatpush1.msra.mxu0 %v46
  %1203 = vmatprep.subr.mxu0 0.0
  %1204 = vmatpush1.msra.mxu0 %v47
  %1205 = vmatprep.subr.mxu0 0.0
  %1206 = vmatpush1.msra.mxu0 %v48
  %1207 = vmatprep.subr.mxu0 0.0
  %1208 = vmatpush1.msra.mxu0 %v49
  %1209 = vmatprep.subr.mxu0 0.0
  %1210 = vmatpush1.msra.mxu0 %v50
  %1211 = vmatprep.subr.mxu0 0.0
  %1212 = vmatpush1.msra.mxu0 %v51
  %1213 = vmatprep.subr.mxu0 0.0
  %1214 = vmatpush1.msra.mxu0 %v52
  %1215 = vmatprep.subr.mxu0 0.0
  %1216 = vmatpush1.msra.mxu0 %v53
  %1217 = vmatprep.subr.mxu0 0.0
  %1218 = vmatpush1.msra.mxu0 %v54
  %1219 = vmatprep.subr.mxu0 0.0
  %1220 = vmatpush1.msra.mxu0 %v55
  %1221 = vmatprep.subr.mxu0 0.0
  %1222 = vmatpush1.msra.mxu0 %v56
  %1223 = vmatprep.subr.mxu0 0.0
  %1224 = vmatpush1.msra.mxu0 %v57
  %1225 = vmatprep.subr.mxu0 0.0
  %1226 = vmatpush1.msra.mxu0 %v58
  %1227 = vmatprep.subr.mxu0 0.0
  %1228 = vmatpush1.msra.mxu0 %v59
  %1229 = vmatprep.subr.mxu0 0.0
  %1230 = vmatpush1.msra.mxu0 %v60
  %1231 = vmatprep.subr.mxu0 0.0
  %1232 = vmatpush1.msra.mxu0 %v61
  %1233 = vmatprep.subr.mxu0 0.0
  %1234 = vmatpush1.msra.mxu0 %v62
  %1235 = vmatprep.subr.mxu0 0.0
  %1236 = vmatpush1.msra.mxu0 %v63
  %1237 = vmatprep.subr.mxu0 0.0
  %1238 = vmatpush1.msra.mxu0 %v64
  %1239 = vmatprep.subr.mxu0 0.0
  %1240 = vmatpush1.msra.mxu0 %v65
  %1241 = vmatprep.subr.mxu0 0.0
  %1242 = vmatpush1.msra.mxu0 %v66
  %1243 = vmatprep.subr.mxu0 0.0
  %1244 = vmatpush1.msra.mxu0 %v67
  %1245 = vmatprep.subr.mxu0 0.0
  %1246 = vmatpush1.msra.mxu0 0.0
  %1247 = vmatprep.subr.mxu0 0.0
  %1248 = vmatpush1.msra.mxu0 0.0
  %1249 = vmatprep.subr.mxu0 0.0
  %1250 = vmatpush1.msra.mxu0 0.0
  %1251 = vmatprep.subr.mxu0 0.0
  %1252 = vmatpush1.msra.mxu0 0.0
  %1253 = vmatprep.subr.mxu0 0.0
  %1254 = vmatpush1.msra.mxu0 0.0
  %1255 = vmatprep.subr.mxu0 0.0
  %1256 = vmatpush1.msra.mxu0 0.0
  %1257 = vmatprep.subr.mxu0 0.0
  %1258 = vmatpush1.msra.mxu0 0.0
  %1259 = vmatprep.subr.mxu0 0.0
  %1260 = vmatpush1.msra.mxu0 0.0
  %1261 = vmatprep.subr.mxu0 0.0
  %1262 = vmatpush1.msra.mxu0 0.0
  %1263 = vmatprep.subr.mxu0 0.0
  %1264 = vmatpush1.msra.mxu0 0.0
  %1265 = vmatprep.mubr.f32.mxu0 %v1121
  %1266 = vmatmul.mubr.f32.gmra.mrb[0].mxu0 %v1114
  %v1267 = vpop.f32.mrb[0].mxu0
  %v1268 = vadd.f32 %v1193, %v1267
  %v1269 = vpop.f32.mrb[0].mxu0
  %1270 = vmatprep.mubr.f32.mxu0 %v1124
  %1271 = vmatmul.mubr.f32.gmra.mrb[0].mxu0 %v1118
  %v1272 = vpop.f32.mrb[0].mxu0
  %v1273 = vadd.f32 %v1198, %v1272
  %v1274 = vpop.f32.mrb[0].mxu0
  %1275 = vdwg.mxu0
  %vm1276 = vcmp.ge.f32.partialorder %v1268, 0.0
  %vm1277 = vcmp.ge.f32.partialorder %v1273, 0.0
  %v1278 = vmul.f32 %v1268, 0.01
  %v1279 = vmul.f32 %v1273, 0.01
  %v1280 = vsel %vm1276, %v1268, %v1278
  %v1281 = vsel %vm1277, %v1273, %v1279
  %v1282 = vmax.f32 %v1109, %v1280
  %v1283 = vmax.f32 %v1110, %v1281
  %s1284 = scalar_lea.vmem %s0, 448
  %v1285 = vld [vmem:[%s1284] sm:$0xff]
  %v1286 = vld [vmem:[%s1284 + $0x8] sm:$0xff]
  %v1287 = vld [vmem:[%s1284 + $0x10] sm:$0xff]
  %v1288 = vld [vmem:[%s1284 + $0x18] sm:$0xff]
  %v1289 = vld [vmem:[%s1284 + $0x20] sm:$0xff]
  %v1290 = vld [vmem:[%s1284 + $0x28] sm:$0xff]
  %v1291 = vld [vmem:[%s1284 + $0x30] sm:$0xff]
  %v1292 = vld [vmem:[%s1284 + $0x38] sm:$0xff]
  %v1294 = vsel %vm83, %v1288, 0
  %v1297 = vsel %vm83, %v1292, 0
  %1299 = vmatprep.subr.mxu0 0.0
  %1300 = vmatpush1.msra.mxu0 %v14
  %1301 = vmatprep.subr.mxu0 0.0
  %1302 = vmatpush1.msra.mxu0 %v15
  %1303 = vmatprep.subr.mxu0 0.0
  %1304 = vmatpush1.msra.mxu0 %v16
  %1305 = vmatprep.subr.mxu0 0.0
  %1306 = vmatpush1.msra.mxu0 %v17
  %1307 = vmatprep.subr.mxu0 0.0
  %1308 = vmatpush1.msra.mxu0 %v18
  %1309 = vmatprep.subr.mxu0 0.0
  %1310 = vmatpush1.msra.mxu0 %v19
  %1311 = vmatprep.subr.mxu0 0.0
  %1312 = vmatpush1.msra.mxu0 %v20
  %1313 = vmatprep.subr.mxu0 0.0
  %1314 = vmatpush1.msra.mxu0 %v21
  %1315 = vmatprep.subr.mxu0 0.0
  %1316 = vmatpush1.msra.mxu0 %v22
  %1317 = vmatprep.subr.mxu0 0.0
  %1318 = vmatpush1.msra.mxu0 %v23
  %1319 = vmatprep.subr.mxu0 0.0
  %1320 = vmatpush1.msra.mxu0 %v24
  %1321 = vmatprep.subr.mxu0 0.0
  %1322 = vmatpush1.msra.mxu0 %v25
  %1323 = vmatprep.subr.mxu0 0.0
  %1324 = vmatpush1.msra.mxu0 %v26
  %1325 = vmatprep.subr.mxu0 0.0
  %1326 = vmatpush1.msra.mxu0 %v27
  %1327 = vmatprep.subr.mxu0 0.0
  %1328 = vmatpush1.msra.mxu0 %v28
  %1329 = vmatprep.subr.mxu0 0.0
  %1330 = vmatpush1.msra.mxu0 %v29
  %1331 = vmatprep.subr.mxu0 0.0
  %1332 = vmatpush1.msra.mxu0 %v30
  %1333 = vmatprep.subr.mxu0 0.0
  %1334 = vmatpush1.msra.mxu0 %v31
  %1335 = vmatprep.subr.mxu0 0.0
  %1336 = vmatpush1.msra.mxu0 %v32
  %1337 = vmatprep.subr.mxu0 0.0
  %1338 = vmatpush1.msra.mxu0 %v33
  %1339 = vmatprep.subr.mxu0 0.0
  %1340 = vmatpush1.msra.mxu0 %v34
  %1341 = vmatprep.subr.mxu0 0.0
  %1342 = vmatpush1.msra.mxu0 %v35
  %1343 = vmatprep.subr.mxu0 0.0
  %1344 = vmatpush1.msra.mxu0 %v36
  %1345 = vmatprep.subr.mxu0 0.0
  %1346 = vmatpush1.msra.mxu0 %v37
  %1347 = vmatprep.subr.mxu0 0.0
  %1348 = vmatpush1.msra.mxu0 %v38
  %1349 = vmatprep.subr.mxu0 0.0
  %1350 = vmatpush1.msra.mxu0 %v39
  %1351 = vmatprep.subr.mxu0 0.0
  %1352 = vmatpush1.msra.mxu0 %v40
  %1353 = vmatprep.subr.mxu0 0.0
  %1354 = vmatpush1.msra.mxu0 %v41
  %1355 = vmatprep.subr.mxu0 0.0
  %1356 = vmatpush1.msra.mxu0 %v42
  %1357 = vmatprep.subr.mxu0 0.0
  %1358 = vmatpush1.msra.mxu0 %v43
  %1359 = vmatprep.subr.mxu0 0.0
  %1360 = vmatpush1.msra.mxu0 %v44
  %1361 = vmatprep.subr.mxu0 0.0
  %1362 = vmatpush1.msra.mxu0 %v45
  %1363 = vmatprep.mubr.f32.mxu0 %v1286
  %1364 = vmatmul.mubr.f32.gmra.mrb[0].mxu0 %v1285
  %v1365 = vpop.f32.mrb[0].mxu0
  %v1366 = vadd.f32 %v81, %v1365
  %v1367 = vpop.f32.mrb[0].mxu0
  %1368 = vmatprep.mubr.f32.mxu0 %v1290
  %1369 = vmatmul.mubr.f32.gmra.mrb[0].mxu0 %v1289
  %v1370 = vpop.f32.mrb[0].mxu0
  %v1371 = vadd.f32 %v81, %v1370
  %v1372 = vpop.f32.mrb[0].mxu0
  %1373 = vdwg.mxu0
  %1374 = vmatprep.subr.mxu0 0.0
  %1375 = vmatpush1.msra.mxu0 %v46
  %1376 = vmatprep.subr.mxu0 0.0
  %1377 = vmatpush1.msra.mxu0 %v47
  %1378 = vmatprep.subr.mxu0 0.0
  %1379 = vmatpush1.msra.mxu0 %v48
  %1380 = vmatprep.subr.mxu0 0.0
  %1381 = vmatpush1.msra.mxu0 %v49
  %1382 = vmatprep.subr.mxu0 0.0
  %1383 = vmatpush1.msra.mxu0 %v50
  %1384 = vmatprep.subr.mxu0 0.0
  %1385 = vmatpush1.msra.mxu0 %v51
  %1386 = vmatprep.subr.mxu0 0.0
  %1387 = vmatpush1.msra.mxu0 %v52
  %1388 = vmatprep.subr.mxu0 0.0
  %1389 = vmatpush1.msra.mxu0 %v53
  %1390 = vmatprep.subr.mxu0 0.0
  %1391 = vmatpush1.msra.mxu0 %v54
  %1392 = vmatprep.subr.mxu0 0.0
  %1393 = vmatpush1.msra.mxu0 %v55
  %1394 = vmatprep.subr.mxu0 0.0
  %1395 = vmatpush1.msra.mxu0 %v56
  %1396 = vmatprep.subr.mxu0 0.0
  %1397 = vmatpush1.msra.mxu0 %v57
  %1398 = vmatprep.subr.mxu0 0.0
  %1399 = vmatpush1.msra.mxu0 %v58
  %1400 = vmatprep.subr.mxu0 0.0
  %1401 = vmatpush1.msra.mxu0 %v59
  %1402 = vmatprep.subr.mxu0 0.0
  %1403 = vmatpush1.msra.mxu0 %v60
  %1404 = vmatprep.subr.mxu0 0.0
  %1405 = vmatpush1.msra.mxu0 %v61
  %1406 = vmatprep.subr.mxu0 0.0
  %1407 = vmatpush1.msra.mxu0 %v62
  %1408 = vmatprep.subr.mxu0 0.0
  %1409 = vmatpush1.msra.mxu0 %v63
  %1410 = vmatprep.subr.mxu0 0.0
  %1411 = vmatpush1.msra.mxu0 %v64
  %1412 = vmatprep.subr.mxu0 0.0
  %1413 = vmatpush1.msra.mxu0 %v65
  %1414 = vmatprep.subr.mxu0 0.0
  %1415 = vmatpush1.msra.mxu0 %v66
  %1416 = vmatprep.subr.mxu0 0.0
  %1417 = vmatpush1.msra.mxu0 %v67
  %1418 = vmatprep.subr.mxu0 0.0
  %1419 = vmatpush1.msra.mxu0 0.0
  %1420 = vmatprep.subr.mxu0 0.0
  %1421 = vmatpush1.msra.mxu0 0.0
  %1422 = vmatprep.subr.mxu0 0.0
  %1423 = vmatpush1.msra.mxu0 0.0
  %1424 = vmatprep.subr.mxu0 0.0
  %1425 = vmatpush1.msra.mxu0 0.0
  %1426 = vmatprep.subr.mxu0 0.0
  %1427 = vmatpush1.msra.mxu0 0.0
  %1428 = vmatprep.subr.mxu0 0.0
  %1429 = vmatpush1.msra.mxu0 0.0
  %1430 = vmatprep.subr.mxu0 0.0
  %1431 = vmatpush1.msra.mxu0 0.0
  %1432 = vmatprep.subr.mxu0 0.0
  %1433 = vmatpush1.msra.mxu0 0.0
  %1434 = vmatprep.subr.mxu0 0.0
  %1435 = vmatpush1.msra.mxu0 0.0
  %1436 = vmatprep.subr.mxu0 0.0
  %1437 = vmatpush1.msra.mxu0 0.0
  %1438 = vmatprep.mubr.f32.mxu0 %v1294
  %1439 = vmatmul.mubr.f32.gmra.mrb[0].mxu0 %v1287
  %v1440 = vpop.f32.mrb[0].mxu0
  %v1441 = vadd.f32 %v1366, %v1440
  %v1442 = vpop.f32.mrb[0].mxu0
  %1443 = vmatprep.mubr.f32.mxu0 %v1297
  %1444 = vmatmul.mubr.f32.gmra.mrb[0].mxu0 %v1291
  %v1445 = vpop.f32.mrb[0].mxu0
  %v1446 = vadd.f32 %v1371, %v1445
  %v1447 = vpop.f32.mrb[0].mxu0
  %1448 = vdwg.mxu0
  %vm1449 = vcmp.ge.f32.partialorder %v1441, 0.0
  %vm1450 = vcmp.ge.f32.partialorder %v1446, 0.0
  %v1451 = vmul.f32 %v1441, 0.01
  %v1452 = vmul.f32 %v1446, 0.01
  %v1453 = vsel %vm1449, %v1441, %v1451
  %v1454 = vsel %vm1450, %v1446, %v1452
  %v1455 = vmax.f32 %v1282, %v1453
  %v1456 = vmax.f32 %v1283, %v1454
  %vm1457 = vcmask 523264
  %1458 = vst.msk [vmem:[%s3] sm:$0xff] %vm1457, %v1455
  %1459 = vst.msk [vmem:[%s3 + $0x8] sm:$0xff] %vm1457, %v1456
  // Predicated region
  $region14: #{cnn_forward.4} parent=0 // pred_check
    _
  $region15: #{cnn_forward.4} parent=0 // pred_check_branch
    %1461 = sbr.rel (0) target = $region17
  $region16: #{cnn_forward.4} parent=0 // pred_region
    _
  $region17: #{cnn_forward.4} parent=0 // pred_fallthru
    _
  // Predicated region
  $region18: #{cnn_forward.4} parent=0 // pred_check
    _
  $region19: #{cnn_forward.4} parent=0 // pred_check_branch
    %1463 = sbr.rel (0) target = $region21
  $region20: #{cnn_forward.4} parent=0 // pred_region
    _
  $region21: #{cnn_forward.4} parent=0 // pred_fallthru
    _

// kernel: cnn_forward.5
$region0: #{cnn_forward.5}
  #allocation0 [shape = 'u32[]', space=smem, size = 0x4, offset = 0x4, fixed_abs, tag = 'smem constant byte address 0x4 - core index']
  #allocation1 [shape = 'u32[144,128]{1,0:T(1,128)}', space=vmem, size = 0x12000, scoped, tag = 'internal scratch']
  %s0 = inlined_call_operand.vmem [shape: f32[2,512], index: 0, kind: input, shape index: {}]
  %s1 = inlined_call_operand.vmem [shape: f32[512,128], index: 1, kind: input, shape index: {}]
  %s2 = inlined_call_operand.vmem [shape: f32[1,128], index: 2, kind: input, shape index: {}]
  %s3 = inlined_call_operand.vmem [shape: f32[1,128], index: 3, kind: input, shape index: {}]
  %s4 = inlined_call_operand.vmem [shape: f32[1,128], index: 4, kind: input, shape index: {}]
  %s5 = inlined_call_operand.vmem [shape: f32[1,128], index: 5, kind: input, shape index: {}]
  %s6 = inlined_call_operand.vmem [shape: f32[1,128], index: 6, kind: input, shape index: {}]
  %s7 = inlined_call_operand.vmem [shape: f32[128,9], index: 7, kind: input, shape index: {}]
  %s8 = inlined_call_operand.vmem [shape: f32[1,9], index: 8, kind: input, shape index: {}]
  %s9 = inlined_call_operand.hbm [shape: f32[2,9], index: 9, kind: output, shape index: {}]
  %s10 = sld [smem:[#allocation0]]
  $region46: #{cnn_forward.5} parent=0
    _
  %s12 = ssub.s32 1, %s10
  %s13 = scalar_select 0, %s12, %s10
  $region1: #{cnn_forward.5} parent=0
    #allocation2 [shape = 'u8[1024]{0}', space=vmem, size = 0x400, scoped, tag = 'output window, operand 0, single buffered']
    #allocation3 [shape = 's32[1]{0}', space=sflag, size = 0x4, scoped, tag = 'scoped memory for cnn_forward.5']
    %14 = vsyncpa [#allocation3], 0
    // Predicated region
    $region2: #{cnn_forward.5} parent=1 // pred_check
      _
    $region3: #{cnn_forward.5} parent=1 // pred_check_branch
      %16 = sbr.rel (0) target = $region5
    $region4: #{cnn_forward.5} parent=1 // pred_region
      _
    $region5: #{cnn_forward.5} parent=1 // pred_fallthru
      _
    // Predicated region
    $region6: #{cnn_forward.5} parent=1 // pred_check
      _
    $region7: #{cnn_forward.5} parent=1 // pred_check_branch
      %18 = sbr.rel (0) target = $region9
    $region8: #{cnn_forward.5} parent=1 // pred_region
      _
    $region9: #{cnn_forward.5} parent=1 // pred_fallthru
      _
    // Predicated region
    $region10: #{cnn_forward.5} parent=1 // pred_check
      _
    $region11: #{cnn_forward.5} parent=1 // pred_check_branch
      %20 = sbr.rel (0) target = $region13
    $region12: #{cnn_forward.5} parent=1 // pred_region
      _
    $region13: #{cnn_forward.5} parent=1 // pred_fallthru
      _
    // Predicated region
    $region14: #{cnn_forward.5} parent=1 // pred_check
      _
    $region15: #{cnn_forward.5} parent=1 // pred_check_branch
      %22 = sbr.rel (0) target = $region17
    $region16: #{cnn_forward.5} parent=1 // pred_region
      _
    $region17: #{cnn_forward.5} parent=1 // pred_fallthru
      _
    // Predicated region
    $region18: #{cnn_forward.5} parent=1 // pred_check
      _
    $region19: #{cnn_forward.5} parent=1 // pred_check_branch
      %24 = sbr.rel (0) target = $region21
    $region20: #{cnn_forward.5} parent=1 // pred_region
      _
    $region21: #{cnn_forward.5} parent=1 // pred_fallthru
      _
    // Predicated region
    $region22: #{cnn_forward.5} parent=1 // pred_check
      _
    $region23: #{cnn_forward.5} parent=1 // pred_check_branch
      %26 = sbr.rel (0) target = $region25
    $region24: #{cnn_forward.5} parent=1 // pred_region
      _
    $region25: #{cnn_forward.5} parent=1 // pred_fallthru
      _
    // Predicated region
    $region26: #{cnn_forward.5} parent=1 // pred_check
      _
    $region27: #{cnn_forward.5} parent=1 // pred_check_branch
      %28 = sbr.rel (0) target = $region29
    $region28: #{cnn_forward.5} parent=1 // pred_region
      _
    $region29: #{cnn_forward.5} parent=1 // pred_fallthru
      _
    // Predicated region
    $region30: #{cnn_forward.5} parent=1 // pred_check
      _
    $region31: #{cnn_forward.5} parent=1 // pred_check_branch
      %30 = sbr.rel (0) target = $region33
    $region32: #{cnn_forward.5} parent=1 // pred_region
      _
    $region33: #{cnn_forward.5} parent=1 // pred_fallthru
      _
    // Predicated region
    $region34: #{cnn_forward.5} parent=1 // pred_check
      _
    $region35: #{cnn_forward.5} parent=1 // pred_check_branch
      %32 = sbr.rel (0) target = $region37
    $region36: #{cnn_forward.5} parent=1 // pred_region
      _
    $region37: #{cnn_forward.5} parent=1 // pred_fallthru
      _
    %v33 = vld [vmem:[%s0] sm:$0xff]
    %v34 = vld [vmem:[%s1] sm:$0xff]
    %v35 = vld [vmem:[%s1 + $0x8] sm:$0xff]
    %v36 = vld [vmem:[%s1 + $0x10] sm:$0xff]
    %v37 = vld [vmem:[%s1 + $0x18] sm:$0xff]
    %v38 = vld [vmem:[%s1 + $0x20] sm:$0xff]
    %v39 = vld [vmem:[%s1 + $0x28] sm:$0xff]
    %v40 = vld [vmem:[%s1 + $0x30] sm:$0xff]
    %v41 = vld [vmem:[%s1 + $0x38] sm:$0xff]
    %v42 = vld [vmem:[%s1 + $0x40] sm:$0xff]
    %v43 = vld [vmem:[%s1 + $0x48] sm:$0xff]
    %v44 = vld [vmem:[%s1 + $0x50] sm:$0xff]
    %v45 = vld [vmem:[%s1 + $0x58] sm:$0xff]
    %v46 = vld [vmem:[%s1 + $0x60] sm:$0xff]
    %v47 = vld [vmem:[%s1 + $0x68] sm:$0xff]
    %v48 = vld [vmem:[%s1 + $0x70] sm:$0xff]
    %v49 = vld [vmem:[%s1 + $0x78] sm:$0xff]
    %v50 = vld [vmem:[%s1 + $0x80] sm:$0xff]
    %v51 = vld [vmem:[%s1 + $0x88] sm:$0xff]
    %v52 = vld [vmem:[%s1 + $0x90] sm:$0xff]
    %v53 = vld [vmem:[%s1 + $0x98] sm:$0xff]
    %v54 = vld [vmem:[%s1 + $0xa0] sm:$0xff]
    %v55 = vld [vmem:[%s1 + $0xa8] sm:$0xff]
    %v56 = vld [vmem:[%s1 + $0xb0] sm:$0xff]
    %v57 = vld [vmem:[%s1 + $0xb8] sm:$0xff]
    %v58 = vld [vmem:[%s1 + $0xc0] sm:$0xff]
    %v59 = vld [vmem:[%s1 + $0xc8] sm:$0xff]
    %v60 = vld [vmem:[%s1 + $0xd0] sm:$0xff]
    %v61 = vld [vmem:[%s1 + $0xd8] sm:$0xff]
    %v62 = vld [vmem:[%s1 + $0xe0] sm:$0xff]
    %v63 = vld [vmem:[%s1 + $0xe8] sm:$0xff]
    %v64 = vld [vmem:[%s1 + $0xf0] sm:$0xff]
    %v65 = vld [vmem:[%s1 + $0xf8] sm:$0xff]
    %v66 = vld [vmem:[%s1 + $0x100] sm:$0xff]
    %v67 = vld [vmem:[%s1 + $0x108] sm:$0xff]
    %v68 = vld [vmem:[%s1 + $0x110] sm:$0xff]
    %v69 = vld [vmem:[%s1 + $0x118] sm:$0xff]
    %v70 = vld [vmem:[%s1 + $0x120] sm:$0xff]
    %v71 = vld [vmem:[%s1 + $0x128] sm:$0xff]
    %v72 = vld [vmem:[%s1 + $0x130] sm:$0xff]
    %v73 = vld [vmem:[%s1 + $0x138] sm:$0xff]
    %v74 = vld [vmem:[%s1 + $0x140] sm:$0xff]
    %v75 = vld [vmem:[%s1 + $0x148] sm:$0xff]
    %v76 = vld [vmem:[%s1 + $0x150] sm:$0xff]
    %v77 = vld [vmem:[%s1 + $0x158] sm:$0xff]
    %v78 = vld [vmem:[%s1 + $0x160] sm:$0xff]
    %v79 = vld [vmem:[%s1 + $0x168] sm:$0xff]
    %v80 = vld [vmem:[%s1 + $0x170] sm:$0xff]
    %v81 = vld [vmem:[%s1 + $0x178] sm:$0xff]
    %v82 = vld [vmem:[%s1 + $0x180] sm:$0xff]
    %v83 = vld [vmem:[%s1 + $0x188] sm:$0xff]
    %v84 = vld [vmem:[%s1 + $0x190] sm:$0xff]
    %v85 = vld [vmem:[%s1 + $0x198] sm:$0xff]
    %v86 = vld [vmem:[%s1 + $0x1a0] sm:$0xff]
    %v87 = vld [vmem:[%s1 + $0x1a8] sm:$0xff]
    %v88 = vld [vmem:[%s1 + $0x1b0] sm:$0xff]
    %v89 = vld [vmem:[%s1 + $0x1b8] sm:$0xff]
    %v90 = vld [vmem:[%s1 + $0x1c0] sm:$0xff]
    %v91 = vld [vmem:[%s1 + $0x1c8] sm:$0xff]
    %v92 = vld [vmem:[%s1 + $0x1d0] sm:$0xff]
    %v93 = vld [vmem:[%s1 + $0x1d8] sm:$0xff]
    %v94 = vld [vmem:[%s1 + $0x1e0] sm:$0xff]
    %v95 = vld [vmem:[%s1 + $0x1e8] sm:$0xff]
    %v96 = vld [vmem:[%s1 + $0x1f0] sm:$0xff]
    %v97 = vld [vmem:[%s1 + $0x1f8] sm:$0xff]
    %v98 = vld [vmem:[%s2] sm:$0x1]
    %v100 = vlaneseq
    %v101 = vshrl.u32 %v100, 7
    %v102 = vsub.s32 0, %v101
    %v103 = vrot.slane %v98, %v102
    %v106 = vcombine.high %v33, %v33
    %v108 = vunpack.c.l.s4 1983009808
    %v109 = vunpack.c.0.s8 %v108
    %v110 = vlaneseq
    %v111 = vshrl.u32 %v110, 7
    %v112 = vsub.s32 %v109, %v111
    %v113 = vrot.slane %v33, %v112
    %v115 = vunpack.c.l.s4 1983009808
    %v116 = vunpack.c.0.s8 %v115
    %v117 = vlaneseq
    %v118 = vshrl.u32 %v117, 7
    %v119 = vsub.s32 %v116, %v118
    %v120 = vrot.slane %v106, %v119
    %v121 = vcombine.high %v113, %v113
    %v122 = vcombine.high %v120, %v120
    %127 = vmatprep.subr.mxu0 0.0
    %128 = vmatpush1.msra.mxu0 %v34
    %129 = vmatprep.subr.mxu0 0.0
    %130 = vmatpush1.msra.mxu0 %v35
    %131 = vmatprep.subr.mxu0 0.0
    %132 = vmatpush1.msra.mxu0 %v36
    %133 = vmatprep.subr.mxu0 0.0
    %134 = vmatpush1.msra.mxu0 %v37
    %135 = vmatprep.subr.mxu0 0.0
    %136 = vmatpush1.msra.mxu0 %v38
    %137 = vmatprep.subr.mxu0 0.0
    %138 = vmatpush1.msra.mxu0 %v39
    %139 = vmatprep.subr.mxu0 0.0
    %140 = vmatpush1.msra.mxu0 %v40
    %141 = vmatprep.subr.mxu0 0.0
    %142 = vmatpush1.msra.mxu0 %v41
    %143 = vmatprep.subr.mxu0 0.0
    %144 = vmatpush1.msra.mxu0 %v42
    %145 = vmatprep.subr.mxu0 0.0
    %146 = vmatpush1.msra.mxu0 %v43
    %147 = vmatprep.subr.mxu0 0.0
    %148 = vmatpush1.msra.mxu0 %v44
    %149 = vmatprep.subr.mxu0 0.0
    %150 = vmatpush1.msra.mxu0 %v45
    %151 = vmatprep.subr.mxu0 0.0
    %152 = vmatpush1.msra.mxu0 %v46
    %153 = vmatprep.subr.mxu0 0.0
    %154 = vmatpush1.msra.mxu0 %v47
    %155 = vmatprep.subr.mxu0 0.0
    %156 = vmatpush1.msra.mxu0 %v48
    %157 = vmatprep.subr.mxu0 0.0
    %158 = vmatpush1.msra.mxu0 %v49
    %159 = vmatprep.subr.mxu0 0.0
    %160 = vmatpush1.msra.mxu0 %v50
    %161 = vmatprep.subr.mxu0 0.0
    %162 = vmatpush1.msra.mxu0 %v51
    %163 = vmatprep.subr.mxu0 0.0
    %164 = vmatpush1.msra.mxu0 %v52
    %165 = vmatprep.subr.mxu0 0.0
    %166 = vmatpush1.msra.mxu0 %v53
    %167 = vmatprep.subr.mxu0 0.0
    %168 = vmatpush1.msra.mxu0 %v54
    %169 = vmatprep.subr.mxu0 0.0
    %170 = vmatpush1.msra.mxu0 %v55
    %171 = vmatprep.subr.mxu0 0.0
    %172 = vmatpush1.msra.mxu0 %v56
    %173 = vmatprep.subr.mxu0 0.0
    %174 = vmatpush1.msra.mxu0 %v57
    %175 = vmatprep.subr.mxu0 0.0
    %176 = vmatpush1.msra.mxu0 %v58
    %177 = vmatprep.subr.mxu0 0.0
    %178 = vmatpush1.msra.mxu0 %v59
    %179 = vmatprep.subr.mxu0 0.0
    %180 = vmatpush1.msra.mxu0 %v60
    %181 = vmatprep.subr.mxu0 0.0
    %182 = vmatpush1.msra.mxu0 %v61
    %183 = vmatprep.subr.mxu0 0.0
    %184 = vmatpush1.msra.mxu0 %v62
    %185 = vmatprep.subr.mxu0 0.0
    %186 = vmatpush1.msra.mxu0 %v63
    %187 = vmatprep.subr.mxu0 0.0
    %188 = vmatpush1.msra.mxu0 %v64
    %189 = vmatprep.subr.mxu0 0.0
    %190 = vmatpush1.msra.mxu0 %v65
    %191 = vmatprep.mubr.f32.mxu0 %v121
    %192 = vmatmul.mubr.f32.gmra.mrb[0].mxu0 %v113
    %v193 = vpop.f32.mrb[0].mxu0
    %v194 = vadd.f32 %v103, %v193
    %v195 = vpop.f32.mrb[0].mxu0
    %196 = vdwg.mxu0
    %197 = vmatprep.subr.mxu0 0.0
    %198 = vmatpush1.msra.mxu0 %v66
    %199 = vmatprep.subr.mxu0 0.0
    %200 = vmatpush1.msra.mxu0 %v67
    %201 = vmatprep.subr.mxu0 0.0
    %202 = vmatpush1.msra.mxu0 %v68
    %203 = vmatprep.subr.mxu0 0.0
    %204 = vmatpush1.msra.mxu0 %v69
    %205 = vmatprep.subr.mxu0 0.0
    %206 = vmatpush1.msra.mxu0 %v70
    %207 = vmatprep.subr.mxu0 0.0
    %208 = vmatpush1.msra.mxu0 %v71
    %209 = vmatprep.subr.mxu0 0.0
    %210 = vmatpush1.msra.mxu0 %v72
    %211 = vmatprep.subr.mxu0 0.0
    %212 = vmatpush1.msra.mxu0 %v73
    %213 = vmatprep.subr.mxu0 0.0
    %214 = vmatpush1.msra.mxu0 %v74
    %215 = vmatprep.subr.mxu0 0.0
    %216 = vmatpush1.msra.mxu0 %v75
    %217 = vmatprep.subr.mxu0 0.0
    %218 = vmatpush1.msra.mxu0 %v76
    %219 = vmatprep.subr.mxu0 0.0
    %220 = vmatpush1.msra.mxu0 %v77
    %221 = vmatprep.subr.mxu0 0.0
    %222 = vmatpush1.msra.mxu0 %v78
    %223 = vmatprep.subr.mxu0 0.0
    %224 = vmatpush1.msra.mxu0 %v79
    %225 = vmatprep.subr.mxu0 0.0
    %226 = vmatpush1.msra.mxu0 %v80
    %227 = vmatprep.subr.mxu0 0.0
    %228 = vmatpush1.msra.mxu0 %v81
    %229 = vmatprep.subr.mxu0 0.0
    %230 = vmatpush1.msra.mxu0 %v82
    %231 = vmatprep.subr.mxu0 0.0
    %232 = vmatpush1.msra.mxu0 %v83
    %233 = vmatprep.subr.mxu0 0.0
    %234 = vmatpush1.msra.mxu0 %v84
    %235 = vmatprep.subr.mxu0 0.0
    %236 = vmatpush1.msra.mxu0 %v85
    %237 = vmatprep.subr.mxu0 0.0
    %238 = vmatpush1.msra.mxu0 %v86
    %239 = vmatprep.subr.mxu0 0.0
    %240 = vmatpush1.msra.mxu0 %v87
    %241 = vmatprep.subr.mxu0 0.0
    %242 = vmatpush1.msra.mxu0 %v88
    %243 = vmatprep.subr.mxu0 0.0
    %244 = vmatpush1.msra.mxu0 %v89
    %245 = vmatprep.subr.mxu0 0.0
    %246 = vmatpush1.msra.mxu0 %v90
    %247 = vmatprep.subr.mxu0 0.0
    %248 = vmatpush1.msra.mxu0 %v91
    %249 = vmatprep.subr.mxu0 0.0
    %250 = vmatpush1.msra.mxu0 %v92
    %251 = vmatprep.subr.mxu0 0.0
    %252 = vmatpush1.msra.mxu0 %v93
    %253 = vmatprep.subr.mxu0 0.0
    %254 = vmatpush1.msra.mxu0 %v94
    %255 = vmatprep.subr.mxu0 0.0
    %256 = vmatpush1.msra.mxu0 %v95
    %257 = vmatprep.subr.mxu0 0.0
    %258 = vmatpush1.msra.mxu0 %v96
    %259 = vmatprep.subr.mxu0 0.0
    %260 = vmatpush1.msra.mxu0 %v97
    %261 = vmatprep.mubr.f32.mxu0 %v122
    %262 = vmatmul.mubr.f32.gmra.mrb[0].mxu0 %v120
    %v263 = vpop.f32.mrb[0].mxu0
    %v264 = vadd.f32 %v194, %v263
    %v265 = vpop.f32.mrb[0].mxu0
    %266 = vdwg.mxu0
    %vm267 = vcmp.ge.f32.partialorder %v264, 0.0
    %v268 = vmul.f32 %v264, 0.01
    %v269 = vsel %vm267, %v264, %v268
    %v270 = vld [vmem:[%s5] sm:$0x1]
    %v272 = vlaneseq
    %v273 = vshrl.u32 %v272, 7
    %v274 = vsub.s32 0, %v273
    %v275 = vrot.slane %v270, %v274
    %v277 = vsub.f32 %v269, %v275
    %v278 = vld [vmem:[%s6] sm:$0x1]
    %v279 = vadd.f32 %v278, 1e-05
    %v280 = vrsqrt.pop %v279
    %v282 = vlaneseq
    %v283 = vshrl.u32 %v282, 7
    %v284 = vsub.s32 0, %v283
    %v285 = vrot.slane %v280, %v284
    %v287 = vmul.f32 %v277, %v285
    %v288 = vld [vmem:[%s3] sm:$0x1]
    %v290 = vlaneseq
    %v291 = vshrl.u32 %v290, 7
    %v292 = vsub.s32 0, %v291
    %v293 = vrot.slane %v288, %v292
    %v295 = vmul.f32 %v287, %v293
    %v296 = vld [vmem:[%s4] sm:$0x1]
    %v298 = vlaneseq
    %v299 = vshrl.u32 %v298, 7
    %v300 = vsub.s32 0, %v299
    %v301 = vrot.slane %v296, %v300
    %v303 = vadd.f32 %v295, %v301
    %v304 = vld [vmem:[%s7] sm:$0xff]
    %v305 = vld [vmem:[%s7 + $0x8] sm:$0xff]
    %v306 = vld [vmem:[%s7 + $0x10] sm:$0xff]
    %v307 = vld [vmem:[%s7 + $0x18] sm:$0xff]
    %v308 = vld [vmem:[%s7 + $0x20] sm:$0xff]
    %v309 = vld [vmem:[%s7 + $0x28] sm:$0xff]
    %v310 = vld [vmem:[%s7 + $0x30] sm:$0xff]
    %v311 = vld [vmem:[%s7 + $0x38] sm:$0xff]
    %v312 = vld [vmem:[%s7 + $0x40] sm:$0xff]
    %v313 = vld [vmem:[%s7 + $0x48] sm:$0xff]
    %v314 = vld [vmem:[%s7 + $0x50] sm:$0xff]
    %v315 = vld [vmem:[%s7 + $0x58] sm:$0xff]
    %v316 = vld [vmem:[%s7 + $0x60] sm:$0xff]
    %v317 = vld [vmem:[%s7 + $0x68] sm:$0xff]
    %v318 = vld [vmem:[%s7 + $0x70] sm:$0xff]
    %v319 = vld [vmem:[%s7 + $0x78] sm:$0xff]
    %v320 = vld [vmem:[%s8] sm:$0x1]
    %v322 = vlaneseq
    %v323 = vshrl.u32 %v322, 7
    %v324 = vsub.s32 0, %v323
    %v325 = vrot.slane %v320, %v324
    %327 = vmatprep.subr.mxu0 0.0
    %328 = vmatpush1.msra.mxu0 %v304
    %329 = vmatprep.subr.mxu0 0.0
    %330 = vmatpush1.msra.mxu0 %v305
    %331 = vmatprep.subr.mxu0 0.0
    %332 = vmatpush1.msra.mxu0 %v306
    %333 = vmatprep.subr.mxu0 0.0
    %334 = vmatpush1.msra.mxu0 %v307
    %335 = vmatprep.subr.mxu0 0.0
    %336 = vmatpush1.msra.mxu0 %v308
    %337 = vmatprep.subr.mxu0 0.0
    %338 = vmatpush1.msra.mxu0 %v309
    %339 = vmatprep.subr.mxu0 0.0
    %340 = vmatpush1.msra.mxu0 %v310
    %341 = vmatprep.subr.mxu0 0.0
    %342 = vmatpush1.msra.mxu0 %v311
    %343 = vmatprep.subr.mxu0 0.0
    %344 = vmatpush1.msra.mxu0 %v312
    %345 = vmatprep.subr.mxu0 0.0
    %346 = vmatpush1.msra.mxu0 %v313
    %347 = vmatprep.subr.mxu0 0.0
    %348 = vmatpush1.msra.mxu0 %v314
    %349 = vmatprep.subr.mxu0 0.0
    %350 = vmatpush1.msra.mxu0 %v315
    %351 = vmatprep.subr.mxu0 0.0
    %352 = vmatpush1.msra.mxu0 %v316
    %353 = vmatprep.subr.mxu0 0.0
    %354 = vmatpush1.msra.mxu0 %v317
    %355 = vmatprep.subr.mxu0 0.0
    %356 = vmatpush1.msra.mxu0 %v318
    %357 = vmatprep.subr.mxu0 0.0
    %358 = vmatpush1.msra.mxu0 %v319
    %359 = vmatprep.subr.mxu0 0.0
    %360 = vmatpush1.msra.mxu0 0.0
    %361 = vmatprep.subr.mxu0 0.0
    %362 = vmatpush1.msra.mxu0 0.0
    %363 = vmatprep.subr.mxu0 0.0
    %364 = vmatpush1.msra.mxu0 0.0
    %365 = vmatprep.subr.mxu0 0.0
    %366 = vmatpush1.msra.mxu0 0.0
    %367 = vmatprep.subr.mxu0 0.0
    %368 = vmatpush1.msra.mxu0 0.0
    %369 = vmatprep.subr.mxu0 0.0
    %370 = vmatpush1.msra.mxu0 0.0
    %371 = vmatprep.subr.mxu0 0.0
    %372 = vmatpush1.msra.mxu0 0.0
    %373 = vmatprep.subr.mxu0 0.0
    %374 = vmatpush1.msra.mxu0 0.0
    %375 = vmatprep.subr.mxu0 0.0
    %376 = vmatpush1.msra.mxu0 0.0
    %377 = vmatprep.subr.mxu0 0.0
    %378 = vmatpush1.msra.mxu0 0.0
    %379 = vmatprep.subr.mxu0 0.0
    %380 = vmatpush1.msra.mxu0 0.0
    %381 = vmatprep.subr.mxu0 0.0
    %382 = vmatpush1.msra.mxu0 0.0
    %383 = vmatprep.subr.mxu0 0.0
    %384 = vmatpush1.msra.mxu0 0.0
    %385 = vmatprep.subr.mxu0 0.0
    %386 = vmatpush1.msra.mxu0 0.0
    %387 = vmatprep.subr.mxu0 0.0
    %388 = vmatpush1.msra.mxu0 0.0
    %389 = vmatprep.subr.mxu0 0.0
    %390 = vmatpush1.msra.mxu0 0.0
    %391 = vmatprep.mubr.f32.mxu0 0.0
    %392 = vmatmul.mubr.f32.gmra.mrb[0].mxu0 %v303
    %v393 = vpop.f32.mrb[0].mxu0
    %v394 = vadd.f32 %v325, %v393
    %v395 = vpop.f32.mrb[0].mxu0
    %396 = vdwg.mxu0
    %vm397 = vcmask 66560
    %398 = vst.msk [vmem:[#allocation2] sm:$0x3] %vm397, %v394
    // Predicated region
    $region38: #{cnn_forward.5} parent=1 // pred_check
      _
    $region39: #{cnn_forward.5} parent=1 // pred_check_branch
      %400 = sbr.rel (0) target = $region41
    $region40: #{cnn_forward.5} parent=1 // pred_region
      %s402 = ssub.s32 32, 32
      %403 = vsyncadd [#allocation3], %s402
      %s405 = sshll.u32 [#allocation2], 4
      %s406 = int_to_ptr.vmem [resolvable:$true] %s405
      %408 = dma.vmem_to_hbm [thread:$0]  %s406, 32, %s9, [#allocation3]
    $region41: #{cnn_forward.5} parent=1 // pred_fallthru
      _
    // Predicated region
    $region42: #{cnn_forward.5} parent=1 // pred_check
      _
    $region43: #{cnn_forward.5} parent=1 // pred_check_branch
      %410 = sbr.rel (0) target = $region45
    $region44: #{cnn_forward.5} parent=1 // pred_region
      %411 = dma.done [#allocation3], 32
    $region45: #{cnn_forward.5} parent=1 // pred_fallthru
      _
    %412 = vsyncpa [#allocation3], 1

</llo_original>
